<compile_context>
chip_gen: v7x
topology: tpu7x:2x2x1
jax: 0.10.0
libtpu: 0.0.40
codegen_flags: <defaults>
</compile_context>

<pallas_src>
import math

import jax
import jax.numpy as jnp
from jax.experimental import pallas as pl
from jax.experimental.pallas import tpu as pltpu


_LANES = 128
_SUBLANES = 8


def _round_up(x, m=_LANES):
    return ((x + m - 1) // m) * m


def _pad_to(a, shape):
    return jnp.pad(a, [(0, t - s) for s, t in zip(a.shape, shape)])


# ----------------------------------------------------------------------------
# Fused kernel: encoder (num_layers GRU layers) + greedy GRUCell decoder + head
# ----------------------------------------------------------------------------
def _make_grunet_kernel(num_layers, L, S, BT, P, Vp, V):
    """All arguments are static Python ints.

    BT = batch tile (sublane-padded, 8)
    P  = shared lane-padded width of dim_input and dim_recurrent
    Vp = lane-padded target vocab; V = logical target vocab (argmax restricted to it)
    """

    def gru_cell(gates_x, h, whh_bf16, bhh):
        # gates_x = x @ Wih + bih (precomputed off the serial h chain), (BT, 3P) f32
        gates_h = jnp.dot(h.astype(jnp.bfloat16), whh_bf16,
                          preferred_element_type=jnp.float32) + bhh
        r = jax.nn.sigmoid(gates_x[:, 0 * P:1 * P] + gates_h[:, 0 * P:1 * P])
        z = jax.nn.sigmoid(gates_x[:, 1 * P:2 * P] + gates_h[:, 1 * P:2 * P])
        n = jnp.tanh(gates_x[:, 2 * P:3 * P] + r * gates_h[:, 2 * P:3 * P])
        return (1.0 - z) * n + z * h                              # f32 state

    def kernel(x_seq_ref, x0_ref,
               enc_wih_ref, enc_whh_ref, enc_bih_ref, enc_bhh_ref,
               dec_wih_ref, dec_whh_ref, dec_bih_ref, dec_bhh_ref,
               wf_ref, bf_ref, emb_tgt_ref,
               word_prob_ref,
               seq_scr_ref):
        # ------------------------------ encoder ------------------------------
        h = jnp.zeros((BT, P), jnp.float32)
        for layer in range(num_layers):
            src_ref = x_seq_ref if layer == 0 else seq_scr_ref
            seq = src_ref[...]                                    # (L*BT, P) f32, time-major
            wih = enc_wih_ref[layer]                              # (P, 3P) bf16
            whh = enc_whh_ref[layer]                              # (P, 3P) bf16
            bih = enc_bih_ref[layer]                              # (1, 3P) f32
            bhh = enc_bhh_ref[layer]                              # (1, 3P) f32
            # Hoisted input projection: ONE wide bf16 matmul for all L timesteps.
            xg = jnp.dot(seq.astype(jnp.bfloat16), wih,
                         preferred_element_type=jnp.float32) + bih     # (L*BT, 3P) f32
            h = jnp.zeros((BT, P), jnp.float32)                   # zero init per layer
            for t in range(L):                                    # unrolled (static L)
                h = gru_cell(xg[t * BT:(t + 1) * BT, :], h, whh, bhh)
                if layer + 1 < num_layers:
                    seq_scr_ref[t * BT:(t + 1) * BT, :] = h       # (8,128) aligned store
        # h == hidden[-1] of the stacked nn.GRU

        # ------------------------------ decoder ------------------------------
        dec_wih = dec_wih_ref[...]                                # (P, 3P) bf16
        dec_whh = dec_whh_ref[...]                                # (P, 3P) bf16
        dec_bih = dec_bih_ref[...]                                # (1, 3P) f32
        dec_bhh = dec_bhh_ref[...]                                # (1, 3P) f32
        wf = wf_ref[...]                                          # (P, Vp) bf16
        bf = bf_ref[...]                                          # (1, Vp) f32
        emb_tgt = emb_tgt_ref[...]                                # (Vp, P) bf16

        col = jax.lax.broadcasted_iota(jnp.int32, (BT, Vp), 1)
        valid = col < V

        x = x0_ref[...].astype(jnp.bfloat16)                      # (BT, P)
        word_prob_ref[0] = jnp.zeros((BT, Vp), jnp.float32)       # only row 0 stays 0
        for i in range(S - 1):                                    # unrolled (static S)
            gx = jnp.dot(x, dec_wih, preferred_element_type=jnp.float32) + dec_bih
            h = gru_cell(gx, h, dec_whh, dec_bhh)
            logits = jnp.dot(jnp.maximum(h, 0.0).astype(jnp.bfloat16), wf,
                             preferred_element_type=jnp.float32) + bf   # (BT, Vp) f32
            word_prob_ref[i + 1] = logits                         # (8,128) dense store
            # argmax over the logical vocab (first occurrence on ties)
            masked = jnp.where(valid, logits, -jnp.inf)
            m = jnp.max(masked, axis=1, keepdims=True)
            idx = jnp.min(jnp.where(masked == m, col, Vp), axis=1, keepdims=True)
            onehot = (col == idx).astype(jnp.bfloat16)            # (BT, Vp)
            # TODO(synk): at realistic vocab size, replace the one-hot matmul with a
            #             per-row DMA / scalar gather of emb_tgt (kept in HBM).
            x = jnp.dot(onehot, emb_tgt,
                        preferred_element_type=jnp.float32).astype(jnp.bfloat16)

    return kernel


# ----------------------------------------------------------------------------
# Wrapper (glue: embedding gathers, batch/lane padding, batch-tile layout)
# ----------------------------------------------------------------------------
def grunet_forward(params, tokens, predict_token):
    """tokens: (B, L) int32, predict_token: (B,) int32 -> (B, num_sequence, V) f32."""
    p = params
    P, Vp, V = p["P"], p["Vp"], p["tgt_vocab_size"]
    N, S = p["num_layers"], p["num_sequence"]
    B, L = tokens.shape
    BT = _SUBLANES                                 # batch tile = one f32 sublane group
    Bp = _round_up(B, BT)
    nbt = Bp // BT
    G = 3 * P

    # Source embedding lookups (plain XLA gather on the lane-padded f32 table).
    x = jnp.take(p["emb_src"], tokens, axis=0)                       # (B, L, P)
    x_seq = jnp.transpose(x, (1, 0, 2))                              # (L, B, P)
    x_seq = jnp.pad(x_seq, ((0, 0), (0, Bp - B), (0, 0)))            # (L, Bp, P)
    # Batch-tile major, time-major within a tile -> (nbt, L*BT, P), lane/sublane dense.
    x_seq = x_seq.reshape(L, nbt, BT, P).transpose(1, 0, 2, 3).reshape(nbt, L * BT, P)

    x0 = jnp.take(p["emb_src"], predict_token, axis=0)               # (B, P)
    x0 = jnp.pad(x0, ((0, Bp - B), (0, 0)))                          # (Bp, P)

    kernel = _make_grunet_kernel(N, L, S, BT, P, Vp, V)

    word_prob_p = pl.pallas_call(
        kernel,
        out_shape=jax.ShapeDtypeStruct((S, Bp, Vp), jnp.float32),
        grid=(nbt,),
        in_specs=[
            pl.BlockSpec((None, L * BT, P), lambda b: (b, 0, 0)),    # x_seq (squeezed)
            pl.BlockSpec((BT, P), lambda b: (b, 0)),                 # x0
            pl.BlockSpec((N, P, G), lambda b: (0, 0, 0)),            # enc_wih (bf16)
            pl.BlockSpec((N, P, G), lambda b: (0, 0, 0)),            # enc_whh (bf16)
            pl.BlockSpec((N, 1, G), lambda b: (0, 0, 0)),            # enc_bih (f32)
            pl.BlockSpec((N, 1, G), lambda b: (0, 0, 0)),            # enc_bhh (f32)
            pl.BlockSpec((P, G), lambda b: (0, 0)),                  # dec_wih (bf16)
            pl.BlockSpec((P, G), lambda b: (0, 0)),                  # dec_whh (bf16)
            pl.BlockSpec((1, G), lambda b: (0, 0)),                  # dec_bih (f32)
            pl.BlockSpec((1, G), lambda b: (0, 0)),                  # dec_bhh (f32)
            pl.BlockSpec((P, Vp), lambda b: (0, 0)),                 # wf (bf16)
            pl.BlockSpec((1, Vp), lambda b: (0, 0)),                 # bf (f32)
            pl.BlockSpec((Vp, P), lambda b: (0, 0)),                 # emb_tgt (bf16)
        ],
        out_specs=pl.BlockSpec((S, BT, Vp), lambda b: (0, b, 0)),
        scratch_shapes=[pltpu.VMEM((L * BT, P), jnp.float32)],       # inter-layer seq
        compiler_params=pltpu.CompilerParams(
            dimension_semantics=("parallel",),           # batch tiles -> both v7x TCs
            vmem_limit_bytes=64 * 1024 * 1024),
    )(x_seq, x0,
      p["enc_wih"], p["enc_whh"], p["enc_bih"], p["enc_bhh"],
      p["dec_wih"], p["dec_whh"], p["dec_bih"], p["dec_bhh"],
      p["wf"], p["bf"], p["emb_tgt"])

    word_prob = word_prob_p[:, :B, :V]                 # drop batch + lane padding
    return jnp.transpose(word_prob, (1, 0, 2))         # (B, S, V)


# ----------------------------------------------------------------------------
# Deterministic parameter init (PyTorch default-style distributions), lane-padded
# ----------------------------------------------------------------------------
def init_params(key, dim_input, dim_recurrent, num_sequence,
                src_padding_idx, tgt_padding_idx, src_vocab_size, tgt_vocab_size):
    D, H, V = dim_input, dim_recurrent, tgt_vocab_size
    N = num_sequence                              # nn.GRU(num_layers=num_sequence)
    P = max(_round_up(D), _round_up(H))           # shared lane-padded width
    Vp = _round_up(V)
    k = 1.0 / math.sqrt(H)

    keys = iter(jax.random.split(key, 8 + 4 * N))

    def uni(shape):
        return jax.random.uniform(next(keys), shape, jnp.float32, -k, k)

    def fused_w(din):
        # per-gate (din, H) weights, gate order [r, z, n] -> fused lane-padded (P, 3P)
        w = uni((3, din, H))
        return jnp.concatenate([_pad_to(w[g], (P, P)) for g in range(3)], axis=1)

    def fused_b():
        b = uni((3, H))
        return jnp.concatenate([jnp.pad(b[g], (0, P - H)) for g in range(3)])[None, :]

    # nn.Embedding: N(0,1) rows, padding_idx row zeroed; columns lane-padded to P.
    emb_src = jax.random.normal(next(keys), (src_vocab_size, D), jnp.float32)
    emb_src = emb_src.at[src_padding_idx].set(0.0)
    emb_tgt = jax.random.normal(next(keys), (tgt_vocab_size, D), jnp.float32)
    emb_tgt = emb_tgt.at[tgt_padding_idx].set(0.0)
    emb_src_p = _pad_to(emb_src, (src_vocab_size, P))
    emb_tgt_p = _pad_to(emb_tgt, (Vp, P))

    enc_wih, enc_whh, enc_bih, enc_bhh = [], [], [], []
    for layer in range(N):
        din = D if layer == 0 else H
        enc_wih.append(fused_w(din))
        enc_whh.append(fused_w(H))
        enc_bih.append(fused_b())
        enc_bhh.append(fused_b())

    dec_wih = fused_w(D)
    dec_whh = fused_w(H)
    dec_bih = fused_b()
    dec_bhh = fused_b()

    wf = _pad_to(uni((H, V)), (P, Vp))            # Linear weight stored transposed
    bf = _pad_to(uni((V,)), (Vp,))[None, :]

    bf16 = jnp.bfloat16                           # MXU-native operands; pads stay exact 0
    return {
        "emb_src": emb_src_p,                     # f32 (gathered outside the kernel)
        "emb_tgt": emb_tgt_p.astype(bf16),
        "enc_wih": jnp.stack(enc_wih).astype(bf16),
        "enc_whh": jnp.stack(enc_whh).astype(bf16),
        "enc_bih": jnp.stack(enc_bih), "enc_bhh": jnp.stack(enc_bhh),
        "dec_wih": dec_wih.astype(bf16), "dec_whh": dec_whh.astype(bf16),
        "dec_bih": dec_bih, "dec_bhh": dec_bhh,
        "wf": wf.astype(bf16), "bf": bf,
        "num_sequence": num_sequence, "num_layers": N,
        "tgt_vocab_size": V, "P": P, "Vp": Vp,
    }


# ----------------------------------------------------------------------------
if __name__ == "__main__":
    B = 2
    dim_input = 32
    dim_recurrent = 32
    num_sequence = 4          # == GRU num_layers == number of decode steps
    src_vocab_size = 64
    tgt_vocab_size = 64
    src_padding_idx = 0
    tgt_padding_idx = 0
    L = 6                     # encoder source length

    root = jax.random.PRNGKey(0)
    k_params, k_tok, k_pred = jax.random.split(root, 3)

    params = init_params(k_params, dim_input, dim_recurrent, num_sequence,
                         src_padding_idx, tgt_padding_idx,
                         src_vocab_size, tgt_vocab_size)

    tokens = jax.random.randint(k_tok, (B, L), 0, src_vocab_size, dtype=jnp.int32)
    predict_token = jax.random.randint(k_pred, (B,), 0, src_vocab_size, dtype=jnp.int32)

    word_prob = grunet_forward(params, tokens, predict_token)
    word_prob = jax.block_until_ready(word_prob)

    assert word_prob.shape == (B, num_sequence, tgt_vocab_size)
    assert word_prob.dtype == jnp.float32
    print("KERNEL_OK")
</pallas_src>

<mosaic_0001>
module attributes {stable_mosaic.version = 11 : i64} {
  func.func @kernel(%arg0: i32, %arg1: memref<1x48x128xf32, #tpu.memory_space<vmem>>, %arg2: memref<8x128xf32, #tpu.memory_space<vmem>>, %arg3: memref<4x128x384xbf16, #tpu.memory_space<vmem>>, %arg4: memref<4x128x384xbf16, #tpu.memory_space<vmem>>, %arg5: memref<4x1x384xf32, #tpu.memory_space<vmem>>, %arg6: memref<4x1x384xf32, #tpu.memory_space<vmem>>, %arg7: memref<128x384xbf16, #tpu.memory_space<vmem>>, %arg8: memref<128x384xbf16, #tpu.memory_space<vmem>>, %arg9: memref<1x384xf32, #tpu.memory_space<vmem>>, %arg10: memref<1x384xf32, #tpu.memory_space<vmem>>, %arg11: memref<128x128xbf16, #tpu.memory_space<vmem>>, %arg12: memref<1x128xf32, #tpu.memory_space<vmem>>, %arg13: memref<128x128xbf16, #tpu.memory_space<vmem>>, %arg14: memref<4x8x128xf32, #tpu.memory_space<vmem>>, %arg15: memref<48x128xf32, #tpu.memory_space<vmem>>) attributes {dimension_semantics = [#tpu.dimension_semantics<parallel>], iteration_bounds = array<i64: 1>, scalar_prefetch = 0 : i64, scratch_operands = 1 : i64, tpu.core_type = #tpu.core_type<tc>, window_params = [{transform_indices = @transform_0, window_bounds = array<i64: 1, 48, 128>}, {transform_indices = @transform_1, window_bounds = array<i64: 8, 128>}, {pipeline_mode = #tpu.pipeline_mode<synchronous>, transform_indices = @transform_2, window_bounds = array<i64: 4, 128, 384>}, {pipeline_mode = #tpu.pipeline_mode<synchronous>, transform_indices = @transform_3, window_bounds = array<i64: 4, 128, 384>}, {pipeline_mode = #tpu.pipeline_mode<synchronous>, transform_indices = @transform_4, window_bounds = array<i64: 4, 1, 384>}, {pipeline_mode = #tpu.pipeline_mode<synchronous>, transform_indices = @transform_5, window_bounds = array<i64: 4, 1, 384>}, {pipeline_mode = #tpu.pipeline_mode<synchronous>, transform_indices = @transform_6, window_bounds = array<i64: 128, 384>}, {pipeline_mode = #tpu.pipeline_mode<synchronous>, transform_indices = @transform_7, window_bounds = array<i64: 128, 384>}, {pipeline_mode = #tpu.pipeline_mode<synchronous>, transform_indices = @transform_8, window_bounds = array<i64: 1, 384>}, {pipeline_mode = #tpu.pipeline_mode<synchronous>, transform_indices = @transform_9, window_bounds = array<i64: 1, 384>}, {pipeline_mode = #tpu.pipeline_mode<synchronous>, transform_indices = @transform_10, window_bounds = array<i64: 128, 128>}, {pipeline_mode = #tpu.pipeline_mode<synchronous>, transform_indices = @transform_11, window_bounds = array<i64: 1, 128>}, {pipeline_mode = #tpu.pipeline_mode<synchronous>, transform_indices = @transform_12, window_bounds = array<i64: 128, 128>}, {transform_indices = @transform_13, window_bounds = array<i64: 4, 8, 128>}]} {
    %c0 = arith.constant 0 : index
    %c0_0 = arith.constant 0 : index
    %c0_1 = arith.constant 0 : index
    %0 = vector.load %arg1[%c0, %c0_0, %c0_1] : memref<1x48x128xf32, #tpu.memory_space<vmem>>, vector<1x48x128xf32>
    %1 = vector.shape_cast %0 : vector<1x48x128xf32> to vector<48x128xf32>
    %c0_2 = arith.constant 0 : index
    %c0_3 = arith.constant 0 : index
    %c0_4 = arith.constant 0 : index
    %2 = vector.load %arg3[%c0_2, %c0_3, %c0_4] : memref<4x128x384xbf16, #tpu.memory_space<vmem>>, vector<1x128x384xbf16>
    %3 = vector.shape_cast %2 : vector<1x128x384xbf16> to vector<128x384xbf16>
    %c0_5 = arith.constant 0 : index
    %c0_6 = arith.constant 0 : index
    %c0_7 = arith.constant 0 : index
    %4 = vector.load %arg4[%c0_5, %c0_6, %c0_7] : memref<4x128x384xbf16, #tpu.memory_space<vmem>>, vector<1x128x384xbf16>
    %5 = vector.shape_cast %4 : vector<1x128x384xbf16> to vector<128x384xbf16>
    %c0_8 = arith.constant 0 : index
    %c0_9 = arith.constant 0 : index
    %c0_10 = arith.constant 0 : index
    %6 = vector.load %arg5[%c0_8, %c0_9, %c0_10] : memref<4x1x384xf32, #tpu.memory_space<vmem>>, vector<1x1x384xf32>
    %7 = vector.shape_cast %6 : vector<1x1x384xf32> to vector<1x384xf32>
    %c0_11 = arith.constant 0 : index
    %c0_12 = arith.constant 0 : index
    %c0_13 = arith.constant 0 : index
    %8 = vector.load %arg6[%c0_11, %c0_12, %c0_13] : memref<4x1x384xf32, #tpu.memory_space<vmem>>, vector<1x1x384xf32>
    %9 = vector.shape_cast %8 : vector<1x1x384xf32> to vector<1x384xf32>
    %10 = arith.truncf %1 : vector<48x128xf32> to vector<48x128xbf16>
    %cst = arith.constant dense<0.000000e+00> : vector<48x384xf32>
    %11 = tpu.matmul %10, %3, %cst {dimension_numbers = #tpu.dot_dimension_numbers<[1], [0], [0], [1], [0, 0, 1, 1], [], []>} : vector<48x128xbf16>, vector<128x384xbf16>, vector<48x384xf32> -> vector<48x384xf32>
    %12 = vector.broadcast %7 : vector<1x384xf32> to vector<48x384xf32>
    %13 = arith.addf %11, %12 : vector<48x384xf32>
    %cst_14 = arith.constant 0.000000e+00 : f32
    %14 = vector.broadcast %cst_14 : f32 to vector<8x128xf32>
    %15 = vector.extract_strided_slice %13 {offsets = [0, 0], sizes = [8, 384], strides = [1, 1]} : vector<48x384xf32> to vector<8x384xf32>
    %16 = arith.truncf %14 : vector<8x128xf32> to vector<8x128xbf16>
    %cst_15 = arith.constant dense<0.000000e+00> : vector<8x384xf32>
    %17 = tpu.matmul %16, %5, %cst_15 {dimension_numbers = #tpu.dot_dimension_numbers<[1], [0], [0], [1], [0, 0, 1, 1], [], []>} : vector<8x128xbf16>, vector<128x384xbf16>, vector<8x384xf32> -> vector<8x384xf32>
    %18 = vector.broadcast %9 : vector<1x384xf32> to vector<8x384xf32>
    %19 = arith.addf %17, %18 : vector<8x384xf32>
    %20 = vector.extract_strided_slice %15 {offsets = [0, 0], sizes = [8, 128], strides = [1, 1]} : vector<8x384xf32> to vector<8x128xf32>
    %21 = vector.extract_strided_slice %19 {offsets = [0, 0], sizes = [8, 128], strides = [1, 1]} : vector<8x384xf32> to vector<8x128xf32>
    %22 = arith.addf %20, %21 : vector<8x128xf32>
    %23 = arith.negf %22 : vector<8x128xf32>
    %24 = math.exp %23 : vector<8x128xf32>
    %cst_16 = arith.constant 1.000000e+00 : f32
    %25 = vector.broadcast %cst_16 : f32 to vector<8x128xf32>
    %26 = arith.addf %25, %24 : vector<8x128xf32>
    %27 = arith.divf %25, %26 : vector<8x128xf32>
    %28 = vector.extract_strided_slice %15 {offsets = [0, 128], sizes = [8, 128], strides = [1, 1]} : vector<8x384xf32> to vector<8x128xf32>
    %29 = vector.extract_strided_slice %19 {offsets = [0, 128], sizes = [8, 128], strides = [1, 1]} : vector<8x384xf32> to vector<8x128xf32>
    %30 = arith.addf %28, %29 : vector<8x128xf32>
    %31 = arith.negf %30 : vector<8x128xf32>
    %32 = math.exp %31 : vector<8x128xf32>
    %cst_17 = arith.constant 1.000000e+00 : f32
    %33 = vector.broadcast %cst_17 : f32 to vector<8x128xf32>
    %34 = arith.addf %33, %32 : vector<8x128xf32>
    %35 = arith.divf %33, %34 : vector<8x128xf32>
    %36 = vector.extract_strided_slice %15 {offsets = [0, 256], sizes = [8, 128], strides = [1, 1]} : vector<8x384xf32> to vector<8x128xf32>
    %37 = vector.extract_strided_slice %19 {offsets = [0, 256], sizes = [8, 128], strides = [1, 1]} : vector<8x384xf32> to vector<8x128xf32>
    %38 = arith.mulf %27, %37 : vector<8x128xf32>
    %39 = arith.addf %36, %38 : vector<8x128xf32>
    %40 = math.tanh %39 : vector<8x128xf32>
    %cst_18 = arith.constant 1.000000e+00 : f32
    %41 = vector.broadcast %cst_18 : f32 to vector<8x128xf32>
    %42 = arith.subf %41, %35 : vector<8x128xf32>
    %43 = arith.mulf %42, %40 : vector<8x128xf32>
    %44 = arith.mulf %35, %14 : vector<8x128xf32>
    %45 = arith.addf %43, %44 : vector<8x128xf32>
    %c0_19 = arith.constant 0 : index
    %c0_20 = arith.constant 0 : index
    %46 = vector.load %arg15[%c0_19, %c0_20] : memref<48x128xf32, #tpu.memory_space<vmem>>, vector<8x128xf32>
    tpu.vector_store %arg15[%c0_19, %c0_20], %45 {strides = array<i32>} : memref<48x128xf32, #tpu.memory_space<vmem>>, vector<8x128xf32>,
    %47 = vector.extract_strided_slice %13 {offsets = [8, 0], sizes = [8, 384], strides = [1, 1]} : vector<48x384xf32> to vector<8x384xf32>
    %48 = arith.truncf %45 : vector<8x128xf32> to vector<8x128xbf16>
    %cst_21 = arith.constant dense<0.000000e+00> : vector<8x384xf32>
    %49 = tpu.matmul %48, %5, %cst_21 {dimension_numbers = #tpu.dot_dimension_numbers<[1], [0], [0], [1], [0, 0, 1, 1], [], []>} : vector<8x128xbf16>, vector<128x384xbf16>, vector<8x384xf32> -> vector<8x384xf32>
    %50 = vector.broadcast %9 : vector<1x384xf32> to vector<8x384xf32>
    %51 = arith.addf %49, %50 : vector<8x384xf32>
    %52 = vector.extract_strided_slice %47 {offsets = [0, 0], sizes = [8, 128], strides = [1, 1]} : vector<8x384xf32> to vector<8x128xf32>
    %53 = vector.extract_strided_slice %51 {offsets = [0, 0], sizes = [8, 128], strides = [1, 1]} : vector<8x384xf32> to vector<8x128xf32>
    %54 = arith.addf %52, %53 : vector<8x128xf32>
    %55 = arith.negf %54 : vector<8x128xf32>
    %56 = math.exp %55 : vector<8x128xf32>
    %cst_22 = arith.constant 1.000000e+00 : f32
    %57 = vector.broadcast %cst_22 : f32 to vector<8x128xf32>
    %58 = arith.addf %57, %56 : vector<8x128xf32>
    %59 = arith.divf %57, %58 : vector<8x128xf32>
    %60 = vector.extract_strided_slice %47 {offsets = [0, 128], sizes = [8, 128], strides = [1, 1]} : vector<8x384xf32> to vector<8x128xf32>
    %61 = vector.extract_strided_slice %51 {offsets = [0, 128], sizes = [8, 128], strides = [1, 1]} : vector<8x384xf32> to vector<8x128xf32>
    %62 = arith.addf %60, %61 : vector<8x128xf32>
    %63 = arith.negf %62 : vector<8x128xf32>
    %64 = math.exp %63 : vector<8x128xf32>
    %cst_23 = arith.constant 1.000000e+00 : f32
    %65 = vector.broadcast %cst_23 : f32 to vector<8x128xf32>
    %66 = arith.addf %65, %64 : vector<8x128xf32>
    %67 = arith.divf %65, %66 : vector<8x128xf32>
    %68 = vector.extract_strided_slice %47 {offsets = [0, 256], sizes = [8, 128], strides = [1, 1]} : vector<8x384xf32> to vector<8x128xf32>
    %69 = vector.extract_strided_slice %51 {offsets = [0, 256], sizes = [8, 128], strides = [1, 1]} : vector<8x384xf32> to vector<8x128xf32>
    %70 = arith.mulf %59, %69 : vector<8x128xf32>
    %71 = arith.addf %68, %70 : vector<8x128xf32>
    %72 = math.tanh %71 : vector<8x128xf32>
    %cst_24 = arith.constant 1.000000e+00 : f32
    %73 = vector.broadcast %cst_24 : f32 to vector<8x128xf32>
    %74 = arith.subf %73, %67 : vector<8x128xf32>
    %75 = arith.mulf %74, %72 : vector<8x128xf32>
    %76 = arith.mulf %67, %45 : vector<8x128xf32>
    %77 = arith.addf %75, %76 : vector<8x128xf32>
    %c8 = arith.constant 8 : index
    %c0_25 = arith.constant 0 : index
    %78 = vector.load %arg15[%c8, %c0_25] : memref<48x128xf32, #tpu.memory_space<vmem>>, vector<8x128xf32>
    tpu.vector_store %arg15[%c8, %c0_25], %77 {strides = array<i32>} : memref<48x128xf32, #tpu.memory_space<vmem>>, vector<8x128xf32>,
    %79 = vector.extract_strided_slice %13 {offsets = [16, 0], sizes = [8, 384], strides = [1, 1]} : vector<48x384xf32> to vector<8x384xf32>
    %80 = arith.truncf %77 : vector<8x128xf32> to vector<8x128xbf16>
    %cst_26 = arith.constant dense<0.000000e+00> : vector<8x384xf32>
    %81 = tpu.matmul %80, %5, %cst_26 {dimension_numbers = #tpu.dot_dimension_numbers<[1], [0], [0], [1], [0, 0, 1, 1], [], []>} : vector<8x128xbf16>, vector<128x384xbf16>, vector<8x384xf32> -> vector<8x384xf32>
    %82 = vector.broadcast %9 : vector<1x384xf32> to vector<8x384xf32>
    %83 = arith.addf %81, %82 : vector<8x384xf32>
    %84 = vector.extract_strided_slice %79 {offsets = [0, 0], sizes = [8, 128], strides = [1, 1]} : vector<8x384xf32> to vector<8x128xf32>
    %85 = vector.extract_strided_slice %83 {offsets = [0, 0], sizes = [8, 128], strides = [1, 1]} : vector<8x384xf32> to vector<8x128xf32>
    %86 = arith.addf %84, %85 : vector<8x128xf32>
    %87 = arith.negf %86 : vector<8x128xf32>
    %88 = math.exp %87 : vector<8x128xf32>
    %cst_27 = arith.constant 1.000000e+00 : f32
    %89 = vector.broadcast %cst_27 : f32 to vector<8x128xf32>
    %90 = arith.addf %89, %88 : vector<8x128xf32>
    %91 = arith.divf %89, %90 : vector<8x128xf32>
    %92 = vector.extract_strided_slice %79 {offsets = [0, 128], sizes = [8, 128], strides = [1, 1]} : vector<8x384xf32> to vector<8x128xf32>
    %93 = vector.extract_strided_slice %83 {offsets = [0, 128], sizes = [8, 128], strides = [1, 1]} : vector<8x384xf32> to vector<8x128xf32>
    %94 = arith.addf %92, %93 : vector<8x128xf32>
    %95 = arith.negf %94 : vector<8x128xf32>
    %96 = math.exp %95 : vector<8x128xf32>
    %cst_28 = arith.constant 1.000000e+00 : f32
    %97 = vector.broadcast %cst_28 : f32 to vector<8x128xf32>
    %98 = arith.addf %97, %96 : vector<8x128xf32>
    %99 = arith.divf %97, %98 : vector<8x128xf32>
    %100 = vector.extract_strided_slice %79 {offsets = [0, 256], sizes = [8, 128], strides = [1, 1]} : vector<8x384xf32> to vector<8x128xf32>
    %101 = vector.extract_strided_slice %83 {offsets = [0, 256], sizes = [8, 128], strides = [1, 1]} : vector<8x384xf32> to vector<8x128xf32>
    %102 = arith.mulf %91, %101 : vector<8x128xf32>
    %103 = arith.addf %100, %102 : vector<8x128xf32>
    %104 = math.tanh %103 : vector<8x128xf32>
    %cst_29 = arith.constant 1.000000e+00 : f32
    %105 = vector.broadcast %cst_29 : f32 to vector<8x128xf32>
    %106 = arith.subf %105, %99 : vector<8x128xf32>
    %107 = arith.mulf %106, %104 : vector<8x128xf32>
    %108 = arith.mulf %99, %77 : vector<8x128xf32>
    %109 = arith.addf %107, %108 : vector<8x128xf32>
    %c16 = arith.constant 16 : index
    %c0_30 = arith.constant 0 : index
    %110 = vector.load %arg15[%c16, %c0_30] : memref<48x128xf32, #tpu.memory_space<vmem>>, vector<8x128xf32>
    tpu.vector_store %arg15[%c16, %c0_30], %109 {strides = array<i32>} : memref<48x128xf32, #tpu.memory_space<vmem>>, vector<8x128xf32>,
    %111 = vector.extract_strided_slice %13 {offsets = [24, 0], sizes = [8, 384], strides = [1, 1]} : vector<48x384xf32> to vector<8x384xf32>
    %112 = arith.truncf %109 : vector<8x128xf32> to vector<8x128xbf16>
    %cst_31 = arith.constant dense<0.000000e+00> : vector<8x384xf32>
    %113 = tpu.matmul %112, %5, %cst_31 {dimension_numbers = #tpu.dot_dimension_numbers<[1], [0], [0], [1], [0, 0, 1, 1], [], []>} : vector<8x128xbf16>, vector<128x384xbf16>, vector<8x384xf32> -> vector<8x384xf32>
    %114 = vector.broadcast %9 : vector<1x384xf32> to vector<8x384xf32>
    %115 = arith.addf %113, %114 : vector<8x384xf32>
    %116 = vector.extract_strided_slice %111 {offsets = [0, 0], sizes = [8, 128], strides = [1, 1]} : vector<8x384xf32> to vector<8x128xf32>
    %117 = vector.extract_strided_slice %115 {offsets = [0, 0], sizes = [8, 128], strides = [1, 1]} : vector<8x384xf32> to vector<8x128xf32>
    %118 = arith.addf %116, %117 : vector<8x128xf32>
    %119 = arith.negf %118 : vector<8x128xf32>
    %120 = math.exp %119 : vector<8x128xf32>
    %cst_32 = arith.constant 1.000000e+00 : f32
    %121 = vector.broadcast %cst_32 : f32 to vector<8x128xf32>
    %122 = arith.addf %121, %120 : vector<8x128xf32>
    %123 = arith.divf %121, %122 : vector<8x128xf32>
    %124 = vector.extract_strided_slice %111 {offsets = [0, 128], sizes = [8, 128], strides = [1, 1]} : vector<8x384xf32> to vector<8x128xf32>
    %125 = vector.extract_strided_slice %115 {offsets = [0, 128], sizes = [8, 128], strides = [1, 1]} : vector<8x384xf32> to vector<8x128xf32>
    %126 = arith.addf %124, %125 : vector<8x128xf32>
    %127 = arith.negf %126 : vector<8x128xf32>
    %128 = math.exp %127 : vector<8x128xf32>
    %cst_33 = arith.constant 1.000000e+00 : f32
    %129 = vector.broadcast %cst_33 : f32 to vector<8x128xf32>
    %130 = arith.addf %129, %128 : vector<8x128xf32>
    %131 = arith.divf %129, %130 : vector<8x128xf32>
    %132 = vector.extract_strided_slice %111 {offsets = [0, 256], sizes = [8, 128], strides = [1, 1]} : vector<8x384xf32> to vector<8x128xf32>
    %133 = vector.extract_strided_slice %115 {offsets = [0, 256], sizes = [8, 128], strides = [1, 1]} : vector<8x384xf32> to vector<8x128xf32>
    %134 = arith.mulf %123, %133 : vector<8x128xf32>
    %135 = arith.addf %132, %134 : vector<8x128xf32>
    %136 = math.tanh %135 : vector<8x128xf32>
    %cst_34 = arith.constant 1.000000e+00 : f32
    %137 = vector.broadcast %cst_34 : f32 to vector<8x128xf32>
    %138 = arith.subf %137, %131 : vector<8x128xf32>
    %139 = arith.mulf %138, %136 : vector<8x128xf32>
    %140 = arith.mulf %131, %109 : vector<8x128xf32>
    %141 = arith.addf %139, %140 : vector<8x128xf32>
    %c24 = arith.constant 24 : index
    %c0_35 = arith.constant 0 : index
    %142 = vector.load %arg15[%c24, %c0_35] : memref<48x128xf32, #tpu.memory_space<vmem>>, vector<8x128xf32>
    tpu.vector_store %arg15[%c24, %c0_35], %141 {strides = array<i32>} : memref<48x128xf32, #tpu.memory_space<vmem>>, vector<8x128xf32>,
    %143 = vector.extract_strided_slice %13 {offsets = [32, 0], sizes = [8, 384], strides = [1, 1]} : vector<48x384xf32> to vector<8x384xf32>
    %144 = arith.truncf %141 : vector<8x128xf32> to vector<8x128xbf16>
    %cst_36 = arith.constant dense<0.000000e+00> : vector<8x384xf32>
    %145 = tpu.matmul %144, %5, %cst_36 {dimension_numbers = #tpu.dot_dimension_numbers<[1], [0], [0], [1], [0, 0, 1, 1], [], []>} : vector<8x128xbf16>, vector<128x384xbf16>, vector<8x384xf32> -> vector<8x384xf32>
    %146 = vector.broadcast %9 : vector<1x384xf32> to vector<8x384xf32>
    %147 = arith.addf %145, %146 : vector<8x384xf32>
    %148 = vector.extract_strided_slice %143 {offsets = [0, 0], sizes = [8, 128], strides = [1, 1]} : vector<8x384xf32> to vector<8x128xf32>
    %149 = vector.extract_strided_slice %147 {offsets = [0, 0], sizes = [8, 128], strides = [1, 1]} : vector<8x384xf32> to vector<8x128xf32>
    %150 = arith.addf %148, %149 : vector<8x128xf32>
    %151 = arith.negf %150 : vector<8x128xf32>
    %152 = math.exp %151 : vector<8x128xf32>
    %cst_37 = arith.constant 1.000000e+00 : f32
    %153 = vector.broadcast %cst_37 : f32 to vector<8x128xf32>
    %154 = arith.addf %153, %152 : vector<8x128xf32>
    %155 = arith.divf %153, %154 : vector<8x128xf32>
    %156 = vector.extract_strided_slice %143 {offsets = [0, 128], sizes = [8, 128], strides = [1, 1]} : vector<8x384xf32> to vector<8x128xf32>
    %157 = vector.extract_strided_slice %147 {offsets = [0, 128], sizes = [8, 128], strides = [1, 1]} : vector<8x384xf32> to vector<8x128xf32>
    %158 = arith.addf %156, %157 : vector<8x128xf32>
    %159 = arith.negf %158 : vector<8x128xf32>
    %160 = math.exp %159 : vector<8x128xf32>
    %cst_38 = arith.constant 1.000000e+00 : f32
    %161 = vector.broadcast %cst_38 : f32 to vector<8x128xf32>
    %162 = arith.addf %161, %160 : vector<8x128xf32>
    %163 = arith.divf %161, %162 : vector<8x128xf32>
    %164 = vector.extract_strided_slice %143 {offsets = [0, 256], sizes = [8, 128], strides = [1, 1]} : vector<8x384xf32> to vector<8x128xf32>
    %165 = vector.extract_strided_slice %147 {offsets = [0, 256], sizes = [8, 128], strides = [1, 1]} : vector<8x384xf32> to vector<8x128xf32>
    %166 = arith.mulf %155, %165 : vector<8x128xf32>
    %167 = arith.addf %164, %166 : vector<8x128xf32>
    %168 = math.tanh %167 : vector<8x128xf32>
    %cst_39 = arith.constant 1.000000e+00 : f32
    %169 = vector.broadcast %cst_39 : f32 to vector<8x128xf32>
    %170 = arith.subf %169, %163 : vector<8x128xf32>
    %171 = arith.mulf %170, %168 : vector<8x128xf32>
    %172 = arith.mulf %163, %141 : vector<8x128xf32>
    %173 = arith.addf %171, %172 : vector<8x128xf32>
    %c32 = arith.constant 32 : index
    %c0_40 = arith.constant 0 : index
    %174 = vector.load %arg15[%c32, %c0_40] : memref<48x128xf32, #tpu.memory_space<vmem>>, vector<8x128xf32>
    tpu.vector_store %arg15[%c32, %c0_40], %173 {strides = array<i32>} : memref<48x128xf32, #tpu.memory_space<vmem>>, vector<8x128xf32>,
    %175 = vector.extract_strided_slice %13 {offsets = [40, 0], sizes = [8, 384], strides = [1, 1]} : vector<48x384xf32> to vector<8x384xf32>
    %176 = arith.truncf %173 : vector<8x128xf32> to vector<8x128xbf16>
    %cst_41 = arith.constant dense<0.000000e+00> : vector<8x384xf32>
    %177 = tpu.matmul %176, %5, %cst_41 {dimension_numbers = #tpu.dot_dimension_numbers<[1], [0], [0], [1], [0, 0, 1, 1], [], []>} : vector<8x128xbf16>, vector<128x384xbf16>, vector<8x384xf32> -> vector<8x384xf32>
    %178 = vector.broadcast %9 : vector<1x384xf32> to vector<8x384xf32>
    %179 = arith.addf %177, %178 : vector<8x384xf32>
    %180 = vector.extract_strided_slice %175 {offsets = [0, 0], sizes = [8, 128], strides = [1, 1]} : vector<8x384xf32> to vector<8x128xf32>
    %181 = vector.extract_strided_slice %179 {offsets = [0, 0], sizes = [8, 128], strides = [1, 1]} : vector<8x384xf32> to vector<8x128xf32>
    %182 = arith.addf %180, %181 : vector<8x128xf32>
    %183 = arith.negf %182 : vector<8x128xf32>
    %184 = math.exp %183 : vector<8x128xf32>
    %cst_42 = arith.constant 1.000000e+00 : f32
    %185 = vector.broadcast %cst_42 : f32 to vector<8x128xf32>
    %186 = arith.addf %185, %184 : vector<8x128xf32>
    %187 = arith.divf %185, %186 : vector<8x128xf32>
    %188 = vector.extract_strided_slice %175 {offsets = [0, 128], sizes = [8, 128], strides = [1, 1]} : vector<8x384xf32> to vector<8x128xf32>
    %189 = vector.extract_strided_slice %179 {offsets = [0, 128], sizes = [8, 128], strides = [1, 1]} : vector<8x384xf32> to vector<8x128xf32>
    %190 = arith.addf %188, %189 : vector<8x128xf32>
    %191 = arith.negf %190 : vector<8x128xf32>
    %192 = math.exp %191 : vector<8x128xf32>
    %cst_43 = arith.constant 1.000000e+00 : f32
    %193 = vector.broadcast %cst_43 : f32 to vector<8x128xf32>
    %194 = arith.addf %193, %192 : vector<8x128xf32>
    %195 = arith.divf %193, %194 : vector<8x128xf32>
    %196 = vector.extract_strided_slice %175 {offsets = [0, 256], sizes = [8, 128], strides = [1, 1]} : vector<8x384xf32> to vector<8x128xf32>
    %197 = vector.extract_strided_slice %179 {offsets = [0, 256], sizes = [8, 128], strides = [1, 1]} : vector<8x384xf32> to vector<8x128xf32>
    %198 = arith.mulf %187, %197 : vector<8x128xf32>
    %199 = arith.addf %196, %198 : vector<8x128xf32>
    %200 = math.tanh %199 : vector<8x128xf32>
    %cst_44 = arith.constant 1.000000e+00 : f32
    %201 = vector.broadcast %cst_44 : f32 to vector<8x128xf32>
    %202 = arith.subf %201, %195 : vector<8x128xf32>
    %203 = arith.mulf %202, %200 : vector<8x128xf32>
    %204 = arith.mulf %195, %173 : vector<8x128xf32>
    %205 = arith.addf %203, %204 : vector<8x128xf32>
    %c40 = arith.constant 40 : index
    %c0_45 = arith.constant 0 : index
    %206 = vector.load %arg15[%c40, %c0_45] : memref<48x128xf32, #tpu.memory_space<vmem>>, vector<8x128xf32>
    tpu.vector_store %arg15[%c40, %c0_45], %205 {strides = array<i32>} : memref<48x128xf32, #tpu.memory_space<vmem>>, vector<8x128xf32>,
    %c0_46 = arith.constant 0 : index
    %c0_47 = arith.constant 0 : index
    %207 = vector.load %arg15[%c0_46, %c0_47] : memref<48x128xf32, #tpu.memory_space<vmem>>, vector<48x128xf32>
    %c1 = arith.constant 1 : index
    %c0_48 = arith.constant 0 : index
    %c0_49 = arith.constant 0 : index
    %208 = vector.load %arg3[%c1, %c0_48, %c0_49] : memref<4x128x384xbf16, #tpu.memory_space<vmem>>, vector<1x128x384xbf16>
    %209 = vector.shape_cast %208 : vector<1x128x384xbf16> to vector<128x384xbf16>
    %c1_50 = arith.constant 1 : index
    %c0_51 = arith.constant 0 : index
    %c0_52 = arith.constant 0 : index
    %210 = vector.load %arg4[%c1_50, %c0_51, %c0_52] : memref<4x128x384xbf16, #tpu.memory_space<vmem>>, vector<1x128x384xbf16>
    %211 = vector.shape_cast %210 : vector<1x128x384xbf16> to vector<128x384xbf16>
    %c1_53 = arith.constant 1 : index
    %c0_54 = arith.constant 0 : index
    %c0_55 = arith.constant 0 : index
    %212 = vector.load %arg5[%c1_53, %c0_54, %c0_55] : memref<4x1x384xf32, #tpu.memory_space<vmem>>, vector<1x1x384xf32>
    %213 = vector.shape_cast %212 : vector<1x1x384xf32> to vector<1x384xf32>
    %c1_56 = arith.constant 1 : index
    %c0_57 = arith.constant 0 : index
    %c0_58 = arith.constant 0 : index
    %214 = vector.load %arg6[%c1_56, %c0_57, %c0_58] : memref<4x1x384xf32, #tpu.memory_space<vmem>>, vector<1x1x384xf32>
    %215 = vector.shape_cast %214 : vector<1x1x384xf32> to vector<1x384xf32>
    %216 = arith.truncf %207 : vector<48x128xf32> to vector<48x128xbf16>
    %cst_59 = arith.constant dense<0.000000e+00> : vector<48x384xf32>
    %217 = tpu.matmul %216, %209, %cst_59 {dimension_numbers = #tpu.dot_dimension_numbers<[1], [0], [0], [1], [0, 0, 1, 1], [], []>} : vector<48x128xbf16>, vector<128x384xbf16>, vector<48x384xf32> -> vector<48x384xf32>
    %218 = vector.broadcast %213 : vector<1x384xf32> to vector<48x384xf32>
    %219 = arith.addf %217, %218 : vector<48x384xf32>
    %cst_60 = arith.constant 0.000000e+00 : f32
    %220 = vector.broadcast %cst_60 : f32 to vector<8x128xf32>
    %221 = vector.extract_strided_slice %219 {offsets = [0, 0], sizes = [8, 384], strides = [1, 1]} : vector<48x384xf32> to vector<8x384xf32>
    %222 = arith.truncf %220 : vector<8x128xf32> to vector<8x128xbf16>
    %cst_61 = arith.constant dense<0.000000e+00> : vector<8x384xf32>
    %223 = tpu.matmul %222, %211, %cst_61 {dimension_numbers = #tpu.dot_dimension_numbers<[1], [0], [0], [1], [0, 0, 1, 1], [], []>} : vector<8x128xbf16>, vector<128x384xbf16>, vector<8x384xf32> -> vector<8x384xf32>
    %224 = vector.broadcast %215 : vector<1x384xf32> to vector<8x384xf32>
    %225 = arith.addf %223, %224 : vector<8x384xf32>
    %226 = vector.extract_strided_slice %221 {offsets = [0, 0], sizes = [8, 128], strides = [1, 1]} : vector<8x384xf32> to vector<8x128xf32>
    %227 = vector.extract_strided_slice %225 {offsets = [0, 0], sizes = [8, 128], strides = [1, 1]} : vector<8x384xf32> to vector<8x128xf32>
    %228 = arith.addf %226, %227 : vector<8x128xf32>
    %229 = arith.negf %228 : vector<8x128xf32>
    %230 = math.exp %229 : vector<8x128xf32>
    %cst_62 = arith.constant 1.000000e+00 : f32
    %231 = vector.broadcast %cst_62 : f32 to vector<8x128xf32>
    %232 = arith.addf %231, %230 : vector<8x128xf32>
    %233 = arith.divf %231, %232 : vector<8x128xf32>
    %234 = vector.extract_strided_slice %221 {offsets = [0, 128], sizes = [8, 128], strides = [1, 1]} : vector<8x384xf32> to vector<8x128xf32>
    %235 = vector.extract_strided_slice %225 {offsets = [0, 128], sizes = [8, 128], strides = [1, 1]} : vector<8x384xf32> to vector<8x128xf32>
    %236 = arith.addf %234, %235 : vector<8x128xf32>
    %237 = arith.negf %236 : vector<8x128xf32>
    %238 = math.exp %237 : vector<8x128xf32>
    %cst_63 = arith.constant 1.000000e+00 : f32
    %239 = vector.broadcast %cst_63 : f32 to vector<8x128xf32>
    %240 = arith.addf %239, %238 : vector<8x128xf32>
    %241 = arith.divf %239, %240 : vector<8x128xf32>
    %242 = vector.extract_strided_slice %221 {offsets = [0, 256], sizes = [8, 128], strides = [1, 1]} : vector<8x384xf32> to vector<8x128xf32>
    %243 = vector.extract_strided_slice %225 {offsets = [0, 256], sizes = [8, 128], strides = [1, 1]} : vector<8x384xf32> to vector<8x128xf32>
    %244 = arith.mulf %233, %243 : vector<8x128xf32>
    %245 = arith.addf %242, %244 : vector<8x128xf32>
    %246 = math.tanh %245 : vector<8x128xf32>
    %cst_64 = arith.constant 1.000000e+00 : f32
    %247 = vector.broadcast %cst_64 : f32 to vector<8x128xf32>
    %248 = arith.subf %247, %241 : vector<8x128xf32>
    %249 = arith.mulf %248, %246 : vector<8x128xf32>
    %250 = arith.mulf %241, %220 : vector<8x128xf32>
    %251 = arith.addf %249, %250 : vector<8x128xf32>
    %c0_65 = arith.constant 0 : index
    %c0_66 = arith.constant 0 : index
    %252 = vector.load %arg15[%c0_65, %c0_66] : memref<48x128xf32, #tpu.memory_space<vmem>>, vector<8x128xf32>
    tpu.vector_store %arg15[%c0_65, %c0_66], %251 {strides = array<i32>} : memref<48x128xf32, #tpu.memory_space<vmem>>, vector<8x128xf32>,
    %253 = vector.extract_strided_slice %219 {offsets = [8, 0], sizes = [8, 384], strides = [1, 1]} : vector<48x384xf32> to vector<8x384xf32>
    %254 = arith.truncf %251 : vector<8x128xf32> to vector<8x128xbf16>
    %cst_67 = arith.constant dense<0.000000e+00> : vector<8x384xf32>
    %255 = tpu.matmul %254, %211, %cst_67 {dimension_numbers = #tpu.dot_dimension_numbers<[1], [0], [0], [1], [0, 0, 1, 1], [], []>} : vector<8x128xbf16>, vector<128x384xbf16>, vector<8x384xf32> -> vector<8x384xf32>
    %256 = vector.broadcast %215 : vector<1x384xf32> to vector<8x384xf32>
    %257 = arith.addf %255, %256 : vector<8x384xf32>
    %258 = vector.extract_strided_slice %253 {offsets = [0, 0], sizes = [8, 128], strides = [1, 1]} : vector<8x384xf32> to vector<8x128xf32>
    %259 = vector.extract_strided_slice %257 {offsets = [0, 0], sizes = [8, 128], strides = [1, 1]} : vector<8x384xf32> to vector<8x128xf32>
    %260 = arith.addf %258, %259 : vector<8x128xf32>
    %261 = arith.negf %260 : vector<8x128xf32>
    %262 = math.exp %261 : vector<8x128xf32>
    %cst_68 = arith.constant 1.000000e+00 : f32
    %263 = vector.broadcast %cst_68 : f32 to vector<8x128xf32>
    %264 = arith.addf %263, %262 : vector<8x128xf32>
    %265 = arith.divf %263, %264 : vector<8x128xf32>
    %266 = vector.extract_strided_slice %253 {offsets = [0, 128], sizes = [8, 128], strides = [1, 1]} : vector<8x384xf32> to vector<8x128xf32>
    %267 = vector.extract_strided_slice %257 {offsets = [0, 128], sizes = [8, 128], strides = [1, 1]} : vector<8x384xf32> to vector<8x128xf32>
    %268 = arith.addf %266, %267 : vector<8x128xf32>
    %269 = arith.negf %268 : vector<8x128xf32>
    %270 = math.exp %269 : vector<8x128xf32>
    %cst_69 = arith.constant 1.000000e+00 : f32
    %271 = vector.broadcast %cst_69 : f32 to vector<8x128xf32>
    %272 = arith.addf %271, %270 : vector<8x128xf32>
    %273 = arith.divf %271, %272 : vector<8x128xf32>
    %274 = vector.extract_strided_slice %253 {offsets = [0, 256], sizes = [8, 128], strides = [1, 1]} : vector<8x384xf32> to vector<8x128xf32>
    %275 = vector.extract_strided_slice %257 {offsets = [0, 256], sizes = [8, 128], strides = [1, 1]} : vector<8x384xf32> to vector<8x128xf32>
    %276 = arith.mulf %265, %275 : vector<8x128xf32>
    %277 = arith.addf %274, %276 : vector<8x128xf32>
    %278 = math.tanh %277 : vector<8x128xf32>
    %cst_70 = arith.constant 1.000000e+00 : f32
    %279 = vector.broadcast %cst_70 : f32 to vector<8x128xf32>
    %280 = arith.subf %279, %273 : vector<8x128xf32>
    %281 = arith.mulf %280, %278 : vector<8x128xf32>
    %282 = arith.mulf %273, %251 : vector<8x128xf32>
    %283 = arith.addf %281, %282 : vector<8x128xf32>
    %c8_71 = arith.constant 8 : index
    %c0_72 = arith.constant 0 : index
    %284 = vector.load %arg15[%c8_71, %c0_72] : memref<48x128xf32, #tpu.memory_space<vmem>>, vector<8x128xf32>
    tpu.vector_store %arg15[%c8_71, %c0_72], %283 {strides = array<i32>} : memref<48x128xf32, #tpu.memory_space<vmem>>, vector<8x128xf32>,
    %285 = vector.extract_strided_slice %219 {offsets = [16, 0], sizes = [8, 384], strides = [1, 1]} : vector<48x384xf32> to vector<8x384xf32>
    %286 = arith.truncf %283 : vector<8x128xf32> to vector<8x128xbf16>
    %cst_73 = arith.constant dense<0.000000e+00> : vector<8x384xf32>
    %287 = tpu.matmul %286, %211, %cst_73 {dimension_numbers = #tpu.dot_dimension_numbers<[1], [0], [0], [1], [0, 0, 1, 1], [], []>} : vector<8x128xbf16>, vector<128x384xbf16>, vector<8x384xf32> -> vector<8x384xf32>
    %288 = vector.broadcast %215 : vector<1x384xf32> to vector<8x384xf32>
    %289 = arith.addf %287, %288 : vector<8x384xf32>
    %290 = vector.extract_strided_slice %285 {offsets = [0, 0], sizes = [8, 128], strides = [1, 1]} : vector<8x384xf32> to vector<8x128xf32>
    %291 = vector.extract_strided_slice %289 {offsets = [0, 0], sizes = [8, 128], strides = [1, 1]} : vector<8x384xf32> to vector<8x128xf32>
    %292 = arith.addf %290, %291 : vector<8x128xf32>
    %293 = arith.negf %292 : vector<8x128xf32>
    %294 = math.exp %293 : vector<8x128xf32>
    %cst_74 = arith.constant 1.000000e+00 : f32
    %295 = vector.broadcast %cst_74 : f32 to vector<8x128xf32>
    %296 = arith.addf %295, %294 : vector<8x128xf32>
    %297 = arith.divf %295, %296 : vector<8x128xf32>
    %298 = vector.extract_strided_slice %285 {offsets = [0, 128], sizes = [8, 128], strides = [1, 1]} : vector<8x384xf32> to vector<8x128xf32>
    %299 = vector.extract_strided_slice %289 {offsets = [0, 128], sizes = [8, 128], strides = [1, 1]} : vector<8x384xf32> to vector<8x128xf32>
    %300 = arith.addf %298, %299 : vector<8x128xf32>
    %301 = arith.negf %300 : vector<8x128xf32>
    %302 = math.exp %301 : vector<8x128xf32>
    %cst_75 = arith.constant 1.000000e+00 : f32
    %303 = vector.broadcast %cst_75 : f32 to vector<8x128xf32>
    %304 = arith.addf %303, %302 : vector<8x128xf32>
    %305 = arith.divf %303, %304 : vector<8x128xf32>
    %306 = vector.extract_strided_slice %285 {offsets = [0, 256], sizes = [8, 128], strides = [1, 1]} : vector<8x384xf32> to vector<8x128xf32>
    %307 = vector.extract_strided_slice %289 {offsets = [0, 256], sizes = [8, 128], strides = [1, 1]} : vector<8x384xf32> to vector<8x128xf32>
    %308 = arith.mulf %297, %307 : vector<8x128xf32>
    %309 = arith.addf %306, %308 : vector<8x128xf32>
    %310 = math.tanh %309 : vector<8x128xf32>
    %cst_76 = arith.constant 1.000000e+00 : f32
    %311 = vector.broadcast %cst_76 : f32 to vector<8x128xf32>
    %312 = arith.subf %311, %305 : vector<8x128xf32>
    %313 = arith.mulf %312, %310 : vector<8x128xf32>
    %314 = arith.mulf %305, %283 : vector<8x128xf32>
    %315 = arith.addf %313, %314 : vector<8x128xf32>
    %c16_77 = arith.constant 16 : index
    %c0_78 = arith.constant 0 : index
    %316 = vector.load %arg15[%c16_77, %c0_78] : memref<48x128xf32, #tpu.memory_space<vmem>>, vector<8x128xf32>
    tpu.vector_store %arg15[%c16_77, %c0_78], %315 {strides = array<i32>} : memref<48x128xf32, #tpu.memory_space<vmem>>, vector<8x128xf32>,
    %317 = vector.extract_strided_slice %219 {offsets = [24, 0], sizes = [8, 384], strides = [1, 1]} : vector<48x384xf32> to vector<8x384xf32>
    %318 = arith.truncf %315 : vector<8x128xf32> to vector<8x128xbf16>
    %cst_79 = arith.constant dense<0.000000e+00> : vector<8x384xf32>
    %319 = tpu.matmul %318, %211, %cst_79 {dimension_numbers = #tpu.dot_dimension_numbers<[1], [0], [0], [1], [0, 0, 1, 1], [], []>} : vector<8x128xbf16>, vector<128x384xbf16>, vector<8x384xf32> -> vector<8x384xf32>
    %320 = vector.broadcast %215 : vector<1x384xf32> to vector<8x384xf32>
    %321 = arith.addf %319, %320 : vector<8x384xf32>
    %322 = vector.extract_strided_slice %317 {offsets = [0, 0], sizes = [8, 128], strides = [1, 1]} : vector<8x384xf32> to vector<8x128xf32>
    %323 = vector.extract_strided_slice %321 {offsets = [0, 0], sizes = [8, 128], strides = [1, 1]} : vector<8x384xf32> to vector<8x128xf32>
    %324 = arith.addf %322, %323 : vector<8x128xf32>
    %325 = arith.negf %324 : vector<8x128xf32>
    %326 = math.exp %325 : vector<8x128xf32>
    %cst_80 = arith.constant 1.000000e+00 : f32
    %327 = vector.broadcast %cst_80 : f32 to vector<8x128xf32>
    %328 = arith.addf %327, %326 : vector<8x128xf32>
    %329 = arith.divf %327, %328 : vector<8x128xf32>
    %330 = vector.extract_strided_slice %317 {offsets = [0, 128], sizes = [8, 128], strides = [1, 1]} : vector<8x384xf32> to vector<8x128xf32>
    %331 = vector.extract_strided_slice %321 {offsets = [0, 128], sizes = [8, 128], strides = [1, 1]} : vector<8x384xf32> to vector<8x128xf32>
    %332 = arith.addf %330, %331 : vector<8x128xf32>
    %333 = arith.negf %332 : vector<8x128xf32>
    %334 = math.exp %333 : vector<8x128xf32>
    %cst_81 = arith.constant 1.000000e+00 : f32
    %335 = vector.broadcast %cst_81 : f32 to vector<8x128xf32>
    %336 = arith.addf %335, %334 : vector<8x128xf32>
    %337 = arith.divf %335, %336 : vector<8x128xf32>
    %338 = vector.extract_strided_slice %317 {offsets = [0, 256], sizes = [8, 128], strides = [1, 1]} : vector<8x384xf32> to vector<8x128xf32>
    %339 = vector.extract_strided_slice %321 {offsets = [0, 256], sizes = [8, 128], strides = [1, 1]} : vector<8x384xf32> to vector<8x128xf32>
    %340 = arith.mulf %329, %339 : vector<8x128xf32>
    %341 = arith.addf %338, %340 : vector<8x128xf32>
    %342 = math.tanh %341 : vector<8x128xf32>
    %cst_82 = arith.constant 1.000000e+00 : f32
    %343 = vector.broadcast %cst_82 : f32 to vector<8x128xf32>
    %344 = arith.subf %343, %337 : vector<8x128xf32>
    %345 = arith.mulf %344, %342 : vector<8x128xf32>
    %346 = arith.mulf %337, %315 : vector<8x128xf32>
    %347 = arith.addf %345, %346 : vector<8x128xf32>
    %c24_83 = arith.constant 24 : index
    %c0_84 = arith.constant 0 : index
    %348 = vector.load %arg15[%c24_83, %c0_84] : memref<48x128xf32, #tpu.memory_space<vmem>>, vector<8x128xf32>
    tpu.vector_store %arg15[%c24_83, %c0_84], %347 {strides = array<i32>} : memref<48x128xf32, #tpu.memory_space<vmem>>, vector<8x128xf32>,
    %349 = vector.extract_strided_slice %219 {offsets = [32, 0], sizes = [8, 384], strides = [1, 1]} : vector<48x384xf32> to vector<8x384xf32>
    %350 = arith.truncf %347 : vector<8x128xf32> to vector<8x128xbf16>
    %cst_85 = arith.constant dense<0.000000e+00> : vector<8x384xf32>
    %351 = tpu.matmul %350, %211, %cst_85 {dimension_numbers = #tpu.dot_dimension_numbers<[1], [0], [0], [1], [0, 0, 1, 1], [], []>} : vector<8x128xbf16>, vector<128x384xbf16>, vector<8x384xf32> -> vector<8x384xf32>
    %352 = vector.broadcast %215 : vector<1x384xf32> to vector<8x384xf32>
    %353 = arith.addf %351, %352 : vector<8x384xf32>
    %354 = vector.extract_strided_slice %349 {offsets = [0, 0], sizes = [8, 128], strides = [1, 1]} : vector<8x384xf32> to vector<8x128xf32>
    %355 = vector.extract_strided_slice %353 {offsets = [0, 0], sizes = [8, 128], strides = [1, 1]} : vector<8x384xf32> to vector<8x128xf32>
    %356 = arith.addf %354, %355 : vector<8x128xf32>
    %357 = arith.negf %356 : vector<8x128xf32>
    %358 = math.exp %357 : vector<8x128xf32>
    %cst_86 = arith.constant 1.000000e+00 : f32
    %359 = vector.broadcast %cst_86 : f32 to vector<8x128xf32>
    %360 = arith.addf %359, %358 : vector<8x128xf32>
    %361 = arith.divf %359, %360 : vector<8x128xf32>
    %362 = vector.extract_strided_slice %349 {offsets = [0, 128], sizes = [8, 128], strides = [1, 1]} : vector<8x384xf32> to vector<8x128xf32>
    %363 = vector.extract_strided_slice %353 {offsets = [0, 128], sizes = [8, 128], strides = [1, 1]} : vector<8x384xf32> to vector<8x128xf32>
    %364 = arith.addf %362, %363 : vector<8x128xf32>
    %365 = arith.negf %364 : vector<8x128xf32>
    %366 = math.exp %365 : vector<8x128xf32>
    %cst_87 = arith.constant 1.000000e+00 : f32
    %367 = vector.broadcast %cst_87 : f32 to vector<8x128xf32>
    %368 = arith.addf %367, %366 : vector<8x128xf32>
    %369 = arith.divf %367, %368 : vector<8x128xf32>
    %370 = vector.extract_strided_slice %349 {offsets = [0, 256], sizes = [8, 128], strides = [1, 1]} : vector<8x384xf32> to vector<8x128xf32>
    %371 = vector.extract_strided_slice %353 {offsets = [0, 256], sizes = [8, 128], strides = [1, 1]} : vector<8x384xf32> to vector<8x128xf32>
    %372 = arith.mulf %361, %371 : vector<8x128xf32>
    %373 = arith.addf %370, %372 : vector<8x128xf32>
    %374 = math.tanh %373 : vector<8x128xf32>
    %cst_88 = arith.constant 1.000000e+00 : f32
    %375 = vector.broadcast %cst_88 : f32 to vector<8x128xf32>
    %376 = arith.subf %375, %369 : vector<8x128xf32>
    %377 = arith.mulf %376, %374 : vector<8x128xf32>
    %378 = arith.mulf %369, %347 : vector<8x128xf32>
    %379 = arith.addf %377, %378 : vector<8x128xf32>
    %c32_89 = arith.constant 32 : index
    %c0_90 = arith.constant 0 : index
    %380 = vector.load %arg15[%c32_89, %c0_90] : memref<48x128xf32, #tpu.memory_space<vmem>>, vector<8x128xf32>
    tpu.vector_store %arg15[%c32_89, %c0_90], %379 {strides = array<i32>} : memref<48x128xf32, #tpu.memory_space<vmem>>, vector<8x128xf32>,
    %381 = vector.extract_strided_slice %219 {offsets = [40, 0], sizes = [8, 384], strides = [1, 1]} : vector<48x384xf32> to vector<8x384xf32>
    %382 = arith.truncf %379 : vector<8x128xf32> to vector<8x128xbf16>
    %cst_91 = arith.constant dense<0.000000e+00> : vector<8x384xf32>
    %383 = tpu.matmul %382, %211, %cst_91 {dimension_numbers = #tpu.dot_dimension_numbers<[1], [0], [0], [1], [0, 0, 1, 1], [], []>} : vector<8x128xbf16>, vector<128x384xbf16>, vector<8x384xf32> -> vector<8x384xf32>
    %384 = vector.broadcast %215 : vector<1x384xf32> to vector<8x384xf32>
    %385 = arith.addf %383, %384 : vector<8x384xf32>
    %386 = vector.extract_strided_slice %381 {offsets = [0, 0], sizes = [8, 128], strides = [1, 1]} : vector<8x384xf32> to vector<8x128xf32>
    %387 = vector.extract_strided_slice %385 {offsets = [0, 0], sizes = [8, 128], strides = [1, 1]} : vector<8x384xf32> to vector<8x128xf32>
    %388 = arith.addf %386, %387 : vector<8x128xf32>
    %389 = arith.negf %388 : vector<8x128xf32>
    %390 = math.exp %389 : vector<8x128xf32>
    %cst_92 = arith.constant 1.000000e+00 : f32
    %391 = vector.broadcast %cst_92 : f32 to vector<8x128xf32>
    %392 = arith.addf %391, %390 : vector<8x128xf32>
    %393 = arith.divf %391, %392 : vector<8x128xf32>
    %394 = vector.extract_strided_slice %381 {offsets = [0, 128], sizes = [8, 128], strides = [1, 1]} : vector<8x384xf32> to vector<8x128xf32>
    %395 = vector.extract_strided_slice %385 {offsets = [0, 128], sizes = [8, 128], strides = [1, 1]} : vector<8x384xf32> to vector<8x128xf32>
    %396 = arith.addf %394, %395 : vector<8x128xf32>
    %397 = arith.negf %396 : vector<8x128xf32>
    %398 = math.exp %397 : vector<8x128xf32>
    %cst_93 = arith.constant 1.000000e+00 : f32
    %399 = vector.broadcast %cst_93 : f32 to vector<8x128xf32>
    %400 = arith.addf %399, %398 : vector<8x128xf32>
    %401 = arith.divf %399, %400 : vector<8x128xf32>
    %402 = vector.extract_strided_slice %381 {offsets = [0, 256], sizes = [8, 128], strides = [1, 1]} : vector<8x384xf32> to vector<8x128xf32>
    %403 = vector.extract_strided_slice %385 {offsets = [0, 256], sizes = [8, 128], strides = [1, 1]} : vector<8x384xf32> to vector<8x128xf32>
    %404 = arith.mulf %393, %403 : vector<8x128xf32>
    %405 = arith.addf %402, %404 : vector<8x128xf32>
    %406 = math.tanh %405 : vector<8x128xf32>
    %cst_94 = arith.constant 1.000000e+00 : f32
    %407 = vector.broadcast %cst_94 : f32 to vector<8x128xf32>
    %408 = arith.subf %407, %401 : vector<8x128xf32>
    %409 = arith.mulf %408, %406 : vector<8x128xf32>
    %410 = arith.mulf %401, %379 : vector<8x128xf32>
    %411 = arith.addf %409, %410 : vector<8x128xf32>
    %c40_95 = arith.constant 40 : index
    %c0_96 = arith.constant 0 : index
    %412 = vector.load %arg15[%c40_95, %c0_96] : memref<48x128xf32, #tpu.memory_space<vmem>>, vector<8x128xf32>
    tpu.vector_store %arg15[%c40_95, %c0_96], %411 {strides = array<i32>} : memref<48x128xf32, #tpu.memory_space<vmem>>, vector<8x128xf32>,
    %c0_97 = arith.constant 0 : index
    %c0_98 = arith.constant 0 : index
    %413 = vector.load %arg15[%c0_97, %c0_98] : memref<48x128xf32, #tpu.memory_space<vmem>>, vector<48x128xf32>
    %c2 = arith.constant 2 : index
    %c0_99 = arith.constant 0 : index
    %c0_100 = arith.constant 0 : index
    %414 = vector.load %arg3[%c2, %c0_99, %c0_100] : memref<4x128x384xbf16, #tpu.memory_space<vmem>>, vector<1x128x384xbf16>
    %415 = vector.shape_cast %414 : vector<1x128x384xbf16> to vector<128x384xbf16>
    %c2_101 = arith.constant 2 : index
    %c0_102 = arith.constant 0 : index
    %c0_103 = arith.constant 0 : index
    %416 = vector.load %arg4[%c2_101, %c0_102, %c0_103] : memref<4x128x384xbf16, #tpu.memory_space<vmem>>, vector<1x128x384xbf16>
    %417 = vector.shape_cast %416 : vector<1x128x384xbf16> to vector<128x384xbf16>
    %c2_104 = arith.constant 2 : index
    %c0_105 = arith.constant 0 : index
    %c0_106 = arith.constant 0 : index
    %418 = vector.load %arg5[%c2_104, %c0_105, %c0_106] : memref<4x1x384xf32, #tpu.memory_space<vmem>>, vector<1x1x384xf32>
    %419 = vector.shape_cast %418 : vector<1x1x384xf32> to vector<1x384xf32>
    %c2_107 = arith.constant 2 : index
    %c0_108 = arith.constant 0 : index
    %c0_109 = arith.constant 0 : index
    %420 = vector.load %arg6[%c2_107, %c0_108, %c0_109] : memref<4x1x384xf32, #tpu.memory_space<vmem>>, vector<1x1x384xf32>
    %421 = vector.shape_cast %420 : vector<1x1x384xf32> to vector<1x384xf32>
    %422 = arith.truncf %413 : vector<48x128xf32> to vector<48x128xbf16>
    %cst_110 = arith.constant dense<0.000000e+00> : vector<48x384xf32>
    %423 = tpu.matmul %422, %415, %cst_110 {dimension_numbers = #tpu.dot_dimension_numbers<[1], [0], [0], [1], [0, 0, 1, 1], [], []>} : vector<48x128xbf16>, vector<128x384xbf16>, vector<48x384xf32> -> vector<48x384xf32>
    %424 = vector.broadcast %419 : vector<1x384xf32> to vector<48x384xf32>
    %425 = arith.addf %423, %424 : vector<48x384xf32>
    %cst_111 = arith.constant 0.000000e+00 : f32
    %426 = vector.broadcast %cst_111 : f32 to vector<8x128xf32>
    %427 = vector.extract_strided_slice %425 {offsets = [0, 0], sizes = [8, 384], strides = [1, 1]} : vector<48x384xf32> to vector<8x384xf32>
    %428 = arith.truncf %426 : vector<8x128xf32> to vector<8x128xbf16>
    %cst_112 = arith.constant dense<0.000000e+00> : vector<8x384xf32>
    %429 = tpu.matmul %428, %417, %cst_112 {dimension_numbers = #tpu.dot_dimension_numbers<[1], [0], [0], [1], [0, 0, 1, 1], [], []>} : vector<8x128xbf16>, vector<128x384xbf16>, vector<8x384xf32> -> vector<8x384xf32>
    %430 = vector.broadcast %421 : vector<1x384xf32> to vector<8x384xf32>
    %431 = arith.addf %429, %430 : vector<8x384xf32>
    %432 = vector.extract_strided_slice %427 {offsets = [0, 0], sizes = [8, 128], strides = [1, 1]} : vector<8x384xf32> to vector<8x128xf32>
    %433 = vector.extract_strided_slice %431 {offsets = [0, 0], sizes = [8, 128], strides = [1, 1]} : vector<8x384xf32> to vector<8x128xf32>
    %434 = arith.addf %432, %433 : vector<8x128xf32>
    %435 = arith.negf %434 : vector<8x128xf32>
    %436 = math.exp %435 : vector<8x128xf32>
    %cst_113 = arith.constant 1.000000e+00 : f32
    %437 = vector.broadcast %cst_113 : f32 to vector<8x128xf32>
    %438 = arith.addf %437, %436 : vector<8x128xf32>
    %439 = arith.divf %437, %438 : vector<8x128xf32>
    %440 = vector.extract_strided_slice %427 {offsets = [0, 128], sizes = [8, 128], strides = [1, 1]} : vector<8x384xf32> to vector<8x128xf32>
    %441 = vector.extract_strided_slice %431 {offsets = [0, 128], sizes = [8, 128], strides = [1, 1]} : vector<8x384xf32> to vector<8x128xf32>
    %442 = arith.addf %440, %441 : vector<8x128xf32>
    %443 = arith.negf %442 : vector<8x128xf32>
    %444 = math.exp %443 : vector<8x128xf32>
    %cst_114 = arith.constant 1.000000e+00 : f32
    %445 = vector.broadcast %cst_114 : f32 to vector<8x128xf32>
    %446 = arith.addf %445, %444 : vector<8x128xf32>
    %447 = arith.divf %445, %446 : vector<8x128xf32>
    %448 = vector.extract_strided_slice %427 {offsets = [0, 256], sizes = [8, 128], strides = [1, 1]} : vector<8x384xf32> to vector<8x128xf32>
    %449 = vector.extract_strided_slice %431 {offsets = [0, 256], sizes = [8, 128], strides = [1, 1]} : vector<8x384xf32> to vector<8x128xf32>
    %450 = arith.mulf %439, %449 : vector<8x128xf32>
    %451 = arith.addf %448, %450 : vector<8x128xf32>
    %452 = math.tanh %451 : vector<8x128xf32>
    %cst_115 = arith.constant 1.000000e+00 : f32
    %453 = vector.broadcast %cst_115 : f32 to vector<8x128xf32>
    %454 = arith.subf %453, %447 : vector<8x128xf32>
    %455 = arith.mulf %454, %452 : vector<8x128xf32>
    %456 = arith.mulf %447, %426 : vector<8x128xf32>
    %457 = arith.addf %455, %456 : vector<8x128xf32>
    %c0_116 = arith.constant 0 : index
    %c0_117 = arith.constant 0 : index
    %458 = vector.load %arg15[%c0_116, %c0_117] : memref<48x128xf32, #tpu.memory_space<vmem>>, vector<8x128xf32>
    tpu.vector_store %arg15[%c0_116, %c0_117], %457 {strides = array<i32>} : memref<48x128xf32, #tpu.memory_space<vmem>>, vector<8x128xf32>,
    %459 = vector.extract_strided_slice %425 {offsets = [8, 0], sizes = [8, 384], strides = [1, 1]} : vector<48x384xf32> to vector<8x384xf32>
    %460 = arith.truncf %457 : vector<8x128xf32> to vector<8x128xbf16>
    %cst_118 = arith.constant dense<0.000000e+00> : vector<8x384xf32>
    %461 = tpu.matmul %460, %417, %cst_118 {dimension_numbers = #tpu.dot_dimension_numbers<[1], [0], [0], [1], [0, 0, 1, 1], [], []>} : vector<8x128xbf16>, vector<128x384xbf16>, vector<8x384xf32> -> vector<8x384xf32>
    %462 = vector.broadcast %421 : vector<1x384xf32> to vector<8x384xf32>
    %463 = arith.addf %461, %462 : vector<8x384xf32>
    %464 = vector.extract_strided_slice %459 {offsets = [0, 0], sizes = [8, 128], strides = [1, 1]} : vector<8x384xf32> to vector<8x128xf32>
    %465 = vector.extract_strided_slice %463 {offsets = [0, 0], sizes = [8, 128], strides = [1, 1]} : vector<8x384xf32> to vector<8x128xf32>
    %466 = arith.addf %464, %465 : vector<8x128xf32>
    %467 = arith.negf %466 : vector<8x128xf32>
    %468 = math.exp %467 : vector<8x128xf32>
    %cst_119 = arith.constant 1.000000e+00 : f32
    %469 = vector.broadcast %cst_119 : f32 to vector<8x128xf32>
    %470 = arith.addf %469, %468 : vector<8x128xf32>
    %471 = arith.divf %469, %470 : vector<8x128xf32>
    %472 = vector.extract_strided_slice %459 {offsets = [0, 128], sizes = [8, 128], strides = [1, 1]} : vector<8x384xf32> to vector<8x128xf32>
    %473 = vector.extract_strided_slice %463 {offsets = [0, 128], sizes = [8, 128], strides = [1, 1]} : vector<8x384xf32> to vector<8x128xf32>
    %474 = arith.addf %472, %473 : vector<8x128xf32>
    %475 = arith.negf %474 : vector<8x128xf32>
    %476 = math.exp %475 : vector<8x128xf32>
    %cst_120 = arith.constant 1.000000e+00 : f32
    %477 = vector.broadcast %cst_120 : f32 to vector<8x128xf32>
    %478 = arith.addf %477, %476 : vector<8x128xf32>
    %479 = arith.divf %477, %478 : vector<8x128xf32>
    %480 = vector.extract_strided_slice %459 {offsets = [0, 256], sizes = [8, 128], strides = [1, 1]} : vector<8x384xf32> to vector<8x128xf32>
    %481 = vector.extract_strided_slice %463 {offsets = [0, 256], sizes = [8, 128], strides = [1, 1]} : vector<8x384xf32> to vector<8x128xf32>
    %482 = arith.mulf %471, %481 : vector<8x128xf32>
    %483 = arith.addf %480, %482 : vector<8x128xf32>
    %484 = math.tanh %483 : vector<8x128xf32>
    %cst_121 = arith.constant 1.000000e+00 : f32
    %485 = vector.broadcast %cst_121 : f32 to vector<8x128xf32>
    %486 = arith.subf %485, %479 : vector<8x128xf32>
    %487 = arith.mulf %486, %484 : vector<8x128xf32>
    %488 = arith.mulf %479, %457 : vector<8x128xf32>
    %489 = arith.addf %487, %488 : vector<8x128xf32>
    %c8_122 = arith.constant 8 : index
    %c0_123 = arith.constant 0 : index
    %490 = vector.load %arg15[%c8_122, %c0_123] : memref<48x128xf32, #tpu.memory_space<vmem>>, vector<8x128xf32>
    tpu.vector_store %arg15[%c8_122, %c0_123], %489 {strides = array<i32>} : memref<48x128xf32, #tpu.memory_space<vmem>>, vector<8x128xf32>,
    %491 = vector.extract_strided_slice %425 {offsets = [16, 0], sizes = [8, 384], strides = [1, 1]} : vector<48x384xf32> to vector<8x384xf32>
    %492 = arith.truncf %489 : vector<8x128xf32> to vector<8x128xbf16>
    %cst_124 = arith.constant dense<0.000000e+00> : vector<8x384xf32>
    %493 = tpu.matmul %492, %417, %cst_124 {dimension_numbers = #tpu.dot_dimension_numbers<[1], [0], [0], [1], [0, 0, 1, 1], [], []>} : vector<8x128xbf16>, vector<128x384xbf16>, vector<8x384xf32> -> vector<8x384xf32>
    %494 = vector.broadcast %421 : vector<1x384xf32> to vector<8x384xf32>
    %495 = arith.addf %493, %494 : vector<8x384xf32>
    %496 = vector.extract_strided_slice %491 {offsets = [0, 0], sizes = [8, 128], strides = [1, 1]} : vector<8x384xf32> to vector<8x128xf32>
    %497 = vector.extract_strided_slice %495 {offsets = [0, 0], sizes = [8, 128], strides = [1, 1]} : vector<8x384xf32> to vector<8x128xf32>
    %498 = arith.addf %496, %497 : vector<8x128xf32>
    %499 = arith.negf %498 : vector<8x128xf32>
    %500 = math.exp %499 : vector<8x128xf32>
    %cst_125 = arith.constant 1.000000e+00 : f32
    %501 = vector.broadcast %cst_125 : f32 to vector<8x128xf32>
    %502 = arith.addf %501, %500 : vector<8x128xf32>
    %503 = arith.divf %501, %502 : vector<8x128xf32>
    %504 = vector.extract_strided_slice %491 {offsets = [0, 128], sizes = [8, 128], strides = [1, 1]} : vector<8x384xf32> to vector<8x128xf32>
    %505 = vector.extract_strided_slice %495 {offsets = [0, 128], sizes = [8, 128], strides = [1, 1]} : vector<8x384xf32> to vector<8x128xf32>
    %506 = arith.addf %504, %505 : vector<8x128xf32>
    %507 = arith.negf %506 : vector<8x128xf32>
    %508 = math.exp %507 : vector<8x128xf32>
    %cst_126 = arith.constant 1.000000e+00 : f32
    %509 = vector.broadcast %cst_126 : f32 to vector<8x128xf32>
    %510 = arith.addf %509, %508 : vector<8x128xf32>
    %511 = arith.divf %509, %510 : vector<8x128xf32>
    %512 = vector.extract_strided_slice %491 {offsets = [0, 256], sizes = [8, 128], strides = [1, 1]} : vector<8x384xf32> to vector<8x128xf32>
    %513 = vector.extract_strided_slice %495 {offsets = [0, 256], sizes = [8, 128], strides = [1, 1]} : vector<8x384xf32> to vector<8x128xf32>
    %514 = arith.mulf %503, %513 : vector<8x128xf32>
    %515 = arith.addf %512, %514 : vector<8x128xf32>
    %516 = math.tanh %515 : vector<8x128xf32>
    %cst_127 = arith.constant 1.000000e+00 : f32
    %517 = vector.broadcast %cst_127 : f32 to vector<8x128xf32>
    %518 = arith.subf %517, %511 : vector<8x128xf32>
    %519 = arith.mulf %518, %516 : vector<8x128xf32>
    %520 = arith.mulf %511, %489 : vector<8x128xf32>
    %521 = arith.addf %519, %520 : vector<8x128xf32>
    %c16_128 = arith.constant 16 : index
    %c0_129 = arith.constant 0 : index
    %522 = vector.load %arg15[%c16_128, %c0_129] : memref<48x128xf32, #tpu.memory_space<vmem>>, vector<8x128xf32>
    tpu.vector_store %arg15[%c16_128, %c0_129], %521 {strides = array<i32>} : memref<48x128xf32, #tpu.memory_space<vmem>>, vector<8x128xf32>,
    %523 = vector.extract_strided_slice %425 {offsets = [24, 0], sizes = [8, 384], strides = [1, 1]} : vector<48x384xf32> to vector<8x384xf32>
    %524 = arith.truncf %521 : vector<8x128xf32> to vector<8x128xbf16>
    %cst_130 = arith.constant dense<0.000000e+00> : vector<8x384xf32>
    %525 = tpu.matmul %524, %417, %cst_130 {dimension_numbers = #tpu.dot_dimension_numbers<[1], [0], [0], [1], [0, 0, 1, 1], [], []>} : vector<8x128xbf16>, vector<128x384xbf16>, vector<8x384xf32> -> vector<8x384xf32>
    %526 = vector.broadcast %421 : vector<1x384xf32> to vector<8x384xf32>
    %527 = arith.addf %525, %526 : vector<8x384xf32>
    %528 = vector.extract_strided_slice %523 {offsets = [0, 0], sizes = [8, 128], strides = [1, 1]} : vector<8x384xf32> to vector<8x128xf32>
    %529 = vector.extract_strided_slice %527 {offsets = [0, 0], sizes = [8, 128], strides = [1, 1]} : vector<8x384xf32> to vector<8x128xf32>
    %530 = arith.addf %528, %529 : vector<8x128xf32>
    %531 = arith.negf %530 : vector<8x128xf32>
    %532 = math.exp %531 : vector<8x128xf32>
    %cst_131 = arith.constant 1.000000e+00 : f32
    %533 = vector.broadcast %cst_131 : f32 to vector<8x128xf32>
    %534 = arith.addf %533, %532 : vector<8x128xf32>
    %535 = arith.divf %533, %534 : vector<8x128xf32>
    %536 = vector.extract_strided_slice %523 {offsets = [0, 128], sizes = [8, 128], strides = [1, 1]} : vector<8x384xf32> to vector<8x128xf32>
    %537 = vector.extract_strided_slice %527 {offsets = [0, 128], sizes = [8, 128], strides = [1, 1]} : vector<8x384xf32> to vector<8x128xf32>
    %538 = arith.addf %536, %537 : vector<8x128xf32>
    %539 = arith.negf %538 : vector<8x128xf32>
    %540 = math.exp %539 : vector<8x128xf32>
    %cst_132 = arith.constant 1.000000e+00 : f32
    %541 = vector.broadcast %cst_132 : f32 to vector<8x128xf32>
    %542 = arith.addf %541, %540 : vector<8x128xf32>
    %543 = arith.divf %541, %542 : vector<8x128xf32>
    %544 = vector.extract_strided_slice %523 {offsets = [0, 256], sizes = [8, 128], strides = [1, 1]} : vector<8x384xf32> to vector<8x128xf32>
    %545 = vector.extract_strided_slice %527 {offsets = [0, 256], sizes = [8, 128], strides = [1, 1]} : vector<8x384xf32> to vector<8x128xf32>
    %546 = arith.mulf %535, %545 : vector<8x128xf32>
    %547 = arith.addf %544, %546 : vector<8x128xf32>
    %548 = math.tanh %547 : vector<8x128xf32>
    %cst_133 = arith.constant 1.000000e+00 : f32
    %549 = vector.broadcast %cst_133 : f32 to vector<8x128xf32>
    %550 = arith.subf %549, %543 : vector<8x128xf32>
    %551 = arith.mulf %550, %548 : vector<8x128xf32>
    %552 = arith.mulf %543, %521 : vector<8x128xf32>
    %553 = arith.addf %551, %552 : vector<8x128xf32>
    %c24_134 = arith.constant 24 : index
    %c0_135 = arith.constant 0 : index
    %554 = vector.load %arg15[%c24_134, %c0_135] : memref<48x128xf32, #tpu.memory_space<vmem>>, vector<8x128xf32>
    tpu.vector_store %arg15[%c24_134, %c0_135], %553 {strides = array<i32>} : memref<48x128xf32, #tpu.memory_space<vmem>>, vector<8x128xf32>,
    %555 = vector.extract_strided_slice %425 {offsets = [32, 0], sizes = [8, 384], strides = [1, 1]} : vector<48x384xf32> to vector<8x384xf32>
    %556 = arith.truncf %553 : vector<8x128xf32> to vector<8x128xbf16>
    %cst_136 = arith.constant dense<0.000000e+00> : vector<8x384xf32>
    %557 = tpu.matmul %556, %417, %cst_136 {dimension_numbers = #tpu.dot_dimension_numbers<[1], [0], [0], [1], [0, 0, 1, 1], [], []>} : vector<8x128xbf16>, vector<128x384xbf16>, vector<8x384xf32> -> vector<8x384xf32>
    %558 = vector.broadcast %421 : vector<1x384xf32> to vector<8x384xf32>
    %559 = arith.addf %557, %558 : vector<8x384xf32>
    %560 = vector.extract_strided_slice %555 {offsets = [0, 0], sizes = [8, 128], strides = [1, 1]} : vector<8x384xf32> to vector<8x128xf32>
    %561 = vector.extract_strided_slice %559 {offsets = [0, 0], sizes = [8, 128], strides = [1, 1]} : vector<8x384xf32> to vector<8x128xf32>
    %562 = arith.addf %560, %561 : vector<8x128xf32>
    %563 = arith.negf %562 : vector<8x128xf32>
    %564 = math.exp %563 : vector<8x128xf32>
    %cst_137 = arith.constant 1.000000e+00 : f32
    %565 = vector.broadcast %cst_137 : f32 to vector<8x128xf32>
    %566 = arith.addf %565, %564 : vector<8x128xf32>
    %567 = arith.divf %565, %566 : vector<8x128xf32>
    %568 = vector.extract_strided_slice %555 {offsets = [0, 128], sizes = [8, 128], strides = [1, 1]} : vector<8x384xf32> to vector<8x128xf32>
    %569 = vector.extract_strided_slice %559 {offsets = [0, 128], sizes = [8, 128], strides = [1, 1]} : vector<8x384xf32> to vector<8x128xf32>
    %570 = arith.addf %568, %569 : vector<8x128xf32>
    %571 = arith.negf %570 : vector<8x128xf32>
    %572 = math.exp %571 : vector<8x128xf32>
    %cst_138 = arith.constant 1.000000e+00 : f32
    %573 = vector.broadcast %cst_138 : f32 to vector<8x128xf32>
    %574 = arith.addf %573, %572 : vector<8x128xf32>
    %575 = arith.divf %573, %574 : vector<8x128xf32>
    %576 = vector.extract_strided_slice %555 {offsets = [0, 256], sizes = [8, 128], strides = [1, 1]} : vector<8x384xf32> to vector<8x128xf32>
    %577 = vector.extract_strided_slice %559 {offsets = [0, 256], sizes = [8, 128], strides = [1, 1]} : vector<8x384xf32> to vector<8x128xf32>
    %578 = arith.mulf %567, %577 : vector<8x128xf32>
    %579 = arith.addf %576, %578 : vector<8x128xf32>
    %580 = math.tanh %579 : vector<8x128xf32>
    %cst_139 = arith.constant 1.000000e+00 : f32
    %581 = vector.broadcast %cst_139 : f32 to vector<8x128xf32>
    %582 = arith.subf %581, %575 : vector<8x128xf32>
    %583 = arith.mulf %582, %580 : vector<8x128xf32>
    %584 = arith.mulf %575, %553 : vector<8x128xf32>
    %585 = arith.addf %583, %584 : vector<8x128xf32>
    %c32_140 = arith.constant 32 : index
    %c0_141 = arith.constant 0 : index
    %586 = vector.load %arg15[%c32_140, %c0_141] : memref<48x128xf32, #tpu.memory_space<vmem>>, vector<8x128xf32>
    tpu.vector_store %arg15[%c32_140, %c0_141], %585 {strides = array<i32>} : memref<48x128xf32, #tpu.memory_space<vmem>>, vector<8x128xf32>,
    %587 = vector.extract_strided_slice %425 {offsets = [40, 0], sizes = [8, 384], strides = [1, 1]} : vector<48x384xf32> to vector<8x384xf32>
    %588 = arith.truncf %585 : vector<8x128xf32> to vector<8x128xbf16>
    %cst_142 = arith.constant dense<0.000000e+00> : vector<8x384xf32>
    %589 = tpu.matmul %588, %417, %cst_142 {dimension_numbers = #tpu.dot_dimension_numbers<[1], [0], [0], [1], [0, 0, 1, 1], [], []>} : vector<8x128xbf16>, vector<128x384xbf16>, vector<8x384xf32> -> vector<8x384xf32>
    %590 = vector.broadcast %421 : vector<1x384xf32> to vector<8x384xf32>
    %591 = arith.addf %589, %590 : vector<8x384xf32>
    %592 = vector.extract_strided_slice %587 {offsets = [0, 0], sizes = [8, 128], strides = [1, 1]} : vector<8x384xf32> to vector<8x128xf32>
    %593 = vector.extract_strided_slice %591 {offsets = [0, 0], sizes = [8, 128], strides = [1, 1]} : vector<8x384xf32> to vector<8x128xf32>
    %594 = arith.addf %592, %593 : vector<8x128xf32>
    %595 = arith.negf %594 : vector<8x128xf32>
    %596 = math.exp %595 : vector<8x128xf32>
    %cst_143 = arith.constant 1.000000e+00 : f32
    %597 = vector.broadcast %cst_143 : f32 to vector<8x128xf32>
    %598 = arith.addf %597, %596 : vector<8x128xf32>
    %599 = arith.divf %597, %598 : vector<8x128xf32>
    %600 = vector.extract_strided_slice %587 {offsets = [0, 128], sizes = [8, 128], strides = [1, 1]} : vector<8x384xf32> to vector<8x128xf32>
    %601 = vector.extract_strided_slice %591 {offsets = [0, 128], sizes = [8, 128], strides = [1, 1]} : vector<8x384xf32> to vector<8x128xf32>
    %602 = arith.addf %600, %601 : vector<8x128xf32>
    %603 = arith.negf %602 : vector<8x128xf32>
    %604 = math.exp %603 : vector<8x128xf32>
    %cst_144 = arith.constant 1.000000e+00 : f32
    %605 = vector.broadcast %cst_144 : f32 to vector<8x128xf32>
    %606 = arith.addf %605, %604 : vector<8x128xf32>
    %607 = arith.divf %605, %606 : vector<8x128xf32>
    %608 = vector.extract_strided_slice %587 {offsets = [0, 256], sizes = [8, 128], strides = [1, 1]} : vector<8x384xf32> to vector<8x128xf32>
    %609 = vector.extract_strided_slice %591 {offsets = [0, 256], sizes = [8, 128], strides = [1, 1]} : vector<8x384xf32> to vector<8x128xf32>
    %610 = arith.mulf %599, %609 : vector<8x128xf32>
    %611 = arith.addf %608, %610 : vector<8x128xf32>
    %612 = math.tanh %611 : vector<8x128xf32>
    %cst_145 = arith.constant 1.000000e+00 : f32
    %613 = vector.broadcast %cst_145 : f32 to vector<8x128xf32>
    %614 = arith.subf %613, %607 : vector<8x128xf32>
    %615 = arith.mulf %614, %612 : vector<8x128xf32>
    %616 = arith.mulf %607, %585 : vector<8x128xf32>
    %617 = arith.addf %615, %616 : vector<8x128xf32>
    %c40_146 = arith.constant 40 : index
    %c0_147 = arith.constant 0 : index
    %618 = vector.load %arg15[%c40_146, %c0_147] : memref<48x128xf32, #tpu.memory_space<vmem>>, vector<8x128xf32>
    tpu.vector_store %arg15[%c40_146, %c0_147], %617 {strides = array<i32>} : memref<48x128xf32, #tpu.memory_space<vmem>>, vector<8x128xf32>,
    %c0_148 = arith.constant 0 : index
    %c0_149 = arith.constant 0 : index
    %619 = vector.load %arg15[%c0_148, %c0_149] : memref<48x128xf32, #tpu.memory_space<vmem>>, vector<48x128xf32>
    %c3 = arith.constant 3 : index
    %c0_150 = arith.constant 0 : index
    %c0_151 = arith.constant 0 : index
    %620 = vector.load %arg3[%c3, %c0_150, %c0_151] : memref<4x128x384xbf16, #tpu.memory_space<vmem>>, vector<1x128x384xbf16>
    %621 = vector.shape_cast %620 : vector<1x128x384xbf16> to vector<128x384xbf16>
    %c3_152 = arith.constant 3 : index
    %c0_153 = arith.constant 0 : index
    %c0_154 = arith.constant 0 : index
    %622 = vector.load %arg4[%c3_152, %c0_153, %c0_154] : memref<4x128x384xbf16, #tpu.memory_space<vmem>>, vector<1x128x384xbf16>
    %623 = vector.shape_cast %622 : vector<1x128x384xbf16> to vector<128x384xbf16>
    %c3_155 = arith.constant 3 : index
    %c0_156 = arith.constant 0 : index
    %c0_157 = arith.constant 0 : index
    %624 = vector.load %arg5[%c3_155, %c0_156, %c0_157] : memref<4x1x384xf32, #tpu.memory_space<vmem>>, vector<1x1x384xf32>
    %625 = vector.shape_cast %624 : vector<1x1x384xf32> to vector<1x384xf32>
    %c3_158 = arith.constant 3 : index
    %c0_159 = arith.constant 0 : index
    %c0_160 = arith.constant 0 : index
    %626 = vector.load %arg6[%c3_158, %c0_159, %c0_160] : memref<4x1x384xf32, #tpu.memory_space<vmem>>, vector<1x1x384xf32>
    %627 = vector.shape_cast %626 : vector<1x1x384xf32> to vector<1x384xf32>
    %628 = arith.truncf %619 : vector<48x128xf32> to vector<48x128xbf16>
    %cst_161 = arith.constant dense<0.000000e+00> : vector<48x384xf32>
    %629 = tpu.matmul %628, %621, %cst_161 {dimension_numbers = #tpu.dot_dimension_numbers<[1], [0], [0], [1], [0, 0, 1, 1], [], []>} : vector<48x128xbf16>, vector<128x384xbf16>, vector<48x384xf32> -> vector<48x384xf32>
    %630 = vector.broadcast %625 : vector<1x384xf32> to vector<48x384xf32>
    %631 = arith.addf %629, %630 : vector<48x384xf32>
    %cst_162 = arith.constant 0.000000e+00 : f32
    %632 = vector.broadcast %cst_162 : f32 to vector<8x128xf32>
    %633 = vector.extract_strided_slice %631 {offsets = [0, 0], sizes = [8, 384], strides = [1, 1]} : vector<48x384xf32> to vector<8x384xf32>
    %634 = arith.truncf %632 : vector<8x128xf32> to vector<8x128xbf16>
    %cst_163 = arith.constant dense<0.000000e+00> : vector<8x384xf32>
    %635 = tpu.matmul %634, %623, %cst_163 {dimension_numbers = #tpu.dot_dimension_numbers<[1], [0], [0], [1], [0, 0, 1, 1], [], []>} : vector<8x128xbf16>, vector<128x384xbf16>, vector<8x384xf32> -> vector<8x384xf32>
    %636 = vector.broadcast %627 : vector<1x384xf32> to vector<8x384xf32>
    %637 = arith.addf %635, %636 : vector<8x384xf32>
    %638 = vector.extract_strided_slice %633 {offsets = [0, 0], sizes = [8, 128], strides = [1, 1]} : vector<8x384xf32> to vector<8x128xf32>
    %639 = vector.extract_strided_slice %637 {offsets = [0, 0], sizes = [8, 128], strides = [1, 1]} : vector<8x384xf32> to vector<8x128xf32>
    %640 = arith.addf %638, %639 : vector<8x128xf32>
    %641 = arith.negf %640 : vector<8x128xf32>
    %642 = math.exp %641 : vector<8x128xf32>
    %cst_164 = arith.constant 1.000000e+00 : f32
    %643 = vector.broadcast %cst_164 : f32 to vector<8x128xf32>
    %644 = arith.addf %643, %642 : vector<8x128xf32>
    %645 = arith.divf %643, %644 : vector<8x128xf32>
    %646 = vector.extract_strided_slice %633 {offsets = [0, 128], sizes = [8, 128], strides = [1, 1]} : vector<8x384xf32> to vector<8x128xf32>
    %647 = vector.extract_strided_slice %637 {offsets = [0, 128], sizes = [8, 128], strides = [1, 1]} : vector<8x384xf32> to vector<8x128xf32>
    %648 = arith.addf %646, %647 : vector<8x128xf32>
    %649 = arith.negf %648 : vector<8x128xf32>
    %650 = math.exp %649 : vector<8x128xf32>
    %cst_165 = arith.constant 1.000000e+00 : f32
    %651 = vector.broadcast %cst_165 : f32 to vector<8x128xf32>
    %652 = arith.addf %651, %650 : vector<8x128xf32>
    %653 = arith.divf %651, %652 : vector<8x128xf32>
    %654 = vector.extract_strided_slice %633 {offsets = [0, 256], sizes = [8, 128], strides = [1, 1]} : vector<8x384xf32> to vector<8x128xf32>
    %655 = vector.extract_strided_slice %637 {offsets = [0, 256], sizes = [8, 128], strides = [1, 1]} : vector<8x384xf32> to vector<8x128xf32>
    %656 = arith.mulf %645, %655 : vector<8x128xf32>
    %657 = arith.addf %654, %656 : vector<8x128xf32>
    %658 = math.tanh %657 : vector<8x128xf32>
    %cst_166 = arith.constant 1.000000e+00 : f32
    %659 = vector.broadcast %cst_166 : f32 to vector<8x128xf32>
    %660 = arith.subf %659, %653 : vector<8x128xf32>
    %661 = arith.mulf %660, %658 : vector<8x128xf32>
    %662 = arith.mulf %653, %632 : vector<8x128xf32>
    %663 = arith.addf %661, %662 : vector<8x128xf32>
    %664 = vector.extract_strided_slice %631 {offsets = [8, 0], sizes = [8, 384], strides = [1, 1]} : vector<48x384xf32> to vector<8x384xf32>
    %665 = arith.truncf %663 : vector<8x128xf32> to vector<8x128xbf16>
    %cst_167 = arith.constant dense<0.000000e+00> : vector<8x384xf32>
    %666 = tpu.matmul %665, %623, %cst_167 {dimension_numbers = #tpu.dot_dimension_numbers<[1], [0], [0], [1], [0, 0, 1, 1], [], []>} : vector<8x128xbf16>, vector<128x384xbf16>, vector<8x384xf32> -> vector<8x384xf32>
    %667 = vector.broadcast %627 : vector<1x384xf32> to vector<8x384xf32>
    %668 = arith.addf %666, %667 : vector<8x384xf32>
    %669 = vector.extract_strided_slice %664 {offsets = [0, 0], sizes = [8, 128], strides = [1, 1]} : vector<8x384xf32> to vector<8x128xf32>
    %670 = vector.extract_strided_slice %668 {offsets = [0, 0], sizes = [8, 128], strides = [1, 1]} : vector<8x384xf32> to vector<8x128xf32>
    %671 = arith.addf %669, %670 : vector<8x128xf32>
    %672 = arith.negf %671 : vector<8x128xf32>
    %673 = math.exp %672 : vector<8x128xf32>
    %cst_168 = arith.constant 1.000000e+00 : f32
    %674 = vector.broadcast %cst_168 : f32 to vector<8x128xf32>
    %675 = arith.addf %674, %673 : vector<8x128xf32>
    %676 = arith.divf %674, %675 : vector<8x128xf32>
    %677 = vector.extract_strided_slice %664 {offsets = [0, 128], sizes = [8, 128], strides = [1, 1]} : vector<8x384xf32> to vector<8x128xf32>
    %678 = vector.extract_strided_slice %668 {offsets = [0, 128], sizes = [8, 128], strides = [1, 1]} : vector<8x384xf32> to vector<8x128xf32>
    %679 = arith.addf %677, %678 : vector<8x128xf32>
    %680 = arith.negf %679 : vector<8x128xf32>
    %681 = math.exp %680 : vector<8x128xf32>
    %cst_169 = arith.constant 1.000000e+00 : f32
    %682 = vector.broadcast %cst_169 : f32 to vector<8x128xf32>
    %683 = arith.addf %682, %681 : vector<8x128xf32>
    %684 = arith.divf %682, %683 : vector<8x128xf32>
    %685 = vector.extract_strided_slice %664 {offsets = [0, 256], sizes = [8, 128], strides = [1, 1]} : vector<8x384xf32> to vector<8x128xf32>
    %686 = vector.extract_strided_slice %668 {offsets = [0, 256], sizes = [8, 128], strides = [1, 1]} : vector<8x384xf32> to vector<8x128xf32>
    %687 = arith.mulf %676, %686 : vector<8x128xf32>
    %688 = arith.addf %685, %687 : vector<8x128xf32>
    %689 = math.tanh %688 : vector<8x128xf32>
    %cst_170 = arith.constant 1.000000e+00 : f32
    %690 = vector.broadcast %cst_170 : f32 to vector<8x128xf32>
    %691 = arith.subf %690, %684 : vector<8x128xf32>
    %692 = arith.mulf %691, %689 : vector<8x128xf32>
    %693 = arith.mulf %684, %663 : vector<8x128xf32>
    %694 = arith.addf %692, %693 : vector<8x128xf32>
    %695 = vector.extract_strided_slice %631 {offsets = [16, 0], sizes = [8, 384], strides = [1, 1]} : vector<48x384xf32> to vector<8x384xf32>
    %696 = arith.truncf %694 : vector<8x128xf32> to vector<8x128xbf16>
    %cst_171 = arith.constant dense<0.000000e+00> : vector<8x384xf32>
    %697 = tpu.matmul %696, %623, %cst_171 {dimension_numbers = #tpu.dot_dimension_numbers<[1], [0], [0], [1], [0, 0, 1, 1], [], []>} : vector<8x128xbf16>, vector<128x384xbf16>, vector<8x384xf32> -> vector<8x384xf32>
    %698 = vector.broadcast %627 : vector<1x384xf32> to vector<8x384xf32>
    %699 = arith.addf %697, %698 : vector<8x384xf32>
    %700 = vector.extract_strided_slice %695 {offsets = [0, 0], sizes = [8, 128], strides = [1, 1]} : vector<8x384xf32> to vector<8x128xf32>
    %701 = vector.extract_strided_slice %699 {offsets = [0, 0], sizes = [8, 128], strides = [1, 1]} : vector<8x384xf32> to vector<8x128xf32>
    %702 = arith.addf %700, %701 : vector<8x128xf32>
    %703 = arith.negf %702 : vector<8x128xf32>
    %704 = math.exp %703 : vector<8x128xf32>
    %cst_172 = arith.constant 1.000000e+00 : f32
    %705 = vector.broadcast %cst_172 : f32 to vector<8x128xf32>
    %706 = arith.addf %705, %704 : vector<8x128xf32>
    %707 = arith.divf %705, %706 : vector<8x128xf32>
    %708 = vector.extract_strided_slice %695 {offsets = [0, 128], sizes = [8, 128], strides = [1, 1]} : vector<8x384xf32> to vector<8x128xf32>
    %709 = vector.extract_strided_slice %699 {offsets = [0, 128], sizes = [8, 128], strides = [1, 1]} : vector<8x384xf32> to vector<8x128xf32>
    %710 = arith.addf %708, %709 : vector<8x128xf32>
    %711 = arith.negf %710 : vector<8x128xf32>
    %712 = math.exp %711 : vector<8x128xf32>
    %cst_173 = arith.constant 1.000000e+00 : f32
    %713 = vector.broadcast %cst_173 : f32 to vector<8x128xf32>
    %714 = arith.addf %713, %712 : vector<8x128xf32>
    %715 = arith.divf %713, %714 : vector<8x128xf32>
    %716 = vector.extract_strided_slice %695 {offsets = [0, 256], sizes = [8, 128], strides = [1, 1]} : vector<8x384xf32> to vector<8x128xf32>
    %717 = vector.extract_strided_slice %699 {offsets = [0, 256], sizes = [8, 128], strides = [1, 1]} : vector<8x384xf32> to vector<8x128xf32>
    %718 = arith.mulf %707, %717 : vector<8x128xf32>
    %719 = arith.addf %716, %718 : vector<8x128xf32>
    %720 = math.tanh %719 : vector<8x128xf32>
    %cst_174 = arith.constant 1.000000e+00 : f32
    %721 = vector.broadcast %cst_174 : f32 to vector<8x128xf32>
    %722 = arith.subf %721, %715 : vector<8x128xf32>
    %723 = arith.mulf %722, %720 : vector<8x128xf32>
    %724 = arith.mulf %715, %694 : vector<8x128xf32>
    %725 = arith.addf %723, %724 : vector<8x128xf32>
    %726 = vector.extract_strided_slice %631 {offsets = [24, 0], sizes = [8, 384], strides = [1, 1]} : vector<48x384xf32> to vector<8x384xf32>
    %727 = arith.truncf %725 : vector<8x128xf32> to vector<8x128xbf16>
    %cst_175 = arith.constant dense<0.000000e+00> : vector<8x384xf32>
    %728 = tpu.matmul %727, %623, %cst_175 {dimension_numbers = #tpu.dot_dimension_numbers<[1], [0], [0], [1], [0, 0, 1, 1], [], []>} : vector<8x128xbf16>, vector<128x384xbf16>, vector<8x384xf32> -> vector<8x384xf32>
    %729 = vector.broadcast %627 : vector<1x384xf32> to vector<8x384xf32>
    %730 = arith.addf %728, %729 : vector<8x384xf32>
    %731 = vector.extract_strided_slice %726 {offsets = [0, 0], sizes = [8, 128], strides = [1, 1]} : vector<8x384xf32> to vector<8x128xf32>
    %732 = vector.extract_strided_slice %730 {offsets = [0, 0], sizes = [8, 128], strides = [1, 1]} : vector<8x384xf32> to vector<8x128xf32>
    %733 = arith.addf %731, %732 : vector<8x128xf32>
    %734 = arith.negf %733 : vector<8x128xf32>
    %735 = math.exp %734 : vector<8x128xf32>
    %cst_176 = arith.constant 1.000000e+00 : f32
    %736 = vector.broadcast %cst_176 : f32 to vector<8x128xf32>
    %737 = arith.addf %736, %735 : vector<8x128xf32>
    %738 = arith.divf %736, %737 : vector<8x128xf32>
    %739 = vector.extract_strided_slice %726 {offsets = [0, 128], sizes = [8, 128], strides = [1, 1]} : vector<8x384xf32> to vector<8x128xf32>
    %740 = vector.extract_strided_slice %730 {offsets = [0, 128], sizes = [8, 128], strides = [1, 1]} : vector<8x384xf32> to vector<8x128xf32>
    %741 = arith.addf %739, %740 : vector<8x128xf32>
    %742 = arith.negf %741 : vector<8x128xf32>
    %743 = math.exp %742 : vector<8x128xf32>
    %cst_177 = arith.constant 1.000000e+00 : f32
    %744 = vector.broadcast %cst_177 : f32 to vector<8x128xf32>
    %745 = arith.addf %744, %743 : vector<8x128xf32>
    %746 = arith.divf %744, %745 : vector<8x128xf32>
    %747 = vector.extract_strided_slice %726 {offsets = [0, 256], sizes = [8, 128], strides = [1, 1]} : vector<8x384xf32> to vector<8x128xf32>
    %748 = vector.extract_strided_slice %730 {offsets = [0, 256], sizes = [8, 128], strides = [1, 1]} : vector<8x384xf32> to vector<8x128xf32>
    %749 = arith.mulf %738, %748 : vector<8x128xf32>
    %750 = arith.addf %747, %749 : vector<8x128xf32>
    %751 = math.tanh %750 : vector<8x128xf32>
    %cst_178 = arith.constant 1.000000e+00 : f32
    %752 = vector.broadcast %cst_178 : f32 to vector<8x128xf32>
    %753 = arith.subf %752, %746 : vector<8x128xf32>
    %754 = arith.mulf %753, %751 : vector<8x128xf32>
    %755 = arith.mulf %746, %725 : vector<8x128xf32>
    %756 = arith.addf %754, %755 : vector<8x128xf32>
    %757 = vector.extract_strided_slice %631 {offsets = [32, 0], sizes = [8, 384], strides = [1, 1]} : vector<48x384xf32> to vector<8x384xf32>
    %758 = arith.truncf %756 : vector<8x128xf32> to vector<8x128xbf16>
    %cst_179 = arith.constant dense<0.000000e+00> : vector<8x384xf32>
    %759 = tpu.matmul %758, %623, %cst_179 {dimension_numbers = #tpu.dot_dimension_numbers<[1], [0], [0], [1], [0, 0, 1, 1], [], []>} : vector<8x128xbf16>, vector<128x384xbf16>, vector<8x384xf32> -> vector<8x384xf32>
    %760 = vector.broadcast %627 : vector<1x384xf32> to vector<8x384xf32>
    %761 = arith.addf %759, %760 : vector<8x384xf32>
    %762 = vector.extract_strided_slice %757 {offsets = [0, 0], sizes = [8, 128], strides = [1, 1]} : vector<8x384xf32> to vector<8x128xf32>
    %763 = vector.extract_strided_slice %761 {offsets = [0, 0], sizes = [8, 128], strides = [1, 1]} : vector<8x384xf32> to vector<8x128xf32>
    %764 = arith.addf %762, %763 : vector<8x128xf32>
    %765 = arith.negf %764 : vector<8x128xf32>
    %766 = math.exp %765 : vector<8x128xf32>
    %cst_180 = arith.constant 1.000000e+00 : f32
    %767 = vector.broadcast %cst_180 : f32 to vector<8x128xf32>
    %768 = arith.addf %767, %766 : vector<8x128xf32>
    %769 = arith.divf %767, %768 : vector<8x128xf32>
    %770 = vector.extract_strided_slice %757 {offsets = [0, 128], sizes = [8, 128], strides = [1, 1]} : vector<8x384xf32> to vector<8x128xf32>
    %771 = vector.extract_strided_slice %761 {offsets = [0, 128], sizes = [8, 128], strides = [1, 1]} : vector<8x384xf32> to vector<8x128xf32>
    %772 = arith.addf %770, %771 : vector<8x128xf32>
    %773 = arith.negf %772 : vector<8x128xf32>
    %774 = math.exp %773 : vector<8x128xf32>
    %cst_181 = arith.constant 1.000000e+00 : f32
    %775 = vector.broadcast %cst_181 : f32 to vector<8x128xf32>
    %776 = arith.addf %775, %774 : vector<8x128xf32>
    %777 = arith.divf %775, %776 : vector<8x128xf32>
    %778 = vector.extract_strided_slice %757 {offsets = [0, 256], sizes = [8, 128], strides = [1, 1]} : vector<8x384xf32> to vector<8x128xf32>
    %779 = vector.extract_strided_slice %761 {offsets = [0, 256], sizes = [8, 128], strides = [1, 1]} : vector<8x384xf32> to vector<8x128xf32>
    %780 = arith.mulf %769, %779 : vector<8x128xf32>
    %781 = arith.addf %778, %780 : vector<8x128xf32>
    %782 = math.tanh %781 : vector<8x128xf32>
    %cst_182 = arith.constant 1.000000e+00 : f32
    %783 = vector.broadcast %cst_182 : f32 to vector<8x128xf32>
    %784 = arith.subf %783, %777 : vector<8x128xf32>
    %785 = arith.mulf %784, %782 : vector<8x128xf32>
    %786 = arith.mulf %777, %756 : vector<8x128xf32>
    %787 = arith.addf %785, %786 : vector<8x128xf32>
    %788 = vector.extract_strided_slice %631 {offsets = [40, 0], sizes = [8, 384], strides = [1, 1]} : vector<48x384xf32> to vector<8x384xf32>
    %789 = arith.truncf %787 : vector<8x128xf32> to vector<8x128xbf16>
    %cst_183 = arith.constant dense<0.000000e+00> : vector<8x384xf32>
    %790 = tpu.matmul %789, %623, %cst_183 {dimension_numbers = #tpu.dot_dimension_numbers<[1], [0], [0], [1], [0, 0, 1, 1], [], []>} : vector<8x128xbf16>, vector<128x384xbf16>, vector<8x384xf32> -> vector<8x384xf32>
    %791 = vector.broadcast %627 : vector<1x384xf32> to vector<8x384xf32>
    %792 = arith.addf %790, %791 : vector<8x384xf32>
    %793 = vector.extract_strided_slice %788 {offsets = [0, 0], sizes = [8, 128], strides = [1, 1]} : vector<8x384xf32> to vector<8x128xf32>
    %794 = vector.extract_strided_slice %792 {offsets = [0, 0], sizes = [8, 128], strides = [1, 1]} : vector<8x384xf32> to vector<8x128xf32>
    %795 = arith.addf %793, %794 : vector<8x128xf32>
    %796 = arith.negf %795 : vector<8x128xf32>
    %797 = math.exp %796 : vector<8x128xf32>
    %cst_184 = arith.constant 1.000000e+00 : f32
    %798 = vector.broadcast %cst_184 : f32 to vector<8x128xf32>
    %799 = arith.addf %798, %797 : vector<8x128xf32>
    %800 = arith.divf %798, %799 : vector<8x128xf32>
    %801 = vector.extract_strided_slice %788 {offsets = [0, 128], sizes = [8, 128], strides = [1, 1]} : vector<8x384xf32> to vector<8x128xf32>
    %802 = vector.extract_strided_slice %792 {offsets = [0, 128], sizes = [8, 128], strides = [1, 1]} : vector<8x384xf32> to vector<8x128xf32>
    %803 = arith.addf %801, %802 : vector<8x128xf32>
    %804 = arith.negf %803 : vector<8x128xf32>
    %805 = math.exp %804 : vector<8x128xf32>
    %cst_185 = arith.constant 1.000000e+00 : f32
    %806 = vector.broadcast %cst_185 : f32 to vector<8x128xf32>
    %807 = arith.addf %806, %805 : vector<8x128xf32>
    %808 = arith.divf %806, %807 : vector<8x128xf32>
    %809 = vector.extract_strided_slice %788 {offsets = [0, 256], sizes = [8, 128], strides = [1, 1]} : vector<8x384xf32> to vector<8x128xf32>
    %810 = vector.extract_strided_slice %792 {offsets = [0, 256], sizes = [8, 128], strides = [1, 1]} : vector<8x384xf32> to vector<8x128xf32>
    %811 = arith.mulf %800, %810 : vector<8x128xf32>
    %812 = arith.addf %809, %811 : vector<8x128xf32>
    %813 = math.tanh %812 : vector<8x128xf32>
    %cst_186 = arith.constant 1.000000e+00 : f32
    %814 = vector.broadcast %cst_186 : f32 to vector<8x128xf32>
    %815 = arith.subf %814, %808 : vector<8x128xf32>
    %816 = arith.mulf %815, %813 : vector<8x128xf32>
    %817 = arith.mulf %808, %787 : vector<8x128xf32>
    %818 = arith.addf %816, %817 : vector<8x128xf32>
    %c0_187 = arith.constant 0 : index
    %c0_188 = arith.constant 0 : index
    %819 = vector.load %arg7[%c0_187, %c0_188] : memref<128x384xbf16, #tpu.memory_space<vmem>>, vector<128x384xbf16>
    %c0_189 = arith.constant 0 : index
    %c0_190 = arith.constant 0 : index
    %820 = vector.load %arg8[%c0_189, %c0_190] : memref<128x384xbf16, #tpu.memory_space<vmem>>, vector<128x384xbf16>
    %c0_191 = arith.constant 0 : index
    %c0_192 = arith.constant 0 : index
    %821 = vector.load %arg9[%c0_191, %c0_192] : memref<1x384xf32, #tpu.memory_space<vmem>>, vector<1x384xf32>
    %c0_193 = arith.constant 0 : index
    %c0_194 = arith.constant 0 : index
    %822 = vector.load %arg10[%c0_193, %c0_194] : memref<1x384xf32, #tpu.memory_space<vmem>>, vector<1x384xf32>
    %c0_195 = arith.constant 0 : index
    %c0_196 = arith.constant 0 : index
    %823 = vector.load %arg11[%c0_195, %c0_196] : memref<128x128xbf16, #tpu.memory_space<vmem>>, vector<128x128xbf16>
    %c0_197 = arith.constant 0 : index
    %c0_198 = arith.constant 0 : index
    %824 = vector.load %arg12[%c0_197, %c0_198] : memref<1x128xf32, #tpu.memory_space<vmem>>, vector<1x128xf32>
    %c0_199 = arith.constant 0 : index
    %c0_200 = arith.constant 0 : index
    %825 = vector.load %arg13[%c0_199, %c0_200] : memref<128x128xbf16, #tpu.memory_space<vmem>>, vector<128x128xbf16>
    %826 = tpu.iota {dimensions = array<i32: 1>} : vector<8x128xi32>
    %c64_i32 = arith.constant 64 : i32
    %827 = vector.broadcast %c64_i32 : i32 to vector<8x128xi32>
    %828 = arith.cmpi slt, %826, %827 : vector<8x128xi32>
    %c0_201 = arith.constant 0 : index
    %c0_202 = arith.constant 0 : index
    %829 = vector.load %arg2[%c0_201, %c0_202] : memref<8x128xf32, #tpu.memory_space<vmem>>, vector<8x128xf32>
    %830 = arith.truncf %829 : vector<8x128xf32> to vector<8x128xbf16>
    %cst_203 = arith.constant 0.000000e+00 : f32
    %831 = vector.broadcast %cst_203 : f32 to vector<8x128xf32>
    %c0_204 = arith.constant 0 : index
    %c0_205 = arith.constant 0 : index
    %c0_206 = arith.constant 0 : index
    %832 = vector.load %arg14[%c0_204, %c0_205, %c0_206] : memref<4x8x128xf32, #tpu.memory_space<vmem>>, vector<1x8x128xf32>
    %833 = vector.shape_cast %832 : vector<1x8x128xf32> to vector<8x128xf32>
    %834 = vector.shape_cast %831 : vector<8x128xf32> to vector<1x8x128xf32>
    tpu.vector_store %arg14[%c0_204, %c0_205, %c0_206], %834 {strides = array<i32>} : memref<4x8x128xf32, #tpu.memory_space<vmem>>, vector<1x8x128xf32>,
    %cst_207 = arith.constant dense<0.000000e+00> : vector<8x384xf32>
    %835 = tpu.matmul %830, %819, %cst_207 {dimension_numbers = #tpu.dot_dimension_numbers<[1], [0], [0], [1], [0, 0, 1, 1], [], []>} : vector<8x128xbf16>, vector<128x384xbf16>, vector<8x384xf32> -> vector<8x384xf32>
    %836 = vector.broadcast %821 : vector<1x384xf32> to vector<8x384xf32>
    %837 = arith.addf %835, %836 : vector<8x384xf32>
    %838 = arith.truncf %818 : vector<8x128xf32> to vector<8x128xbf16>
    %cst_208 = arith.constant dense<0.000000e+00> : vector<8x384xf32>
    %839 = tpu.matmul %838, %820, %cst_208 {dimension_numbers = #tpu.dot_dimension_numbers<[1], [0], [0], [1], [0, 0, 1, 1], [], []>} : vector<8x128xbf16>, vector<128x384xbf16>, vector<8x384xf32> -> vector<8x384xf32>
    %840 = vector.broadcast %822 : vector<1x384xf32> to vector<8x384xf32>
    %841 = arith.addf %839, %840 : vector<8x384xf32>
    %842 = vector.extract_strided_slice %837 {offsets = [0, 0], sizes = [8, 128], strides = [1, 1]} : vector<8x384xf32> to vector<8x128xf32>
    %843 = vector.extract_strided_slice %841 {offsets = [0, 0], sizes = [8, 128], strides = [1, 1]} : vector<8x384xf32> to vector<8x128xf32>
    %844 = arith.addf %842, %843 : vector<8x128xf32>
    %845 = arith.negf %844 : vector<8x128xf32>
    %846 = math.exp %845 : vector<8x128xf32>
    %cst_209 = arith.constant 1.000000e+00 : f32
    %847 = vector.broadcast %cst_209 : f32 to vector<8x128xf32>
    %848 = arith.addf %847, %846 : vector<8x128xf32>
    %849 = arith.divf %847, %848 : vector<8x128xf32>
    %850 = vector.extract_strided_slice %837 {offsets = [0, 128], sizes = [8, 128], strides = [1, 1]} : vector<8x384xf32> to vector<8x128xf32>
    %851 = vector.extract_strided_slice %841 {offsets = [0, 128], sizes = [8, 128], strides = [1, 1]} : vector<8x384xf32> to vector<8x128xf32>
    %852 = arith.addf %850, %851 : vector<8x128xf32>
    %853 = arith.negf %852 : vector<8x128xf32>
    %854 = math.exp %853 : vector<8x128xf32>
    %cst_210 = arith.constant 1.000000e+00 : f32
    %855 = vector.broadcast %cst_210 : f32 to vector<8x128xf32>
    %856 = arith.addf %855, %854 : vector<8x128xf32>
    %857 = arith.divf %855, %856 : vector<8x128xf32>
    %858 = vector.extract_strided_slice %837 {offsets = [0, 256], sizes = [8, 128], strides = [1, 1]} : vector<8x384xf32> to vector<8x128xf32>
    %859 = vector.extract_strided_slice %841 {offsets = [0, 256], sizes = [8, 128], strides = [1, 1]} : vector<8x384xf32> to vector<8x128xf32>
    %860 = arith.mulf %849, %859 : vector<8x128xf32>
    %861 = arith.addf %858, %860 : vector<8x128xf32>
    %862 = math.tanh %861 : vector<8x128xf32>
    %cst_211 = arith.constant 1.000000e+00 : f32
    %863 = vector.broadcast %cst_211 : f32 to vector<8x128xf32>
    %864 = arith.subf %863, %857 : vector<8x128xf32>
    %865 = arith.mulf %864, %862 : vector<8x128xf32>
    %866 = arith.mulf %857, %818 : vector<8x128xf32>
    %867 = arith.addf %865, %866 : vector<8x128xf32>
    %cst_212 = arith.constant 0.000000e+00 : f32
    %868 = vector.broadcast %cst_212 : f32 to vector<8x128xf32>
    %869 = arith.maximumf %867, %868 : vector<8x128xf32>
    %870 = arith.truncf %869 : vector<8x128xf32> to vector<8x128xbf16>
    %cst_213 = arith.constant dense<0.000000e+00> : vector<8x128xf32>
    %871 = tpu.matmul %870, %823, %cst_213 {dimension_numbers = #tpu.dot_dimension_numbers<[1], [0], [0], [1], [0, 0, 1, 1], [], []>} : vector<8x128xbf16>, vector<128x128xbf16>, vector<8x128xf32> -> vector<8x128xf32>
    %872 = vector.broadcast %824 : vector<1x128xf32> to vector<8x128xf32>
    %873 = arith.addf %871, %872 : vector<8x128xf32>
    %c1_214 = arith.constant 1 : index
    %c0_215 = arith.constant 0 : index
    %c0_216 = arith.constant 0 : index
    %874 = vector.load %arg14[%c1_214, %c0_215, %c0_216] : memref<4x8x128xf32, #tpu.memory_space<vmem>>, vector<1x8x128xf32>
    %875 = vector.shape_cast %874 : vector<1x8x128xf32> to vector<8x128xf32>
    %876 = vector.shape_cast %873 : vector<8x128xf32> to vector<1x8x128xf32>
    tpu.vector_store %arg14[%c1_214, %c0_215, %c0_216], %876 {strides = array<i32>} : memref<4x8x128xf32, #tpu.memory_space<vmem>>, vector<1x8x128xf32>,
    %cst_217 = arith.constant 0xFF800000 : f32
    %877 = vector.broadcast %cst_217 : f32 to vector<8x128xf32>
    %878 = arith.select %828, %873, %877 : vector<8x128xi1>, vector<8x128xf32>
    %cst_218 = arith.constant dense<0xFF800000> : vector<8xf32>
    %879 = vector.multi_reduction <maximumf>, %878, %cst_218 [1] : vector<8x128xf32> to vector<8xf32>
    %880 = vector.shape_cast %879 : vector<8xf32> to vector<8x1xf32>
    %881 = vector.broadcast %880 : vector<8x1xf32> to vector<8x128xf32>
    %882 = arith.cmpf oeq, %878, %881 : vector<8x128xf32>
    %c128_i32 = arith.constant 128 : i32
    %883 = vector.broadcast %c128_i32 : i32 to vector<8x128xi32>
    %884 = arith.select %882, %826, %883 : vector<8x128xi1>, vector<8x128xi32>
    %cst_219 = arith.constant dense<2147483647> : vector<8xi32>
    %885 = vector.multi_reduction <minsi>, %884, %cst_219 [1] : vector<8x128xi32> to vector<8xi32>
    %886 = vector.shape_cast %885 : vector<8xi32> to vector<8x1xi32>
    %887 = vector.broadcast %886 : vector<8x1xi32> to vector<8x128xi32>
    %888 = arith.cmpi eq, %826, %887 : vector<8x128xi32>
    %889 = arith.extui %888 : vector<8x128xi1> to vector<8x128xi32>
    %890 = arith.sitofp %889 : vector<8x128xi32> to vector<8x128xf32>
    %891 = arith.truncf %890 : vector<8x128xf32> to vector<8x128xbf16>
    %cst_220 = arith.constant dense<0.000000e+00> : vector<8x128xf32>
    %892 = tpu.matmul %891, %825, %cst_220 {dimension_numbers = #tpu.dot_dimension_numbers<[1], [0], [0], [1], [0, 0, 1, 1], [], []>} : vector<8x128xbf16>, vector<128x128xbf16>, vector<8x128xf32> -> vector<8x128xf32>
    %893 = arith.truncf %892 : vector<8x128xf32> to vector<8x128xbf16>
    %cst_221 = arith.constant dense<0.000000e+00> : vector<8x384xf32>
    %894 = tpu.matmul %893, %819, %cst_221 {dimension_numbers = #tpu.dot_dimension_numbers<[1], [0], [0], [1], [0, 0, 1, 1], [], []>} : vector<8x128xbf16>, vector<128x384xbf16>, vector<8x384xf32> -> vector<8x384xf32>
    %895 = vector.broadcast %821 : vector<1x384xf32> to vector<8x384xf32>
    %896 = arith.addf %894, %895 : vector<8x384xf32>
    %897 = arith.truncf %867 : vector<8x128xf32> to vector<8x128xbf16>
    %cst_222 = arith.constant dense<0.000000e+00> : vector<8x384xf32>
    %898 = tpu.matmul %897, %820, %cst_222 {dimension_numbers = #tpu.dot_dimension_numbers<[1], [0], [0], [1], [0, 0, 1, 1], [], []>} : vector<8x128xbf16>, vector<128x384xbf16>, vector<8x384xf32> -> vector<8x384xf32>
    %899 = vector.broadcast %822 : vector<1x384xf32> to vector<8x384xf32>
    %900 = arith.addf %898, %899 : vector<8x384xf32>
    %901 = vector.extract_strided_slice %896 {offsets = [0, 0], sizes = [8, 128], strides = [1, 1]} : vector<8x384xf32> to vector<8x128xf32>
    %902 = vector.extract_strided_slice %900 {offsets = [0, 0], sizes = [8, 128], strides = [1, 1]} : vector<8x384xf32> to vector<8x128xf32>
    %903 = arith.addf %901, %902 : vector<8x128xf32>
    %904 = arith.negf %903 : vector<8x128xf32>
    %905 = math.exp %904 : vector<8x128xf32>
    %cst_223 = arith.constant 1.000000e+00 : f32
    %906 = vector.broadcast %cst_223 : f32 to vector<8x128xf32>
    %907 = arith.addf %906, %905 : vector<8x128xf32>
    %908 = arith.divf %906, %907 : vector<8x128xf32>
    %909 = vector.extract_strided_slice %896 {offsets = [0, 128], sizes = [8, 128], strides = [1, 1]} : vector<8x384xf32> to vector<8x128xf32>
    %910 = vector.extract_strided_slice %900 {offsets = [0, 128], sizes = [8, 128], strides = [1, 1]} : vector<8x384xf32> to vector<8x128xf32>
    %911 = arith.addf %909, %910 : vector<8x128xf32>
    %912 = arith.negf %911 : vector<8x128xf32>
    %913 = math.exp %912 : vector<8x128xf32>
    %cst_224 = arith.constant 1.000000e+00 : f32
    %914 = vector.broadcast %cst_224 : f32 to vector<8x128xf32>
    %915 = arith.addf %914, %913 : vector<8x128xf32>
    %916 = arith.divf %914, %915 : vector<8x128xf32>
    %917 = vector.extract_strided_slice %896 {offsets = [0, 256], sizes = [8, 128], strides = [1, 1]} : vector<8x384xf32> to vector<8x128xf32>
    %918 = vector.extract_strided_slice %900 {offsets = [0, 256], sizes = [8, 128], strides = [1, 1]} : vector<8x384xf32> to vector<8x128xf32>
    %919 = arith.mulf %908, %918 : vector<8x128xf32>
    %920 = arith.addf %917, %919 : vector<8x128xf32>
    %921 = math.tanh %920 : vector<8x128xf32>
    %cst_225 = arith.constant 1.000000e+00 : f32
    %922 = vector.broadcast %cst_225 : f32 to vector<8x128xf32>
    %923 = arith.subf %922, %916 : vector<8x128xf32>
    %924 = arith.mulf %923, %921 : vector<8x128xf32>
    %925 = arith.mulf %916, %867 : vector<8x128xf32>
    %926 = arith.addf %924, %925 : vector<8x128xf32>
    %cst_226 = arith.constant 0.000000e+00 : f32
    %927 = vector.broadcast %cst_226 : f32 to vector<8x128xf32>
    %928 = arith.maximumf %926, %927 : vector<8x128xf32>
    %929 = arith.truncf %928 : vector<8x128xf32> to vector<8x128xbf16>
    %cst_227 = arith.constant dense<0.000000e+00> : vector<8x128xf32>
    %930 = tpu.matmul %929, %823, %cst_227 {dimension_numbers = #tpu.dot_dimension_numbers<[1], [0], [0], [1], [0, 0, 1, 1], [], []>} : vector<8x128xbf16>, vector<128x128xbf16>, vector<8x128xf32> -> vector<8x128xf32>
    %931 = vector.broadcast %824 : vector<1x128xf32> to vector<8x128xf32>
    %932 = arith.addf %930, %931 : vector<8x128xf32>
    %c2_228 = arith.constant 2 : index
    %c0_229 = arith.constant 0 : index
    %c0_230 = arith.constant 0 : index
    %933 = vector.load %arg14[%c2_228, %c0_229, %c0_230] : memref<4x8x128xf32, #tpu.memory_space<vmem>>, vector<1x8x128xf32>
    %934 = vector.shape_cast %933 : vector<1x8x128xf32> to vector<8x128xf32>
    %935 = vector.shape_cast %932 : vector<8x128xf32> to vector<1x8x128xf32>
    tpu.vector_store %arg14[%c2_228, %c0_229, %c0_230], %935 {strides = array<i32>} : memref<4x8x128xf32, #tpu.memory_space<vmem>>, vector<1x8x128xf32>,
    %cst_231 = arith.constant 0xFF800000 : f32
    %936 = vector.broadcast %cst_231 : f32 to vector<8x128xf32>
    %937 = arith.select %828, %932, %936 : vector<8x128xi1>, vector<8x128xf32>
    %cst_232 = arith.constant dense<0xFF800000> : vector<8xf32>
    %938 = vector.multi_reduction <maximumf>, %937, %cst_232 [1] : vector<8x128xf32> to vector<8xf32>
    %939 = vector.shape_cast %938 : vector<8xf32> to vector<8x1xf32>
    %940 = vector.broadcast %939 : vector<8x1xf32> to vector<8x128xf32>
    %941 = arith.cmpf oeq, %937, %940 : vector<8x128xf32>
    %c128_i32_233 = arith.constant 128 : i32
    %942 = vector.broadcast %c128_i32_233 : i32 to vector<8x128xi32>
    %943 = arith.select %941, %826, %942 : vector<8x128xi1>, vector<8x128xi32>
    %cst_234 = arith.constant dense<2147483647> : vector<8xi32>
    %944 = vector.multi_reduction <minsi>, %943, %cst_234 [1] : vector<8x128xi32> to vector<8xi32>
    %945 = vector.shape_cast %944 : vector<8xi32> to vector<8x1xi32>
    %946 = vector.broadcast %945 : vector<8x1xi32> to vector<8x128xi32>
    %947 = arith.cmpi eq, %826, %946 : vector<8x128xi32>
    %948 = arith.extui %947 : vector<8x128xi1> to vector<8x128xi32>
    %949 = arith.sitofp %948 : vector<8x128xi32> to vector<8x128xf32>
    %950 = arith.truncf %949 : vector<8x128xf32> to vector<8x128xbf16>
    %cst_235 = arith.constant dense<0.000000e+00> : vector<8x128xf32>
    %951 = tpu.matmul %950, %825, %cst_235 {dimension_numbers = #tpu.dot_dimension_numbers<[1], [0], [0], [1], [0, 0, 1, 1], [], []>} : vector<8x128xbf16>, vector<128x128xbf16>, vector<8x128xf32> -> vector<8x128xf32>
    %952 = arith.truncf %951 : vector<8x128xf32> to vector<8x128xbf16>
    %cst_236 = arith.constant dense<0.000000e+00> : vector<8x384xf32>
    %953 = tpu.matmul %952, %819, %cst_236 {dimension_numbers = #tpu.dot_dimension_numbers<[1], [0], [0], [1], [0, 0, 1, 1], [], []>} : vector<8x128xbf16>, vector<128x384xbf16>, vector<8x384xf32> -> vector<8x384xf32>
    %954 = vector.broadcast %821 : vector<1x384xf32> to vector<8x384xf32>
    %955 = arith.addf %953, %954 : vector<8x384xf32>
    %956 = arith.truncf %926 : vector<8x128xf32> to vector<8x128xbf16>
    %cst_237 = arith.constant dense<0.000000e+00> : vector<8x384xf32>
    %957 = tpu.matmul %956, %820, %cst_237 {dimension_numbers = #tpu.dot_dimension_numbers<[1], [0], [0], [1], [0, 0, 1, 1], [], []>} : vector<8x128xbf16>, vector<128x384xbf16>, vector<8x384xf32> -> vector<8x384xf32>
    %958 = vector.broadcast %822 : vector<1x384xf32> to vector<8x384xf32>
    %959 = arith.addf %957, %958 : vector<8x384xf32>
    %960 = vector.extract_strided_slice %955 {offsets = [0, 0], sizes = [8, 128], strides = [1, 1]} : vector<8x384xf32> to vector<8x128xf32>
    %961 = vector.extract_strided_slice %959 {offsets = [0, 0], sizes = [8, 128], strides = [1, 1]} : vector<8x384xf32> to vector<8x128xf32>
    %962 = arith.addf %960, %961 : vector<8x128xf32>
    %963 = arith.negf %962 : vector<8x128xf32>
    %964 = math.exp %963 : vector<8x128xf32>
    %cst_238 = arith.constant 1.000000e+00 : f32
    %965 = vector.broadcast %cst_238 : f32 to vector<8x128xf32>
    %966 = arith.addf %965, %964 : vector<8x128xf32>
    %967 = arith.divf %965, %966 : vector<8x128xf32>
    %968 = vector.extract_strided_slice %955 {offsets = [0, 128], sizes = [8, 128], strides = [1, 1]} : vector<8x384xf32> to vector<8x128xf32>
    %969 = vector.extract_strided_slice %959 {offsets = [0, 128], sizes = [8, 128], strides = [1, 1]} : vector<8x384xf32> to vector<8x128xf32>
    %970 = arith.addf %968, %969 : vector<8x128xf32>
    %971 = arith.negf %970 : vector<8x128xf32>
    %972 = math.exp %971 : vector<8x128xf32>
    %cst_239 = arith.constant 1.000000e+00 : f32
    %973 = vector.broadcast %cst_239 : f32 to vector<8x128xf32>
    %974 = arith.addf %973, %972 : vector<8x128xf32>
    %975 = arith.divf %973, %974 : vector<8x128xf32>
    %976 = vector.extract_strided_slice %955 {offsets = [0, 256], sizes = [8, 128], strides = [1, 1]} : vector<8x384xf32> to vector<8x128xf32>
    %977 = vector.extract_strided_slice %959 {offsets = [0, 256], sizes = [8, 128], strides = [1, 1]} : vector<8x384xf32> to vector<8x128xf32>
    %978 = arith.mulf %967, %977 : vector<8x128xf32>
    %979 = arith.addf %976, %978 : vector<8x128xf32>
    %980 = math.tanh %979 : vector<8x128xf32>
    %cst_240 = arith.constant 1.000000e+00 : f32
    %981 = vector.broadcast %cst_240 : f32 to vector<8x128xf32>
    %982 = arith.subf %981, %975 : vector<8x128xf32>
    %983 = arith.mulf %982, %980 : vector<8x128xf32>
    %984 = arith.mulf %975, %926 : vector<8x128xf32>
    %985 = arith.addf %983, %984 : vector<8x128xf32>
    %cst_241 = arith.constant 0.000000e+00 : f32
    %986 = vector.broadcast %cst_241 : f32 to vector<8x128xf32>
    %987 = arith.maximumf %985, %986 : vector<8x128xf32>
    %988 = arith.truncf %987 : vector<8x128xf32> to vector<8x128xbf16>
    %cst_242 = arith.constant dense<0.000000e+00> : vector<8x128xf32>
    %989 = tpu.matmul %988, %823, %cst_242 {dimension_numbers = #tpu.dot_dimension_numbers<[1], [0], [0], [1], [0, 0, 1, 1], [], []>} : vector<8x128xbf16>, vector<128x128xbf16>, vector<8x128xf32> -> vector<8x128xf32>
    %990 = vector.broadcast %824 : vector<1x128xf32> to vector<8x128xf32>
    %991 = arith.addf %989, %990 : vector<8x128xf32>
    %c3_243 = arith.constant 3 : index
    %c0_244 = arith.constant 0 : index
    %c0_245 = arith.constant 0 : index
    %992 = vector.load %arg14[%c3_243, %c0_244, %c0_245] : memref<4x8x128xf32, #tpu.memory_space<vmem>>, vector<1x8x128xf32>
    %993 = vector.shape_cast %992 : vector<1x8x128xf32> to vector<8x128xf32>
    %994 = vector.shape_cast %991 : vector<8x128xf32> to vector<1x8x128xf32>
    tpu.vector_store %arg14[%c3_243, %c0_244, %c0_245], %994 {strides = array<i32>} : memref<4x8x128xf32, #tpu.memory_space<vmem>>, vector<1x8x128xf32>,
    return
  }
  func.func @transform_0(%arg0: i32) -> (i32, i32, i32) {
    %c0_i32 = arith.constant 0 : i32
    %c0_i32_0 = arith.constant 0 : i32
    %c0_i32_1 = arith.constant 0 : i32
    return %arg0, %c0_i32, %c0_i32_0 : i32, i32, i32
  }
  func.func @transform_1(%arg0: i32) -> (i32, i32) {
    %c0_i32 = arith.constant 0 : i32
    %c0_i32_0 = arith.constant 0 : i32
    return %arg0, %c0_i32 : i32, i32
  }
  func.func @transform_2(%arg0: i32) -> (i32, i32, i32) {
    %c0_i32 = arith.constant 0 : i32
    %c0_i32_0 = arith.constant 0 : i32
    %c0_i32_1 = arith.constant 0 : i32
    %c0_i32_2 = arith.constant 0 : i32
    return %c0_i32, %c0_i32_0, %c0_i32_1 : i32, i32, i32
  }
  func.func @transform_3(%arg0: i32) -> (i32, i32, i32) {
    %c0_i32 = arith.constant 0 : i32
    %c0_i32_0 = arith.constant 0 : i32
    %c0_i32_1 = arith.constant 0 : i32
    %c0_i32_2 = arith.constant 0 : i32
    return %c0_i32, %c0_i32_0, %c0_i32_1 : i32, i32, i32
  }
  func.func @transform_4(%arg0: i32) -> (i32, i32, i32) {
    %c0_i32 = arith.constant 0 : i32
    %c0_i32_0 = arith.constant 0 : i32
    %c0_i32_1 = arith.constant 0 : i32
    %c0_i32_2 = arith.constant 0 : i32
    return %c0_i32, %c0_i32_0, %c0_i32_1 : i32, i32, i32
  }
  func.func @transform_5(%arg0: i32) -> (i32, i32, i32) {
    %c0_i32 = arith.constant 0 : i32
    %c0_i32_0 = arith.constant 0 : i32
    %c0_i32_1 = arith.constant 0 : i32
    %c0_i32_2 = arith.constant 0 : i32
    return %c0_i32, %c0_i32_0, %c0_i32_1 : i32, i32, i32
  }
  func.func @transform_6(%arg0: i32) -> (i32, i32) {
    %c0_i32 = arith.constant 0 : i32
    %c0_i32_0 = arith.constant 0 : i32
    %c0_i32_1 = arith.constant 0 : i32
    return %c0_i32, %c0_i32_0 : i32, i32
  }
  func.func @transform_7(%arg0: i32) -> (i32, i32) {
    %c0_i32 = arith.constant 0 : i32
    %c0_i32_0 = arith.constant 0 : i32
    %c0_i32_1 = arith.constant 0 : i32
    return %c0_i32, %c0_i32_0 : i32, i32
  }
  func.func @transform_8(%arg0: i32) -> (i32, i32) {
    %c0_i32 = arith.constant 0 : i32
    %c0_i32_0 = arith.constant 0 : i32
    %c0_i32_1 = arith.constant 0 : i32
    return %c0_i32, %c0_i32_0 : i32, i32
  }
  func.func @transform_9(%arg0: i32) -> (i32, i32) {
    %c0_i32 = arith.constant 0 : i32
    %c0_i32_0 = arith.constant 0 : i32
    %c0_i32_1 = arith.constant 0 : i32
    return %c0_i32, %c0_i32_0 : i32, i32
  }
  func.func @transform_10(%arg0: i32) -> (i32, i32) {
    %c0_i32 = arith.constant 0 : i32
    %c0_i32_0 = arith.constant 0 : i32
    %c0_i32_1 = arith.constant 0 : i32
    return %c0_i32, %c0_i32_0 : i32, i32
  }
  func.func @transform_11(%arg0: i32) -> (i32, i32) {
    %c0_i32 = arith.constant 0 : i32
    %c0_i32_0 = arith.constant 0 : i32
    %c0_i32_1 = arith.constant 0 : i32
    return %c0_i32, %c0_i32_0 : i32, i32
  }
  func.func @transform_12(%arg0: i32) -> (i32, i32) {
    %c0_i32 = arith.constant 0 : i32
    %c0_i32_0 = arith.constant 0 : i32
    %c0_i32_1 = arith.constant 0 : i32
    return %c0_i32, %c0_i32_0 : i32, i32
  }
  func.func @transform_13(%arg0: i32) -> (i32, i32, i32) {
    %c0_i32 = arith.constant 0 : i32
    %c0_i32_0 = arith.constant 0 : i32
    %c0_i32_1 = arith.constant 0 : i32
    return %c0_i32, %arg0, %c0_i32_0 : i32, i32, i32
  }
}

</mosaic_0001>

<llo_original>
// kernel: tpu_custom_call.1
$region0: #{tpu_custom_call.1}
  #allocation0 [shape = 'u32[]', space=smem, size = 0x4, offset = 0x4, fixed_abs, tag = 'smem constant byte address 0x4 - core index']
  #allocation1 [shape = 'u32[144,128]{1,0:T(1,128)}', space=vmem, size = 0x12000, scoped, tag = 'internal scratch']
  #allocation2 [shape = 'f32[48,128]{1,0:T(8,128)}', space=vmem, size = 0x6000, scoped, tag = 'scratch operand']
  %s0 = inlined_call_operand.hbm [shape: f32[1,48,128], index: 0, kind: input, shape index: {}]
  %s1 = inlined_call_operand.hbm [shape: f32[8,128], index: 1, kind: input, shape index: {}]
  %s2 = inlined_call_operand.hbm [shape: bf16[4,128,384], index: 2, kind: input, shape index: {}]
  %s3 = inlined_call_operand.hbm [shape: bf16[4,128,384], index: 3, kind: input, shape index: {}]
  %s4 = inlined_call_operand.hbm [shape: f32[4,1,384], index: 4, kind: input, shape index: {}]
  %s5 = inlined_call_operand.hbm [shape: f32[4,1,384], index: 5, kind: input, shape index: {}]
  %s6 = inlined_call_operand.hbm [shape: bf16[128,384], index: 6, kind: input, shape index: {}]
  %s7 = inlined_call_operand.hbm [shape: bf16[128,384], index: 7, kind: input, shape index: {}]
  %s8 = inlined_call_operand.hbm [shape: f32[1,384], index: 8, kind: input, shape index: {}]
  %s9 = inlined_call_operand.hbm [shape: f32[1,384], index: 9, kind: input, shape index: {}]
  %s10 = inlined_call_operand.hbm [shape: bf16[128,128], index: 10, kind: input, shape index: {}]
  %s11 = inlined_call_operand.hbm [shape: f32[1,128], index: 11, kind: input, shape index: {}]
  %s12 = inlined_call_operand.hbm [shape: bf16[128,128], index: 12, kind: input, shape index: {}]
  %s13 = inlined_call_operand.hbm [shape: f32[4,8,128], index: 13, kind: output, shape index: {}]
  %s14 = sld [smem:[#allocation0]]
  $region114: #{tpu_custom_call.1} parent=0
    _
  %s16 = ssub.s32 1, %s14
  %s17 = scalar_select 0, %s16, %s14
  $region1: #{tpu_custom_call.1} parent=0
    #allocation3 [shape = 'u8[24576]{0}', space=vmem, size = 0x6000, scoped, tag = 'input window, operand 0, single buffered']
    #allocation4 [shape = 's32[1]{0}', space=sflag, size = 0x4, scoped, tag = 'scoped memory for tpu_custom_call.1']
    #allocation5 [shape = 's32[1]{0}', space=sflag, size = 0x4, scoped, tag = 'scoped memory for tpu_custom_call.1']
    #allocation6 [shape = 'u8[4096]{0}', space=vmem, size = 0x1000, scoped, tag = 'input window, operand 1, single buffered']
    #allocation7 [shape = 's32[1]{0}', space=sflag, size = 0x4, scoped, tag = 'scoped memory for tpu_custom_call.1']
    #allocation8 [shape = 'u8[393216]{0}', space=vmem, size = 0x60000, scoped, tag = 'input window, operand 2, single buffered']
    #allocation9 [shape = 'u8[393216]{0}', space=vmem, size = 0x60000, scoped, tag = 'input window, operand 3, single buffered']
    #allocation10 [shape = 's32[1]{0}', space=sflag, size = 0x4, scoped, tag = 'scoped memory for tpu_custom_call.1']
    #allocation11 [shape = 'u8[6144]{0}', space=vmem, size = 0x1800, scoped, tag = 'input window, operand 4, single buffered']
    #allocation12 [shape = 'u8[6144]{0}', space=vmem, size = 0x1800, scoped, tag = 'input window, operand 5, single buffered']
    #allocation13 [shape = 's32[1]{0}', space=sflag, size = 0x4, scoped, tag = 'scoped memory for tpu_custom_call.1']
    #allocation14 [shape = 'u8[98304]{0}', space=vmem, size = 0x18000, scoped, tag = 'input window, operand 6, single buffered']
    #allocation15 [shape = 'u8[98304]{0}', space=vmem, size = 0x18000, scoped, tag = 'input window, operand 7, single buffered']
    #allocation16 [shape = 's32[1]{0}', space=sflag, size = 0x4, scoped, tag = 'scoped memory for tpu_custom_call.1']
    #allocation17 [shape = 'u8[1536]{0}', space=vmem, size = 0x800, scoped, tag = 'input window, operand 8, single buffered']
    #allocation18 [shape = 'u8[1536]{0}', space=vmem, size = 0x800, scoped, tag = 'input window, operand 9, single buffered']
    #allocation19 [shape = 's32[1]{0}', space=sflag, size = 0x4, scoped, tag = 'scoped memory for tpu_custom_call.1']
    #allocation20 [shape = 'u8[32768]{0}', space=vmem, size = 0x8000, scoped, tag = 'input window, operand 10, single buffered']
    #allocation21 [shape = 'u8[512]{0}', space=vmem, size = 0x400, scoped, tag = 'input window, operand 11, single buffered']
    #allocation22 [shape = 's32[1]{0}', space=sflag, size = 0x4, scoped, tag = 'scoped memory for tpu_custom_call.1']
    #allocation23 [shape = 'u8[32768]{0}', space=vmem, size = 0x8000, scoped, tag = 'input window, operand 12, single buffered']
    #allocation24 [shape = 'u8[16384]{0}', space=vmem, size = 0x4000, scoped, tag = 'output window, operand 0, single buffered']
    %18 = vsyncpa [#allocation4], 0
    %19 = vsyncpa [#allocation7], 0
    %20 = vsyncpa [#allocation10], 0
    %21 = vsyncpa [#allocation13], 0
    %22 = vsyncpa [#allocation16], 0
    %23 = vsyncpa [#allocation19], 0
    %24 = vsyncpa [#allocation22], 0
    %25 = vsyncpa [#allocation5], 0
    // Predicated region
    $region2: #{tpu_custom_call.1} parent=1 // pred_check
      _
    $region3: #{tpu_custom_call.1} parent=1 // pred_check_branch
      %27 = sbr.rel (0) target = $region5
    $region4: #{tpu_custom_call.1} parent=1 // pred_region
      %s29 = ssub.s32 768, 768
      %30 = vsyncadd [#allocation4], %s29
      %s31 = sshll.u32 [#allocation3], 4
      %s32 = int_to_ptr.vmem [resolvable:$true] %s31
      %37 = dma.hbm_to_vmem [thread:$0]  %s0, 768, %s32, [#allocation4], 128, 128, 8
    $region5: #{tpu_custom_call.1} parent=1 // pred_fallthru
      _
    // Predicated region
    $region6: #{tpu_custom_call.1} parent=1 // pred_check
      _
    $region7: #{tpu_custom_call.1} parent=1 // pred_check_branch
      %39 = sbr.rel (0) target = $region9
    $region8: #{tpu_custom_call.1} parent=1 // pred_region
      %s41 = ssub.s32 128, 128
      %42 = vsyncadd [#allocation7], %s41
      %s44 = sshll.u32 [#allocation6], 4
      %s45 = int_to_ptr.vmem [resolvable:$true] %s44
      %47 = dma.hbm_to_vmem [thread:$0]  %s1, 128, %s45, [#allocation7]
    $region9: #{tpu_custom_call.1} parent=1 // pred_fallthru
      _
    // Predicated region
    $region10: #{tpu_custom_call.1} parent=1 // pred_check
      _
    $region11: #{tpu_custom_call.1} parent=1 // pred_check_branch
      %49 = sbr.rel (0) target = $region13
    $region12: #{tpu_custom_call.1} parent=1 // pred_region
      %s51 = ssub.s32 12288, 12288
      %52 = vsyncadd [#allocation7], %s51
      %s53 = sshll.u32 [#allocation8], 4
      %s54 = int_to_ptr.vmem [resolvable:$true] %s53
      %59 = dma.hbm_to_vmem [thread:$0]  %s2, 12288, %s54, [#allocation7], 192, 192, 12
    $region13: #{tpu_custom_call.1} parent=1 // pred_fallthru
      _
    // Predicated region
    $region14: #{tpu_custom_call.1} parent=1 // pred_check
      _
    $region15: #{tpu_custom_call.1} parent=1 // pred_check_branch
      %61 = sbr.rel (0) target = $region17
    $region16: #{tpu_custom_call.1} parent=1 // pred_region
      %s63 = ssub.s32 12288, 12288
      %64 = vsyncadd [#allocation10], %s63
      %s65 = sshll.u32 [#allocation9], 4
      %s66 = int_to_ptr.vmem [resolvable:$true] %s65
      %71 = dma.hbm_to_vmem [thread:$0]  %s3, 12288, %s66, [#allocation10], 192, 192, 12
    $region17: #{tpu_custom_call.1} parent=1 // pred_fallthru
      _
    // Predicated region
    $region18: #{tpu_custom_call.1} parent=1 // pred_check
      _
    $region19: #{tpu_custom_call.1} parent=1 // pred_check_branch
      %73 = sbr.rel (0) target = $region21
    $region20: #{tpu_custom_call.1} parent=1 // pred_region
      %s75 = ssub.s32 192, 192
      %76 = vsyncadd [#allocation10], %s75
      %s77 = sshll.u32 [#allocation11], 4
      %s78 = int_to_ptr.vmem [resolvable:$true] %s77
      %83 = dma.hbm_to_vmem [thread:$0]  %s4, 192, %s78, [#allocation10], 48, 48, 3
    $region21: #{tpu_custom_call.1} parent=1 // pred_fallthru
      _
    // Predicated region
    $region22: #{tpu_custom_call.1} parent=1 // pred_check
      _
    $region23: #{tpu_custom_call.1} parent=1 // pred_check_branch
      %85 = sbr.rel (0) target = $region25
    $region24: #{tpu_custom_call.1} parent=1 // pred_region
      %s87 = ssub.s32 192, 192
      %88 = vsyncadd [#allocation13], %s87
      %s89 = sshll.u32 [#allocation12], 4
      %s90 = int_to_ptr.vmem [resolvable:$true] %s89
      %95 = dma.hbm_to_vmem [thread:$0]  %s5, 192, %s90, [#allocation13], 48, 48, 3
    $region25: #{tpu_custom_call.1} parent=1 // pred_fallthru
      _
    // Predicated region
    $region26: #{tpu_custom_call.1} parent=1 // pred_check
      _
    $region27: #{tpu_custom_call.1} parent=1 // pred_check_branch
      %97 = sbr.rel (0) target = $region29
    $region28: #{tpu_custom_call.1} parent=1 // pred_region
      %s99 = ssub.s32 3072, 3072
      %100 = vsyncadd [#allocation13], %s99
      %s101 = sshll.u32 [#allocation14], 4
      %s102 = int_to_ptr.vmem [resolvable:$true] %s101
      %107 = dma.hbm_to_vmem [thread:$0]  %s6, 3072, %s102, [#allocation13], 192, 192, 12
    $region29: #{tpu_custom_call.1} parent=1 // pred_fallthru
      _
    // Predicated region
    $region30: #{tpu_custom_call.1} parent=1 // pred_check
      _
    $region31: #{tpu_custom_call.1} parent=1 // pred_check_branch
      %109 = sbr.rel (0) target = $region33
    $region32: #{tpu_custom_call.1} parent=1 // pred_region
      %s111 = ssub.s32 3072, 3072
      %112 = vsyncadd [#allocation16], %s111
      %s113 = sshll.u32 [#allocation15], 4
      %s114 = int_to_ptr.vmem [resolvable:$true] %s113
      %119 = dma.hbm_to_vmem [thread:$0]  %s7, 3072, %s114, [#allocation16], 192, 192, 12
    $region33: #{tpu_custom_call.1} parent=1 // pred_fallthru
      _
    // Predicated region
    $region34: #{tpu_custom_call.1} parent=1 // pred_check
      _
    $region35: #{tpu_custom_call.1} parent=1 // pred_check_branch
      %121 = sbr.rel (0) target = $region37
    $region36: #{tpu_custom_call.1} parent=1 // pred_region
      %s123 = ssub.s32 48, 48
      %124 = vsyncadd [#allocation16], %s123
      %s126 = sshll.u32 [#allocation17], 4
      %s127 = int_to_ptr.vmem [resolvable:$true] %s126
      %129 = dma.hbm_to_vmem [thread:$0]  %s8, 48, %s127, [#allocation16]
    $region37: #{tpu_custom_call.1} parent=1 // pred_fallthru
      _
    // Predicated region
    $region38: #{tpu_custom_call.1} parent=1 // pred_check
      _
    $region39: #{tpu_custom_call.1} parent=1 // pred_check_branch
      %131 = sbr.rel (0) target = $region41
    $region40: #{tpu_custom_call.1} parent=1 // pred_region
      %s133 = ssub.s32 48, 48
      %134 = vsyncadd [#allocation19], %s133
      %s136 = sshll.u32 [#allocation18], 4
      %s137 = int_to_ptr.vmem [resolvable:$true] %s136
      %139 = dma.hbm_to_vmem [thread:$0]  %s9, 48, %s137, [#allocation19]
    $region41: #{tpu_custom_call.1} parent=1 // pred_fallthru
      _
    // Predicated region
    $region42: #{tpu_custom_call.1} parent=1 // pred_check
      _
    $region43: #{tpu_custom_call.1} parent=1 // pred_check_branch
      %141 = sbr.rel (0) target = $region45
    $region44: #{tpu_custom_call.1} parent=1 // pred_region
      %s143 = ssub.s32 1024, 1024
      %144 = vsyncadd [#allocation19], %s143
      %s145 = sshll.u32 [#allocation20], 4
      %s146 = int_to_ptr.vmem [resolvable:$true] %s145
      %151 = dma.hbm_to_vmem [thread:$0]  %s10, 1024, %s146, [#allocation19], 64, 64, 4
    $region45: #{tpu_custom_call.1} parent=1 // pred_fallthru
      _
    // Predicated region
    $region46: #{tpu_custom_call.1} parent=1 // pred_check
      _
    $region47: #{tpu_custom_call.1} parent=1 // pred_check_branch
      %153 = sbr.rel (0) target = $region49
    $region48: #{tpu_custom_call.1} parent=1 // pred_region
      %s155 = ssub.s32 16, 16
      %156 = vsyncadd [#allocation22], %s155
      %s158 = sshll.u32 [#allocation21], 4
      %s159 = int_to_ptr.vmem [resolvable:$true] %s158
      %161 = dma.hbm_to_vmem [thread:$0]  %s11, 16, %s159, [#allocation22]
    $region49: #{tpu_custom_call.1} parent=1 // pred_fallthru
      _
    // Predicated region
    $region50: #{tpu_custom_call.1} parent=1 // pred_check
      _
    $region51: #{tpu_custom_call.1} parent=1 // pred_check_branch
      %163 = sbr.rel (0) target = $region53
    $region52: #{tpu_custom_call.1} parent=1 // pred_region
      %s165 = ssub.s32 1024, 1024
      %166 = vsyncadd [#allocation22], %s165
      %s167 = sshll.u32 [#allocation23], 4
      %s168 = int_to_ptr.vmem [resolvable:$true] %s167
      %173 = dma.hbm_to_vmem [thread:$0]  %s12, 1024, %s168, [#allocation22], 64, 64, 4
    $region53: #{tpu_custom_call.1} parent=1 // pred_fallthru
      _
    // Predicated region
    $region54: #{tpu_custom_call.1} parent=1 // pred_check
      _
    $region55: #{tpu_custom_call.1} parent=1 // pred_check_branch
      %175 = sbr.rel (0) target = $region57
    $region56: #{tpu_custom_call.1} parent=1 // pred_region
      %176 = dma.done [#allocation4], 768
    $region57: #{tpu_custom_call.1} parent=1 // pred_fallthru
      _
    // Predicated region
    $region58: #{tpu_custom_call.1} parent=1 // pred_check
      _
    $region59: #{tpu_custom_call.1} parent=1 // pred_check_branch
      %178 = sbr.rel (0) target = $region61
    $region60: #{tpu_custom_call.1} parent=1 // pred_region
      %179 = dma.done [#allocation7], 128
    $region61: #{tpu_custom_call.1} parent=1 // pred_fallthru
      _
    // Predicated region
    $region62: #{tpu_custom_call.1} parent=1 // pred_check
      _
    $region63: #{tpu_custom_call.1} parent=1 // pred_check_branch
      %181 = sbr.rel (0) target = $region65
    $region64: #{tpu_custom_call.1} parent=1 // pred_region
      %182 = dma.done [#allocation7], 12288
    $region65: #{tpu_custom_call.1} parent=1 // pred_fallthru
      _
    // Predicated region
    $region66: #{tpu_custom_call.1} parent=1 // pred_check
      _
    $region67: #{tpu_custom_call.1} parent=1 // pred_check_branch
      %184 = sbr.rel (0) target = $region69
    $region68: #{tpu_custom_call.1} parent=1 // pred_region
      %185 = dma.done [#allocation10], 12288
    $region69: #{tpu_custom_call.1} parent=1 // pred_fallthru
      _
    // Predicated region
    $region70: #{tpu_custom_call.1} parent=1 // pred_check
      _
    $region71: #{tpu_custom_call.1} parent=1 // pred_check_branch
      %187 = sbr.rel (0) target = $region73
    $region72: #{tpu_custom_call.1} parent=1 // pred_region
      %188 = dma.done [#allocation10], 192
    $region73: #{tpu_custom_call.1} parent=1 // pred_fallthru
      _
    // Predicated region
    $region74: #{tpu_custom_call.1} parent=1 // pred_check
      _
    $region75: #{tpu_custom_call.1} parent=1 // pred_check_branch
      %190 = sbr.rel (0) target = $region77
    $region76: #{tpu_custom_call.1} parent=1 // pred_region
      %191 = dma.done [#allocation13], 192
    $region77: #{tpu_custom_call.1} parent=1 // pred_fallthru
      _
    // Predicated region
    $region78: #{tpu_custom_call.1} parent=1 // pred_check
      _
    $region79: #{tpu_custom_call.1} parent=1 // pred_check_branch
      %193 = sbr.rel (0) target = $region81
    $region80: #{tpu_custom_call.1} parent=1 // pred_region
      %194 = dma.done [#allocation13], 3072
    $region81: #{tpu_custom_call.1} parent=1 // pred_fallthru
      _
    // Predicated region
    $region82: #{tpu_custom_call.1} parent=1 // pred_check
      _
    $region83: #{tpu_custom_call.1} parent=1 // pred_check_branch
      %196 = sbr.rel (0) target = $region85
    $region84: #{tpu_custom_call.1} parent=1 // pred_region
      %197 = dma.done [#allocation16], 3072
    $region85: #{tpu_custom_call.1} parent=1 // pred_fallthru
      _
    // Predicated region
    $region86: #{tpu_custom_call.1} parent=1 // pred_check
      _
    $region87: #{tpu_custom_call.1} parent=1 // pred_check_branch
      %199 = sbr.rel (0) target = $region89
    $region88: #{tpu_custom_call.1} parent=1 // pred_region
      %200 = dma.done [#allocation16], 48
    $region89: #{tpu_custom_call.1} parent=1 // pred_fallthru
      _
    // Predicated region
    $region90: #{tpu_custom_call.1} parent=1 // pred_check
      _
    $region91: #{tpu_custom_call.1} parent=1 // pred_check_branch
      %202 = sbr.rel (0) target = $region93
    $region92: #{tpu_custom_call.1} parent=1 // pred_region
      %203 = dma.done [#allocation19], 48
    $region93: #{tpu_custom_call.1} parent=1 // pred_fallthru
      _
    // Predicated region
    $region94: #{tpu_custom_call.1} parent=1 // pred_check
      _
    $region95: #{tpu_custom_call.1} parent=1 // pred_check_branch
      %205 = sbr.rel (0) target = $region97
    $region96: #{tpu_custom_call.1} parent=1 // pred_region
      %206 = dma.done [#allocation19], 1024
    $region97: #{tpu_custom_call.1} parent=1 // pred_fallthru
      _
    // Predicated region
    $region98: #{tpu_custom_call.1} parent=1 // pred_check
      _
    $region99: #{tpu_custom_call.1} parent=1 // pred_check_branch
      %208 = sbr.rel (0) target = $region101
    $region100: #{tpu_custom_call.1} parent=1 // pred_region
      %209 = dma.done [#allocation22], 16
    $region101: #{tpu_custom_call.1} parent=1 // pred_fallthru
      _
    // Predicated region
    $region102: #{tpu_custom_call.1} parent=1 // pred_check
      _
    $region103: #{tpu_custom_call.1} parent=1 // pred_check_branch
      %211 = sbr.rel (0) target = $region105
    $region104: #{tpu_custom_call.1} parent=1 // pred_region
      %212 = dma.done [#allocation22], 1024
    $region105: #{tpu_custom_call.1} parent=1 // pred_fallthru
      _
    %v214 = vld [vmem:[#allocation3] sm:$0xff]
    %v215 = vld [vmem:[#allocation3 + $0x8] sm:$0xff]
    %v216 = vld [vmem:[#allocation3 + $0x10] sm:$0xff]
    %v217 = vld [vmem:[#allocation3 + $0x18] sm:$0xff]
    %v218 = vld [vmem:[#allocation3 + $0x20] sm:$0xff]
    %v219 = vld [vmem:[#allocation3 + $0x28] sm:$0xff]
    %v220 = vld [vmem:[#allocation8] sm:$0xff]
    %v221 = vld [vmem:[#allocation8 + $0x8] sm:$0xf]
    %v222 = vld [vmem:[#allocation8 + $0xc] sm:$0xff]
    %v223 = vld [vmem:[#allocation8 + $0x14] sm:$0xf]
    %v224 = vld [vmem:[#allocation8 + $0x18] sm:$0xff]
    %v225 = vld [vmem:[#allocation8 + $0x20] sm:$0xf]
    %v226 = vld [vmem:[#allocation8 + $0x24] sm:$0xff]
    %v227 = vld [vmem:[#allocation8 + $0x2c] sm:$0xf]
    %v228 = vld [vmem:[#allocation8 + $0x30] sm:$0xff]
    %v229 = vld [vmem:[#allocation8 + $0x38] sm:$0xf]
    %v230 = vld [vmem:[#allocation8 + $0x3c] sm:$0xff]
    %v231 = vld [vmem:[#allocation8 + $0x44] sm:$0xf]
    %v232 = vld [vmem:[#allocation8 + $0x48] sm:$0xff]
    %v233 = vld [vmem:[#allocation8 + $0x50] sm:$0xf]
    %v234 = vld [vmem:[#allocation8 + $0x54] sm:$0xff]
    %v235 = vld [vmem:[#allocation8 + $0x5c] sm:$0xf]
    %v236 = vld [vmem:[#allocation8 + $0x60] sm:$0xff]
    %v237 = vld [vmem:[#allocation8 + $0x68] sm:$0xf]
    %v238 = vld [vmem:[#allocation8 + $0x6c] sm:$0xff]
    %v239 = vld [vmem:[#allocation8 + $0x74] sm:$0xf]
    %v240 = vld [vmem:[#allocation8 + $0x78] sm:$0xff]
    %v241 = vld [vmem:[#allocation8 + $0x80] sm:$0xf]
    %v242 = vld [vmem:[#allocation8 + $0x84] sm:$0xff]
    %v243 = vld [vmem:[#allocation8 + $0x8c] sm:$0xf]
    %v244 = vld [vmem:[#allocation8 + $0x90] sm:$0xff]
    %v245 = vld [vmem:[#allocation8 + $0x98] sm:$0xf]
    %v246 = vld [vmem:[#allocation8 + $0x9c] sm:$0xff]
    %v247 = vld [vmem:[#allocation8 + $0xa4] sm:$0xf]
    %v248 = vld [vmem:[#allocation8 + $0xa8] sm:$0xff]
    %v249 = vld [vmem:[#allocation8 + $0xb0] sm:$0xf]
    %v250 = vld [vmem:[#allocation8 + $0xb4] sm:$0xff]
    %v251 = vld [vmem:[#allocation8 + $0xbc] sm:$0xf]
    %v252 = vld [vmem:[#allocation9] sm:$0xff]
    %v253 = vld [vmem:[#allocation9 + $0x8] sm:$0xf]
    %v254 = vld [vmem:[#allocation9 + $0xc] sm:$0xff]
    %v255 = vld [vmem:[#allocation9 + $0x14] sm:$0xf]
    %v256 = vld [vmem:[#allocation9 + $0x18] sm:$0xff]
    %v257 = vld [vmem:[#allocation9 + $0x20] sm:$0xf]
    %v258 = vld [vmem:[#allocation9 + $0x24] sm:$0xff]
    %v259 = vld [vmem:[#allocation9 + $0x2c] sm:$0xf]
    %v260 = vld [vmem:[#allocation9 + $0x30] sm:$0xff]
    %v261 = vld [vmem:[#allocation9 + $0x38] sm:$0xf]
    %v262 = vld [vmem:[#allocation9 + $0x3c] sm:$0xff]
    %v263 = vld [vmem:[#allocation9 + $0x44] sm:$0xf]
    %v264 = vld [vmem:[#allocation9 + $0x48] sm:$0xff]
    %v265 = vld [vmem:[#allocation9 + $0x50] sm:$0xf]
    %v266 = vld [vmem:[#allocation9 + $0x54] sm:$0xff]
    %v267 = vld [vmem:[#allocation9 + $0x5c] sm:$0xf]
    %v268 = vld [vmem:[#allocation9 + $0x60] sm:$0xff]
    %v269 = vld [vmem:[#allocation9 + $0x68] sm:$0xf]
    %v270 = vld [vmem:[#allocation9 + $0x6c] sm:$0xff]
    %v271 = vld [vmem:[#allocation9 + $0x74] sm:$0xf]
    %v272 = vld [vmem:[#allocation9 + $0x78] sm:$0xff]
    %v273 = vld [vmem:[#allocation9 + $0x80] sm:$0xf]
    %v274 = vld [vmem:[#allocation9 + $0x84] sm:$0xff]
    %v275 = vld [vmem:[#allocation9 + $0x8c] sm:$0xf]
    %v276 = vld [vmem:[#allocation9 + $0x90] sm:$0xff]
    %v277 = vld [vmem:[#allocation9 + $0x98] sm:$0xf]
    %v278 = vld [vmem:[#allocation9 + $0x9c] sm:$0xff]
    %v279 = vld [vmem:[#allocation9 + $0xa4] sm:$0xf]
    %v280 = vld [vmem:[#allocation9 + $0xa8] sm:$0xff]
    %v281 = vld [vmem:[#allocation9 + $0xb0] sm:$0xf]
    %v282 = vld [vmem:[#allocation9 + $0xb4] sm:$0xff]
    %v283 = vld [vmem:[#allocation9 + $0xbc] sm:$0xf]
    %v284 = vld [vmem:[#allocation11] sm:$0x7]
    %v285 = vld [vmem:[#allocation12] sm:$0x7]
    %v286 = vpack.c.bf16 %v215, %v214
    %v287 = vpack.c.bf16 %v217, %v216
    %v288 = vpack.c.bf16 %v219, %v218
    %v290 = vlaneseq
    %v291 = vshrl.u32 %v290, 7
    %v292 = vsub.s32 0, %v291
    %v293 = vrot.slane %v284, %v292
    %v294 = vlaneseq
    %v295 = vshrl.u32 %v294, 7
    %v296 = vsub.s32 1, %v295
    %v297 = vrot.slane %v284, %v296
    %v298 = vlaneseq
    %v299 = vshrl.u32 %v298, 7
    %v300 = vsub.s32 2, %v299
    %v301 = vrot.slane %v284, %v300
    %v337 = vunpack.c.l.b16 %v220
    %v338 = vunpack.c.h.b16 %v220
    %v339 = vunpack.c.l.b16 %v221
    %v340 = vunpack.c.l.b16 %v222
    %v341 = vunpack.c.h.b16 %v222
    %v342 = vunpack.c.l.b16 %v223
    %v343 = vunpack.c.l.b16 %v224
    %v344 = vunpack.c.h.b16 %v224
    %v345 = vunpack.c.l.b16 %v225
    %v346 = vunpack.c.l.b16 %v226
    %v347 = vunpack.c.h.b16 %v226
    %v348 = vunpack.c.l.b16 %v227
    %v349 = vunpack.c.l.b16 %v228
    %v350 = vunpack.c.h.b16 %v228
    %v351 = vunpack.c.l.b16 %v229
    %v352 = vunpack.c.l.b16 %v230
    %v353 = vunpack.c.h.b16 %v230
    %v354 = vunpack.c.l.b16 %v231
    %v355 = vunpack.c.l.b16 %v232
    %v356 = vunpack.c.h.b16 %v232
    %v357 = vunpack.c.l.b16 %v233
    %v358 = vunpack.c.l.b16 %v234
    %v359 = vunpack.c.h.b16 %v234
    %v360 = vunpack.c.l.b16 %v235
    %v361 = vunpack.c.l.b16 %v236
    %v362 = vunpack.c.h.b16 %v236
    %v363 = vunpack.c.l.b16 %v237
    %v364 = vunpack.c.l.b16 %v238
    %v365 = vunpack.c.h.b16 %v238
    %v366 = vunpack.c.l.b16 %v239
    %v367 = vunpack.c.l.b16 %v240
    %v368 = vunpack.c.h.b16 %v240
    %v369 = vunpack.c.l.b16 %v241
    %v370 = vunpack.c.l.b16 %v242
    %v371 = vunpack.c.h.b16 %v242
    %v372 = vunpack.c.l.b16 %v243
    %v373 = vunpack.c.l.b16 %v244
    %v374 = vunpack.c.h.b16 %v244
    %v375 = vunpack.c.l.b16 %v245
    %v376 = vunpack.c.l.b16 %v246
    %v377 = vunpack.c.h.b16 %v246
    %v378 = vunpack.c.l.b16 %v247
    %v379 = vunpack.c.l.b16 %v248
    %v380 = vunpack.c.h.b16 %v248
    %v381 = vunpack.c.l.b16 %v249
    %v382 = vunpack.c.l.b16 %v250
    %v383 = vunpack.c.h.b16 %v250
    %v384 = vunpack.c.l.b16 %v251
    %v385 = vpack.c.b16 %v340, %v337
    %v386 = vpack.c.b16 %v341, %v338
    %v387 = vpack.c.b16 %v342, %v339
    %v388 = vpack.c.b16 %v346, %v343
    %v389 = vpack.c.b16 %v347, %v344
    %v390 = vpack.c.b16 %v348, %v345
    %v391 = vpack.c.b16 %v352, %v349
    %v392 = vpack.c.b16 %v353, %v350
    %v393 = vpack.c.b16 %v354, %v351
    %v394 = vpack.c.b16 %v358, %v355
    %v395 = vpack.c.b16 %v359, %v356
    %v396 = vpack.c.b16 %v360, %v357
    %v397 = vpack.c.b16 %v364, %v361
    %v398 = vpack.c.b16 %v365, %v362
    %v399 = vpack.c.b16 %v366, %v363
    %v400 = vpack.c.b16 %v370, %v367
    %v401 = vpack.c.b16 %v371, %v368
    %v402 = vpack.c.b16 %v372, %v369
    %v403 = vpack.c.b16 %v376, %v373
    %v404 = vpack.c.b16 %v377, %v374
    %v405 = vpack.c.b16 %v378, %v375
    %v406 = vpack.c.b16 %v382, %v379
    %v407 = vpack.c.b16 %v383, %v380
    %v408 = vpack.c.b16 %v384, %v381
    %433 = vmatprep.subr.bf16.mxu0 %v386
    %434 = vmatpush1.bf16.msra.mxu0 %v385
    %435 = vmatprep.subr.bf16.mxu0 %v389
    %436 = vmatpush1.bf16.msra.mxu0 %v388
    %437 = vmatprep.subr.bf16.mxu0 %v392
    %438 = vmatpush1.bf16.msra.mxu0 %v391
    %439 = vmatprep.subr.bf16.mxu0 %v395
    %440 = vmatpush1.bf16.msra.mxu0 %v394
    %441 = vmatprep.subr.bf16.mxu0 %v398
    %442 = vmatpush1.bf16.msra.mxu0 %v397
    %443 = vmatprep.subr.bf16.mxu0 %v401
    %444 = vmatpush1.bf16.msra.mxu0 %v400
    %445 = vmatprep.subr.bf16.mxu0 %v404
    %446 = vmatpush1.bf16.msra.mxu0 %v403
    %447 = vmatprep.subr.bf16.mxu0 %v407
    %448 = vmatpush1.bf16.msra.mxu0 %v406
    %449 = vmatprep.subr.bf16.mxu0 0
    %450 = vmatpush1.bf16.msra.mxu0 0
    %451 = vmatprep.subr.bf16.mxu0 0
    %452 = vmatpush1.bf16.msra.mxu0 0
    %453 = vmatprep.subr.bf16.mxu0 0
    %454 = vmatpush1.bf16.msra.mxu0 0
    %455 = vmatprep.subr.bf16.mxu0 0
    %456 = vmatpush1.bf16.msra.mxu0 0
    %457 = vmatprep.subr.bf16.mxu0 0
    %458 = vmatpush1.bf16.msra.mxu0 0
    %459 = vmatprep.subr.bf16.mxu0 0
    %460 = vmatpush1.bf16.msra.mxu0 0
    %461 = vmatprep.subr.bf16.mxu0 0
    %462 = vmatpush1.bf16.msra.mxu0 0
    %463 = vmatprep.subr.bf16.mxu0 0
    %464 = vmatpush1.bf16.msra.mxu0 0
    %465 = vmatprep.mubr.bf16.mxu0 0
    %466 = vmatmul.mubr.bf16.gmra.mrb[0].mxu0 %v286
    %v467 = vpop.f32.mrb[0].mxu0
    %v468 = vadd.f32 %v293, %v467
    %v469 = vpop.f32.mrb[0].mxu0
    %v470 = vadd.f32 %v297, %v469
    %v471 = vpop.f32.mrb[0].mxu0
    %v472 = vadd.f32 %v293, %v471
    %v473 = vpop.f32.mrb[0].mxu0
    %v474 = vadd.f32 %v297, %v473
    %475 = vmatprep.mubr.bf16.mxu0 0
    %476 = vmatmul.mubr.bf16.gmra.mrb[0].mxu0 %v287
    %v477 = vpop.f32.mrb[0].mxu0
    %v478 = vadd.f32 %v293, %v477
    %v479 = vpop.f32.mrb[0].mxu0
    %v480 = vadd.f32 %v297, %v479
    %v481 = vpop.f32.mrb[0].mxu0
    %v482 = vadd.f32 %v293, %v481
    %v483 = vpop.f32.mrb[0].mxu0
    %v484 = vadd.f32 %v297, %v483
    %485 = vmatprep.mubr.bf16.mxu0 0
    %486 = vmatmul.mubr.bf16.gmra.mrb[0].mxu0 %v288
    %v487 = vpop.f32.mrb[0].mxu0
    %v488 = vadd.f32 %v293, %v487
    %v489 = vpop.f32.mrb[0].mxu0
    %v490 = vadd.f32 %v297, %v489
    %v491 = vpop.f32.mrb[0].mxu0
    %v492 = vadd.f32 %v293, %v491
    %v493 = vpop.f32.mrb[0].mxu0
    %v494 = vadd.f32 %v297, %v493
    %495 = vdwg.mxu0
    %496 = vmatprep.subr.bf16.mxu0 0
    %497 = vmatpush1.bf16.msra.mxu0 %v387
    %498 = vmatprep.subr.bf16.mxu0 0
    %499 = vmatpush1.bf16.msra.mxu0 %v390
    %500 = vmatprep.subr.bf16.mxu0 0
    %501 = vmatpush1.bf16.msra.mxu0 %v393
    %502 = vmatprep.subr.bf16.mxu0 0
    %503 = vmatpush1.bf16.msra.mxu0 %v396
    %504 = vmatprep.subr.bf16.mxu0 0
    %505 = vmatpush1.bf16.msra.mxu0 %v399
    %506 = vmatprep.subr.bf16.mxu0 0
    %507 = vmatpush1.bf16.msra.mxu0 %v402
    %508 = vmatprep.subr.bf16.mxu0 0
    %509 = vmatpush1.bf16.msra.mxu0 %v405
    %510 = vmatprep.subr.bf16.mxu0 0
    %511 = vmatpush1.bf16.msra.mxu0 %v408
    %512 = vmatprep.subr.bf16.mxu0 0
    %513 = vmatpush1.bf16.msra.mxu0 0
    %514 = vmatprep.subr.bf16.mxu0 0
    %515 = vmatpush1.bf16.msra.mxu0 0
    %516 = vmatprep.subr.bf16.mxu0 0
    %517 = vmatpush1.bf16.msra.mxu0 0
    %518 = vmatprep.subr.bf16.mxu0 0
    %519 = vmatpush1.bf16.msra.mxu0 0
    %520 = vmatprep.subr.bf16.mxu0 0
    %521 = vmatpush1.bf16.msra.mxu0 0
    %522 = vmatprep.subr.bf16.mxu0 0
    %523 = vmatpush1.bf16.msra.mxu0 0
    %524 = vmatprep.subr.bf16.mxu0 0
    %525 = vmatpush1.bf16.msra.mxu0 0
    %526 = vmatprep.subr.bf16.mxu0 0
    %527 = vmatpush1.bf16.msra.mxu0 0
    %528 = vmatprep.mubr.bf16.mxu0 0
    %529 = vmatmul.mubr.bf16.gmra.mrb[0].mxu0 %v286
    %v530 = vpop.f32.mrb[0].mxu0
    %v531 = vadd.f32 %v301, %v530
    %v532 = vpop.f32.mrb[0].mxu0
    %v533 = vpop.f32.mrb[0].mxu0
    %v534 = vadd.f32 %v301, %v533
    %v535 = vpop.f32.mrb[0].mxu0
    %536 = vmatprep.mubr.bf16.mxu0 0
    %537 = vmatmul.mubr.bf16.gmra.mrb[0].mxu0 %v287
    %v538 = vpop.f32.mrb[0].mxu0
    %v539 = vadd.f32 %v301, %v538
    %v540 = vpop.f32.mrb[0].mxu0
    %v541 = vpop.f32.mrb[0].mxu0
    %v542 = vadd.f32 %v301, %v541
    %v543 = vpop.f32.mrb[0].mxu0
    %544 = vmatprep.mubr.bf16.mxu0 0
    %545 = vmatmul.mubr.bf16.gmra.mrb[0].mxu0 %v288
    %v546 = vpop.f32.mrb[0].mxu0
    %v547 = vadd.f32 %v301, %v546
    %v548 = vpop.f32.mrb[0].mxu0
    %v549 = vpop.f32.mrb[0].mxu0
    %v550 = vadd.f32 %v301, %v549
    %v551 = vpop.f32.mrb[0].mxu0
    %552 = vdwg.mxu0
    %v554 = vlaneseq
    %v555 = vshrl.u32 %v554, 7
    %v556 = vsub.s32 0, %v555
    %v557 = vrot.slane %v285, %v556
    %v558 = vlaneseq
    %v559 = vshrl.u32 %v558, 7
    %v560 = vsub.s32 1, %v559
    %v561 = vrot.slane %v285, %v560
    %v562 = vlaneseq
    %v563 = vshrl.u32 %v562, 7
    %v564 = vsub.s32 2, %v563
    %v565 = vrot.slane %v285, %v564
    %v601 = vunpack.c.l.b16 %v252
    %v602 = vunpack.c.h.b16 %v252
    %v603 = vunpack.c.l.b16 %v253
    %v604 = vunpack.c.l.b16 %v254
    %v605 = vunpack.c.h.b16 %v254
    %v606 = vunpack.c.l.b16 %v255
    %v607 = vunpack.c.l.b16 %v256
    %v608 = vunpack.c.h.b16 %v256
    %v609 = vunpack.c.l.b16 %v257
    %v610 = vunpack.c.l.b16 %v258
    %v611 = vunpack.c.h.b16 %v258
    %v612 = vunpack.c.l.b16 %v259
    %v613 = vunpack.c.l.b16 %v260
    %v614 = vunpack.c.h.b16 %v260
    %v615 = vunpack.c.l.b16 %v261
    %v616 = vunpack.c.l.b16 %v262
    %v617 = vunpack.c.h.b16 %v262
    %v618 = vunpack.c.l.b16 %v263
    %v619 = vunpack.c.l.b16 %v264
    %v620 = vunpack.c.h.b16 %v264
    %v621 = vunpack.c.l.b16 %v265
    %v622 = vunpack.c.l.b16 %v266
    %v623 = vunpack.c.h.b16 %v266
    %v624 = vunpack.c.l.b16 %v267
    %v625 = vunpack.c.l.b16 %v268
    %v626 = vunpack.c.h.b16 %v268
    %v627 = vunpack.c.l.b16 %v269
    %v628 = vunpack.c.l.b16 %v270
    %v629 = vunpack.c.h.b16 %v270
    %v630 = vunpack.c.l.b16 %v271
    %v631 = vunpack.c.l.b16 %v272
    %v632 = vunpack.c.h.b16 %v272
    %v633 = vunpack.c.l.b16 %v273
    %v634 = vunpack.c.l.b16 %v274
    %v635 = vunpack.c.h.b16 %v274
    %v636 = vunpack.c.l.b16 %v275
    %v637 = vunpack.c.l.b16 %v276
    %v638 = vunpack.c.h.b16 %v276
    %v639 = vunpack.c.l.b16 %v277
    %v640 = vunpack.c.l.b16 %v278
    %v641 = vunpack.c.h.b16 %v278
    %v642 = vunpack.c.l.b16 %v279
    %v643 = vunpack.c.l.b16 %v280
    %v644 = vunpack.c.h.b16 %v280
    %v645 = vunpack.c.l.b16 %v281
    %v646 = vunpack.c.l.b16 %v282
    %v647 = vunpack.c.h.b16 %v282
    %v648 = vunpack.c.l.b16 %v283
    %v649 = vpack.c.b16 %v604, %v601
    %v650 = vpack.c.b16 %v605, %v602
    %v651 = vpack.c.b16 %v606, %v603
    %v652 = vpack.c.b16 %v610, %v607
    %v653 = vpack.c.b16 %v611, %v608
    %v654 = vpack.c.b16 %v612, %v609
    %v655 = vpack.c.b16 %v616, %v613
    %v656 = vpack.c.b16 %v617, %v614
    %v657 = vpack.c.b16 %v618, %v615
    %v658 = vpack.c.b16 %v622, %v619
    %v659 = vpack.c.b16 %v623, %v620
    %v660 = vpack.c.b16 %v624, %v621
    %v661 = vpack.c.b16 %v628, %v625
    %v662 = vpack.c.b16 %v629, %v626
    %v663 = vpack.c.b16 %v630, %v627
    %v664 = vpack.c.b16 %v634, %v631
    %v665 = vpack.c.b16 %v635, %v632
    %v666 = vpack.c.b16 %v636, %v633
    %v667 = vpack.c.b16 %v640, %v637
    %v668 = vpack.c.b16 %v641, %v638
    %v669 = vpack.c.b16 %v642, %v639
    %v670 = vpack.c.b16 %v646, %v643
    %v671 = vpack.c.b16 %v647, %v644
    %v672 = vpack.c.b16 %v648, %v645
    %697 = vmatprep.subr.bf16.mxu0 %v650
    %698 = vmatpush1.bf16.msra.mxu0 %v649
    %699 = vmatprep.subr.bf16.mxu0 %v653
    %700 = vmatpush1.bf16.msra.mxu0 %v652
    %701 = vmatprep.subr.bf16.mxu0 %v656
    %702 = vmatpush1.bf16.msra.mxu0 %v655
    %703 = vmatprep.subr.bf16.mxu0 %v659
    %704 = vmatpush1.bf16.msra.mxu0 %v658
    %705 = vmatprep.subr.bf16.mxu0 %v662
    %706 = vmatpush1.bf16.msra.mxu0 %v661
    %707 = vmatprep.subr.bf16.mxu0 %v665
    %708 = vmatpush1.bf16.msra.mxu0 %v664
    %709 = vmatprep.subr.bf16.mxu0 %v668
    %710 = vmatpush1.bf16.msra.mxu0 %v667
    %711 = vmatprep.subr.bf16.mxu0 %v671
    %712 = vmatpush1.bf16.msra.mxu0 %v670
    %713 = vmatprep.subr.bf16.mxu0 0
    %714 = vmatpush1.bf16.msra.mxu0 0
    %715 = vmatprep.subr.bf16.mxu0 0
    %716 = vmatpush1.bf16.msra.mxu0 0
    %717 = vmatprep.subr.bf16.mxu0 0
    %718 = vmatpush1.bf16.msra.mxu0 0
    %719 = vmatprep.subr.bf16.mxu0 0
    %720 = vmatpush1.bf16.msra.mxu0 0
    %721 = vmatprep.subr.bf16.mxu0 0
    %722 = vmatpush1.bf16.msra.mxu0 0
    %723 = vmatprep.subr.bf16.mxu0 0
    %724 = vmatpush1.bf16.msra.mxu0 0
    %725 = vmatprep.subr.bf16.mxu0 0
    %726 = vmatpush1.bf16.msra.mxu0 0
    %727 = vmatprep.subr.bf16.mxu0 0
    %728 = vmatpush1.bf16.msra.mxu0 0
    %729 = vmatprep.mubr.bf16.mxu0 0
    %730 = vmatmul.mubr.bf16.gmra.mrb[0].mxu0 0
    %v731 = vpop.f32.mrb[0].mxu0
    %v732 = vadd.f32 %v557, %v731
    %v733 = vpop.f32.mrb[0].mxu0
    %v734 = vadd.f32 %v561, %v733
    %v735 = vpop.f32.mrb[0].mxu0
    %v736 = vpop.f32.mrb[0].mxu0
    %737 = vdwg.mxu0
    %738 = vmatprep.subr.bf16.mxu0 0
    %739 = vmatpush1.bf16.msra.mxu0 %v651
    %740 = vmatprep.subr.bf16.mxu0 0
    %741 = vmatpush1.bf16.msra.mxu0 %v654
    %742 = vmatprep.subr.bf16.mxu0 0
    %743 = vmatpush1.bf16.msra.mxu0 %v657
    %744 = vmatprep.subr.bf16.mxu0 0
    %745 = vmatpush1.bf16.msra.mxu0 %v660
    %746 = vmatprep.subr.bf16.mxu0 0
    %747 = vmatpush1.bf16.msra.mxu0 %v663
    %748 = vmatprep.subr.bf16.mxu0 0
    %749 = vmatpush1.bf16.msra.mxu0 %v666
    %750 = vmatprep.subr.bf16.mxu0 0
    %751 = vmatpush1.bf16.msra.mxu0 %v669
    %752 = vmatprep.subr.bf16.mxu0 0
    %753 = vmatpush1.bf16.msra.mxu0 %v672
    %754 = vmatprep.subr.bf16.mxu0 0
    %755 = vmatpush1.bf16.msra.mxu0 0
    %756 = vmatprep.subr.bf16.mxu0 0
    %757 = vmatpush1.bf16.msra.mxu0 0
    %758 = vmatprep.subr.bf16.mxu0 0
    %759 = vmatpush1.bf16.msra.mxu0 0
    %760 = vmatprep.subr.bf16.mxu0 0
    %761 = vmatpush1.bf16.msra.mxu0 0
    %762 = vmatprep.subr.bf16.mxu0 0
    %763 = vmatpush1.bf16.msra.mxu0 0
    %764 = vmatprep.subr.bf16.mxu0 0
    %765 = vmatpush1.bf16.msra.mxu0 0
    %766 = vmatprep.subr.bf16.mxu0 0
    %767 = vmatpush1.bf16.msra.mxu0 0
    %768 = vmatprep.subr.bf16.mxu0 0
    %769 = vmatpush1.bf16.msra.mxu0 0
    %770 = vmatprep.mubr.bf16.mxu0 0
    %771 = vmatmul.mubr.bf16.gmra.mrb[0].mxu0 0
    %v772 = vpop.f32.mrb[0].mxu0
    %v773 = vadd.f32 %v565, %v772
    %v774 = vpop.f32.mrb[0].mxu0
    %v775 = vpop.f32.mrb[0].mxu0
    %v776 = vpop.f32.mrb[0].mxu0
    %777 = vdwg.mxu0
    %v778 = vadd.f32 %v468, %v732
    %v779 = vxor.u32 %v778, 2147483648
    %v780 = vmul.f32 %v779, 1.442695
    %v781 = vpow.pop %v780
    %v782 = vadd.f32 %v781, 1.0
    %v783 = vrcp.pop %v782
    %v784 = vmul.f32 1.0, %v783
    %v785 = vadd.f32 %v470, %v734
    %v786 = vxor.u32 %v785, 2147483648
    %v787 = vmul.f32 %v786, 1.442695
    %v788 = vpow.pop %v787
    %v789 = vadd.f32 %v788, 1.0
    %v790 = vrcp.pop %v789
    %v791 = vmul.f32 1.0, %v790
    %v792 = vmul.f32 %v784, %v773
    %v793 = vadd.f32 %v531, %v792
    %v794 = vtanh.pop %v793
    %v795 = vsub.f32 1.0, %v791
    %v796 = vmul.f32 %v795, %v794
    %v797 = vmul.f32 %v791, 0.0
    %v798 = vadd.f32 %v796, %v797
    %799 = vst [vmem:[#allocation2] sm:$0xff] %v798
    %v800 = vpack.c.bf16 %v798, %v798
    %801 = vmatprep.subr.bf16.mxu0 %v650
    %802 = vmatpush1.bf16.msra.mxu0 %v649
    %803 = vmatprep.subr.bf16.mxu0 %v653
    %804 = vmatpush1.bf16.msra.mxu0 %v652
    %805 = vmatprep.subr.bf16.mxu0 %v656
    %806 = vmatpush1.bf16.msra.mxu0 %v655
    %807 = vmatprep.subr.bf16.mxu0 %v659
    %808 = vmatpush1.bf16.msra.mxu0 %v658
    %809 = vmatprep.subr.bf16.mxu0 %v662
    %810 = vmatpush1.bf16.msra.mxu0 %v661
    %811 = vmatprep.subr.bf16.mxu0 %v665
    %812 = vmatpush1.bf16.msra.mxu0 %v664
    %813 = vmatprep.subr.bf16.mxu0 %v668
    %814 = vmatpush1.bf16.msra.mxu0 %v667
    %815 = vmatprep.subr.bf16.mxu0 %v671
    %816 = vmatpush1.bf16.msra.mxu0 %v670
    %817 = vmatprep.subr.bf16.mxu0 0
    %818 = vmatpush1.bf16.msra.mxu0 0
    %819 = vmatprep.subr.bf16.mxu0 0
    %820 = vmatpush1.bf16.msra.mxu0 0
    %821 = vmatprep.subr.bf16.mxu0 0
    %822 = vmatpush1.bf16.msra.mxu0 0
    %823 = vmatprep.subr.bf16.mxu0 0
    %824 = vmatpush1.bf16.msra.mxu0 0
    %825 = vmatprep.subr.bf16.mxu0 0
    %826 = vmatpush1.bf16.msra.mxu0 0
    %827 = vmatprep.subr.bf16.mxu0 0
    %828 = vmatpush1.bf16.msra.mxu0 0
    %829 = vmatprep.subr.bf16.mxu0 0
    %830 = vmatpush1.bf16.msra.mxu0 0
    %831 = vmatprep.subr.bf16.mxu0 0
    %832 = vmatpush1.bf16.msra.mxu0 0
    %833 = vmatprep.mubr.bf16.mxu0 0
    %834 = vmatmul.mubr.bf16.gmra.mrb[0].mxu0 %v800
    %v835 = vpop.f32.mrb[0].mxu0
    %v836 = vadd.f32 %v557, %v835
    %v837 = vpop.f32.mrb[0].mxu0
    %v838 = vadd.f32 %v561, %v837
    %v839 = vpop.f32.mrb[0].mxu0
    %v840 = vpop.f32.mrb[0].mxu0
    %841 = vdwg.mxu0
    %842 = vmatprep.subr.bf16.mxu0 0
    %843 = vmatpush1.bf16.msra.mxu0 %v651
    %844 = vmatprep.subr.bf16.mxu0 0
    %845 = vmatpush1.bf16.msra.mxu0 %v654
    %846 = vmatprep.subr.bf16.mxu0 0
    %847 = vmatpush1.bf16.msra.mxu0 %v657
    %848 = vmatprep.subr.bf16.mxu0 0
    %849 = vmatpush1.bf16.msra.mxu0 %v660
    %850 = vmatprep.subr.bf16.mxu0 0
    %851 = vmatpush1.bf16.msra.mxu0 %v663
    %852 = vmatprep.subr.bf16.mxu0 0
    %853 = vmatpush1.bf16.msra.mxu0 %v666
    %854 = vmatprep.subr.bf16.mxu0 0
    %855 = vmatpush1.bf16.msra.mxu0 %v669
    %856 = vmatprep.subr.bf16.mxu0 0
    %857 = vmatpush1.bf16.msra.mxu0 %v672
    %858 = vmatprep.subr.bf16.mxu0 0
    %859 = vmatpush1.bf16.msra.mxu0 0
    %860 = vmatprep.subr.bf16.mxu0 0
    %861 = vmatpush1.bf16.msra.mxu0 0
    %862 = vmatprep.subr.bf16.mxu0 0
    %863 = vmatpush1.bf16.msra.mxu0 0
    %864 = vmatprep.subr.bf16.mxu0 0
    %865 = vmatpush1.bf16.msra.mxu0 0
    %866 = vmatprep.subr.bf16.mxu0 0
    %867 = vmatpush1.bf16.msra.mxu0 0
    %868 = vmatprep.subr.bf16.mxu0 0
    %869 = vmatpush1.bf16.msra.mxu0 0
    %870 = vmatprep.subr.bf16.mxu0 0
    %871 = vmatpush1.bf16.msra.mxu0 0
    %872 = vmatprep.subr.bf16.mxu0 0
    %873 = vmatpush1.bf16.msra.mxu0 0
    %874 = vmatprep.mubr.bf16.mxu0 0
    %875 = vmatmul.mubr.bf16.gmra.mrb[0].mxu0 %v800
    %v876 = vpop.f32.mrb[0].mxu0
    %v877 = vadd.f32 %v565, %v876
    %v878 = vpop.f32.mrb[0].mxu0
    %v879 = vpop.f32.mrb[0].mxu0
    %v880 = vpop.f32.mrb[0].mxu0
    %881 = vdwg.mxu0
    %v882 = vadd.f32 %v472, %v836
    %v883 = vxor.u32 %v882, 2147483648
    %v884 = vmul.f32 %v883, 1.442695
    %v885 = vpow.pop %v884
    %v886 = vadd.f32 %v885, 1.0
    %v887 = vrcp.pop %v886
    %v888 = vmul.f32 1.0, %v887
    %v889 = vadd.f32 %v474, %v838
    %v890 = vxor.u32 %v889, 2147483648
    %v891 = vmul.f32 %v890, 1.442695
    %v892 = vpow.pop %v891
    %v893 = vadd.f32 %v892, 1.0
    %v894 = vrcp.pop %v893
    %v895 = vmul.f32 1.0, %v894
    %v896 = vmul.f32 %v888, %v877
    %v897 = vadd.f32 %v534, %v896
    %v898 = vtanh.pop %v897
    %v899 = vsub.f32 1.0, %v895
    %v900 = vmul.f32 %v899, %v898
    %v901 = vmul.f32 %v895, %v798
    %v902 = vadd.f32 %v900, %v901
    %903 = vst [vmem:[#allocation2 + $0x8] sm:$0xff] %v902
    %v904 = vpack.c.bf16 %v902, %v902
    %905 = vmatprep.subr.bf16.mxu0 %v650
    %906 = vmatpush1.bf16.msra.mxu0 %v649
    %907 = vmatprep.subr.bf16.mxu0 %v653
    %908 = vmatpush1.bf16.msra.mxu0 %v652
    %909 = vmatprep.subr.bf16.mxu0 %v656
    %910 = vmatpush1.bf16.msra.mxu0 %v655
    %911 = vmatprep.subr.bf16.mxu0 %v659
    %912 = vmatpush1.bf16.msra.mxu0 %v658
    %913 = vmatprep.subr.bf16.mxu0 %v662
    %914 = vmatpush1.bf16.msra.mxu0 %v661
    %915 = vmatprep.subr.bf16.mxu0 %v665
    %916 = vmatpush1.bf16.msra.mxu0 %v664
    %917 = vmatprep.subr.bf16.mxu0 %v668
    %918 = vmatpush1.bf16.msra.mxu0 %v667
    %919 = vmatprep.subr.bf16.mxu0 %v671
    %920 = vmatpush1.bf16.msra.mxu0 %v670
    %921 = vmatprep.subr.bf16.mxu0 0
    %922 = vmatpush1.bf16.msra.mxu0 0
    %923 = vmatprep.subr.bf16.mxu0 0
    %924 = vmatpush1.bf16.msra.mxu0 0
    %925 = vmatprep.subr.bf16.mxu0 0
    %926 = vmatpush1.bf16.msra.mxu0 0
    %927 = vmatprep.subr.bf16.mxu0 0
    %928 = vmatpush1.bf16.msra.mxu0 0
    %929 = vmatprep.subr.bf16.mxu0 0
    %930 = vmatpush1.bf16.msra.mxu0 0
    %931 = vmatprep.subr.bf16.mxu0 0
    %932 = vmatpush1.bf16.msra.mxu0 0
    %933 = vmatprep.subr.bf16.mxu0 0
    %934 = vmatpush1.bf16.msra.mxu0 0
    %935 = vmatprep.subr.bf16.mxu0 0
    %936 = vmatpush1.bf16.msra.mxu0 0
    %937 = vmatprep.mubr.bf16.mxu0 0
    %938 = vmatmul.mubr.bf16.gmra.mrb[0].mxu0 %v904
    %v939 = vpop.f32.mrb[0].mxu0
    %v940 = vadd.f32 %v557, %v939
    %v941 = vpop.f32.mrb[0].mxu0
    %v942 = vadd.f32 %v561, %v941
    %v943 = vpop.f32.mrb[0].mxu0
    %v944 = vpop.f32.mrb[0].mxu0
    %945 = vdwg.mxu0
    %946 = vmatprep.subr.bf16.mxu0 0
    %947 = vmatpush1.bf16.msra.mxu0 %v651
    %948 = vmatprep.subr.bf16.mxu0 0
    %949 = vmatpush1.bf16.msra.mxu0 %v654
    %950 = vmatprep.subr.bf16.mxu0 0
    %951 = vmatpush1.bf16.msra.mxu0 %v657
    %952 = vmatprep.subr.bf16.mxu0 0
    %953 = vmatpush1.bf16.msra.mxu0 %v660
    %954 = vmatprep.subr.bf16.mxu0 0
    %955 = vmatpush1.bf16.msra.mxu0 %v663
    %956 = vmatprep.subr.bf16.mxu0 0
    %957 = vmatpush1.bf16.msra.mxu0 %v666
    %958 = vmatprep.subr.bf16.mxu0 0
    %959 = vmatpush1.bf16.msra.mxu0 %v669
    %960 = vmatprep.subr.bf16.mxu0 0
    %961 = vmatpush1.bf16.msra.mxu0 %v672
    %962 = vmatprep.subr.bf16.mxu0 0
    %963 = vmatpush1.bf16.msra.mxu0 0
    %964 = vmatprep.subr.bf16.mxu0 0
    %965 = vmatpush1.bf16.msra.mxu0 0
    %966 = vmatprep.subr.bf16.mxu0 0
    %967 = vmatpush1.bf16.msra.mxu0 0
    %968 = vmatprep.subr.bf16.mxu0 0
    %969 = vmatpush1.bf16.msra.mxu0 0
    %970 = vmatprep.subr.bf16.mxu0 0
    %971 = vmatpush1.bf16.msra.mxu0 0
    %972 = vmatprep.subr.bf16.mxu0 0
    %973 = vmatpush1.bf16.msra.mxu0 0
    %974 = vmatprep.subr.bf16.mxu0 0
    %975 = vmatpush1.bf16.msra.mxu0 0
    %976 = vmatprep.subr.bf16.mxu0 0
    %977 = vmatpush1.bf16.msra.mxu0 0
    %978 = vmatprep.mubr.bf16.mxu0 0
    %979 = vmatmul.mubr.bf16.gmra.mrb[0].mxu0 %v904
    %v980 = vpop.f32.mrb[0].mxu0
    %v981 = vadd.f32 %v565, %v980
    %v982 = vpop.f32.mrb[0].mxu0
    %v983 = vpop.f32.mrb[0].mxu0
    %v984 = vpop.f32.mrb[0].mxu0
    %985 = vdwg.mxu0
    %v986 = vadd.f32 %v478, %v940
    %v987 = vxor.u32 %v986, 2147483648
    %v988 = vmul.f32 %v987, 1.442695
    %v989 = vpow.pop %v988
    %v990 = vadd.f32 %v989, 1.0
    %v991 = vrcp.pop %v990
    %v992 = vmul.f32 1.0, %v991
    %v993 = vadd.f32 %v480, %v942
    %v994 = vxor.u32 %v993, 2147483648
    %v995 = vmul.f32 %v994, 1.442695
    %v996 = vpow.pop %v995
    %v997 = vadd.f32 %v996, 1.0
    %v998 = vrcp.pop %v997
    %v999 = vmul.f32 1.0, %v998
    %v1000 = vmul.f32 %v992, %v981
    %v1001 = vadd.f32 %v539, %v1000
    %v1002 = vtanh.pop %v1001
    %v1003 = vsub.f32 1.0, %v999
    %v1004 = vmul.f32 %v1003, %v1002
    %v1005 = vmul.f32 %v999, %v902
    %v1006 = vadd.f32 %v1004, %v1005
    %1007 = vst [vmem:[#allocation2 + $0x10] sm:$0xff] %v1006
    %v1008 = vpack.c.bf16 %v1006, %v1006
    %1009 = vmatprep.subr.bf16.mxu0 %v650
    %1010 = vmatpush1.bf16.msra.mxu0 %v649
    %1011 = vmatprep.subr.bf16.mxu0 %v653
    %1012 = vmatpush1.bf16.msra.mxu0 %v652
    %1013 = vmatprep.subr.bf16.mxu0 %v656
    %1014 = vmatpush1.bf16.msra.mxu0 %v655
    %1015 = vmatprep.subr.bf16.mxu0 %v659
    %1016 = vmatpush1.bf16.msra.mxu0 %v658
    %1017 = vmatprep.subr.bf16.mxu0 %v662
    %1018 = vmatpush1.bf16.msra.mxu0 %v661
    %1019 = vmatprep.subr.bf16.mxu0 %v665
    %1020 = vmatpush1.bf16.msra.mxu0 %v664
    %1021 = vmatprep.subr.bf16.mxu0 %v668
    %1022 = vmatpush1.bf16.msra.mxu0 %v667
    %1023 = vmatprep.subr.bf16.mxu0 %v671
    %1024 = vmatpush1.bf16.msra.mxu0 %v670
    %1025 = vmatprep.subr.bf16.mxu0 0
    %1026 = vmatpush1.bf16.msra.mxu0 0
    %1027 = vmatprep.subr.bf16.mxu0 0
    %1028 = vmatpush1.bf16.msra.mxu0 0
    %1029 = vmatprep.subr.bf16.mxu0 0
    %1030 = vmatpush1.bf16.msra.mxu0 0
    %1031 = vmatprep.subr.bf16.mxu0 0
    %1032 = vmatpush1.bf16.msra.mxu0 0
    %1033 = vmatprep.subr.bf16.mxu0 0
    %1034 = vmatpush1.bf16.msra.mxu0 0
    %1035 = vmatprep.subr.bf16.mxu0 0
    %1036 = vmatpush1.bf16.msra.mxu0 0
    %1037 = vmatprep.subr.bf16.mxu0 0
    %1038 = vmatpush1.bf16.msra.mxu0 0
    %1039 = vmatprep.subr.bf16.mxu0 0
    %1040 = vmatpush1.bf16.msra.mxu0 0
    %1041 = vmatprep.mubr.bf16.mxu0 0
    %1042 = vmatmul.mubr.bf16.gmra.mrb[0].mxu0 %v1008
    %v1043 = vpop.f32.mrb[0].mxu0
    %v1044 = vadd.f32 %v557, %v1043
    %v1045 = vpop.f32.mrb[0].mxu0
    %v1046 = vadd.f32 %v561, %v1045
    %v1047 = vpop.f32.mrb[0].mxu0
    %v1048 = vpop.f32.mrb[0].mxu0
    %1049 = vdwg.mxu0
    %1050 = vmatprep.subr.bf16.mxu0 0
    %1051 = vmatpush1.bf16.msra.mxu0 %v651
    %1052 = vmatprep.subr.bf16.mxu0 0
    %1053 = vmatpush1.bf16.msra.mxu0 %v654
    %1054 = vmatprep.subr.bf16.mxu0 0
    %1055 = vmatpush1.bf16.msra.mxu0 %v657
    %1056 = vmatprep.subr.bf16.mxu0 0
    %1057 = vmatpush1.bf16.msra.mxu0 %v660
    %1058 = vmatprep.subr.bf16.mxu0 0
    %1059 = vmatpush1.bf16.msra.mxu0 %v663
    %1060 = vmatprep.subr.bf16.mxu0 0
    %1061 = vmatpush1.bf16.msra.mxu0 %v666
    %1062 = vmatprep.subr.bf16.mxu0 0
    %1063 = vmatpush1.bf16.msra.mxu0 %v669
    %1064 = vmatprep.subr.bf16.mxu0 0
    %1065 = vmatpush1.bf16.msra.mxu0 %v672
    %1066 = vmatprep.subr.bf16.mxu0 0
    %1067 = vmatpush1.bf16.msra.mxu0 0
    %1068 = vmatprep.subr.bf16.mxu0 0
    %1069 = vmatpush1.bf16.msra.mxu0 0
    %1070 = vmatprep.subr.bf16.mxu0 0
    %1071 = vmatpush1.bf16.msra.mxu0 0
    %1072 = vmatprep.subr.bf16.mxu0 0
    %1073 = vmatpush1.bf16.msra.mxu0 0
    %1074 = vmatprep.subr.bf16.mxu0 0
    %1075 = vmatpush1.bf16.msra.mxu0 0
    %1076 = vmatprep.subr.bf16.mxu0 0
    %1077 = vmatpush1.bf16.msra.mxu0 0
    %1078 = vmatprep.subr.bf16.mxu0 0
    %1079 = vmatpush1.bf16.msra.mxu0 0
    %1080 = vmatprep.subr.bf16.mxu0 0
    %1081 = vmatpush1.bf16.msra.mxu0 0
    %1082 = vmatprep.mubr.bf16.mxu0 0
    %1083 = vmatmul.mubr.bf16.gmra.mrb[0].mxu0 %v1008
    %v1084 = vpop.f32.mrb[0].mxu0
    %v1085 = vadd.f32 %v565, %v1084
    %v1086 = vpop.f32.mrb[0].mxu0
    %v1087 = vpop.f32.mrb[0].mxu0
    %v1088 = vpop.f32.mrb[0].mxu0
    %1089 = vdwg.mxu0
    %v1090 = vadd.f32 %v482, %v1044
    %v1091 = vxor.u32 %v1090, 2147483648
    %v1092 = vmul.f32 %v1091, 1.442695
    %v1093 = vpow.pop %v1092
    %v1094 = vadd.f32 %v1093, 1.0
    %v1095 = vrcp.pop %v1094
    %v1096 = vmul.f32 1.0, %v1095
    %v1097 = vadd.f32 %v484, %v1046
    %v1098 = vxor.u32 %v1097, 2147483648
    %v1099 = vmul.f32 %v1098, 1.442695
    %v1100 = vpow.pop %v1099
    %v1101 = vadd.f32 %v1100, 1.0
    %v1102 = vrcp.pop %v1101
    %v1103 = vmul.f32 1.0, %v1102
    %v1104 = vmul.f32 %v1096, %v1085
    %v1105 = vadd.f32 %v542, %v1104
    %v1106 = vtanh.pop %v1105
    %v1107 = vsub.f32 1.0, %v1103
    %v1108 = vmul.f32 %v1107, %v1106
    %v1109 = vmul.f32 %v1103, %v1006
    %v1110 = vadd.f32 %v1108, %v1109
    %1111 = vst [vmem:[#allocation2 + $0x18] sm:$0xff] %v1110
    %v1112 = vpack.c.bf16 %v1110, %v1110
    %1113 = vmatprep.subr.bf16.mxu0 %v650
    %1114 = vmatpush1.bf16.msra.mxu0 %v649
    %1115 = vmatprep.subr.bf16.mxu0 %v653
    %1116 = vmatpush1.bf16.msra.mxu0 %v652
    %1117 = vmatprep.subr.bf16.mxu0 %v656
    %1118 = vmatpush1.bf16.msra.mxu0 %v655
    %1119 = vmatprep.subr.bf16.mxu0 %v659
    %1120 = vmatpush1.bf16.msra.mxu0 %v658
    %1121 = vmatprep.subr.bf16.mxu0 %v662
    %1122 = vmatpush1.bf16.msra.mxu0 %v661
    %1123 = vmatprep.subr.bf16.mxu0 %v665
    %1124 = vmatpush1.bf16.msra.mxu0 %v664
    %1125 = vmatprep.subr.bf16.mxu0 %v668
    %1126 = vmatpush1.bf16.msra.mxu0 %v667
    %1127 = vmatprep.subr.bf16.mxu0 %v671
    %1128 = vmatpush1.bf16.msra.mxu0 %v670
    %1129 = vmatprep.subr.bf16.mxu0 0
    %1130 = vmatpush1.bf16.msra.mxu0 0
    %1131 = vmatprep.subr.bf16.mxu0 0
    %1132 = vmatpush1.bf16.msra.mxu0 0
    %1133 = vmatprep.subr.bf16.mxu0 0
    %1134 = vmatpush1.bf16.msra.mxu0 0
    %1135 = vmatprep.subr.bf16.mxu0 0
    %1136 = vmatpush1.bf16.msra.mxu0 0
    %1137 = vmatprep.subr.bf16.mxu0 0
    %1138 = vmatpush1.bf16.msra.mxu0 0
    %1139 = vmatprep.subr.bf16.mxu0 0
    %1140 = vmatpush1.bf16.msra.mxu0 0
    %1141 = vmatprep.subr.bf16.mxu0 0
    %1142 = vmatpush1.bf16.msra.mxu0 0
    %1143 = vmatprep.subr.bf16.mxu0 0
    %1144 = vmatpush1.bf16.msra.mxu0 0
    %1145 = vmatprep.mubr.bf16.mxu0 0
    %1146 = vmatmul.mubr.bf16.gmra.mrb[0].mxu0 %v1112
    %v1147 = vpop.f32.mrb[0].mxu0
    %v1148 = vadd.f32 %v557, %v1147
    %v1149 = vpop.f32.mrb[0].mxu0
    %v1150 = vadd.f32 %v561, %v1149
    %v1151 = vpop.f32.mrb[0].mxu0
    %v1152 = vpop.f32.mrb[0].mxu0
    %1153 = vdwg.mxu0
    %1154 = vmatprep.subr.bf16.mxu0 0
    %1155 = vmatpush1.bf16.msra.mxu0 %v651
    %1156 = vmatprep.subr.bf16.mxu0 0
    %1157 = vmatpush1.bf16.msra.mxu0 %v654
    %1158 = vmatprep.subr.bf16.mxu0 0
    %1159 = vmatpush1.bf16.msra.mxu0 %v657
    %1160 = vmatprep.subr.bf16.mxu0 0
    %1161 = vmatpush1.bf16.msra.mxu0 %v660
    %1162 = vmatprep.subr.bf16.mxu0 0
    %1163 = vmatpush1.bf16.msra.mxu0 %v663
    %1164 = vmatprep.subr.bf16.mxu0 0
    %1165 = vmatpush1.bf16.msra.mxu0 %v666
    %1166 = vmatprep.subr.bf16.mxu0 0
    %1167 = vmatpush1.bf16.msra.mxu0 %v669
    %1168 = vmatprep.subr.bf16.mxu0 0
    %1169 = vmatpush1.bf16.msra.mxu0 %v672
    %1170 = vmatprep.subr.bf16.mxu0 0
    %1171 = vmatpush1.bf16.msra.mxu0 0
    %1172 = vmatprep.subr.bf16.mxu0 0
    %1173 = vmatpush1.bf16.msra.mxu0 0
    %1174 = vmatprep.subr.bf16.mxu0 0
    %1175 = vmatpush1.bf16.msra.mxu0 0
    %1176 = vmatprep.subr.bf16.mxu0 0
    %1177 = vmatpush1.bf16.msra.mxu0 0
    %1178 = vmatprep.subr.bf16.mxu0 0
    %1179 = vmatpush1.bf16.msra.mxu0 0
    %1180 = vmatprep.subr.bf16.mxu0 0
    %1181 = vmatpush1.bf16.msra.mxu0 0
    %1182 = vmatprep.subr.bf16.mxu0 0
    %1183 = vmatpush1.bf16.msra.mxu0 0
    %1184 = vmatprep.subr.bf16.mxu0 0
    %1185 = vmatpush1.bf16.msra.mxu0 0
    %1186 = vmatprep.mubr.bf16.mxu0 0
    %1187 = vmatmul.mubr.bf16.gmra.mrb[0].mxu0 %v1112
    %v1188 = vpop.f32.mrb[0].mxu0
    %v1189 = vadd.f32 %v565, %v1188
    %v1190 = vpop.f32.mrb[0].mxu0
    %v1191 = vpop.f32.mrb[0].mxu0
    %v1192 = vpop.f32.mrb[0].mxu0
    %1193 = vdwg.mxu0
    %v1194 = vadd.f32 %v488, %v1148
    %v1195 = vxor.u32 %v1194, 2147483648
    %v1196 = vmul.f32 %v1195, 1.442695
    %v1197 = vpow.pop %v1196
    %v1198 = vadd.f32 %v1197, 1.0
    %v1199 = vrcp.pop %v1198
    %v1200 = vmul.f32 1.0, %v1199
    %v1201 = vadd.f32 %v490, %v1150
    %v1202 = vxor.u32 %v1201, 2147483648
    %v1203 = vmul.f32 %v1202, 1.442695
    %v1204 = vpow.pop %v1203
    %v1205 = vadd.f32 %v1204, 1.0
    %v1206 = vrcp.pop %v1205
    %v1207 = vmul.f32 1.0, %v1206
    %v1208 = vmul.f32 %v1200, %v1189
    %v1209 = vadd.f32 %v547, %v1208
    %v1210 = vtanh.pop %v1209
    %v1211 = vsub.f32 1.0, %v1207
    %v1212 = vmul.f32 %v1211, %v1210
    %v1213 = vmul.f32 %v1207, %v1110
    %v1214 = vadd.f32 %v1212, %v1213
    %1215 = vst [vmem:[#allocation2 + $0x20] sm:$0xff] %v1214
    %v1216 = vpack.c.bf16 %v1214, %v1214
    %1217 = vmatprep.subr.bf16.mxu0 %v650
    %1218 = vmatpush1.bf16.msra.mxu0 %v649
    %1219 = vmatprep.subr.bf16.mxu0 %v653
    %1220 = vmatpush1.bf16.msra.mxu0 %v652
    %1221 = vmatprep.subr.bf16.mxu0 %v656
    %1222 = vmatpush1.bf16.msra.mxu0 %v655
    %1223 = vmatprep.subr.bf16.mxu0 %v659
    %1224 = vmatpush1.bf16.msra.mxu0 %v658
    %1225 = vmatprep.subr.bf16.mxu0 %v662
    %1226 = vmatpush1.bf16.msra.mxu0 %v661
    %1227 = vmatprep.subr.bf16.mxu0 %v665
    %1228 = vmatpush1.bf16.msra.mxu0 %v664
    %1229 = vmatprep.subr.bf16.mxu0 %v668
    %1230 = vmatpush1.bf16.msra.mxu0 %v667
    %1231 = vmatprep.subr.bf16.mxu0 %v671
    %1232 = vmatpush1.bf16.msra.mxu0 %v670
    %1233 = vmatprep.subr.bf16.mxu0 0
    %1234 = vmatpush1.bf16.msra.mxu0 0
    %1235 = vmatprep.subr.bf16.mxu0 0
    %1236 = vmatpush1.bf16.msra.mxu0 0
    %1237 = vmatprep.subr.bf16.mxu0 0
    %1238 = vmatpush1.bf16.msra.mxu0 0
    %1239 = vmatprep.subr.bf16.mxu0 0
    %1240 = vmatpush1.bf16.msra.mxu0 0
    %1241 = vmatprep.subr.bf16.mxu0 0
    %1242 = vmatpush1.bf16.msra.mxu0 0
    %1243 = vmatprep.subr.bf16.mxu0 0
    %1244 = vmatpush1.bf16.msra.mxu0 0
    %1245 = vmatprep.subr.bf16.mxu0 0
    %1246 = vmatpush1.bf16.msra.mxu0 0
    %1247 = vmatprep.subr.bf16.mxu0 0
    %1248 = vmatpush1.bf16.msra.mxu0 0
    %1249 = vmatprep.mubr.bf16.mxu0 0
    %1250 = vmatmul.mubr.bf16.gmra.mrb[0].mxu0 %v1216
    %v1251 = vpop.f32.mrb[0].mxu0
    %v1252 = vadd.f32 %v557, %v1251
    %v1253 = vpop.f32.mrb[0].mxu0
    %v1254 = vadd.f32 %v561, %v1253
    %v1255 = vpop.f32.mrb[0].mxu0
    %v1256 = vpop.f32.mrb[0].mxu0
    %1257 = vdwg.mxu0
    %1258 = vmatprep.subr.bf16.mxu0 0
    %1259 = vmatpush1.bf16.msra.mxu0 %v651
    %1260 = vmatprep.subr.bf16.mxu0 0
    %1261 = vmatpush1.bf16.msra.mxu0 %v654
    %1262 = vmatprep.subr.bf16.mxu0 0
    %1263 = vmatpush1.bf16.msra.mxu0 %v657
    %1264 = vmatprep.subr.bf16.mxu0 0
    %1265 = vmatpush1.bf16.msra.mxu0 %v660
    %1266 = vmatprep.subr.bf16.mxu0 0
    %1267 = vmatpush1.bf16.msra.mxu0 %v663
    %1268 = vmatprep.subr.bf16.mxu0 0
    %1269 = vmatpush1.bf16.msra.mxu0 %v666
    %1270 = vmatprep.subr.bf16.mxu0 0
    %1271 = vmatpush1.bf16.msra.mxu0 %v669
    %1272 = vmatprep.subr.bf16.mxu0 0
    %1273 = vmatpush1.bf16.msra.mxu0 %v672
    %1274 = vmatprep.subr.bf16.mxu0 0
    %1275 = vmatpush1.bf16.msra.mxu0 0
    %1276 = vmatprep.subr.bf16.mxu0 0
    %1277 = vmatpush1.bf16.msra.mxu0 0
    %1278 = vmatprep.subr.bf16.mxu0 0
    %1279 = vmatpush1.bf16.msra.mxu0 0
    %1280 = vmatprep.subr.bf16.mxu0 0
    %1281 = vmatpush1.bf16.msra.mxu0 0
    %1282 = vmatprep.subr.bf16.mxu0 0
    %1283 = vmatpush1.bf16.msra.mxu0 0
    %1284 = vmatprep.subr.bf16.mxu0 0
    %1285 = vmatpush1.bf16.msra.mxu0 0
    %1286 = vmatprep.subr.bf16.mxu0 0
    %1287 = vmatpush1.bf16.msra.mxu0 0
    %1288 = vmatprep.subr.bf16.mxu0 0
    %1289 = vmatpush1.bf16.msra.mxu0 0
    %1290 = vmatprep.mubr.bf16.mxu0 0
    %1291 = vmatmul.mubr.bf16.gmra.mrb[0].mxu0 %v1216
    %v1292 = vpop.f32.mrb[0].mxu0
    %v1293 = vadd.f32 %v565, %v1292
    %v1294 = vpop.f32.mrb[0].mxu0
    %v1295 = vpop.f32.mrb[0].mxu0
    %v1296 = vpop.f32.mrb[0].mxu0
    %1297 = vdwg.mxu0
    %v1298 = vadd.f32 %v492, %v1252
    %v1299 = vxor.u32 %v1298, 2147483648
    %v1300 = vmul.f32 %v1299, 1.442695
    %v1301 = vpow.pop %v1300
    %v1302 = vadd.f32 %v1301, 1.0
    %v1303 = vrcp.pop %v1302
    %v1304 = vmul.f32 1.0, %v1303
    %v1305 = vadd.f32 %v494, %v1254
    %v1306 = vxor.u32 %v1305, 2147483648
    %v1307 = vmul.f32 %v1306, 1.442695
    %v1308 = vpow.pop %v1307
    %v1309 = vadd.f32 %v1308, 1.0
    %v1310 = vrcp.pop %v1309
    %v1311 = vmul.f32 1.0, %v1310
    %v1312 = vmul.f32 %v1304, %v1293
    %v1313 = vadd.f32 %v550, %v1312
    %v1314 = vtanh.pop %v1313
    %v1315 = vsub.f32 1.0, %v1311
    %v1316 = vmul.f32 %v1315, %v1314
    %v1317 = vmul.f32 %v1311, %v1214
    %v1318 = vadd.f32 %v1316, %v1317
    %1319 = vst [vmem:[#allocation2 + $0x28] sm:$0xff] %v1318
    %v1320 = vld [vmem:[#allocation2] sm:$0xff]
    %v1321 = vld [vmem:[#allocation2 + $0x8] sm:$0xff]
    %v1322 = vld [vmem:[#allocation2 + $0x10] sm:$0xff]
    %v1323 = vld [vmem:[#allocation2 + $0x18] sm:$0xff]
    %v1324 = vld [vmem:[#allocation2 + $0x20] sm:$0xff]
    %v1325 = vld [vmem:[#allocation2 + $0x28] sm:$0xff]
    %s1326 = scalar_lea.vmem [#allocation8], 192
    %v1327 = vld [vmem:[%s1326] sm:$0xff]
    %v1328 = vld [vmem:[%s1326 + $0x8] sm:$0xf]
    %v1329 = vld [vmem:[%s1326 + $0xc] sm:$0xff]
    %v1330 = vld [vmem:[%s1326 + $0x14] sm:$0xf]
    %v1331 = vld [vmem:[%s1326 + $0x18] sm:$0xff]
    %v1332 = vld [vmem:[%s1326 + $0x20] sm:$0xf]
    %v1333 = vld [vmem:[%s1326 + $0x24] sm:$0xff]
    %v1334 = vld [vmem:[%s1326 + $0x2c] sm:$0xf]
    %v1335 = vld [vmem:[%s1326 + $0x30] sm:$0xff]
    %v1336 = vld [vmem:[%s1326 + $0x38] sm:$0xf]
    %v1337 = vld [vmem:[%s1326 + $0x3c] sm:$0xff]
    %v1338 = vld [vmem:[%s1326 + $0x44] sm:$0xf]
    %v1339 = vld [vmem:[%s1326 + $0x48] sm:$0xff]
    %v1340 = vld [vmem:[%s1326 + $0x50] sm:$0xf]
    %v1341 = vld [vmem:[%s1326 + $0x54] sm:$0xff]
    %v1342 = vld [vmem:[%s1326 + $0x5c] sm:$0xf]
    %v1343 = vld [vmem:[%s1326 + $0x60] sm:$0xff]
    %v1344 = vld [vmem:[%s1326 + $0x68] sm:$0xf]
    %v1345 = vld [vmem:[%s1326 + $0x6c] sm:$0xff]
    %v1346 = vld [vmem:[%s1326 + $0x74] sm:$0xf]
    %v1347 = vld [vmem:[%s1326 + $0x78] sm:$0xff]
    %v1348 = vld [vmem:[%s1326 + $0x80] sm:$0xf]
    %v1349 = vld [vmem:[%s1326 + $0x84] sm:$0xff]
    %v1350 = vld [vmem:[%s1326 + $0x8c] sm:$0xf]
    %v1351 = vld [vmem:[%s1326 + $0x90] sm:$0xff]
    %v1352 = vld [vmem:[%s1326 + $0x98] sm:$0xf]
    %v1353 = vld [vmem:[%s1326 + $0x9c] sm:$0xff]
    %v1354 = vld [vmem:[%s1326 + $0xa4] sm:$0xf]
    %v1355 = vld [vmem:[%s1326 + $0xa8] sm:$0xff]
    %v1356 = vld [vmem:[%s1326 + $0xb0] sm:$0xf]
    %v1357 = vld [vmem:[%s1326 + $0xb4] sm:$0xff]
    %v1358 = vld [vmem:[%s1326 + $0xbc] sm:$0xf]
    %s1359 = scalar_lea.vmem [#allocation9], 192
    %v1360 = vld [vmem:[%s1359] sm:$0xff]
    %v1361 = vld [vmem:[%s1359 + $0x8] sm:$0xf]
    %v1362 = vld [vmem:[%s1359 + $0xc] sm:$0xff]
    %v1363 = vld [vmem:[%s1359 + $0x14] sm:$0xf]
    %v1364 = vld [vmem:[%s1359 + $0x18] sm:$0xff]
    %v1365 = vld [vmem:[%s1359 + $0x20] sm:$0xf]
    %v1366 = vld [vmem:[%s1359 + $0x24] sm:$0xff]
    %v1367 = vld [vmem:[%s1359 + $0x2c] sm:$0xf]
    %v1368 = vld [vmem:[%s1359 + $0x30] sm:$0xff]
    %v1369 = vld [vmem:[%s1359 + $0x38] sm:$0xf]
    %v1370 = vld [vmem:[%s1359 + $0x3c] sm:$0xff]
    %v1371 = vld [vmem:[%s1359 + $0x44] sm:$0xf]
    %v1372 = vld [vmem:[%s1359 + $0x48] sm:$0xff]
    %v1373 = vld [vmem:[%s1359 + $0x50] sm:$0xf]
    %v1374 = vld [vmem:[%s1359 + $0x54] sm:$0xff]
    %v1375 = vld [vmem:[%s1359 + $0x5c] sm:$0xf]
    %v1376 = vld [vmem:[%s1359 + $0x60] sm:$0xff]
    %v1377 = vld [vmem:[%s1359 + $0x68] sm:$0xf]
    %v1378 = vld [vmem:[%s1359 + $0x6c] sm:$0xff]
    %v1379 = vld [vmem:[%s1359 + $0x74] sm:$0xf]
    %v1380 = vld [vmem:[%s1359 + $0x78] sm:$0xff]
    %v1381 = vld [vmem:[%s1359 + $0x80] sm:$0xf]
    %v1382 = vld [vmem:[%s1359 + $0x84] sm:$0xff]
    %v1383 = vld [vmem:[%s1359 + $0x8c] sm:$0xf]
    %v1384 = vld [vmem:[%s1359 + $0x90] sm:$0xff]
    %v1385 = vld [vmem:[%s1359 + $0x98] sm:$0xf]
    %v1386 = vld [vmem:[%s1359 + $0x9c] sm:$0xff]
    %v1387 = vld [vmem:[%s1359 + $0xa4] sm:$0xf]
    %v1388 = vld [vmem:[%s1359 + $0xa8] sm:$0xff]
    %v1389 = vld [vmem:[%s1359 + $0xb0] sm:$0xf]
    %v1390 = vld [vmem:[%s1359 + $0xb4] sm:$0xff]
    %v1391 = vld [vmem:[%s1359 + $0xbc] sm:$0xf]
    %s1392 = scalar_lea.vmem [#allocation11], 3
    %v1393 = vld [vmem:[%s1392] sm:$0x7]
    %s1394 = scalar_lea.vmem [#allocation12], 3
    %v1395 = vld [vmem:[%s1394] sm:$0x7]
    %v1396 = vpack.c.bf16 %v1321, %v1320
    %v1397 = vpack.c.bf16 %v1323, %v1322
    %v1398 = vpack.c.bf16 %v1325, %v1324
    %v1400 = vlaneseq
    %v1401 = vshrl.u32 %v1400, 7
    %v1402 = vsub.s32 0, %v1401
    %v1403 = vrot.slane %v1393, %v1402
    %v1404 = vlaneseq
    %v1405 = vshrl.u32 %v1404, 7
    %v1406 = vsub.s32 1, %v1405
    %v1407 = vrot.slane %v1393, %v1406
    %v1408 = vlaneseq
    %v1409 = vshrl.u32 %v1408, 7
    %v1410 = vsub.s32 2, %v1409
    %v1411 = vrot.slane %v1393, %v1410
    %v1447 = vunpack.c.l.b16 %v1327
    %v1448 = vunpack.c.h.b16 %v1327
    %v1449 = vunpack.c.l.b16 %v1328
    %v1450 = vunpack.c.l.b16 %v1329
    %v1451 = vunpack.c.h.b16 %v1329
    %v1452 = vunpack.c.l.b16 %v1330
    %v1453 = vunpack.c.l.b16 %v1331
    %v1454 = vunpack.c.h.b16 %v1331
    %v1455 = vunpack.c.l.b16 %v1332
    %v1456 = vunpack.c.l.b16 %v1333
    %v1457 = vunpack.c.h.b16 %v1333
    %v1458 = vunpack.c.l.b16 %v1334
    %v1459 = vunpack.c.l.b16 %v1335
    %v1460 = vunpack.c.h.b16 %v1335
    %v1461 = vunpack.c.l.b16 %v1336
    %v1462 = vunpack.c.l.b16 %v1337
    %v1463 = vunpack.c.h.b16 %v1337
    %v1464 = vunpack.c.l.b16 %v1338
    %v1465 = vunpack.c.l.b16 %v1339
    %v1466 = vunpack.c.h.b16 %v1339
    %v1467 = vunpack.c.l.b16 %v1340
    %v1468 = vunpack.c.l.b16 %v1341
    %v1469 = vunpack.c.h.b16 %v1341
    %v1470 = vunpack.c.l.b16 %v1342
    %v1471 = vunpack.c.l.b16 %v1343
    %v1472 = vunpack.c.h.b16 %v1343
    %v1473 = vunpack.c.l.b16 %v1344
    %v1474 = vunpack.c.l.b16 %v1345
    %v1475 = vunpack.c.h.b16 %v1345
    %v1476 = vunpack.c.l.b16 %v1346
    %v1477 = vunpack.c.l.b16 %v1347
    %v1478 = vunpack.c.h.b16 %v1347
    %v1479 = vunpack.c.l.b16 %v1348
    %v1480 = vunpack.c.l.b16 %v1349
    %v1481 = vunpack.c.h.b16 %v1349
    %v1482 = vunpack.c.l.b16 %v1350
    %v1483 = vunpack.c.l.b16 %v1351
    %v1484 = vunpack.c.h.b16 %v1351
    %v1485 = vunpack.c.l.b16 %v1352
    %v1486 = vunpack.c.l.b16 %v1353
    %v1487 = vunpack.c.h.b16 %v1353
    %v1488 = vunpack.c.l.b16 %v1354
    %v1489 = vunpack.c.l.b16 %v1355
    %v1490 = vunpack.c.h.b16 %v1355
    %v1491 = vunpack.c.l.b16 %v1356
    %v1492 = vunpack.c.l.b16 %v1357
    %v1493 = vunpack.c.h.b16 %v1357
    %v1494 = vunpack.c.l.b16 %v1358
    %v1495 = vpack.c.b16 %v1450, %v1447
    %v1496 = vpack.c.b16 %v1451, %v1448
    %v1497 = vpack.c.b16 %v1452, %v1449
    %v1498 = vpack.c.b16 %v1456, %v1453
    %v1499 = vpack.c.b16 %v1457, %v1454
    %v1500 = vpack.c.b16 %v1458, %v1455
    %v1501 = vpack.c.b16 %v1462, %v1459
    %v1502 = vpack.c.b16 %v1463, %v1460
    %v1503 = vpack.c.b16 %v1464, %v1461
    %v1504 = vpack.c.b16 %v1468, %v1465
    %v1505 = vpack.c.b16 %v1469, %v1466
    %v1506 = vpack.c.b16 %v1470, %v1467
    %v1507 = vpack.c.b16 %v1474, %v1471
    %v1508 = vpack.c.b16 %v1475, %v1472
    %v1509 = vpack.c.b16 %v1476, %v1473
    %v1510 = vpack.c.b16 %v1480, %v1477
    %v1511 = vpack.c.b16 %v1481, %v1478
    %v1512 = vpack.c.b16 %v1482, %v1479
    %v1513 = vpack.c.b16 %v1486, %v1483
    %v1514 = vpack.c.b16 %v1487, %v1484
    %v1515 = vpack.c.b16 %v1488, %v1485
    %v1516 = vpack.c.b16 %v1492, %v1489
    %v1517 = vpack.c.b16 %v1493, %v1490
    %v1518 = vpack.c.b16 %v1494, %v1491
    %1543 = vmatprep.subr.bf16.mxu0 %v1496
    %1544 = vmatpush1.bf16.msra.mxu0 %v1495
    %1545 = vmatprep.subr.bf16.mxu0 %v1499
    %1546 = vmatpush1.bf16.msra.mxu0 %v1498
    %1547 = vmatprep.subr.bf16.mxu0 %v1502
    %1548 = vmatpush1.bf16.msra.mxu0 %v1501
    %1549 = vmatprep.subr.bf16.mxu0 %v1505
    %1550 = vmatpush1.bf16.msra.mxu0 %v1504
    %1551 = vmatprep.subr.bf16.mxu0 %v1508
    %1552 = vmatpush1.bf16.msra.mxu0 %v1507
    %1553 = vmatprep.subr.bf16.mxu0 %v1511
    %1554 = vmatpush1.bf16.msra.mxu0 %v1510
    %1555 = vmatprep.subr.bf16.mxu0 %v1514
    %1556 = vmatpush1.bf16.msra.mxu0 %v1513
    %1557 = vmatprep.subr.bf16.mxu0 %v1517
    %1558 = vmatpush1.bf16.msra.mxu0 %v1516
    %1559 = vmatprep.subr.bf16.mxu0 0
    %1560 = vmatpush1.bf16.msra.mxu0 0
    %1561 = vmatprep.subr.bf16.mxu0 0
    %1562 = vmatpush1.bf16.msra.mxu0 0
    %1563 = vmatprep.subr.bf16.mxu0 0
    %1564 = vmatpush1.bf16.msra.mxu0 0
    %1565 = vmatprep.subr.bf16.mxu0 0
    %1566 = vmatpush1.bf16.msra.mxu0 0
    %1567 = vmatprep.subr.bf16.mxu0 0
    %1568 = vmatpush1.bf16.msra.mxu0 0
    %1569 = vmatprep.subr.bf16.mxu0 0
    %1570 = vmatpush1.bf16.msra.mxu0 0
    %1571 = vmatprep.subr.bf16.mxu0 0
    %1572 = vmatpush1.bf16.msra.mxu0 0
    %1573 = vmatprep.subr.bf16.mxu0 0
    %1574 = vmatpush1.bf16.msra.mxu0 0
    %1575 = vmatprep.mubr.bf16.mxu0 0
    %1576 = vmatmul.mubr.bf16.gmra.mrb[0].mxu0 %v1396
    %v1577 = vpop.f32.mrb[0].mxu0
    %v1578 = vadd.f32 %v1403, %v1577
    %v1579 = vpop.f32.mrb[0].mxu0
    %v1580 = vadd.f32 %v1407, %v1579
    %v1581 = vpop.f32.mrb[0].mxu0
    %v1582 = vadd.f32 %v1403, %v1581
    %v1583 = vpop.f32.mrb[0].mxu0
    %v1584 = vadd.f32 %v1407, %v1583
    %1585 = vmatprep.mubr.bf16.mxu0 0
    %1586 = vmatmul.mubr.bf16.gmra.mrb[0].mxu0 %v1397
    %v1587 = vpop.f32.mrb[0].mxu0
    %v1588 = vadd.f32 %v1403, %v1587
    %v1589 = vpop.f32.mrb[0].mxu0
    %v1590 = vadd.f32 %v1407, %v1589
    %v1591 = vpop.f32.mrb[0].mxu0
    %v1592 = vadd.f32 %v1403, %v1591
    %v1593 = vpop.f32.mrb[0].mxu0
    %v1594 = vadd.f32 %v1407, %v1593
    %1595 = vmatprep.mubr.bf16.mxu0 0
    %1596 = vmatmul.mubr.bf16.gmra.mrb[0].mxu0 %v1398
    %v1597 = vpop.f32.mrb[0].mxu0
    %v1598 = vadd.f32 %v1403, %v1597
    %v1599 = vpop.f32.mrb[0].mxu0
    %v1600 = vadd.f32 %v1407, %v1599
    %v1601 = vpop.f32.mrb[0].mxu0
    %v1602 = vadd.f32 %v1403, %v1601
    %v1603 = vpop.f32.mrb[0].mxu0
    %v1604 = vadd.f32 %v1407, %v1603
    %1605 = vdwg.mxu0
    %1606 = vmatprep.subr.bf16.mxu0 0
    %1607 = vmatpush1.bf16.msra.mxu0 %v1497
    %1608 = vmatprep.subr.bf16.mxu0 0
    %1609 = vmatpush1.bf16.msra.mxu0 %v1500
    %1610 = vmatprep.subr.bf16.mxu0 0
    %1611 = vmatpush1.bf16.msra.mxu0 %v1503
    %1612 = vmatprep.subr.bf16.mxu0 0
    %1613 = vmatpush1.bf16.msra.mxu0 %v1506
    %1614 = vmatprep.subr.bf16.mxu0 0
    %1615 = vmatpush1.bf16.msra.mxu0 %v1509
    %1616 = vmatprep.subr.bf16.mxu0 0
    %1617 = vmatpush1.bf16.msra.mxu0 %v1512
    %1618 = vmatprep.subr.bf16.mxu0 0
    %1619 = vmatpush1.bf16.msra.mxu0 %v1515
    %1620 = vmatprep.subr.bf16.mxu0 0
    %1621 = vmatpush1.bf16.msra.mxu0 %v1518
    %1622 = vmatprep.subr.bf16.mxu0 0
    %1623 = vmatpush1.bf16.msra.mxu0 0
    %1624 = vmatprep.subr.bf16.mxu0 0
    %1625 = vmatpush1.bf16.msra.mxu0 0
    %1626 = vmatprep.subr.bf16.mxu0 0
    %1627 = vmatpush1.bf16.msra.mxu0 0
    %1628 = vmatprep.subr.bf16.mxu0 0
    %1629 = vmatpush1.bf16.msra.mxu0 0
    %1630 = vmatprep.subr.bf16.mxu0 0
    %1631 = vmatpush1.bf16.msra.mxu0 0
    %1632 = vmatprep.subr.bf16.mxu0 0
    %1633 = vmatpush1.bf16.msra.mxu0 0
    %1634 = vmatprep.subr.bf16.mxu0 0
    %1635 = vmatpush1.bf16.msra.mxu0 0
    %1636 = vmatprep.subr.bf16.mxu0 0
    %1637 = vmatpush1.bf16.msra.mxu0 0
    %1638 = vmatprep.mubr.bf16.mxu0 0
    %1639 = vmatmul.mubr.bf16.gmra.mrb[0].mxu0 %v1396
    %v1640 = vpop.f32.mrb[0].mxu0
    %v1641 = vadd.f32 %v1411, %v1640
    %v1642 = vpop.f32.mrb[0].mxu0
    %v1643 = vpop.f32.mrb[0].mxu0
    %v1644 = vadd.f32 %v1411, %v1643
    %v1645 = vpop.f32.mrb[0].mxu0
    %1646 = vmatprep.mubr.bf16.mxu0 0
    %1647 = vmatmul.mubr.bf16.gmra.mrb[0].mxu0 %v1397
    %v1648 = vpop.f32.mrb[0].mxu0
    %v1649 = vadd.f32 %v1411, %v1648
    %v1650 = vpop.f32.mrb[0].mxu0
    %v1651 = vpop.f32.mrb[0].mxu0
    %v1652 = vadd.f32 %v1411, %v1651
    %v1653 = vpop.f32.mrb[0].mxu0
    %1654 = vmatprep.mubr.bf16.mxu0 0
    %1655 = vmatmul.mubr.bf16.gmra.mrb[0].mxu0 %v1398
    %v1656 = vpop.f32.mrb[0].mxu0
    %v1657 = vadd.f32 %v1411, %v1656
    %v1658 = vpop.f32.mrb[0].mxu0
    %v1659 = vpop.f32.mrb[0].mxu0
    %v1660 = vadd.f32 %v1411, %v1659
    %v1661 = vpop.f32.mrb[0].mxu0
    %1662 = vdwg.mxu0
    %v1664 = vlaneseq
    %v1665 = vshrl.u32 %v1664, 7
    %v1666 = vsub.s32 0, %v1665
    %v1667 = vrot.slane %v1395, %v1666
    %v1668 = vlaneseq
    %v1669 = vshrl.u32 %v1668, 7
    %v1670 = vsub.s32 1, %v1669
    %v1671 = vrot.slane %v1395, %v1670
    %v1672 = vlaneseq
    %v1673 = vshrl.u32 %v1672, 7
    %v1674 = vsub.s32 2, %v1673
    %v1675 = vrot.slane %v1395, %v1674
    %v1711 = vunpack.c.l.b16 %v1360
    %v1712 = vunpack.c.h.b16 %v1360
    %v1713 = vunpack.c.l.b16 %v1361
    %v1714 = vunpack.c.l.b16 %v1362
    %v1715 = vunpack.c.h.b16 %v1362
    %v1716 = vunpack.c.l.b16 %v1363
    %v1717 = vunpack.c.l.b16 %v1364
    %v1718 = vunpack.c.h.b16 %v1364
    %v1719 = vunpack.c.l.b16 %v1365
    %v1720 = vunpack.c.l.b16 %v1366
    %v1721 = vunpack.c.h.b16 %v1366
    %v1722 = vunpack.c.l.b16 %v1367
    %v1723 = vunpack.c.l.b16 %v1368
    %v1724 = vunpack.c.h.b16 %v1368
    %v1725 = vunpack.c.l.b16 %v1369
    %v1726 = vunpack.c.l.b16 %v1370
    %v1727 = vunpack.c.h.b16 %v1370
    %v1728 = vunpack.c.l.b16 %v1371
    %v1729 = vunpack.c.l.b16 %v1372
    %v1730 = vunpack.c.h.b16 %v1372
    %v1731 = vunpack.c.l.b16 %v1373
    %v1732 = vunpack.c.l.b16 %v1374
    %v1733 = vunpack.c.h.b16 %v1374
    %v1734 = vunpack.c.l.b16 %v1375
    %v1735 = vunpack.c.l.b16 %v1376
    %v1736 = vunpack.c.h.b16 %v1376
    %v1737 = vunpack.c.l.b16 %v1377
    %v1738 = vunpack.c.l.b16 %v1378
    %v1739 = vunpack.c.h.b16 %v1378
    %v1740 = vunpack.c.l.b16 %v1379
    %v1741 = vunpack.c.l.b16 %v1380
    %v1742 = vunpack.c.h.b16 %v1380
    %v1743 = vunpack.c.l.b16 %v1381
    %v1744 = vunpack.c.l.b16 %v1382
    %v1745 = vunpack.c.h.b16 %v1382
    %v1746 = vunpack.c.l.b16 %v1383
    %v1747 = vunpack.c.l.b16 %v1384
    %v1748 = vunpack.c.h.b16 %v1384
    %v1749 = vunpack.c.l.b16 %v1385
    %v1750 = vunpack.c.l.b16 %v1386
    %v1751 = vunpack.c.h.b16 %v1386
    %v1752 = vunpack.c.l.b16 %v1387
    %v1753 = vunpack.c.l.b16 %v1388
    %v1754 = vunpack.c.h.b16 %v1388
    %v1755 = vunpack.c.l.b16 %v1389
    %v1756 = vunpack.c.l.b16 %v1390
    %v1757 = vunpack.c.h.b16 %v1390
    %v1758 = vunpack.c.l.b16 %v1391
    %v1759 = vpack.c.b16 %v1714, %v1711
    %v1760 = vpack.c.b16 %v1715, %v1712
    %v1761 = vpack.c.b16 %v1716, %v1713
    %v1762 = vpack.c.b16 %v1720, %v1717
    %v1763 = vpack.c.b16 %v1721, %v1718
    %v1764 = vpack.c.b16 %v1722, %v1719
    %v1765 = vpack.c.b16 %v1726, %v1723
    %v1766 = vpack.c.b16 %v1727, %v1724
    %v1767 = vpack.c.b16 %v1728, %v1725
    %v1768 = vpack.c.b16 %v1732, %v1729
    %v1769 = vpack.c.b16 %v1733, %v1730
    %v1770 = vpack.c.b16 %v1734, %v1731
    %v1771 = vpack.c.b16 %v1738, %v1735
    %v1772 = vpack.c.b16 %v1739, %v1736
    %v1773 = vpack.c.b16 %v1740, %v1737
    %v1774 = vpack.c.b16 %v1744, %v1741
    %v1775 = vpack.c.b16 %v1745, %v1742
    %v1776 = vpack.c.b16 %v1746, %v1743
    %v1777 = vpack.c.b16 %v1750, %v1747
    %v1778 = vpack.c.b16 %v1751, %v1748
    %v1779 = vpack.c.b16 %v1752, %v1749
    %v1780 = vpack.c.b16 %v1756, %v1753
    %v1781 = vpack.c.b16 %v1757, %v1754
    %v1782 = vpack.c.b16 %v1758, %v1755
    %1807 = vmatprep.subr.bf16.mxu0 %v1760
    %1808 = vmatpush1.bf16.msra.mxu0 %v1759
    %1809 = vmatprep.subr.bf16.mxu0 %v1763
    %1810 = vmatpush1.bf16.msra.mxu0 %v1762
    %1811 = vmatprep.subr.bf16.mxu0 %v1766
    %1812 = vmatpush1.bf16.msra.mxu0 %v1765
    %1813 = vmatprep.subr.bf16.mxu0 %v1769
    %1814 = vmatpush1.bf16.msra.mxu0 %v1768
    %1815 = vmatprep.subr.bf16.mxu0 %v1772
    %1816 = vmatpush1.bf16.msra.mxu0 %v1771
    %1817 = vmatprep.subr.bf16.mxu0 %v1775
    %1818 = vmatpush1.bf16.msra.mxu0 %v1774
    %1819 = vmatprep.subr.bf16.mxu0 %v1778
    %1820 = vmatpush1.bf16.msra.mxu0 %v1777
    %1821 = vmatprep.subr.bf16.mxu0 %v1781
    %1822 = vmatpush1.bf16.msra.mxu0 %v1780
    %1823 = vmatprep.subr.bf16.mxu0 0
    %1824 = vmatpush1.bf16.msra.mxu0 0
    %1825 = vmatprep.subr.bf16.mxu0 0
    %1826 = vmatpush1.bf16.msra.mxu0 0
    %1827 = vmatprep.subr.bf16.mxu0 0
    %1828 = vmatpush1.bf16.msra.mxu0 0
    %1829 = vmatprep.subr.bf16.mxu0 0
    %1830 = vmatpush1.bf16.msra.mxu0 0
    %1831 = vmatprep.subr.bf16.mxu0 0
    %1832 = vmatpush1.bf16.msra.mxu0 0
    %1833 = vmatprep.subr.bf16.mxu0 0
    %1834 = vmatpush1.bf16.msra.mxu0 0
    %1835 = vmatprep.subr.bf16.mxu0 0
    %1836 = vmatpush1.bf16.msra.mxu0 0
    %1837 = vmatprep.subr.bf16.mxu0 0
    %1838 = vmatpush1.bf16.msra.mxu0 0
    %1839 = vmatprep.mubr.bf16.mxu0 0
    %1840 = vmatmul.mubr.bf16.gmra.mrb[0].mxu0 0
    %v1841 = vpop.f32.mrb[0].mxu0
    %v1842 = vadd.f32 %v1667, %v1841
    %v1843 = vpop.f32.mrb[0].mxu0
    %v1844 = vadd.f32 %v1671, %v1843
    %v1845 = vpop.f32.mrb[0].mxu0
    %v1846 = vpop.f32.mrb[0].mxu0
    %1847 = vdwg.mxu0
    %1848 = vmatprep.subr.bf16.mxu0 0
    %1849 = vmatpush1.bf16.msra.mxu0 %v1761
    %1850 = vmatprep.subr.bf16.mxu0 0
    %1851 = vmatpush1.bf16.msra.mxu0 %v1764
    %1852 = vmatprep.subr.bf16.mxu0 0
    %1853 = vmatpush1.bf16.msra.mxu0 %v1767
    %1854 = vmatprep.subr.bf16.mxu0 0
    %1855 = vmatpush1.bf16.msra.mxu0 %v1770
    %1856 = vmatprep.subr.bf16.mxu0 0
    %1857 = vmatpush1.bf16.msra.mxu0 %v1773
    %1858 = vmatprep.subr.bf16.mxu0 0
    %1859 = vmatpush1.bf16.msra.mxu0 %v1776
    %1860 = vmatprep.subr.bf16.mxu0 0
    %1861 = vmatpush1.bf16.msra.mxu0 %v1779
    %1862 = vmatprep.subr.bf16.mxu0 0
    %1863 = vmatpush1.bf16.msra.mxu0 %v1782
    %1864 = vmatprep.subr.bf16.mxu0 0
    %1865 = vmatpush1.bf16.msra.mxu0 0
    %1866 = vmatprep.subr.bf16.mxu0 0
    %1867 = vmatpush1.bf16.msra.mxu0 0
    %1868 = vmatprep.subr.bf16.mxu0 0
    %1869 = vmatpush1.bf16.msra.mxu0 0
    %1870 = vmatprep.subr.bf16.mxu0 0
    %1871 = vmatpush1.bf16.msra.mxu0 0
    %1872 = vmatprep.subr.bf16.mxu0 0
    %1873 = vmatpush1.bf16.msra.mxu0 0
    %1874 = vmatprep.subr.bf16.mxu0 0
    %1875 = vmatpush1.bf16.msra.mxu0 0
    %1876 = vmatprep.subr.bf16.mxu0 0
    %1877 = vmatpush1.bf16.msra.mxu0 0
    %1878 = vmatprep.subr.bf16.mxu0 0
    %1879 = vmatpush1.bf16.msra.mxu0 0
    %1880 = vmatprep.mubr.bf16.mxu0 0
    %1881 = vmatmul.mubr.bf16.gmra.mrb[0].mxu0 0
    %v1882 = vpop.f32.mrb[0].mxu0
    %v1883 = vadd.f32 %v1675, %v1882
    %v1884 = vpop.f32.mrb[0].mxu0
    %v1885 = vpop.f32.mrb[0].mxu0
    %v1886 = vpop.f32.mrb[0].mxu0
    %1887 = vdwg.mxu0
    %v1888 = vadd.f32 %v1578, %v1842
    %v1889 = vxor.u32 %v1888, 2147483648
    %v1890 = vmul.f32 %v1889, 1.442695
    %v1891 = vpow.pop %v1890
    %v1892 = vadd.f32 %v1891, 1.0
    %v1893 = vrcp.pop %v1892
    %v1894 = vmul.f32 1.0, %v1893
    %v1895 = vadd.f32 %v1580, %v1844
    %v1896 = vxor.u32 %v1895, 2147483648
    %v1897 = vmul.f32 %v1896, 1.442695
    %v1898 = vpow.pop %v1897
    %v1899 = vadd.f32 %v1898, 1.0
    %v1900 = vrcp.pop %v1899
    %v1901 = vmul.f32 1.0, %v1900
    %v1902 = vmul.f32 %v1894, %v1883
    %v1903 = vadd.f32 %v1641, %v1902
    %v1904 = vtanh.pop %v1903
    %v1905 = vsub.f32 1.0, %v1901
    %v1906 = vmul.f32 %v1905, %v1904
    %v1907 = vmul.f32 %v1901, 0.0
    %v1908 = vadd.f32 %v1906, %v1907
    %1909 = vst [vmem:[#allocation2] sm:$0xff] %v1908
    %v1910 = vpack.c.bf16 %v1908, %v1908
    %1911 = vmatprep.subr.bf16.mxu0 %v1760
    %1912 = vmatpush1.bf16.msra.mxu0 %v1759
    %1913 = vmatprep.subr.bf16.mxu0 %v1763
    %1914 = vmatpush1.bf16.msra.mxu0 %v1762
    %1915 = vmatprep.subr.bf16.mxu0 %v1766
    %1916 = vmatpush1.bf16.msra.mxu0 %v1765
    %1917 = vmatprep.subr.bf16.mxu0 %v1769
    %1918 = vmatpush1.bf16.msra.mxu0 %v1768
    %1919 = vmatprep.subr.bf16.mxu0 %v1772
    %1920 = vmatpush1.bf16.msra.mxu0 %v1771
    %1921 = vmatprep.subr.bf16.mxu0 %v1775
    %1922 = vmatpush1.bf16.msra.mxu0 %v1774
    %1923 = vmatprep.subr.bf16.mxu0 %v1778
    %1924 = vmatpush1.bf16.msra.mxu0 %v1777
    %1925 = vmatprep.subr.bf16.mxu0 %v1781
    %1926 = vmatpush1.bf16.msra.mxu0 %v1780
    %1927 = vmatprep.subr.bf16.mxu0 0
    %1928 = vmatpush1.bf16.msra.mxu0 0
    %1929 = vmatprep.subr.bf16.mxu0 0
    %1930 = vmatpush1.bf16.msra.mxu0 0
    %1931 = vmatprep.subr.bf16.mxu0 0
    %1932 = vmatpush1.bf16.msra.mxu0 0
    %1933 = vmatprep.subr.bf16.mxu0 0
    %1934 = vmatpush1.bf16.msra.mxu0 0
    %1935 = vmatprep.subr.bf16.mxu0 0
    %1936 = vmatpush1.bf16.msra.mxu0 0
    %1937 = vmatprep.subr.bf16.mxu0 0
    %1938 = vmatpush1.bf16.msra.mxu0 0
    %1939 = vmatprep.subr.bf16.mxu0 0
    %1940 = vmatpush1.bf16.msra.mxu0 0
    %1941 = vmatprep.subr.bf16.mxu0 0
    %1942 = vmatpush1.bf16.msra.mxu0 0
    %1943 = vmatprep.mubr.bf16.mxu0 0
    %1944 = vmatmul.mubr.bf16.gmra.mrb[0].mxu0 %v1910
    %v1945 = vpop.f32.mrb[0].mxu0
    %v1946 = vadd.f32 %v1667, %v1945
    %v1947 = vpop.f32.mrb[0].mxu0
    %v1948 = vadd.f32 %v1671, %v1947
    %v1949 = vpop.f32.mrb[0].mxu0
    %v1950 = vpop.f32.mrb[0].mxu0
    %1951 = vdwg.mxu0
    %1952 = vmatprep.subr.bf16.mxu0 0
    %1953 = vmatpush1.bf16.msra.mxu0 %v1761
    %1954 = vmatprep.subr.bf16.mxu0 0
    %1955 = vmatpush1.bf16.msra.mxu0 %v1764
    %1956 = vmatprep.subr.bf16.mxu0 0
    %1957 = vmatpush1.bf16.msra.mxu0 %v1767
    %1958 = vmatprep.subr.bf16.mxu0 0
    %1959 = vmatpush1.bf16.msra.mxu0 %v1770
    %1960 = vmatprep.subr.bf16.mxu0 0
    %1961 = vmatpush1.bf16.msra.mxu0 %v1773
    %1962 = vmatprep.subr.bf16.mxu0 0
    %1963 = vmatpush1.bf16.msra.mxu0 %v1776
    %1964 = vmatprep.subr.bf16.mxu0 0
    %1965 = vmatpush1.bf16.msra.mxu0 %v1779
    %1966 = vmatprep.subr.bf16.mxu0 0
    %1967 = vmatpush1.bf16.msra.mxu0 %v1782
    %1968 = vmatprep.subr.bf16.mxu0 0
    %1969 = vmatpush1.bf16.msra.mxu0 0
    %1970 = vmatprep.subr.bf16.mxu0 0
    %1971 = vmatpush1.bf16.msra.mxu0 0
    %1972 = vmatprep.subr.bf16.mxu0 0
    %1973 = vmatpush1.bf16.msra.mxu0 0
    %1974 = vmatprep.subr.bf16.mxu0 0
    %1975 = vmatpush1.bf16.msra.mxu0 0
    %1976 = vmatprep.subr.bf16.mxu0 0
    %1977 = vmatpush1.bf16.msra.mxu0 0
    %1978 = vmatprep.subr.bf16.mxu0 0
    %1979 = vmatpush1.bf16.msra.mxu0 0
    %1980 = vmatprep.subr.bf16.mxu0 0
    %1981 = vmatpush1.bf16.msra.mxu0 0
    %1982 = vmatprep.subr.bf16.mxu0 0
    %1983 = vmatpush1.bf16.msra.mxu0 0
    %1984 = vmatprep.mubr.bf16.mxu0 0
    %1985 = vmatmul.mubr.bf16.gmra.mrb[0].mxu0 %v1910
    %v1986 = vpop.f32.mrb[0].mxu0
    %v1987 = vadd.f32 %v1675, %v1986
    %v1988 = vpop.f32.mrb[0].mxu0
    %v1989 = vpop.f32.mrb[0].mxu0
    %v1990 = vpop.f32.mrb[0].mxu0
    %1991 = vdwg.mxu0
    %v1992 = vadd.f32 %v1582, %v1946
    %v1993 = vxor.u32 %v1992, 2147483648
    %v1994 = vmul.f32 %v1993, 1.442695
    %v1995 = vpow.pop %v1994
    %v1996 = vadd.f32 %v1995, 1.0
    %v1997 = vrcp.pop %v1996
    %v1998 = vmul.f32 1.0, %v1997
    %v1999 = vadd.f32 %v1584, %v1948
    %v2000 = vxor.u32 %v1999, 2147483648
    %v2001 = vmul.f32 %v2000, 1.442695
    %v2002 = vpow.pop %v2001
    %v2003 = vadd.f32 %v2002, 1.0
    %v2004 = vrcp.pop %v2003
    %v2005 = vmul.f32 1.0, %v2004
    %v2006 = vmul.f32 %v1998, %v1987
    %v2007 = vadd.f32 %v1644, %v2006
    %v2008 = vtanh.pop %v2007
    %v2009 = vsub.f32 1.0, %v2005
    %v2010 = vmul.f32 %v2009, %v2008
    %v2011 = vmul.f32 %v2005, %v1908
    %v2012 = vadd.f32 %v2010, %v2011
    %2013 = vst [vmem:[#allocation2 + $0x8] sm:$0xff] %v2012
    %v2014 = vpack.c.bf16 %v2012, %v2012
    %2015 = vmatprep.subr.bf16.mxu0 %v1760
    %2016 = vmatpush1.bf16.msra.mxu0 %v1759
    %2017 = vmatprep.subr.bf16.mxu0 %v1763
    %2018 = vmatpush1.bf16.msra.mxu0 %v1762
    %2019 = vmatprep.subr.bf16.mxu0 %v1766
    %2020 = vmatpush1.bf16.msra.mxu0 %v1765
    %2021 = vmatprep.subr.bf16.mxu0 %v1769
    %2022 = vmatpush1.bf16.msra.mxu0 %v1768
    %2023 = vmatprep.subr.bf16.mxu0 %v1772
    %2024 = vmatpush1.bf16.msra.mxu0 %v1771
    %2025 = vmatprep.subr.bf16.mxu0 %v1775
    %2026 = vmatpush1.bf16.msra.mxu0 %v1774
    %2027 = vmatprep.subr.bf16.mxu0 %v1778
    %2028 = vmatpush1.bf16.msra.mxu0 %v1777
    %2029 = vmatprep.subr.bf16.mxu0 %v1781
    %2030 = vmatpush1.bf16.msra.mxu0 %v1780
    %2031 = vmatprep.subr.bf16.mxu0 0
    %2032 = vmatpush1.bf16.msra.mxu0 0
    %2033 = vmatprep.subr.bf16.mxu0 0
    %2034 = vmatpush1.bf16.msra.mxu0 0
    %2035 = vmatprep.subr.bf16.mxu0 0
    %2036 = vmatpush1.bf16.msra.mxu0 0
    %2037 = vmatprep.subr.bf16.mxu0 0
    %2038 = vmatpush1.bf16.msra.mxu0 0
    %2039 = vmatprep.subr.bf16.mxu0 0
    %2040 = vmatpush1.bf16.msra.mxu0 0
    %2041 = vmatprep.subr.bf16.mxu0 0
    %2042 = vmatpush1.bf16.msra.mxu0 0
    %2043 = vmatprep.subr.bf16.mxu0 0
    %2044 = vmatpush1.bf16.msra.mxu0 0
    %2045 = vmatprep.subr.bf16.mxu0 0
    %2046 = vmatpush1.bf16.msra.mxu0 0
    %2047 = vmatprep.mubr.bf16.mxu0 0
    %2048 = vmatmul.mubr.bf16.gmra.mrb[0].mxu0 %v2014
    %v2049 = vpop.f32.mrb[0].mxu0
    %v2050 = vadd.f32 %v1667, %v2049
    %v2051 = vpop.f32.mrb[0].mxu0
    %v2052 = vadd.f32 %v1671, %v2051
    %v2053 = vpop.f32.mrb[0].mxu0
    %v2054 = vpop.f32.mrb[0].mxu0
    %2055 = vdwg.mxu0
    %2056 = vmatprep.subr.bf16.mxu0 0
    %2057 = vmatpush1.bf16.msra.mxu0 %v1761
    %2058 = vmatprep.subr.bf16.mxu0 0
    %2059 = vmatpush1.bf16.msra.mxu0 %v1764
    %2060 = vmatprep.subr.bf16.mxu0 0
    %2061 = vmatpush1.bf16.msra.mxu0 %v1767
    %2062 = vmatprep.subr.bf16.mxu0 0
    %2063 = vmatpush1.bf16.msra.mxu0 %v1770
    %2064 = vmatprep.subr.bf16.mxu0 0
    %2065 = vmatpush1.bf16.msra.mxu0 %v1773
    %2066 = vmatprep.subr.bf16.mxu0 0
    %2067 = vmatpush1.bf16.msra.mxu0 %v1776
    %2068 = vmatprep.subr.bf16.mxu0 0
    %2069 = vmatpush1.bf16.msra.mxu0 %v1779
    %2070 = vmatprep.subr.bf16.mxu0 0
    %2071 = vmatpush1.bf16.msra.mxu0 %v1782
    %2072 = vmatprep.subr.bf16.mxu0 0
    %2073 = vmatpush1.bf16.msra.mxu0 0
    %2074 = vmatprep.subr.bf16.mxu0 0
    %2075 = vmatpush1.bf16.msra.mxu0 0
    %2076 = vmatprep.subr.bf16.mxu0 0
    %2077 = vmatpush1.bf16.msra.mxu0 0
    %2078 = vmatprep.subr.bf16.mxu0 0
    %2079 = vmatpush1.bf16.msra.mxu0 0
    %2080 = vmatprep.subr.bf16.mxu0 0
    %2081 = vmatpush1.bf16.msra.mxu0 0
    %2082 = vmatprep.subr.bf16.mxu0 0
    %2083 = vmatpush1.bf16.msra.mxu0 0
    %2084 = vmatprep.subr.bf16.mxu0 0
    %2085 = vmatpush1.bf16.msra.mxu0 0
    %2086 = vmatprep.subr.bf16.mxu0 0
    %2087 = vmatpush1.bf16.msra.mxu0 0
    %2088 = vmatprep.mubr.bf16.mxu0 0
    %2089 = vmatmul.mubr.bf16.gmra.mrb[0].mxu0 %v2014
    %v2090 = vpop.f32.mrb[0].mxu0
    %v2091 = vadd.f32 %v1675, %v2090
    %v2092 = vpop.f32.mrb[0].mxu0
    %v2093 = vpop.f32.mrb[0].mxu0
    %v2094 = vpop.f32.mrb[0].mxu0
    %2095 = vdwg.mxu0
    %v2096 = vadd.f32 %v1588, %v2050
    %v2097 = vxor.u32 %v2096, 2147483648
    %v2098 = vmul.f32 %v2097, 1.442695
    %v2099 = vpow.pop %v2098
    %v2100 = vadd.f32 %v2099, 1.0
    %v2101 = vrcp.pop %v2100
    %v2102 = vmul.f32 1.0, %v2101
    %v2103 = vadd.f32 %v1590, %v2052
    %v2104 = vxor.u32 %v2103, 2147483648
    %v2105 = vmul.f32 %v2104, 1.442695
    %v2106 = vpow.pop %v2105
    %v2107 = vadd.f32 %v2106, 1.0
    %v2108 = vrcp.pop %v2107
    %v2109 = vmul.f32 1.0, %v2108
    %v2110 = vmul.f32 %v2102, %v2091
    %v2111 = vadd.f32 %v1649, %v2110
    %v2112 = vtanh.pop %v2111
    %v2113 = vsub.f32 1.0, %v2109
    %v2114 = vmul.f32 %v2113, %v2112
    %v2115 = vmul.f32 %v2109, %v2012
    %v2116 = vadd.f32 %v2114, %v2115
    %2117 = vst [vmem:[#allocation2 + $0x10] sm:$0xff] %v2116
    %v2118 = vpack.c.bf16 %v2116, %v2116
    %2119 = vmatprep.subr.bf16.mxu0 %v1760
    %2120 = vmatpush1.bf16.msra.mxu0 %v1759
    %2121 = vmatprep.subr.bf16.mxu0 %v1763
    %2122 = vmatpush1.bf16.msra.mxu0 %v1762
    %2123 = vmatprep.subr.bf16.mxu0 %v1766
    %2124 = vmatpush1.bf16.msra.mxu0 %v1765
    %2125 = vmatprep.subr.bf16.mxu0 %v1769
    %2126 = vmatpush1.bf16.msra.mxu0 %v1768
    %2127 = vmatprep.subr.bf16.mxu0 %v1772
    %2128 = vmatpush1.bf16.msra.mxu0 %v1771
    %2129 = vmatprep.subr.bf16.mxu0 %v1775
    %2130 = vmatpush1.bf16.msra.mxu0 %v1774
    %2131 = vmatprep.subr.bf16.mxu0 %v1778
    %2132 = vmatpush1.bf16.msra.mxu0 %v1777
    %2133 = vmatprep.subr.bf16.mxu0 %v1781
    %2134 = vmatpush1.bf16.msra.mxu0 %v1780
    %2135 = vmatprep.subr.bf16.mxu0 0
    %2136 = vmatpush1.bf16.msra.mxu0 0
    %2137 = vmatprep.subr.bf16.mxu0 0
    %2138 = vmatpush1.bf16.msra.mxu0 0
    %2139 = vmatprep.subr.bf16.mxu0 0
    %2140 = vmatpush1.bf16.msra.mxu0 0
    %2141 = vmatprep.subr.bf16.mxu0 0
    %2142 = vmatpush1.bf16.msra.mxu0 0
    %2143 = vmatprep.subr.bf16.mxu0 0
    %2144 = vmatpush1.bf16.msra.mxu0 0
    %2145 = vmatprep.subr.bf16.mxu0 0
    %2146 = vmatpush1.bf16.msra.mxu0 0
    %2147 = vmatprep.subr.bf16.mxu0 0
    %2148 = vmatpush1.bf16.msra.mxu0 0
    %2149 = vmatprep.subr.bf16.mxu0 0
    %2150 = vmatpush1.bf16.msra.mxu0 0
    %2151 = vmatprep.mubr.bf16.mxu0 0
    %2152 = vmatmul.mubr.bf16.gmra.mrb[0].mxu0 %v2118
    %v2153 = vpop.f32.mrb[0].mxu0
    %v2154 = vadd.f32 %v1667, %v2153
    %v2155 = vpop.f32.mrb[0].mxu0
    %v2156 = vadd.f32 %v1671, %v2155
    %v2157 = vpop.f32.mrb[0].mxu0
    %v2158 = vpop.f32.mrb[0].mxu0
    %2159 = vdwg.mxu0
    %2160 = vmatprep.subr.bf16.mxu0 0
    %2161 = vmatpush1.bf16.msra.mxu0 %v1761
    %2162 = vmatprep.subr.bf16.mxu0 0
    %2163 = vmatpush1.bf16.msra.mxu0 %v1764
    %2164 = vmatprep.subr.bf16.mxu0 0
    %2165 = vmatpush1.bf16.msra.mxu0 %v1767
    %2166 = vmatprep.subr.bf16.mxu0 0
    %2167 = vmatpush1.bf16.msra.mxu0 %v1770
    %2168 = vmatprep.subr.bf16.mxu0 0
    %2169 = vmatpush1.bf16.msra.mxu0 %v1773
    %2170 = vmatprep.subr.bf16.mxu0 0
    %2171 = vmatpush1.bf16.msra.mxu0 %v1776
    %2172 = vmatprep.subr.bf16.mxu0 0
    %2173 = vmatpush1.bf16.msra.mxu0 %v1779
    %2174 = vmatprep.subr.bf16.mxu0 0
    %2175 = vmatpush1.bf16.msra.mxu0 %v1782
    %2176 = vmatprep.subr.bf16.mxu0 0
    %2177 = vmatpush1.bf16.msra.mxu0 0
    %2178 = vmatprep.subr.bf16.mxu0 0
    %2179 = vmatpush1.bf16.msra.mxu0 0
    %2180 = vmatprep.subr.bf16.mxu0 0
    %2181 = vmatpush1.bf16.msra.mxu0 0
    %2182 = vmatprep.subr.bf16.mxu0 0
    %2183 = vmatpush1.bf16.msra.mxu0 0
    %2184 = vmatprep.subr.bf16.mxu0 0
    %2185 = vmatpush1.bf16.msra.mxu0 0
    %2186 = vmatprep.subr.bf16.mxu0 0
    %2187 = vmatpush1.bf16.msra.mxu0 0
    %2188 = vmatprep.subr.bf16.mxu0 0
    %2189 = vmatpush1.bf16.msra.mxu0 0
    %2190 = vmatprep.subr.bf16.mxu0 0
    %2191 = vmatpush1.bf16.msra.mxu0 0
    %2192 = vmatprep.mubr.bf16.mxu0 0
    %2193 = vmatmul.mubr.bf16.gmra.mrb[0].mxu0 %v2118
    %v2194 = vpop.f32.mrb[0].mxu0
    %v2195 = vadd.f32 %v1675, %v2194
    %v2196 = vpop.f32.mrb[0].mxu0
    %v2197 = vpop.f32.mrb[0].mxu0
    %v2198 = vpop.f32.mrb[0].mxu0
    %2199 = vdwg.mxu0
    %v2200 = vadd.f32 %v1592, %v2154
    %v2201 = vxor.u32 %v2200, 2147483648
    %v2202 = vmul.f32 %v2201, 1.442695
    %v2203 = vpow.pop %v2202
    %v2204 = vadd.f32 %v2203, 1.0
    %v2205 = vrcp.pop %v2204
    %v2206 = vmul.f32 1.0, %v2205
    %v2207 = vadd.f32 %v1594, %v2156
    %v2208 = vxor.u32 %v2207, 2147483648
    %v2209 = vmul.f32 %v2208, 1.442695
    %v2210 = vpow.pop %v2209
    %v2211 = vadd.f32 %v2210, 1.0
    %v2212 = vrcp.pop %v2211
    %v2213 = vmul.f32 1.0, %v2212
    %v2214 = vmul.f32 %v2206, %v2195
    %v2215 = vadd.f32 %v1652, %v2214
    %v2216 = vtanh.pop %v2215
    %v2217 = vsub.f32 1.0, %v2213
    %v2218 = vmul.f32 %v2217, %v2216
    %v2219 = vmul.f32 %v2213, %v2116
    %v2220 = vadd.f32 %v2218, %v2219
    %2221 = vst [vmem:[#allocation2 + $0x18] sm:$0xff] %v2220
    %v2222 = vpack.c.bf16 %v2220, %v2220
    %2223 = vmatprep.subr.bf16.mxu0 %v1760
    %2224 = vmatpush1.bf16.msra.mxu0 %v1759
    %2225 = vmatprep.subr.bf16.mxu0 %v1763
    %2226 = vmatpush1.bf16.msra.mxu0 %v1762
    %2227 = vmatprep.subr.bf16.mxu0 %v1766
    %2228 = vmatpush1.bf16.msra.mxu0 %v1765
    %2229 = vmatprep.subr.bf16.mxu0 %v1769
    %2230 = vmatpush1.bf16.msra.mxu0 %v1768
    %2231 = vmatprep.subr.bf16.mxu0 %v1772
    %2232 = vmatpush1.bf16.msra.mxu0 %v1771
    %2233 = vmatprep.subr.bf16.mxu0 %v1775
    %2234 = vmatpush1.bf16.msra.mxu0 %v1774
    %2235 = vmatprep.subr.bf16.mxu0 %v1778
    %2236 = vmatpush1.bf16.msra.mxu0 %v1777
    %2237 = vmatprep.subr.bf16.mxu0 %v1781
    %2238 = vmatpush1.bf16.msra.mxu0 %v1780
    %2239 = vmatprep.subr.bf16.mxu0 0
    %2240 = vmatpush1.bf16.msra.mxu0 0
    %2241 = vmatprep.subr.bf16.mxu0 0
    %2242 = vmatpush1.bf16.msra.mxu0 0
    %2243 = vmatprep.subr.bf16.mxu0 0
    %2244 = vmatpush1.bf16.msra.mxu0 0
    %2245 = vmatprep.subr.bf16.mxu0 0
    %2246 = vmatpush1.bf16.msra.mxu0 0
    %2247 = vmatprep.subr.bf16.mxu0 0
    %2248 = vmatpush1.bf16.msra.mxu0 0
    %2249 = vmatprep.subr.bf16.mxu0 0
    %2250 = vmatpush1.bf16.msra.mxu0 0
    %2251 = vmatprep.subr.bf16.mxu0 0
    %2252 = vmatpush1.bf16.msra.mxu0 0
    %2253 = vmatprep.subr.bf16.mxu0 0
    %2254 = vmatpush1.bf16.msra.mxu0 0
    %2255 = vmatprep.mubr.bf16.mxu0 0
    %2256 = vmatmul.mubr.bf16.gmra.mrb[0].mxu0 %v2222
    %v2257 = vpop.f32.mrb[0].mxu0
    %v2258 = vadd.f32 %v1667, %v2257
    %v2259 = vpop.f32.mrb[0].mxu0
    %v2260 = vadd.f32 %v1671, %v2259
    %v2261 = vpop.f32.mrb[0].mxu0
    %v2262 = vpop.f32.mrb[0].mxu0
    %2263 = vdwg.mxu0
    %2264 = vmatprep.subr.bf16.mxu0 0
    %2265 = vmatpush1.bf16.msra.mxu0 %v1761
    %2266 = vmatprep.subr.bf16.mxu0 0
    %2267 = vmatpush1.bf16.msra.mxu0 %v1764
    %2268 = vmatprep.subr.bf16.mxu0 0
    %2269 = vmatpush1.bf16.msra.mxu0 %v1767
    %2270 = vmatprep.subr.bf16.mxu0 0
    %2271 = vmatpush1.bf16.msra.mxu0 %v1770
    %2272 = vmatprep.subr.bf16.mxu0 0
    %2273 = vmatpush1.bf16.msra.mxu0 %v1773
    %2274 = vmatprep.subr.bf16.mxu0 0
    %2275 = vmatpush1.bf16.msra.mxu0 %v1776
    %2276 = vmatprep.subr.bf16.mxu0 0
    %2277 = vmatpush1.bf16.msra.mxu0 %v1779
    %2278 = vmatprep.subr.bf16.mxu0 0
    %2279 = vmatpush1.bf16.msra.mxu0 %v1782
    %2280 = vmatprep.subr.bf16.mxu0 0
    %2281 = vmatpush1.bf16.msra.mxu0 0
    %2282 = vmatprep.subr.bf16.mxu0 0
    %2283 = vmatpush1.bf16.msra.mxu0 0
    %2284 = vmatprep.subr.bf16.mxu0 0
    %2285 = vmatpush1.bf16.msra.mxu0 0
    %2286 = vmatprep.subr.bf16.mxu0 0
    %2287 = vmatpush1.bf16.msra.mxu0 0
    %2288 = vmatprep.subr.bf16.mxu0 0
    %2289 = vmatpush1.bf16.msra.mxu0 0
    %2290 = vmatprep.subr.bf16.mxu0 0
    %2291 = vmatpush1.bf16.msra.mxu0 0
    %2292 = vmatprep.subr.bf16.mxu0 0
    %2293 = vmatpush1.bf16.msra.mxu0 0
    %2294 = vmatprep.subr.bf16.mxu0 0
    %2295 = vmatpush1.bf16.msra.mxu0 0
    %2296 = vmatprep.mubr.bf16.mxu0 0
    %2297 = vmatmul.mubr.bf16.gmra.mrb[0].mxu0 %v2222
    %v2298 = vpop.f32.mrb[0].mxu0
    %v2299 = vadd.f32 %v1675, %v2298
    %v2300 = vpop.f32.mrb[0].mxu0
    %v2301 = vpop.f32.mrb[0].mxu0
    %v2302 = vpop.f32.mrb[0].mxu0
    %2303 = vdwg.mxu0
    %v2304 = vadd.f32 %v1598, %v2258
    %v2305 = vxor.u32 %v2304, 2147483648
    %v2306 = vmul.f32 %v2305, 1.442695
    %v2307 = vpow.pop %v2306
    %v2308 = vadd.f32 %v2307, 1.0
    %v2309 = vrcp.pop %v2308
    %v2310 = vmul.f32 1.0, %v2309
    %v2311 = vadd.f32 %v1600, %v2260
    %v2312 = vxor.u32 %v2311, 2147483648
    %v2313 = vmul.f32 %v2312, 1.442695
    %v2314 = vpow.pop %v2313
    %v2315 = vadd.f32 %v2314, 1.0
    %v2316 = vrcp.pop %v2315
    %v2317 = vmul.f32 1.0, %v2316
    %v2318 = vmul.f32 %v2310, %v2299
    %v2319 = vadd.f32 %v1657, %v2318
    %v2320 = vtanh.pop %v2319
    %v2321 = vsub.f32 1.0, %v2317
    %v2322 = vmul.f32 %v2321, %v2320
    %v2323 = vmul.f32 %v2317, %v2220
    %v2324 = vadd.f32 %v2322, %v2323
    %2325 = vst [vmem:[#allocation2 + $0x20] sm:$0xff] %v2324
    %v2326 = vpack.c.bf16 %v2324, %v2324
    %2327 = vmatprep.subr.bf16.mxu0 %v1760
    %2328 = vmatpush1.bf16.msra.mxu0 %v1759
    %2329 = vmatprep.subr.bf16.mxu0 %v1763
    %2330 = vmatpush1.bf16.msra.mxu0 %v1762
    %2331 = vmatprep.subr.bf16.mxu0 %v1766
    %2332 = vmatpush1.bf16.msra.mxu0 %v1765
    %2333 = vmatprep.subr.bf16.mxu0 %v1769
    %2334 = vmatpush1.bf16.msra.mxu0 %v1768
    %2335 = vmatprep.subr.bf16.mxu0 %v1772
    %2336 = vmatpush1.bf16.msra.mxu0 %v1771
    %2337 = vmatprep.subr.bf16.mxu0 %v1775
    %2338 = vmatpush1.bf16.msra.mxu0 %v1774
    %2339 = vmatprep.subr.bf16.mxu0 %v1778
    %2340 = vmatpush1.bf16.msra.mxu0 %v1777
    %2341 = vmatprep.subr.bf16.mxu0 %v1781
    %2342 = vmatpush1.bf16.msra.mxu0 %v1780
    %2343 = vmatprep.subr.bf16.mxu0 0
    %2344 = vmatpush1.bf16.msra.mxu0 0
    %2345 = vmatprep.subr.bf16.mxu0 0
    %2346 = vmatpush1.bf16.msra.mxu0 0
    %2347 = vmatprep.subr.bf16.mxu0 0
    %2348 = vmatpush1.bf16.msra.mxu0 0
    %2349 = vmatprep.subr.bf16.mxu0 0
    %2350 = vmatpush1.bf16.msra.mxu0 0
    %2351 = vmatprep.subr.bf16.mxu0 0
    %2352 = vmatpush1.bf16.msra.mxu0 0
    %2353 = vmatprep.subr.bf16.mxu0 0
    %2354 = vmatpush1.bf16.msra.mxu0 0
    %2355 = vmatprep.subr.bf16.mxu0 0
    %2356 = vmatpush1.bf16.msra.mxu0 0
    %2357 = vmatprep.subr.bf16.mxu0 0
    %2358 = vmatpush1.bf16.msra.mxu0 0
    %2359 = vmatprep.mubr.bf16.mxu0 0
    %2360 = vmatmul.mubr.bf16.gmra.mrb[0].mxu0 %v2326
    %v2361 = vpop.f32.mrb[0].mxu0
    %v2362 = vadd.f32 %v1667, %v2361
    %v2363 = vpop.f32.mrb[0].mxu0
    %v2364 = vadd.f32 %v1671, %v2363
    %v2365 = vpop.f32.mrb[0].mxu0
    %v2366 = vpop.f32.mrb[0].mxu0
    %2367 = vdwg.mxu0
    %2368 = vmatprep.subr.bf16.mxu0 0
    %2369 = vmatpush1.bf16.msra.mxu0 %v1761
    %2370 = vmatprep.subr.bf16.mxu0 0
    %2371 = vmatpush1.bf16.msra.mxu0 %v1764
    %2372 = vmatprep.subr.bf16.mxu0 0
    %2373 = vmatpush1.bf16.msra.mxu0 %v1767
    %2374 = vmatprep.subr.bf16.mxu0 0
    %2375 = vmatpush1.bf16.msra.mxu0 %v1770
    %2376 = vmatprep.subr.bf16.mxu0 0
    %2377 = vmatpush1.bf16.msra.mxu0 %v1773
    %2378 = vmatprep.subr.bf16.mxu0 0
    %2379 = vmatpush1.bf16.msra.mxu0 %v1776
    %2380 = vmatprep.subr.bf16.mxu0 0
    %2381 = vmatpush1.bf16.msra.mxu0 %v1779
    %2382 = vmatprep.subr.bf16.mxu0 0
    %2383 = vmatpush1.bf16.msra.mxu0 %v1782
    %2384 = vmatprep.subr.bf16.mxu0 0
    %2385 = vmatpush1.bf16.msra.mxu0 0
    %2386 = vmatprep.subr.bf16.mxu0 0
    %2387 = vmatpush1.bf16.msra.mxu0 0
    %2388 = vmatprep.subr.bf16.mxu0 0
    %2389 = vmatpush1.bf16.msra.mxu0 0
    %2390 = vmatprep.subr.bf16.mxu0 0
    %2391 = vmatpush1.bf16.msra.mxu0 0
    %2392 = vmatprep.subr.bf16.mxu0 0
    %2393 = vmatpush1.bf16.msra.mxu0 0
    %2394 = vmatprep.subr.bf16.mxu0 0
    %2395 = vmatpush1.bf16.msra.mxu0 0
    %2396 = vmatprep.subr.bf16.mxu0 0
    %2397 = vmatpush1.bf16.msra.mxu0 0
    %2398 = vmatprep.subr.bf16.mxu0 0
    %2399 = vmatpush1.bf16.msra.mxu0 0
    %2400 = vmatprep.mubr.bf16.mxu0 0
    %2401 = vmatmul.mubr.bf16.gmra.mrb[0].mxu0 %v2326
    %v2402 = vpop.f32.mrb[0].mxu0
    %v2403 = vadd.f32 %v1675, %v2402
    %v2404 = vpop.f32.mrb[0].mxu0
    %v2405 = vpop.f32.mrb[0].mxu0
    %v2406 = vpop.f32.mrb[0].mxu0
    %2407 = vdwg.mxu0
    %v2408 = vadd.f32 %v1602, %v2362
    %v2409 = vxor.u32 %v2408, 2147483648
    %v2410 = vmul.f32 %v2409, 1.442695
    %v2411 = vpow.pop %v2410
    %v2412 = vadd.f32 %v2411, 1.0
    %v2413 = vrcp.pop %v2412
    %v2414 = vmul.f32 1.0, %v2413
    %v2415 = vadd.f32 %v1604, %v2364
    %v2416 = vxor.u32 %v2415, 2147483648
    %v2417 = vmul.f32 %v2416, 1.442695
    %v2418 = vpow.pop %v2417
    %v2419 = vadd.f32 %v2418, 1.0
    %v2420 = vrcp.pop %v2419
    %v2421 = vmul.f32 1.0, %v2420
    %v2422 = vmul.f32 %v2414, %v2403
    %v2423 = vadd.f32 %v1660, %v2422
    %v2424 = vtanh.pop %v2423
    %v2425 = vsub.f32 1.0, %v2421
    %v2426 = vmul.f32 %v2425, %v2424
    %v2427 = vmul.f32 %v2421, %v2324
    %v2428 = vadd.f32 %v2426, %v2427
    %2429 = vst [vmem:[#allocation2 + $0x28] sm:$0xff] %v2428
    %v2430 = vld [vmem:[#allocation2] sm:$0xff]
    %v2431 = vld [vmem:[#allocation2 + $0x8] sm:$0xff]
    %v2432 = vld [vmem:[#allocation2 + $0x10] sm:$0xff]
    %v2433 = vld [vmem:[#allocation2 + $0x18] sm:$0xff]
    %v2434 = vld [vmem:[#allocation2 + $0x20] sm:$0xff]
    %v2435 = vld [vmem:[#allocation2 + $0x28] sm:$0xff]
    %s2436 = scalar_lea.vmem [#allocation8], 384
    %v2437 = vld [vmem:[%s2436] sm:$0xff]
    %v2438 = vld [vmem:[%s2436 + $0x8] sm:$0xf]
    %v2439 = vld [vmem:[%s2436 + $0xc] sm:$0xff]
    %v2440 = vld [vmem:[%s2436 + $0x14] sm:$0xf]
    %v2441 = vld [vmem:[%s2436 + $0x18] sm:$0xff]
    %v2442 = vld [vmem:[%s2436 + $0x20] sm:$0xf]
    %v2443 = vld [vmem:[%s2436 + $0x24] sm:$0xff]
    %v2444 = vld [vmem:[%s2436 + $0x2c] sm:$0xf]
    %v2445 = vld [vmem:[%s2436 + $0x30] sm:$0xff]
    %v2446 = vld [vmem:[%s2436 + $0x38] sm:$0xf]
    %v2447 = vld [vmem:[%s2436 + $0x3c] sm:$0xff]
    %v2448 = vld [vmem:[%s2436 + $0x44] sm:$0xf]
    %v2449 = vld [vmem:[%s2436 + $0x48] sm:$0xff]
    %v2450 = vld [vmem:[%s2436 + $0x50] sm:$0xf]
    %v2451 = vld [vmem:[%s2436 + $0x54] sm:$0xff]
    %v2452 = vld [vmem:[%s2436 + $0x5c] sm:$0xf]
    %v2453 = vld [vmem:[%s2436 + $0x60] sm:$0xff]
    %v2454 = vld [vmem:[%s2436 + $0x68] sm:$0xf]
    %v2455 = vld [vmem:[%s2436 + $0x6c] sm:$0xff]
    %v2456 = vld [vmem:[%s2436 + $0x74] sm:$0xf]
    %v2457 = vld [vmem:[%s2436 + $0x78] sm:$0xff]
    %v2458 = vld [vmem:[%s2436 + $0x80] sm:$0xf]
    %v2459 = vld [vmem:[%s2436 + $0x84] sm:$0xff]
    %v2460 = vld [vmem:[%s2436 + $0x8c] sm:$0xf]
    %v2461 = vld [vmem:[%s2436 + $0x90] sm:$0xff]
    %v2462 = vld [vmem:[%s2436 + $0x98] sm:$0xf]
    %v2463 = vld [vmem:[%s2436 + $0x9c] sm:$0xff]
    %v2464 = vld [vmem:[%s2436 + $0xa4] sm:$0xf]
    %v2465 = vld [vmem:[%s2436 + $0xa8] sm:$0xff]
    %v2466 = vld [vmem:[%s2436 + $0xb0] sm:$0xf]
    %v2467 = vld [vmem:[%s2436 + $0xb4] sm:$0xff]
    %v2468 = vld [vmem:[%s2436 + $0xbc] sm:$0xf]
    %s2469 = scalar_lea.vmem [#allocation9], 384
    %v2470 = vld [vmem:[%s2469] sm:$0xff]
    %v2471 = vld [vmem:[%s2469 + $0x8] sm:$0xf]
    %v2472 = vld [vmem:[%s2469 + $0xc] sm:$0xff]
    %v2473 = vld [vmem:[%s2469 + $0x14] sm:$0xf]
    %v2474 = vld [vmem:[%s2469 + $0x18] sm:$0xff]
    %v2475 = vld [vmem:[%s2469 + $0x20] sm:$0xf]
    %v2476 = vld [vmem:[%s2469 + $0x24] sm:$0xff]
    %v2477 = vld [vmem:[%s2469 + $0x2c] sm:$0xf]
    %v2478 = vld [vmem:[%s2469 + $0x30] sm:$0xff]
    %v2479 = vld [vmem:[%s2469 + $0x38] sm:$0xf]
    %v2480 = vld [vmem:[%s2469 + $0x3c] sm:$0xff]
    %v2481 = vld [vmem:[%s2469 + $0x44] sm:$0xf]
    %v2482 = vld [vmem:[%s2469 + $0x48] sm:$0xff]
    %v2483 = vld [vmem:[%s2469 + $0x50] sm:$0xf]
    %v2484 = vld [vmem:[%s2469 + $0x54] sm:$0xff]
    %v2485 = vld [vmem:[%s2469 + $0x5c] sm:$0xf]
    %v2486 = vld [vmem:[%s2469 + $0x60] sm:$0xff]
    %v2487 = vld [vmem:[%s2469 + $0x68] sm:$0xf]
    %v2488 = vld [vmem:[%s2469 + $0x6c] sm:$0xff]
    %v2489 = vld [vmem:[%s2469 + $0x74] sm:$0xf]
    %v2490 = vld [vmem:[%s2469 + $0x78] sm:$0xff]
    %v2491 = vld [vmem:[%s2469 + $0x80] sm:$0xf]
    %v2492 = vld [vmem:[%s2469 + $0x84] sm:$0xff]
    %v2493 = vld [vmem:[%s2469 + $0x8c] sm:$0xf]
    %v2494 = vld [vmem:[%s2469 + $0x90] sm:$0xff]
    %v2495 = vld [vmem:[%s2469 + $0x98] sm:$0xf]
    %v2496 = vld [vmem:[%s2469 + $0x9c] sm:$0xff]
    %v2497 = vld [vmem:[%s2469 + $0xa4] sm:$0xf]
    %v2498 = vld [vmem:[%s2469 + $0xa8] sm:$0xff]
    %v2499 = vld [vmem:[%s2469 + $0xb0] sm:$0xf]
    %v2500 = vld [vmem:[%s2469 + $0xb4] sm:$0xff]
    %v2501 = vld [vmem:[%s2469 + $0xbc] sm:$0xf]
    %s2502 = scalar_lea.vmem [#allocation11], 6
    %v2503 = vld [vmem:[%s2502] sm:$0x7]
    %s2504 = scalar_lea.vmem [#allocation12], 6
    %v2505 = vld [vmem:[%s2504] sm:$0x7]
    %v2506 = vpack.c.bf16 %v2431, %v2430
    %v2507 = vpack.c.bf16 %v2433, %v2432
    %v2508 = vpack.c.bf16 %v2435, %v2434
    %v2510 = vlaneseq
    %v2511 = vshrl.u32 %v2510, 7
    %v2512 = vsub.s32 0, %v2511
    %v2513 = vrot.slane %v2503, %v2512
    %v2514 = vlaneseq
    %v2515 = vshrl.u32 %v2514, 7
    %v2516 = vsub.s32 1, %v2515
    %v2517 = vrot.slane %v2503, %v2516
    %v2518 = vlaneseq
    %v2519 = vshrl.u32 %v2518, 7
    %v2520 = vsub.s32 2, %v2519
    %v2521 = vrot.slane %v2503, %v2520
    %v2557 = vunpack.c.l.b16 %v2437
    %v2558 = vunpack.c.h.b16 %v2437
    %v2559 = vunpack.c.l.b16 %v2438
    %v2560 = vunpack.c.l.b16 %v2439
    %v2561 = vunpack.c.h.b16 %v2439
    %v2562 = vunpack.c.l.b16 %v2440
    %v2563 = vunpack.c.l.b16 %v2441
    %v2564 = vunpack.c.h.b16 %v2441
    %v2565 = vunpack.c.l.b16 %v2442
    %v2566 = vunpack.c.l.b16 %v2443
    %v2567 = vunpack.c.h.b16 %v2443
    %v2568 = vunpack.c.l.b16 %v2444
    %v2569 = vunpack.c.l.b16 %v2445
    %v2570 = vunpack.c.h.b16 %v2445
    %v2571 = vunpack.c.l.b16 %v2446
    %v2572 = vunpack.c.l.b16 %v2447
    %v2573 = vunpack.c.h.b16 %v2447
    %v2574 = vunpack.c.l.b16 %v2448
    %v2575 = vunpack.c.l.b16 %v2449
    %v2576 = vunpack.c.h.b16 %v2449
    %v2577 = vunpack.c.l.b16 %v2450
    %v2578 = vunpack.c.l.b16 %v2451
    %v2579 = vunpack.c.h.b16 %v2451
    %v2580 = vunpack.c.l.b16 %v2452
    %v2581 = vunpack.c.l.b16 %v2453
    %v2582 = vunpack.c.h.b16 %v2453
    %v2583 = vunpack.c.l.b16 %v2454
    %v2584 = vunpack.c.l.b16 %v2455
    %v2585 = vunpack.c.h.b16 %v2455
    %v2586 = vunpack.c.l.b16 %v2456
    %v2587 = vunpack.c.l.b16 %v2457
    %v2588 = vunpack.c.h.b16 %v2457
    %v2589 = vunpack.c.l.b16 %v2458
    %v2590 = vunpack.c.l.b16 %v2459
    %v2591 = vunpack.c.h.b16 %v2459
    %v2592 = vunpack.c.l.b16 %v2460
    %v2593 = vunpack.c.l.b16 %v2461
    %v2594 = vunpack.c.h.b16 %v2461
    %v2595 = vunpack.c.l.b16 %v2462
    %v2596 = vunpack.c.l.b16 %v2463
    %v2597 = vunpack.c.h.b16 %v2463
    %v2598 = vunpack.c.l.b16 %v2464
    %v2599 = vunpack.c.l.b16 %v2465
    %v2600 = vunpack.c.h.b16 %v2465
    %v2601 = vunpack.c.l.b16 %v2466
    %v2602 = vunpack.c.l.b16 %v2467
    %v2603 = vunpack.c.h.b16 %v2467
    %v2604 = vunpack.c.l.b16 %v2468
    %v2605 = vpack.c.b16 %v2560, %v2557
    %v2606 = vpack.c.b16 %v2561, %v2558
    %v2607 = vpack.c.b16 %v2562, %v2559
    %v2608 = vpack.c.b16 %v2566, %v2563
    %v2609 = vpack.c.b16 %v2567, %v2564
    %v2610 = vpack.c.b16 %v2568, %v2565
    %v2611 = vpack.c.b16 %v2572, %v2569
    %v2612 = vpack.c.b16 %v2573, %v2570
    %v2613 = vpack.c.b16 %v2574, %v2571
    %v2614 = vpack.c.b16 %v2578, %v2575
    %v2615 = vpack.c.b16 %v2579, %v2576
    %v2616 = vpack.c.b16 %v2580, %v2577
    %v2617 = vpack.c.b16 %v2584, %v2581
    %v2618 = vpack.c.b16 %v2585, %v2582
    %v2619 = vpack.c.b16 %v2586, %v2583
    %v2620 = vpack.c.b16 %v2590, %v2587
    %v2621 = vpack.c.b16 %v2591, %v2588
    %v2622 = vpack.c.b16 %v2592, %v2589
    %v2623 = vpack.c.b16 %v2596, %v2593
    %v2624 = vpack.c.b16 %v2597, %v2594
    %v2625 = vpack.c.b16 %v2598, %v2595
    %v2626 = vpack.c.b16 %v2602, %v2599
    %v2627 = vpack.c.b16 %v2603, %v2600
    %v2628 = vpack.c.b16 %v2604, %v2601
    %2653 = vmatprep.subr.bf16.mxu0 %v2606
    %2654 = vmatpush1.bf16.msra.mxu0 %v2605
    %2655 = vmatprep.subr.bf16.mxu0 %v2609
    %2656 = vmatpush1.bf16.msra.mxu0 %v2608
    %2657 = vmatprep.subr.bf16.mxu0 %v2612
    %2658 = vmatpush1.bf16.msra.mxu0 %v2611
    %2659 = vmatprep.subr.bf16.mxu0 %v2615
    %2660 = vmatpush1.bf16.msra.mxu0 %v2614
    %2661 = vmatprep.subr.bf16.mxu0 %v2618
    %2662 = vmatpush1.bf16.msra.mxu0 %v2617
    %2663 = vmatprep.subr.bf16.mxu0 %v2621
    %2664 = vmatpush1.bf16.msra.mxu0 %v2620
    %2665 = vmatprep.subr.bf16.mxu0 %v2624
    %2666 = vmatpush1.bf16.msra.mxu0 %v2623
    %2667 = vmatprep.subr.bf16.mxu0 %v2627
    %2668 = vmatpush1.bf16.msra.mxu0 %v2626
    %2669 = vmatprep.subr.bf16.mxu0 0
    %2670 = vmatpush1.bf16.msra.mxu0 0
    %2671 = vmatprep.subr.bf16.mxu0 0
    %2672 = vmatpush1.bf16.msra.mxu0 0
    %2673 = vmatprep.subr.bf16.mxu0 0
    %2674 = vmatpush1.bf16.msra.mxu0 0
    %2675 = vmatprep.subr.bf16.mxu0 0
    %2676 = vmatpush1.bf16.msra.mxu0 0
    %2677 = vmatprep.subr.bf16.mxu0 0
    %2678 = vmatpush1.bf16.msra.mxu0 0
    %2679 = vmatprep.subr.bf16.mxu0 0
    %2680 = vmatpush1.bf16.msra.mxu0 0
    %2681 = vmatprep.subr.bf16.mxu0 0
    %2682 = vmatpush1.bf16.msra.mxu0 0
    %2683 = vmatprep.subr.bf16.mxu0 0
    %2684 = vmatpush1.bf16.msra.mxu0 0
    %2685 = vmatprep.mubr.bf16.mxu0 0
    %2686 = vmatmul.mubr.bf16.gmra.mrb[0].mxu0 %v2506
    %v2687 = vpop.f32.mrb[0].mxu0
    %v2688 = vadd.f32 %v2513, %v2687
    %v2689 = vpop.f32.mrb[0].mxu0
    %v2690 = vadd.f32 %v2517, %v2689
    %v2691 = vpop.f32.mrb[0].mxu0
    %v2692 = vadd.f32 %v2513, %v2691
    %v2693 = vpop.f32.mrb[0].mxu0
    %v2694 = vadd.f32 %v2517, %v2693
    %2695 = vmatprep.mubr.bf16.mxu0 0
    %2696 = vmatmul.mubr.bf16.gmra.mrb[0].mxu0 %v2507
    %v2697 = vpop.f32.mrb[0].mxu0
    %v2698 = vadd.f32 %v2513, %v2697
    %v2699 = vpop.f32.mrb[0].mxu0
    %v2700 = vadd.f32 %v2517, %v2699
    %v2701 = vpop.f32.mrb[0].mxu0
    %v2702 = vadd.f32 %v2513, %v2701
    %v2703 = vpop.f32.mrb[0].mxu0
    %v2704 = vadd.f32 %v2517, %v2703
    %2705 = vmatprep.mubr.bf16.mxu0 0
    %2706 = vmatmul.mubr.bf16.gmra.mrb[0].mxu0 %v2508
    %v2707 = vpop.f32.mrb[0].mxu0
    %v2708 = vadd.f32 %v2513, %v2707
    %v2709 = vpop.f32.mrb[0].mxu0
    %v2710 = vadd.f32 %v2517, %v2709
    %v2711 = vpop.f32.mrb[0].mxu0
    %v2712 = vadd.f32 %v2513, %v2711
    %v2713 = vpop.f32.mrb[0].mxu0
    %v2714 = vadd.f32 %v2517, %v2713
    %2715 = vdwg.mxu0
    %2716 = vmatprep.subr.bf16.mxu0 0
    %2717 = vmatpush1.bf16.msra.mxu0 %v2607
    %2718 = vmatprep.subr.bf16.mxu0 0
    %2719 = vmatpush1.bf16.msra.mxu0 %v2610
    %2720 = vmatprep.subr.bf16.mxu0 0
    %2721 = vmatpush1.bf16.msra.mxu0 %v2613
    %2722 = vmatprep.subr.bf16.mxu0 0
    %2723 = vmatpush1.bf16.msra.mxu0 %v2616
    %2724 = vmatprep.subr.bf16.mxu0 0
    %2725 = vmatpush1.bf16.msra.mxu0 %v2619
    %2726 = vmatprep.subr.bf16.mxu0 0
    %2727 = vmatpush1.bf16.msra.mxu0 %v2622
    %2728 = vmatprep.subr.bf16.mxu0 0
    %2729 = vmatpush1.bf16.msra.mxu0 %v2625
    %2730 = vmatprep.subr.bf16.mxu0 0
    %2731 = vmatpush1.bf16.msra.mxu0 %v2628
    %2732 = vmatprep.subr.bf16.mxu0 0
    %2733 = vmatpush1.bf16.msra.mxu0 0
    %2734 = vmatprep.subr.bf16.mxu0 0
    %2735 = vmatpush1.bf16.msra.mxu0 0
    %2736 = vmatprep.subr.bf16.mxu0 0
    %2737 = vmatpush1.bf16.msra.mxu0 0
    %2738 = vmatprep.subr.bf16.mxu0 0
    %2739 = vmatpush1.bf16.msra.mxu0 0
    %2740 = vmatprep.subr.bf16.mxu0 0
    %2741 = vmatpush1.bf16.msra.mxu0 0
    %2742 = vmatprep.subr.bf16.mxu0 0
    %2743 = vmatpush1.bf16.msra.mxu0 0
    %2744 = vmatprep.subr.bf16.mxu0 0
    %2745 = vmatpush1.bf16.msra.mxu0 0
    %2746 = vmatprep.subr.bf16.mxu0 0
    %2747 = vmatpush1.bf16.msra.mxu0 0
    %2748 = vmatprep.mubr.bf16.mxu0 0
    %2749 = vmatmul.mubr.bf16.gmra.mrb[0].mxu0 %v2506
    %v2750 = vpop.f32.mrb[0].mxu0
    %v2751 = vadd.f32 %v2521, %v2750
    %v2752 = vpop.f32.mrb[0].mxu0
    %v2753 = vpop.f32.mrb[0].mxu0
    %v2754 = vadd.f32 %v2521, %v2753
    %v2755 = vpop.f32.mrb[0].mxu0
    %2756 = vmatprep.mubr.bf16.mxu0 0
    %2757 = vmatmul.mubr.bf16.gmra.mrb[0].mxu0 %v2507
    %v2758 = vpop.f32.mrb[0].mxu0
    %v2759 = vadd.f32 %v2521, %v2758
    %v2760 = vpop.f32.mrb[0].mxu0
    %v2761 = vpop.f32.mrb[0].mxu0
    %v2762 = vadd.f32 %v2521, %v2761
    %v2763 = vpop.f32.mrb[0].mxu0
    %2764 = vmatprep.mubr.bf16.mxu0 0
    %2765 = vmatmul.mubr.bf16.gmra.mrb[0].mxu0 %v2508
    %v2766 = vpop.f32.mrb[0].mxu0
    %v2767 = vadd.f32 %v2521, %v2766
    %v2768 = vpop.f32.mrb[0].mxu0
    %v2769 = vpop.f32.mrb[0].mxu0
    %v2770 = vadd.f32 %v2521, %v2769
    %v2771 = vpop.f32.mrb[0].mxu0
    %2772 = vdwg.mxu0
    %v2774 = vlaneseq
    %v2775 = vshrl.u32 %v2774, 7
    %v2776 = vsub.s32 0, %v2775
    %v2777 = vrot.slane %v2505, %v2776
    %v2778 = vlaneseq
    %v2779 = vshrl.u32 %v2778, 7
    %v2780 = vsub.s32 1, %v2779
    %v2781 = vrot.slane %v2505, %v2780
    %v2782 = vlaneseq
    %v2783 = vshrl.u32 %v2782, 7
    %v2784 = vsub.s32 2, %v2783
    %v2785 = vrot.slane %v2505, %v2784
    %v2821 = vunpack.c.l.b16 %v2470
    %v2822 = vunpack.c.h.b16 %v2470
    %v2823 = vunpack.c.l.b16 %v2471
    %v2824 = vunpack.c.l.b16 %v2472
    %v2825 = vunpack.c.h.b16 %v2472
    %v2826 = vunpack.c.l.b16 %v2473
    %v2827 = vunpack.c.l.b16 %v2474
    %v2828 = vunpack.c.h.b16 %v2474
    %v2829 = vunpack.c.l.b16 %v2475
    %v2830 = vunpack.c.l.b16 %v2476
    %v2831 = vunpack.c.h.b16 %v2476
    %v2832 = vunpack.c.l.b16 %v2477
    %v2833 = vunpack.c.l.b16 %v2478
    %v2834 = vunpack.c.h.b16 %v2478
    %v2835 = vunpack.c.l.b16 %v2479
    %v2836 = vunpack.c.l.b16 %v2480
    %v2837 = vunpack.c.h.b16 %v2480
    %v2838 = vunpack.c.l.b16 %v2481
    %v2839 = vunpack.c.l.b16 %v2482
    %v2840 = vunpack.c.h.b16 %v2482
    %v2841 = vunpack.c.l.b16 %v2483
    %v2842 = vunpack.c.l.b16 %v2484
    %v2843 = vunpack.c.h.b16 %v2484
    %v2844 = vunpack.c.l.b16 %v2485
    %v2845 = vunpack.c.l.b16 %v2486
    %v2846 = vunpack.c.h.b16 %v2486
    %v2847 = vunpack.c.l.b16 %v2487
    %v2848 = vunpack.c.l.b16 %v2488
    %v2849 = vunpack.c.h.b16 %v2488
    %v2850 = vunpack.c.l.b16 %v2489
    %v2851 = vunpack.c.l.b16 %v2490
    %v2852 = vunpack.c.h.b16 %v2490
    %v2853 = vunpack.c.l.b16 %v2491
    %v2854 = vunpack.c.l.b16 %v2492
    %v2855 = vunpack.c.h.b16 %v2492
    %v2856 = vunpack.c.l.b16 %v2493
    %v2857 = vunpack.c.l.b16 %v2494
    %v2858 = vunpack.c.h.b16 %v2494
    %v2859 = vunpack.c.l.b16 %v2495
    %v2860 = vunpack.c.l.b16 %v2496
    %v2861 = vunpack.c.h.b16 %v2496
    %v2862 = vunpack.c.l.b16 %v2497
    %v2863 = vunpack.c.l.b16 %v2498
    %v2864 = vunpack.c.h.b16 %v2498
    %v2865 = vunpack.c.l.b16 %v2499
    %v2866 = vunpack.c.l.b16 %v2500
    %v2867 = vunpack.c.h.b16 %v2500
    %v2868 = vunpack.c.l.b16 %v2501
    %v2869 = vpack.c.b16 %v2824, %v2821
    %v2870 = vpack.c.b16 %v2825, %v2822
    %v2871 = vpack.c.b16 %v2826, %v2823
    %v2872 = vpack.c.b16 %v2830, %v2827
    %v2873 = vpack.c.b16 %v2831, %v2828
    %v2874 = vpack.c.b16 %v2832, %v2829
    %v2875 = vpack.c.b16 %v2836, %v2833
    %v2876 = vpack.c.b16 %v2837, %v2834
    %v2877 = vpack.c.b16 %v2838, %v2835
    %v2878 = vpack.c.b16 %v2842, %v2839
    %v2879 = vpack.c.b16 %v2843, %v2840
    %v2880 = vpack.c.b16 %v2844, %v2841
    %v2881 = vpack.c.b16 %v2848, %v2845
    %v2882 = vpack.c.b16 %v2849, %v2846
    %v2883 = vpack.c.b16 %v2850, %v2847
    %v2884 = vpack.c.b16 %v2854, %v2851
    %v2885 = vpack.c.b16 %v2855, %v2852
    %v2886 = vpack.c.b16 %v2856, %v2853
    %v2887 = vpack.c.b16 %v2860, %v2857
    %v2888 = vpack.c.b16 %v2861, %v2858
    %v2889 = vpack.c.b16 %v2862, %v2859
    %v2890 = vpack.c.b16 %v2866, %v2863
    %v2891 = vpack.c.b16 %v2867, %v2864
    %v2892 = vpack.c.b16 %v2868, %v2865
    %2917 = vmatprep.subr.bf16.mxu0 %v2870
    %2918 = vmatpush1.bf16.msra.mxu0 %v2869
    %2919 = vmatprep.subr.bf16.mxu0 %v2873
    %2920 = vmatpush1.bf16.msra.mxu0 %v2872
    %2921 = vmatprep.subr.bf16.mxu0 %v2876
    %2922 = vmatpush1.bf16.msra.mxu0 %v2875
    %2923 = vmatprep.subr.bf16.mxu0 %v2879
    %2924 = vmatpush1.bf16.msra.mxu0 %v2878
    %2925 = vmatprep.subr.bf16.mxu0 %v2882
    %2926 = vmatpush1.bf16.msra.mxu0 %v2881
    %2927 = vmatprep.subr.bf16.mxu0 %v2885
    %2928 = vmatpush1.bf16.msra.mxu0 %v2884
    %2929 = vmatprep.subr.bf16.mxu0 %v2888
    %2930 = vmatpush1.bf16.msra.mxu0 %v2887
    %2931 = vmatprep.subr.bf16.mxu0 %v2891
    %2932 = vmatpush1.bf16.msra.mxu0 %v2890
    %2933 = vmatprep.subr.bf16.mxu0 0
    %2934 = vmatpush1.bf16.msra.mxu0 0
    %2935 = vmatprep.subr.bf16.mxu0 0
    %2936 = vmatpush1.bf16.msra.mxu0 0
    %2937 = vmatprep.subr.bf16.mxu0 0
    %2938 = vmatpush1.bf16.msra.mxu0 0
    %2939 = vmatprep.subr.bf16.mxu0 0
    %2940 = vmatpush1.bf16.msra.mxu0 0
    %2941 = vmatprep.subr.bf16.mxu0 0
    %2942 = vmatpush1.bf16.msra.mxu0 0
    %2943 = vmatprep.subr.bf16.mxu0 0
    %2944 = vmatpush1.bf16.msra.mxu0 0
    %2945 = vmatprep.subr.bf16.mxu0 0
    %2946 = vmatpush1.bf16.msra.mxu0 0
    %2947 = vmatprep.subr.bf16.mxu0 0
    %2948 = vmatpush1.bf16.msra.mxu0 0
    %2949 = vmatprep.mubr.bf16.mxu0 0
    %2950 = vmatmul.mubr.bf16.gmra.mrb[0].mxu0 0
    %v2951 = vpop.f32.mrb[0].mxu0
    %v2952 = vadd.f32 %v2777, %v2951
    %v2953 = vpop.f32.mrb[0].mxu0
    %v2954 = vadd.f32 %v2781, %v2953
    %v2955 = vpop.f32.mrb[0].mxu0
    %v2956 = vpop.f32.mrb[0].mxu0
    %2957 = vdwg.mxu0
    %2958 = vmatprep.subr.bf16.mxu0 0
    %2959 = vmatpush1.bf16.msra.mxu0 %v2871
    %2960 = vmatprep.subr.bf16.mxu0 0
    %2961 = vmatpush1.bf16.msra.mxu0 %v2874
    %2962 = vmatprep.subr.bf16.mxu0 0
    %2963 = vmatpush1.bf16.msra.mxu0 %v2877
    %2964 = vmatprep.subr.bf16.mxu0 0
    %2965 = vmatpush1.bf16.msra.mxu0 %v2880
    %2966 = vmatprep.subr.bf16.mxu0 0
    %2967 = vmatpush1.bf16.msra.mxu0 %v2883
    %2968 = vmatprep.subr.bf16.mxu0 0
    %2969 = vmatpush1.bf16.msra.mxu0 %v2886
    %2970 = vmatprep.subr.bf16.mxu0 0
    %2971 = vmatpush1.bf16.msra.mxu0 %v2889
    %2972 = vmatprep.subr.bf16.mxu0 0
    %2973 = vmatpush1.bf16.msra.mxu0 %v2892
    %2974 = vmatprep.subr.bf16.mxu0 0
    %2975 = vmatpush1.bf16.msra.mxu0 0
    %2976 = vmatprep.subr.bf16.mxu0 0
    %2977 = vmatpush1.bf16.msra.mxu0 0
    %2978 = vmatprep.subr.bf16.mxu0 0
    %2979 = vmatpush1.bf16.msra.mxu0 0
    %2980 = vmatprep.subr.bf16.mxu0 0
    %2981 = vmatpush1.bf16.msra.mxu0 0
    %2982 = vmatprep.subr.bf16.mxu0 0
    %2983 = vmatpush1.bf16.msra.mxu0 0
    %2984 = vmatprep.subr.bf16.mxu0 0
    %2985 = vmatpush1.bf16.msra.mxu0 0
    %2986 = vmatprep.subr.bf16.mxu0 0
    %2987 = vmatpush1.bf16.msra.mxu0 0
    %2988 = vmatprep.subr.bf16.mxu0 0
    %2989 = vmatpush1.bf16.msra.mxu0 0
    %2990 = vmatprep.mubr.bf16.mxu0 0
    %2991 = vmatmul.mubr.bf16.gmra.mrb[0].mxu0 0
    %v2992 = vpop.f32.mrb[0].mxu0
    %v2993 = vadd.f32 %v2785, %v2992
    %v2994 = vpop.f32.mrb[0].mxu0
    %v2995 = vpop.f32.mrb[0].mxu0
    %v2996 = vpop.f32.mrb[0].mxu0
    %2997 = vdwg.mxu0
    %v2998 = vadd.f32 %v2688, %v2952
    %v2999 = vxor.u32 %v2998, 2147483648
    %v3000 = vmul.f32 %v2999, 1.442695
    %v3001 = vpow.pop %v3000
    %v3002 = vadd.f32 %v3001, 1.0
    %v3003 = vrcp.pop %v3002
    %v3004 = vmul.f32 1.0, %v3003
    %v3005 = vadd.f32 %v2690, %v2954
    %v3006 = vxor.u32 %v3005, 2147483648
    %v3007 = vmul.f32 %v3006, 1.442695
    %v3008 = vpow.pop %v3007
    %v3009 = vadd.f32 %v3008, 1.0
    %v3010 = vrcp.pop %v3009
    %v3011 = vmul.f32 1.0, %v3010
    %v3012 = vmul.f32 %v3004, %v2993
    %v3013 = vadd.f32 %v2751, %v3012
    %v3014 = vtanh.pop %v3013
    %v3015 = vsub.f32 1.0, %v3011
    %v3016 = vmul.f32 %v3015, %v3014
    %v3017 = vmul.f32 %v3011, 0.0
    %v3018 = vadd.f32 %v3016, %v3017
    %3019 = vst [vmem:[#allocation2] sm:$0xff] %v3018
    %v3020 = vpack.c.bf16 %v3018, %v3018
    %3021 = vmatprep.subr.bf16.mxu0 %v2870
    %3022 = vmatpush1.bf16.msra.mxu0 %v2869
    %3023 = vmatprep.subr.bf16.mxu0 %v2873
    %3024 = vmatpush1.bf16.msra.mxu0 %v2872
    %3025 = vmatprep.subr.bf16.mxu0 %v2876
    %3026 = vmatpush1.bf16.msra.mxu0 %v2875
    %3027 = vmatprep.subr.bf16.mxu0 %v2879
    %3028 = vmatpush1.bf16.msra.mxu0 %v2878
    %3029 = vmatprep.subr.bf16.mxu0 %v2882
    %3030 = vmatpush1.bf16.msra.mxu0 %v2881
    %3031 = vmatprep.subr.bf16.mxu0 %v2885
    %3032 = vmatpush1.bf16.msra.mxu0 %v2884
    %3033 = vmatprep.subr.bf16.mxu0 %v2888
    %3034 = vmatpush1.bf16.msra.mxu0 %v2887
    %3035 = vmatprep.subr.bf16.mxu0 %v2891
    %3036 = vmatpush1.bf16.msra.mxu0 %v2890
    %3037 = vmatprep.subr.bf16.mxu0 0
    %3038 = vmatpush1.bf16.msra.mxu0 0
    %3039 = vmatprep.subr.bf16.mxu0 0
    %3040 = vmatpush1.bf16.msra.mxu0 0
    %3041 = vmatprep.subr.bf16.mxu0 0
    %3042 = vmatpush1.bf16.msra.mxu0 0
    %3043 = vmatprep.subr.bf16.mxu0 0
    %3044 = vmatpush1.bf16.msra.mxu0 0
    %3045 = vmatprep.subr.bf16.mxu0 0
    %3046 = vmatpush1.bf16.msra.mxu0 0
    %3047 = vmatprep.subr.bf16.mxu0 0
    %3048 = vmatpush1.bf16.msra.mxu0 0
    %3049 = vmatprep.subr.bf16.mxu0 0
    %3050 = vmatpush1.bf16.msra.mxu0 0
    %3051 = vmatprep.subr.bf16.mxu0 0
    %3052 = vmatpush1.bf16.msra.mxu0 0
    %3053 = vmatprep.mubr.bf16.mxu0 0
    %3054 = vmatmul.mubr.bf16.gmra.mrb[0].mxu0 %v3020
    %v3055 = vpop.f32.mrb[0].mxu0
    %v3056 = vadd.f32 %v2777, %v3055
    %v3057 = vpop.f32.mrb[0].mxu0
    %v3058 = vadd.f32 %v2781, %v3057
    %v3059 = vpop.f32.mrb[0].mxu0
    %v3060 = vpop.f32.mrb[0].mxu0
    %3061 = vdwg.mxu0
    %3062 = vmatprep.subr.bf16.mxu0 0
    %3063 = vmatpush1.bf16.msra.mxu0 %v2871
    %3064 = vmatprep.subr.bf16.mxu0 0
    %3065 = vmatpush1.bf16.msra.mxu0 %v2874
    %3066 = vmatprep.subr.bf16.mxu0 0
    %3067 = vmatpush1.bf16.msra.mxu0 %v2877
    %3068 = vmatprep.subr.bf16.mxu0 0
    %3069 = vmatpush1.bf16.msra.mxu0 %v2880
    %3070 = vmatprep.subr.bf16.mxu0 0
    %3071 = vmatpush1.bf16.msra.mxu0 %v2883
    %3072 = vmatprep.subr.bf16.mxu0 0
    %3073 = vmatpush1.bf16.msra.mxu0 %v2886
    %3074 = vmatprep.subr.bf16.mxu0 0
    %3075 = vmatpush1.bf16.msra.mxu0 %v2889
    %3076 = vmatprep.subr.bf16.mxu0 0
    %3077 = vmatpush1.bf16.msra.mxu0 %v2892
    %3078 = vmatprep.subr.bf16.mxu0 0
    %3079 = vmatpush1.bf16.msra.mxu0 0
    %3080 = vmatprep.subr.bf16.mxu0 0
    %3081 = vmatpush1.bf16.msra.mxu0 0
    %3082 = vmatprep.subr.bf16.mxu0 0
    %3083 = vmatpush1.bf16.msra.mxu0 0
    %3084 = vmatprep.subr.bf16.mxu0 0
    %3085 = vmatpush1.bf16.msra.mxu0 0
    %3086 = vmatprep.subr.bf16.mxu0 0
    %3087 = vmatpush1.bf16.msra.mxu0 0
    %3088 = vmatprep.subr.bf16.mxu0 0
    %3089 = vmatpush1.bf16.msra.mxu0 0
    %3090 = vmatprep.subr.bf16.mxu0 0
    %3091 = vmatpush1.bf16.msra.mxu0 0
    %3092 = vmatprep.subr.bf16.mxu0 0
    %3093 = vmatpush1.bf16.msra.mxu0 0
    %3094 = vmatprep.mubr.bf16.mxu0 0
    %3095 = vmatmul.mubr.bf16.gmra.mrb[0].mxu0 %v3020
    %v3096 = vpop.f32.mrb[0].mxu0
    %v3097 = vadd.f32 %v2785, %v3096
    %v3098 = vpop.f32.mrb[0].mxu0
    %v3099 = vpop.f32.mrb[0].mxu0
    %v3100 = vpop.f32.mrb[0].mxu0
    %3101 = vdwg.mxu0
    %v3102 = vadd.f32 %v2692, %v3056
    %v3103 = vxor.u32 %v3102, 2147483648
    %v3104 = vmul.f32 %v3103, 1.442695
    %v3105 = vpow.pop %v3104
    %v3106 = vadd.f32 %v3105, 1.0
    %v3107 = vrcp.pop %v3106
    %v3108 = vmul.f32 1.0, %v3107
    %v3109 = vadd.f32 %v2694, %v3058
    %v3110 = vxor.u32 %v3109, 2147483648
    %v3111 = vmul.f32 %v3110, 1.442695
    %v3112 = vpow.pop %v3111
    %v3113 = vadd.f32 %v3112, 1.0
    %v3114 = vrcp.pop %v3113
    %v3115 = vmul.f32 1.0, %v3114
    %v3116 = vmul.f32 %v3108, %v3097
    %v3117 = vadd.f32 %v2754, %v3116
    %v3118 = vtanh.pop %v3117
    %v3119 = vsub.f32 1.0, %v3115
    %v3120 = vmul.f32 %v3119, %v3118
    %v3121 = vmul.f32 %v3115, %v3018
    %v3122 = vadd.f32 %v3120, %v3121
    %3123 = vst [vmem:[#allocation2 + $0x8] sm:$0xff] %v3122
    %v3124 = vpack.c.bf16 %v3122, %v3122
    %3125 = vmatprep.subr.bf16.mxu0 %v2870
    %3126 = vmatpush1.bf16.msra.mxu0 %v2869
    %3127 = vmatprep.subr.bf16.mxu0 %v2873
    %3128 = vmatpush1.bf16.msra.mxu0 %v2872
    %3129 = vmatprep.subr.bf16.mxu0 %v2876
    %3130 = vmatpush1.bf16.msra.mxu0 %v2875
    %3131 = vmatprep.subr.bf16.mxu0 %v2879
    %3132 = vmatpush1.bf16.msra.mxu0 %v2878
    %3133 = vmatprep.subr.bf16.mxu0 %v2882
    %3134 = vmatpush1.bf16.msra.mxu0 %v2881
    %3135 = vmatprep.subr.bf16.mxu0 %v2885
    %3136 = vmatpush1.bf16.msra.mxu0 %v2884
    %3137 = vmatprep.subr.bf16.mxu0 %v2888
    %3138 = vmatpush1.bf16.msra.mxu0 %v2887
    %3139 = vmatprep.subr.bf16.mxu0 %v2891
    %3140 = vmatpush1.bf16.msra.mxu0 %v2890
    %3141 = vmatprep.subr.bf16.mxu0 0
    %3142 = vmatpush1.bf16.msra.mxu0 0
    %3143 = vmatprep.subr.bf16.mxu0 0
    %3144 = vmatpush1.bf16.msra.mxu0 0
    %3145 = vmatprep.subr.bf16.mxu0 0
    %3146 = vmatpush1.bf16.msra.mxu0 0
    %3147 = vmatprep.subr.bf16.mxu0 0
    %3148 = vmatpush1.bf16.msra.mxu0 0
    %3149 = vmatprep.subr.bf16.mxu0 0
    %3150 = vmatpush1.bf16.msra.mxu0 0
    %3151 = vmatprep.subr.bf16.mxu0 0
    %3152 = vmatpush1.bf16.msra.mxu0 0
    %3153 = vmatprep.subr.bf16.mxu0 0
    %3154 = vmatpush1.bf16.msra.mxu0 0
    %3155 = vmatprep.subr.bf16.mxu0 0
    %3156 = vmatpush1.bf16.msra.mxu0 0
    %3157 = vmatprep.mubr.bf16.mxu0 0
    %3158 = vmatmul.mubr.bf16.gmra.mrb[0].mxu0 %v3124
    %v3159 = vpop.f32.mrb[0].mxu0
    %v3160 = vadd.f32 %v2777, %v3159
    %v3161 = vpop.f32.mrb[0].mxu0
    %v3162 = vadd.f32 %v2781, %v3161
    %v3163 = vpop.f32.mrb[0].mxu0
    %v3164 = vpop.f32.mrb[0].mxu0
    %3165 = vdwg.mxu0
    %3166 = vmatprep.subr.bf16.mxu0 0
    %3167 = vmatpush1.bf16.msra.mxu0 %v2871
    %3168 = vmatprep.subr.bf16.mxu0 0
    %3169 = vmatpush1.bf16.msra.mxu0 %v2874
    %3170 = vmatprep.subr.bf16.mxu0 0
    %3171 = vmatpush1.bf16.msra.mxu0 %v2877
    %3172 = vmatprep.subr.bf16.mxu0 0
    %3173 = vmatpush1.bf16.msra.mxu0 %v2880
    %3174 = vmatprep.subr.bf16.mxu0 0
    %3175 = vmatpush1.bf16.msra.mxu0 %v2883
    %3176 = vmatprep.subr.bf16.mxu0 0
    %3177 = vmatpush1.bf16.msra.mxu0 %v2886
    %3178 = vmatprep.subr.bf16.mxu0 0
    %3179 = vmatpush1.bf16.msra.mxu0 %v2889
    %3180 = vmatprep.subr.bf16.mxu0 0
    %3181 = vmatpush1.bf16.msra.mxu0 %v2892
    %3182 = vmatprep.subr.bf16.mxu0 0
    %3183 = vmatpush1.bf16.msra.mxu0 0
    %3184 = vmatprep.subr.bf16.mxu0 0
    %3185 = vmatpush1.bf16.msra.mxu0 0
    %3186 = vmatprep.subr.bf16.mxu0 0
    %3187 = vmatpush1.bf16.msra.mxu0 0
    %3188 = vmatprep.subr.bf16.mxu0 0
    %3189 = vmatpush1.bf16.msra.mxu0 0
    %3190 = vmatprep.subr.bf16.mxu0 0
    %3191 = vmatpush1.bf16.msra.mxu0 0
    %3192 = vmatprep.subr.bf16.mxu0 0
    %3193 = vmatpush1.bf16.msra.mxu0 0
    %3194 = vmatprep.subr.bf16.mxu0 0
    %3195 = vmatpush1.bf16.msra.mxu0 0
    %3196 = vmatprep.subr.bf16.mxu0 0
    %3197 = vmatpush1.bf16.msra.mxu0 0
    %3198 = vmatprep.mubr.bf16.mxu0 0
    %3199 = vmatmul.mubr.bf16.gmra.mrb[0].mxu0 %v3124
    %v3200 = vpop.f32.mrb[0].mxu0
    %v3201 = vadd.f32 %v2785, %v3200
    %v3202 = vpop.f32.mrb[0].mxu0
    %v3203 = vpop.f32.mrb[0].mxu0
    %v3204 = vpop.f32.mrb[0].mxu0
    %3205 = vdwg.mxu0
    %v3206 = vadd.f32 %v2698, %v3160
    %v3207 = vxor.u32 %v3206, 2147483648
    %v3208 = vmul.f32 %v3207, 1.442695
    %v3209 = vpow.pop %v3208
    %v3210 = vadd.f32 %v3209, 1.0
    %v3211 = vrcp.pop %v3210
    %v3212 = vmul.f32 1.0, %v3211
    %v3213 = vadd.f32 %v2700, %v3162
    %v3214 = vxor.u32 %v3213, 2147483648
    %v3215 = vmul.f32 %v3214, 1.442695
    %v3216 = vpow.pop %v3215
    %v3217 = vadd.f32 %v3216, 1.0
    %v3218 = vrcp.pop %v3217
    %v3219 = vmul.f32 1.0, %v3218
    %v3220 = vmul.f32 %v3212, %v3201
    %v3221 = vadd.f32 %v2759, %v3220
    %v3222 = vtanh.pop %v3221
    %v3223 = vsub.f32 1.0, %v3219
    %v3224 = vmul.f32 %v3223, %v3222
    %v3225 = vmul.f32 %v3219, %v3122
    %v3226 = vadd.f32 %v3224, %v3225
    %3227 = vst [vmem:[#allocation2 + $0x10] sm:$0xff] %v3226
    %v3228 = vpack.c.bf16 %v3226, %v3226
    %3229 = vmatprep.subr.bf16.mxu0 %v2870
    %3230 = vmatpush1.bf16.msra.mxu0 %v2869
    %3231 = vmatprep.subr.bf16.mxu0 %v2873
    %3232 = vmatpush1.bf16.msra.mxu0 %v2872
    %3233 = vmatprep.subr.bf16.mxu0 %v2876
    %3234 = vmatpush1.bf16.msra.mxu0 %v2875
    %3235 = vmatprep.subr.bf16.mxu0 %v2879
    %3236 = vmatpush1.bf16.msra.mxu0 %v2878
    %3237 = vmatprep.subr.bf16.mxu0 %v2882
    %3238 = vmatpush1.bf16.msra.mxu0 %v2881
    %3239 = vmatprep.subr.bf16.mxu0 %v2885
    %3240 = vmatpush1.bf16.msra.mxu0 %v2884
    %3241 = vmatprep.subr.bf16.mxu0 %v2888
    %3242 = vmatpush1.bf16.msra.mxu0 %v2887
    %3243 = vmatprep.subr.bf16.mxu0 %v2891
    %3244 = vmatpush1.bf16.msra.mxu0 %v2890
    %3245 = vmatprep.subr.bf16.mxu0 0
    %3246 = vmatpush1.bf16.msra.mxu0 0
    %3247 = vmatprep.subr.bf16.mxu0 0
    %3248 = vmatpush1.bf16.msra.mxu0 0
    %3249 = vmatprep.subr.bf16.mxu0 0
    %3250 = vmatpush1.bf16.msra.mxu0 0
    %3251 = vmatprep.subr.bf16.mxu0 0
    %3252 = vmatpush1.bf16.msra.mxu0 0
    %3253 = vmatprep.subr.bf16.mxu0 0
    %3254 = vmatpush1.bf16.msra.mxu0 0
    %3255 = vmatprep.subr.bf16.mxu0 0
    %3256 = vmatpush1.bf16.msra.mxu0 0
    %3257 = vmatprep.subr.bf16.mxu0 0
    %3258 = vmatpush1.bf16.msra.mxu0 0
    %3259 = vmatprep.subr.bf16.mxu0 0
    %3260 = vmatpush1.bf16.msra.mxu0 0
    %3261 = vmatprep.mubr.bf16.mxu0 0
    %3262 = vmatmul.mubr.bf16.gmra.mrb[0].mxu0 %v3228
    %v3263 = vpop.f32.mrb[0].mxu0
    %v3264 = vadd.f32 %v2777, %v3263
    %v3265 = vpop.f32.mrb[0].mxu0
    %v3266 = vadd.f32 %v2781, %v3265
    %v3267 = vpop.f32.mrb[0].mxu0
    %v3268 = vpop.f32.mrb[0].mxu0
    %3269 = vdwg.mxu0
    %3270 = vmatprep.subr.bf16.mxu0 0
    %3271 = vmatpush1.bf16.msra.mxu0 %v2871
    %3272 = vmatprep.subr.bf16.mxu0 0
    %3273 = vmatpush1.bf16.msra.mxu0 %v2874
    %3274 = vmatprep.subr.bf16.mxu0 0
    %3275 = vmatpush1.bf16.msra.mxu0 %v2877
    %3276 = vmatprep.subr.bf16.mxu0 0
    %3277 = vmatpush1.bf16.msra.mxu0 %v2880
    %3278 = vmatprep.subr.bf16.mxu0 0
    %3279 = vmatpush1.bf16.msra.mxu0 %v2883
    %3280 = vmatprep.subr.bf16.mxu0 0
    %3281 = vmatpush1.bf16.msra.mxu0 %v2886
    %3282 = vmatprep.subr.bf16.mxu0 0
    %3283 = vmatpush1.bf16.msra.mxu0 %v2889
    %3284 = vmatprep.subr.bf16.mxu0 0
    %3285 = vmatpush1.bf16.msra.mxu0 %v2892
    %3286 = vmatprep.subr.bf16.mxu0 0
    %3287 = vmatpush1.bf16.msra.mxu0 0
    %3288 = vmatprep.subr.bf16.mxu0 0
    %3289 = vmatpush1.bf16.msra.mxu0 0
    %3290 = vmatprep.subr.bf16.mxu0 0
    %3291 = vmatpush1.bf16.msra.mxu0 0
    %3292 = vmatprep.subr.bf16.mxu0 0
    %3293 = vmatpush1.bf16.msra.mxu0 0
    %3294 = vmatprep.subr.bf16.mxu0 0
    %3295 = vmatpush1.bf16.msra.mxu0 0
    %3296 = vmatprep.subr.bf16.mxu0 0
    %3297 = vmatpush1.bf16.msra.mxu0 0
    %3298 = vmatprep.subr.bf16.mxu0 0
    %3299 = vmatpush1.bf16.msra.mxu0 0
    %3300 = vmatprep.subr.bf16.mxu0 0
    %3301 = vmatpush1.bf16.msra.mxu0 0
    %3302 = vmatprep.mubr.bf16.mxu0 0
    %3303 = vmatmul.mubr.bf16.gmra.mrb[0].mxu0 %v3228
    %v3304 = vpop.f32.mrb[0].mxu0
    %v3305 = vadd.f32 %v2785, %v3304
    %v3306 = vpop.f32.mrb[0].mxu0
    %v3307 = vpop.f32.mrb[0].mxu0
    %v3308 = vpop.f32.mrb[0].mxu0
    %3309 = vdwg.mxu0
    %v3310 = vadd.f32 %v2702, %v3264
    %v3311 = vxor.u32 %v3310, 2147483648
    %v3312 = vmul.f32 %v3311, 1.442695
    %v3313 = vpow.pop %v3312
    %v3314 = vadd.f32 %v3313, 1.0
    %v3315 = vrcp.pop %v3314
    %v3316 = vmul.f32 1.0, %v3315
    %v3317 = vadd.f32 %v2704, %v3266
    %v3318 = vxor.u32 %v3317, 2147483648
    %v3319 = vmul.f32 %v3318, 1.442695
    %v3320 = vpow.pop %v3319
    %v3321 = vadd.f32 %v3320, 1.0
    %v3322 = vrcp.pop %v3321
    %v3323 = vmul.f32 1.0, %v3322
    %v3324 = vmul.f32 %v3316, %v3305
    %v3325 = vadd.f32 %v2762, %v3324
    %v3326 = vtanh.pop %v3325
    %v3327 = vsub.f32 1.0, %v3323
    %v3328 = vmul.f32 %v3327, %v3326
    %v3329 = vmul.f32 %v3323, %v3226
    %v3330 = vadd.f32 %v3328, %v3329
    %3331 = vst [vmem:[#allocation2 + $0x18] sm:$0xff] %v3330
    %v3332 = vpack.c.bf16 %v3330, %v3330
    %3333 = vmatprep.subr.bf16.mxu0 %v2870
    %3334 = vmatpush1.bf16.msra.mxu0 %v2869
    %3335 = vmatprep.subr.bf16.mxu0 %v2873
    %3336 = vmatpush1.bf16.msra.mxu0 %v2872
    %3337 = vmatprep.subr.bf16.mxu0 %v2876
    %3338 = vmatpush1.bf16.msra.mxu0 %v2875
    %3339 = vmatprep.subr.bf16.mxu0 %v2879
    %3340 = vmatpush1.bf16.msra.mxu0 %v2878
    %3341 = vmatprep.subr.bf16.mxu0 %v2882
    %3342 = vmatpush1.bf16.msra.mxu0 %v2881
    %3343 = vmatprep.subr.bf16.mxu0 %v2885
    %3344 = vmatpush1.bf16.msra.mxu0 %v2884
    %3345 = vmatprep.subr.bf16.mxu0 %v2888
    %3346 = vmatpush1.bf16.msra.mxu0 %v2887
    %3347 = vmatprep.subr.bf16.mxu0 %v2891
    %3348 = vmatpush1.bf16.msra.mxu0 %v2890
    %3349 = vmatprep.subr.bf16.mxu0 0
    %3350 = vmatpush1.bf16.msra.mxu0 0
    %3351 = vmatprep.subr.bf16.mxu0 0
    %3352 = vmatpush1.bf16.msra.mxu0 0
    %3353 = vmatprep.subr.bf16.mxu0 0
    %3354 = vmatpush1.bf16.msra.mxu0 0
    %3355 = vmatprep.subr.bf16.mxu0 0
    %3356 = vmatpush1.bf16.msra.mxu0 0
    %3357 = vmatprep.subr.bf16.mxu0 0
    %3358 = vmatpush1.bf16.msra.mxu0 0
    %3359 = vmatprep.subr.bf16.mxu0 0
    %3360 = vmatpush1.bf16.msra.mxu0 0
    %3361 = vmatprep.subr.bf16.mxu0 0
    %3362 = vmatpush1.bf16.msra.mxu0 0
    %3363 = vmatprep.subr.bf16.mxu0 0
    %3364 = vmatpush1.bf16.msra.mxu0 0
    %3365 = vmatprep.mubr.bf16.mxu0 0
    %3366 = vmatmul.mubr.bf16.gmra.mrb[0].mxu0 %v3332
    %v3367 = vpop.f32.mrb[0].mxu0
    %v3368 = vadd.f32 %v2777, %v3367
    %v3369 = vpop.f32.mrb[0].mxu0
    %v3370 = vadd.f32 %v2781, %v3369
    %v3371 = vpop.f32.mrb[0].mxu0
    %v3372 = vpop.f32.mrb[0].mxu0
    %3373 = vdwg.mxu0
    %3374 = vmatprep.subr.bf16.mxu0 0
    %3375 = vmatpush1.bf16.msra.mxu0 %v2871
    %3376 = vmatprep.subr.bf16.mxu0 0
    %3377 = vmatpush1.bf16.msra.mxu0 %v2874
    %3378 = vmatprep.subr.bf16.mxu0 0
    %3379 = vmatpush1.bf16.msra.mxu0 %v2877
    %3380 = vmatprep.subr.bf16.mxu0 0
    %3381 = vmatpush1.bf16.msra.mxu0 %v2880
    %3382 = vmatprep.subr.bf16.mxu0 0
    %3383 = vmatpush1.bf16.msra.mxu0 %v2883
    %3384 = vmatprep.subr.bf16.mxu0 0
    %3385 = vmatpush1.bf16.msra.mxu0 %v2886
    %3386 = vmatprep.subr.bf16.mxu0 0
    %3387 = vmatpush1.bf16.msra.mxu0 %v2889
    %3388 = vmatprep.subr.bf16.mxu0 0
    %3389 = vmatpush1.bf16.msra.mxu0 %v2892
    %3390 = vmatprep.subr.bf16.mxu0 0
    %3391 = vmatpush1.bf16.msra.mxu0 0
    %3392 = vmatprep.subr.bf16.mxu0 0
    %3393 = vmatpush1.bf16.msra.mxu0 0
    %3394 = vmatprep.subr.bf16.mxu0 0
    %3395 = vmatpush1.bf16.msra.mxu0 0
    %3396 = vmatprep.subr.bf16.mxu0 0
    %3397 = vmatpush1.bf16.msra.mxu0 0
    %3398 = vmatprep.subr.bf16.mxu0 0
    %3399 = vmatpush1.bf16.msra.mxu0 0
    %3400 = vmatprep.subr.bf16.mxu0 0
    %3401 = vmatpush1.bf16.msra.mxu0 0
    %3402 = vmatprep.subr.bf16.mxu0 0
    %3403 = vmatpush1.bf16.msra.mxu0 0
    %3404 = vmatprep.subr.bf16.mxu0 0
    %3405 = vmatpush1.bf16.msra.mxu0 0
    %3406 = vmatprep.mubr.bf16.mxu0 0
    %3407 = vmatmul.mubr.bf16.gmra.mrb[0].mxu0 %v3332
    %v3408 = vpop.f32.mrb[0].mxu0
    %v3409 = vadd.f32 %v2785, %v3408
    %v3410 = vpop.f32.mrb[0].mxu0
    %v3411 = vpop.f32.mrb[0].mxu0
    %v3412 = vpop.f32.mrb[0].mxu0
    %3413 = vdwg.mxu0
    %v3414 = vadd.f32 %v2708, %v3368
    %v3415 = vxor.u32 %v3414, 2147483648
    %v3416 = vmul.f32 %v3415, 1.442695
    %v3417 = vpow.pop %v3416
    %v3418 = vadd.f32 %v3417, 1.0
    %v3419 = vrcp.pop %v3418
    %v3420 = vmul.f32 1.0, %v3419
    %v3421 = vadd.f32 %v2710, %v3370
    %v3422 = vxor.u32 %v3421, 2147483648
    %v3423 = vmul.f32 %v3422, 1.442695
    %v3424 = vpow.pop %v3423
    %v3425 = vadd.f32 %v3424, 1.0
    %v3426 = vrcp.pop %v3425
    %v3427 = vmul.f32 1.0, %v3426
    %v3428 = vmul.f32 %v3420, %v3409
    %v3429 = vadd.f32 %v2767, %v3428
    %v3430 = vtanh.pop %v3429
    %v3431 = vsub.f32 1.0, %v3427
    %v3432 = vmul.f32 %v3431, %v3430
    %v3433 = vmul.f32 %v3427, %v3330
    %v3434 = vadd.f32 %v3432, %v3433
    %3435 = vst [vmem:[#allocation2 + $0x20] sm:$0xff] %v3434
    %v3436 = vpack.c.bf16 %v3434, %v3434
    %3437 = vmatprep.subr.bf16.mxu0 %v2870
    %3438 = vmatpush1.bf16.msra.mxu0 %v2869
    %3439 = vmatprep.subr.bf16.mxu0 %v2873
    %3440 = vmatpush1.bf16.msra.mxu0 %v2872
    %3441 = vmatprep.subr.bf16.mxu0 %v2876
    %3442 = vmatpush1.bf16.msra.mxu0 %v2875
    %3443 = vmatprep.subr.bf16.mxu0 %v2879
    %3444 = vmatpush1.bf16.msra.mxu0 %v2878
    %3445 = vmatprep.subr.bf16.mxu0 %v2882
    %3446 = vmatpush1.bf16.msra.mxu0 %v2881
    %3447 = vmatprep.subr.bf16.mxu0 %v2885
    %3448 = vmatpush1.bf16.msra.mxu0 %v2884
    %3449 = vmatprep.subr.bf16.mxu0 %v2888
    %3450 = vmatpush1.bf16.msra.mxu0 %v2887
    %3451 = vmatprep.subr.bf16.mxu0 %v2891
    %3452 = vmatpush1.bf16.msra.mxu0 %v2890
    %3453 = vmatprep.subr.bf16.mxu0 0
    %3454 = vmatpush1.bf16.msra.mxu0 0
    %3455 = vmatprep.subr.bf16.mxu0 0
    %3456 = vmatpush1.bf16.msra.mxu0 0
    %3457 = vmatprep.subr.bf16.mxu0 0
    %3458 = vmatpush1.bf16.msra.mxu0 0
    %3459 = vmatprep.subr.bf16.mxu0 0
    %3460 = vmatpush1.bf16.msra.mxu0 0
    %3461 = vmatprep.subr.bf16.mxu0 0
    %3462 = vmatpush1.bf16.msra.mxu0 0
    %3463 = vmatprep.subr.bf16.mxu0 0
    %3464 = vmatpush1.bf16.msra.mxu0 0
    %3465 = vmatprep.subr.bf16.mxu0 0
    %3466 = vmatpush1.bf16.msra.mxu0 0
    %3467 = vmatprep.subr.bf16.mxu0 0
    %3468 = vmatpush1.bf16.msra.mxu0 0
    %3469 = vmatprep.mubr.bf16.mxu0 0
    %3470 = vmatmul.mubr.bf16.gmra.mrb[0].mxu0 %v3436
    %v3471 = vpop.f32.mrb[0].mxu0
    %v3472 = vadd.f32 %v2777, %v3471
    %v3473 = vpop.f32.mrb[0].mxu0
    %v3474 = vadd.f32 %v2781, %v3473
    %v3475 = vpop.f32.mrb[0].mxu0
    %v3476 = vpop.f32.mrb[0].mxu0
    %3477 = vdwg.mxu0
    %3478 = vmatprep.subr.bf16.mxu0 0
    %3479 = vmatpush1.bf16.msra.mxu0 %v2871
    %3480 = vmatprep.subr.bf16.mxu0 0
    %3481 = vmatpush1.bf16.msra.mxu0 %v2874
    %3482 = vmatprep.subr.bf16.mxu0 0
    %3483 = vmatpush1.bf16.msra.mxu0 %v2877
    %3484 = vmatprep.subr.bf16.mxu0 0
    %3485 = vmatpush1.bf16.msra.mxu0 %v2880
    %3486 = vmatprep.subr.bf16.mxu0 0
    %3487 = vmatpush1.bf16.msra.mxu0 %v2883
    %3488 = vmatprep.subr.bf16.mxu0 0
    %3489 = vmatpush1.bf16.msra.mxu0 %v2886
    %3490 = vmatprep.subr.bf16.mxu0 0
    %3491 = vmatpush1.bf16.msra.mxu0 %v2889
    %3492 = vmatprep.subr.bf16.mxu0 0
    %3493 = vmatpush1.bf16.msra.mxu0 %v2892
    %3494 = vmatprep.subr.bf16.mxu0 0
    %3495 = vmatpush1.bf16.msra.mxu0 0
    %3496 = vmatprep.subr.bf16.mxu0 0
    %3497 = vmatpush1.bf16.msra.mxu0 0
    %3498 = vmatprep.subr.bf16.mxu0 0
    %3499 = vmatpush1.bf16.msra.mxu0 0
    %3500 = vmatprep.subr.bf16.mxu0 0
    %3501 = vmatpush1.bf16.msra.mxu0 0
    %3502 = vmatprep.subr.bf16.mxu0 0
    %3503 = vmatpush1.bf16.msra.mxu0 0
    %3504 = vmatprep.subr.bf16.mxu0 0
    %3505 = vmatpush1.bf16.msra.mxu0 0
    %3506 = vmatprep.subr.bf16.mxu0 0
    %3507 = vmatpush1.bf16.msra.mxu0 0
    %3508 = vmatprep.subr.bf16.mxu0 0
    %3509 = vmatpush1.bf16.msra.mxu0 0
    %3510 = vmatprep.mubr.bf16.mxu0 0
    %3511 = vmatmul.mubr.bf16.gmra.mrb[0].mxu0 %v3436
    %v3512 = vpop.f32.mrb[0].mxu0
    %v3513 = vadd.f32 %v2785, %v3512
    %v3514 = vpop.f32.mrb[0].mxu0
    %v3515 = vpop.f32.mrb[0].mxu0
    %v3516 = vpop.f32.mrb[0].mxu0
    %3517 = vdwg.mxu0
    %v3518 = vadd.f32 %v2712, %v3472
    %v3519 = vxor.u32 %v3518, 2147483648
    %v3520 = vmul.f32 %v3519, 1.442695
    %v3521 = vpow.pop %v3520
    %v3522 = vadd.f32 %v3521, 1.0
    %v3523 = vrcp.pop %v3522
    %v3524 = vmul.f32 1.0, %v3523
    %v3525 = vadd.f32 %v2714, %v3474
    %v3526 = vxor.u32 %v3525, 2147483648
    %v3527 = vmul.f32 %v3526, 1.442695
    %v3528 = vpow.pop %v3527
    %v3529 = vadd.f32 %v3528, 1.0
    %v3530 = vrcp.pop %v3529
    %v3531 = vmul.f32 1.0, %v3530
    %v3532 = vmul.f32 %v3524, %v3513
    %v3533 = vadd.f32 %v2770, %v3532
    %v3534 = vtanh.pop %v3533
    %v3535 = vsub.f32 1.0, %v3531
    %v3536 = vmul.f32 %v3535, %v3534
    %v3537 = vmul.f32 %v3531, %v3434
    %v3538 = vadd.f32 %v3536, %v3537
    %3539 = vst [vmem:[#allocation2 + $0x28] sm:$0xff] %v3538
    %v3540 = vld [vmem:[#allocation2] sm:$0xff]
    %v3541 = vld [vmem:[#allocation2 + $0x8] sm:$0xff]
    %v3542 = vld [vmem:[#allocation2 + $0x10] sm:$0xff]
    %v3543 = vld [vmem:[#allocation2 + $0x18] sm:$0xff]
    %v3544 = vld [vmem:[#allocation2 + $0x20] sm:$0xff]
    %v3545 = vld [vmem:[#allocation2 + $0x28] sm:$0xff]
    %s3546 = scalar_lea.vmem [#allocation8], 576
    %v3547 = vld [vmem:[%s3546] sm:$0xff]
    %v3548 = vld [vmem:[%s3546 + $0x8] sm:$0xf]
    %v3549 = vld [vmem:[%s3546 + $0xc] sm:$0xff]
    %v3550 = vld [vmem:[%s3546 + $0x14] sm:$0xf]
    %v3551 = vld [vmem:[%s3546 + $0x18] sm:$0xff]
    %v3552 = vld [vmem:[%s3546 + $0x20] sm:$0xf]
    %v3553 = vld [vmem:[%s3546 + $0x24] sm:$0xff]
    %v3554 = vld [vmem:[%s3546 + $0x2c] sm:$0xf]
    %v3555 = vld [vmem:[%s3546 + $0x30] sm:$0xff]
    %v3556 = vld [vmem:[%s3546 + $0x38] sm:$0xf]
    %v3557 = vld [vmem:[%s3546 + $0x3c] sm:$0xff]
    %v3558 = vld [vmem:[%s3546 + $0x44] sm:$0xf]
    %v3559 = vld [vmem:[%s3546 + $0x48] sm:$0xff]
    %v3560 = vld [vmem:[%s3546 + $0x50] sm:$0xf]
    %v3561 = vld [vmem:[%s3546 + $0x54] sm:$0xff]
    %v3562 = vld [vmem:[%s3546 + $0x5c] sm:$0xf]
    %v3563 = vld [vmem:[%s3546 + $0x60] sm:$0xff]
    %v3564 = vld [vmem:[%s3546 + $0x68] sm:$0xf]
    %v3565 = vld [vmem:[%s3546 + $0x6c] sm:$0xff]
    %v3566 = vld [vmem:[%s3546 + $0x74] sm:$0xf]
    %v3567 = vld [vmem:[%s3546 + $0x78] sm:$0xff]
    %v3568 = vld [vmem:[%s3546 + $0x80] sm:$0xf]
    %v3569 = vld [vmem:[%s3546 + $0x84] sm:$0xff]
    %v3570 = vld [vmem:[%s3546 + $0x8c] sm:$0xf]
    %v3571 = vld [vmem:[%s3546 + $0x90] sm:$0xff]
    %v3572 = vld [vmem:[%s3546 + $0x98] sm:$0xf]
    %v3573 = vld [vmem:[%s3546 + $0x9c] sm:$0xff]
    %v3574 = vld [vmem:[%s3546 + $0xa4] sm:$0xf]
    %v3575 = vld [vmem:[%s3546 + $0xa8] sm:$0xff]
    %v3576 = vld [vmem:[%s3546 + $0xb0] sm:$0xf]
    %v3577 = vld [vmem:[%s3546 + $0xb4] sm:$0xff]
    %v3578 = vld [vmem:[%s3546 + $0xbc] sm:$0xf]
    %s3579 = scalar_lea.vmem [#allocation9], 576
    %v3580 = vld [vmem:[%s3579] sm:$0xff]
    %v3581 = vld [vmem:[%s3579 + $0x8] sm:$0xf]
    %v3582 = vld [vmem:[%s3579 + $0xc] sm:$0xff]
    %v3583 = vld [vmem:[%s3579 + $0x14] sm:$0xf]
    %v3584 = vld [vmem:[%s3579 + $0x18] sm:$0xff]
    %v3585 = vld [vmem:[%s3579 + $0x20] sm:$0xf]
    %v3586 = vld [vmem:[%s3579 + $0x24] sm:$0xff]
    %v3587 = vld [vmem:[%s3579 + $0x2c] sm:$0xf]
    %v3588 = vld [vmem:[%s3579 + $0x30] sm:$0xff]
    %v3589 = vld [vmem:[%s3579 + $0x38] sm:$0xf]
    %v3590 = vld [vmem:[%s3579 + $0x3c] sm:$0xff]
    %v3591 = vld [vmem:[%s3579 + $0x44] sm:$0xf]
    %v3592 = vld [vmem:[%s3579 + $0x48] sm:$0xff]
    %v3593 = vld [vmem:[%s3579 + $0x50] sm:$0xf]
    %v3594 = vld [vmem:[%s3579 + $0x54] sm:$0xff]
    %v3595 = vld [vmem:[%s3579 + $0x5c] sm:$0xf]
    %v3596 = vld [vmem:[%s3579 + $0x60] sm:$0xff]
    %v3597 = vld [vmem:[%s3579 + $0x68] sm:$0xf]
    %v3598 = vld [vmem:[%s3579 + $0x6c] sm:$0xff]
    %v3599 = vld [vmem:[%s3579 + $0x74] sm:$0xf]
    %v3600 = vld [vmem:[%s3579 + $0x78] sm:$0xff]
    %v3601 = vld [vmem:[%s3579 + $0x80] sm:$0xf]
    %v3602 = vld [vmem:[%s3579 + $0x84] sm:$0xff]
    %v3603 = vld [vmem:[%s3579 + $0x8c] sm:$0xf]
    %v3604 = vld [vmem:[%s3579 + $0x90] sm:$0xff]
    %v3605 = vld [vmem:[%s3579 + $0x98] sm:$0xf]
    %v3606 = vld [vmem:[%s3579 + $0x9c] sm:$0xff]
    %v3607 = vld [vmem:[%s3579 + $0xa4] sm:$0xf]
    %v3608 = vld [vmem:[%s3579 + $0xa8] sm:$0xff]
    %v3609 = vld [vmem:[%s3579 + $0xb0] sm:$0xf]
    %v3610 = vld [vmem:[%s3579 + $0xb4] sm:$0xff]
    %v3611 = vld [vmem:[%s3579 + $0xbc] sm:$0xf]
    %s3612 = scalar_lea.vmem [#allocation11], 9
    %v3613 = vld [vmem:[%s3612] sm:$0x7]
    %s3614 = scalar_lea.vmem [#allocation12], 9
    %v3615 = vld [vmem:[%s3614] sm:$0x7]
    %v3616 = vpack.c.bf16 %v3541, %v3540
    %v3617 = vpack.c.bf16 %v3543, %v3542
    %v3618 = vpack.c.bf16 %v3545, %v3544
    %v3620 = vlaneseq
    %v3621 = vshrl.u32 %v3620, 7
    %v3622 = vsub.s32 0, %v3621
    %v3623 = vrot.slane %v3613, %v3622
    %v3624 = vlaneseq
    %v3625 = vshrl.u32 %v3624, 7
    %v3626 = vsub.s32 1, %v3625
    %v3627 = vrot.slane %v3613, %v3626
    %v3628 = vlaneseq
    %v3629 = vshrl.u32 %v3628, 7
    %v3630 = vsub.s32 2, %v3629
    %v3631 = vrot.slane %v3613, %v3630
    %v3667 = vunpack.c.l.b16 %v3547
    %v3668 = vunpack.c.h.b16 %v3547
    %v3669 = vunpack.c.l.b16 %v3548
    %v3670 = vunpack.c.l.b16 %v3549
    %v3671 = vunpack.c.h.b16 %v3549
    %v3672 = vunpack.c.l.b16 %v3550
    %v3673 = vunpack.c.l.b16 %v3551
    %v3674 = vunpack.c.h.b16 %v3551
    %v3675 = vunpack.c.l.b16 %v3552
    %v3676 = vunpack.c.l.b16 %v3553
    %v3677 = vunpack.c.h.b16 %v3553
    %v3678 = vunpack.c.l.b16 %v3554
    %v3679 = vunpack.c.l.b16 %v3555
    %v3680 = vunpack.c.h.b16 %v3555
    %v3681 = vunpack.c.l.b16 %v3556
    %v3682 = vunpack.c.l.b16 %v3557
    %v3683 = vunpack.c.h.b16 %v3557
    %v3684 = vunpack.c.l.b16 %v3558
    %v3685 = vunpack.c.l.b16 %v3559
    %v3686 = vunpack.c.h.b16 %v3559
    %v3687 = vunpack.c.l.b16 %v3560
    %v3688 = vunpack.c.l.b16 %v3561
    %v3689 = vunpack.c.h.b16 %v3561
    %v3690 = vunpack.c.l.b16 %v3562
    %v3691 = vunpack.c.l.b16 %v3563
    %v3692 = vunpack.c.h.b16 %v3563
    %v3693 = vunpack.c.l.b16 %v3564
    %v3694 = vunpack.c.l.b16 %v3565
    %v3695 = vunpack.c.h.b16 %v3565
    %v3696 = vunpack.c.l.b16 %v3566
    %v3697 = vunpack.c.l.b16 %v3567
    %v3698 = vunpack.c.h.b16 %v3567
    %v3699 = vunpack.c.l.b16 %v3568
    %v3700 = vunpack.c.l.b16 %v3569
    %v3701 = vunpack.c.h.b16 %v3569
    %v3702 = vunpack.c.l.b16 %v3570
    %v3703 = vunpack.c.l.b16 %v3571
    %v3704 = vunpack.c.h.b16 %v3571
    %v3705 = vunpack.c.l.b16 %v3572
    %v3706 = vunpack.c.l.b16 %v3573
    %v3707 = vunpack.c.h.b16 %v3573
    %v3708 = vunpack.c.l.b16 %v3574
    %v3709 = vunpack.c.l.b16 %v3575
    %v3710 = vunpack.c.h.b16 %v3575
    %v3711 = vunpack.c.l.b16 %v3576
    %v3712 = vunpack.c.l.b16 %v3577
    %v3713 = vunpack.c.h.b16 %v3577
    %v3714 = vunpack.c.l.b16 %v3578
    %v3715 = vpack.c.b16 %v3670, %v3667
    %v3716 = vpack.c.b16 %v3671, %v3668
    %v3717 = vpack.c.b16 %v3672, %v3669
    %v3718 = vpack.c.b16 %v3676, %v3673
    %v3719 = vpack.c.b16 %v3677, %v3674
    %v3720 = vpack.c.b16 %v3678, %v3675
    %v3721 = vpack.c.b16 %v3682, %v3679
    %v3722 = vpack.c.b16 %v3683, %v3680
    %v3723 = vpack.c.b16 %v3684, %v3681
    %v3724 = vpack.c.b16 %v3688, %v3685
    %v3725 = vpack.c.b16 %v3689, %v3686
    %v3726 = vpack.c.b16 %v3690, %v3687
    %v3727 = vpack.c.b16 %v3694, %v3691
    %v3728 = vpack.c.b16 %v3695, %v3692
    %v3729 = vpack.c.b16 %v3696, %v3693
    %v3730 = vpack.c.b16 %v3700, %v3697
    %v3731 = vpack.c.b16 %v3701, %v3698
    %v3732 = vpack.c.b16 %v3702, %v3699
    %v3733 = vpack.c.b16 %v3706, %v3703
    %v3734 = vpack.c.b16 %v3707, %v3704
    %v3735 = vpack.c.b16 %v3708, %v3705
    %v3736 = vpack.c.b16 %v3712, %v3709
    %v3737 = vpack.c.b16 %v3713, %v3710
    %v3738 = vpack.c.b16 %v3714, %v3711
    %3763 = vmatprep.subr.bf16.mxu0 %v3716
    %3764 = vmatpush1.bf16.msra.mxu0 %v3715
    %3765 = vmatprep.subr.bf16.mxu0 %v3719
    %3766 = vmatpush1.bf16.msra.mxu0 %v3718
    %3767 = vmatprep.subr.bf16.mxu0 %v3722
    %3768 = vmatpush1.bf16.msra.mxu0 %v3721
    %3769 = vmatprep.subr.bf16.mxu0 %v3725
    %3770 = vmatpush1.bf16.msra.mxu0 %v3724
    %3771 = vmatprep.subr.bf16.mxu0 %v3728
    %3772 = vmatpush1.bf16.msra.mxu0 %v3727
    %3773 = vmatprep.subr.bf16.mxu0 %v3731
    %3774 = vmatpush1.bf16.msra.mxu0 %v3730
    %3775 = vmatprep.subr.bf16.mxu0 %v3734
    %3776 = vmatpush1.bf16.msra.mxu0 %v3733
    %3777 = vmatprep.subr.bf16.mxu0 %v3737
    %3778 = vmatpush1.bf16.msra.mxu0 %v3736
    %3779 = vmatprep.subr.bf16.mxu0 0
    %3780 = vmatpush1.bf16.msra.mxu0 0
    %3781 = vmatprep.subr.bf16.mxu0 0
    %3782 = vmatpush1.bf16.msra.mxu0 0
    %3783 = vmatprep.subr.bf16.mxu0 0
    %3784 = vmatpush1.bf16.msra.mxu0 0
    %3785 = vmatprep.subr.bf16.mxu0 0
    %3786 = vmatpush1.bf16.msra.mxu0 0
    %3787 = vmatprep.subr.bf16.mxu0 0
    %3788 = vmatpush1.bf16.msra.mxu0 0
    %3789 = vmatprep.subr.bf16.mxu0 0
    %3790 = vmatpush1.bf16.msra.mxu0 0
    %3791 = vmatprep.subr.bf16.mxu0 0
    %3792 = vmatpush1.bf16.msra.mxu0 0
    %3793 = vmatprep.subr.bf16.mxu0 0
    %3794 = vmatpush1.bf16.msra.mxu0 0
    %3795 = vmatprep.mubr.bf16.mxu0 0
    %3796 = vmatmul.mubr.bf16.gmra.mrb[0].mxu0 %v3616
    %v3797 = vpop.f32.mrb[0].mxu0
    %v3798 = vadd.f32 %v3623, %v3797
    %v3799 = vpop.f32.mrb[0].mxu0
    %v3800 = vadd.f32 %v3627, %v3799
    %v3801 = vpop.f32.mrb[0].mxu0
    %v3802 = vadd.f32 %v3623, %v3801
    %v3803 = vpop.f32.mrb[0].mxu0
    %v3804 = vadd.f32 %v3627, %v3803
    %3805 = vmatprep.mubr.bf16.mxu0 0
    %3806 = vmatmul.mubr.bf16.gmra.mrb[0].mxu0 %v3617
    %v3807 = vpop.f32.mrb[0].mxu0
    %v3808 = vadd.f32 %v3623, %v3807
    %v3809 = vpop.f32.mrb[0].mxu0
    %v3810 = vadd.f32 %v3627, %v3809
    %v3811 = vpop.f32.mrb[0].mxu0
    %v3812 = vadd.f32 %v3623, %v3811
    %v3813 = vpop.f32.mrb[0].mxu0
    %v3814 = vadd.f32 %v3627, %v3813
    %3815 = vmatprep.mubr.bf16.mxu0 0
    %3816 = vmatmul.mubr.bf16.gmra.mrb[0].mxu0 %v3618
    %v3817 = vpop.f32.mrb[0].mxu0
    %v3818 = vadd.f32 %v3623, %v3817
    %v3819 = vpop.f32.mrb[0].mxu0
    %v3820 = vadd.f32 %v3627, %v3819
    %v3821 = vpop.f32.mrb[0].mxu0
    %v3822 = vadd.f32 %v3623, %v3821
    %v3823 = vpop.f32.mrb[0].mxu0
    %v3824 = vadd.f32 %v3627, %v3823
    %3825 = vdwg.mxu0
    %3826 = vmatprep.subr.bf16.mxu0 0
    %3827 = vmatpush1.bf16.msra.mxu0 %v3717
    %3828 = vmatprep.subr.bf16.mxu0 0
    %3829 = vmatpush1.bf16.msra.mxu0 %v3720
    %3830 = vmatprep.subr.bf16.mxu0 0
    %3831 = vmatpush1.bf16.msra.mxu0 %v3723
    %3832 = vmatprep.subr.bf16.mxu0 0
    %3833 = vmatpush1.bf16.msra.mxu0 %v3726
    %3834 = vmatprep.subr.bf16.mxu0 0
    %3835 = vmatpush1.bf16.msra.mxu0 %v3729
    %3836 = vmatprep.subr.bf16.mxu0 0
    %3837 = vmatpush1.bf16.msra.mxu0 %v3732
    %3838 = vmatprep.subr.bf16.mxu0 0
    %3839 = vmatpush1.bf16.msra.mxu0 %v3735
    %3840 = vmatprep.subr.bf16.mxu0 0
    %3841 = vmatpush1.bf16.msra.mxu0 %v3738
    %3842 = vmatprep.subr.bf16.mxu0 0
    %3843 = vmatpush1.bf16.msra.mxu0 0
    %3844 = vmatprep.subr.bf16.mxu0 0
    %3845 = vmatpush1.bf16.msra.mxu0 0
    %3846 = vmatprep.subr.bf16.mxu0 0
    %3847 = vmatpush1.bf16.msra.mxu0 0
    %3848 = vmatprep.subr.bf16.mxu0 0
    %3849 = vmatpush1.bf16.msra.mxu0 0
    %3850 = vmatprep.subr.bf16.mxu0 0
    %3851 = vmatpush1.bf16.msra.mxu0 0
    %3852 = vmatprep.subr.bf16.mxu0 0
    %3853 = vmatpush1.bf16.msra.mxu0 0
    %3854 = vmatprep.subr.bf16.mxu0 0
    %3855 = vmatpush1.bf16.msra.mxu0 0
    %3856 = vmatprep.subr.bf16.mxu0 0
    %3857 = vmatpush1.bf16.msra.mxu0 0
    %3858 = vmatprep.mubr.bf16.mxu0 0
    %3859 = vmatmul.mubr.bf16.gmra.mrb[0].mxu0 %v3616
    %v3860 = vpop.f32.mrb[0].mxu0
    %v3861 = vadd.f32 %v3631, %v3860
    %v3862 = vpop.f32.mrb[0].mxu0
    %v3863 = vpop.f32.mrb[0].mxu0
    %v3864 = vadd.f32 %v3631, %v3863
    %v3865 = vpop.f32.mrb[0].mxu0
    %3866 = vmatprep.mubr.bf16.mxu0 0
    %3867 = vmatmul.mubr.bf16.gmra.mrb[0].mxu0 %v3617
    %v3868 = vpop.f32.mrb[0].mxu0
    %v3869 = vadd.f32 %v3631, %v3868
    %v3870 = vpop.f32.mrb[0].mxu0
    %v3871 = vpop.f32.mrb[0].mxu0
    %v3872 = vadd.f32 %v3631, %v3871
    %v3873 = vpop.f32.mrb[0].mxu0
    %3874 = vmatprep.mubr.bf16.mxu0 0
    %3875 = vmatmul.mubr.bf16.gmra.mrb[0].mxu0 %v3618
    %v3876 = vpop.f32.mrb[0].mxu0
    %v3877 = vadd.f32 %v3631, %v3876
    %v3878 = vpop.f32.mrb[0].mxu0
    %v3879 = vpop.f32.mrb[0].mxu0
    %v3880 = vadd.f32 %v3631, %v3879
    %v3881 = vpop.f32.mrb[0].mxu0
    %3882 = vdwg.mxu0
    %v3884 = vlaneseq
    %v3885 = vshrl.u32 %v3884, 7
    %v3886 = vsub.s32 0, %v3885
    %v3887 = vrot.slane %v3615, %v3886
    %v3888 = vlaneseq
    %v3889 = vshrl.u32 %v3888, 7
    %v3890 = vsub.s32 1, %v3889
    %v3891 = vrot.slane %v3615, %v3890
    %v3892 = vlaneseq
    %v3893 = vshrl.u32 %v3892, 7
    %v3894 = vsub.s32 2, %v3893
    %v3895 = vrot.slane %v3615, %v3894
    %v3931 = vunpack.c.l.b16 %v3580
    %v3932 = vunpack.c.h.b16 %v3580
    %v3933 = vunpack.c.l.b16 %v3581
    %v3934 = vunpack.c.l.b16 %v3582
    %v3935 = vunpack.c.h.b16 %v3582
    %v3936 = vunpack.c.l.b16 %v3583
    %v3937 = vunpack.c.l.b16 %v3584
    %v3938 = vunpack.c.h.b16 %v3584
    %v3939 = vunpack.c.l.b16 %v3585
    %v3940 = vunpack.c.l.b16 %v3586
    %v3941 = vunpack.c.h.b16 %v3586
    %v3942 = vunpack.c.l.b16 %v3587
    %v3943 = vunpack.c.l.b16 %v3588
    %v3944 = vunpack.c.h.b16 %v3588
    %v3945 = vunpack.c.l.b16 %v3589
    %v3946 = vunpack.c.l.b16 %v3590
    %v3947 = vunpack.c.h.b16 %v3590
    %v3948 = vunpack.c.l.b16 %v3591
    %v3949 = vunpack.c.l.b16 %v3592
    %v3950 = vunpack.c.h.b16 %v3592
    %v3951 = vunpack.c.l.b16 %v3593
    %v3952 = vunpack.c.l.b16 %v3594
    %v3953 = vunpack.c.h.b16 %v3594
    %v3954 = vunpack.c.l.b16 %v3595
    %v3955 = vunpack.c.l.b16 %v3596
    %v3956 = vunpack.c.h.b16 %v3596
    %v3957 = vunpack.c.l.b16 %v3597
    %v3958 = vunpack.c.l.b16 %v3598
    %v3959 = vunpack.c.h.b16 %v3598
    %v3960 = vunpack.c.l.b16 %v3599
    %v3961 = vunpack.c.l.b16 %v3600
    %v3962 = vunpack.c.h.b16 %v3600
    %v3963 = vunpack.c.l.b16 %v3601
    %v3964 = vunpack.c.l.b16 %v3602
    %v3965 = vunpack.c.h.b16 %v3602
    %v3966 = vunpack.c.l.b16 %v3603
    %v3967 = vunpack.c.l.b16 %v3604
    %v3968 = vunpack.c.h.b16 %v3604
    %v3969 = vunpack.c.l.b16 %v3605
    %v3970 = vunpack.c.l.b16 %v3606
    %v3971 = vunpack.c.h.b16 %v3606
    %v3972 = vunpack.c.l.b16 %v3607
    %v3973 = vunpack.c.l.b16 %v3608
    %v3974 = vunpack.c.h.b16 %v3608
    %v3975 = vunpack.c.l.b16 %v3609
    %v3976 = vunpack.c.l.b16 %v3610
    %v3977 = vunpack.c.h.b16 %v3610
    %v3978 = vunpack.c.l.b16 %v3611
    %v3979 = vpack.c.b16 %v3934, %v3931
    %v3980 = vpack.c.b16 %v3935, %v3932
    %v3981 = vpack.c.b16 %v3936, %v3933
    %v3982 = vpack.c.b16 %v3940, %v3937
    %v3983 = vpack.c.b16 %v3941, %v3938
    %v3984 = vpack.c.b16 %v3942, %v3939
    %v3985 = vpack.c.b16 %v3946, %v3943
    %v3986 = vpack.c.b16 %v3947, %v3944
    %v3987 = vpack.c.b16 %v3948, %v3945
    %v3988 = vpack.c.b16 %v3952, %v3949
    %v3989 = vpack.c.b16 %v3953, %v3950
    %v3990 = vpack.c.b16 %v3954, %v3951
    %v3991 = vpack.c.b16 %v3958, %v3955
    %v3992 = vpack.c.b16 %v3959, %v3956
    %v3993 = vpack.c.b16 %v3960, %v3957
    %v3994 = vpack.c.b16 %v3964, %v3961
    %v3995 = vpack.c.b16 %v3965, %v3962
    %v3996 = vpack.c.b16 %v3966, %v3963
    %v3997 = vpack.c.b16 %v3970, %v3967
    %v3998 = vpack.c.b16 %v3971, %v3968
    %v3999 = vpack.c.b16 %v3972, %v3969
    %v4000 = vpack.c.b16 %v3976, %v3973
    %v4001 = vpack.c.b16 %v3977, %v3974
    %v4002 = vpack.c.b16 %v3978, %v3975
    %4027 = vmatprep.subr.bf16.mxu0 %v3980
    %4028 = vmatpush1.bf16.msra.mxu0 %v3979
    %4029 = vmatprep.subr.bf16.mxu0 %v3983
    %4030 = vmatpush1.bf16.msra.mxu0 %v3982
    %4031 = vmatprep.subr.bf16.mxu0 %v3986
    %4032 = vmatpush1.bf16.msra.mxu0 %v3985
    %4033 = vmatprep.subr.bf16.mxu0 %v3989
    %4034 = vmatpush1.bf16.msra.mxu0 %v3988
    %4035 = vmatprep.subr.bf16.mxu0 %v3992
    %4036 = vmatpush1.bf16.msra.mxu0 %v3991
    %4037 = vmatprep.subr.bf16.mxu0 %v3995
    %4038 = vmatpush1.bf16.msra.mxu0 %v3994
    %4039 = vmatprep.subr.bf16.mxu0 %v3998
    %4040 = vmatpush1.bf16.msra.mxu0 %v3997
    %4041 = vmatprep.subr.bf16.mxu0 %v4001
    %4042 = vmatpush1.bf16.msra.mxu0 %v4000
    %4043 = vmatprep.subr.bf16.mxu0 0
    %4044 = vmatpush1.bf16.msra.mxu0 0
    %4045 = vmatprep.subr.bf16.mxu0 0
    %4046 = vmatpush1.bf16.msra.mxu0 0
    %4047 = vmatprep.subr.bf16.mxu0 0
    %4048 = vmatpush1.bf16.msra.mxu0 0
    %4049 = vmatprep.subr.bf16.mxu0 0
    %4050 = vmatpush1.bf16.msra.mxu0 0
    %4051 = vmatprep.subr.bf16.mxu0 0
    %4052 = vmatpush1.bf16.msra.mxu0 0
    %4053 = vmatprep.subr.bf16.mxu0 0
    %4054 = vmatpush1.bf16.msra.mxu0 0
    %4055 = vmatprep.subr.bf16.mxu0 0
    %4056 = vmatpush1.bf16.msra.mxu0 0
    %4057 = vmatprep.subr.bf16.mxu0 0
    %4058 = vmatpush1.bf16.msra.mxu0 0
    %4059 = vmatprep.mubr.bf16.mxu0 0
    %4060 = vmatmul.mubr.bf16.gmra.mrb[0].mxu0 0
    %v4061 = vpop.f32.mrb[0].mxu0
    %v4062 = vadd.f32 %v3887, %v4061
    %v4063 = vpop.f32.mrb[0].mxu0
    %v4064 = vadd.f32 %v3891, %v4063
    %v4065 = vpop.f32.mrb[0].mxu0
    %v4066 = vpop.f32.mrb[0].mxu0
    %4067 = vdwg.mxu0
    %4068 = vmatprep.subr.bf16.mxu0 0
    %4069 = vmatpush1.bf16.msra.mxu0 %v3981
    %4070 = vmatprep.subr.bf16.mxu0 0
    %4071 = vmatpush1.bf16.msra.mxu0 %v3984
    %4072 = vmatprep.subr.bf16.mxu0 0
    %4073 = vmatpush1.bf16.msra.mxu0 %v3987
    %4074 = vmatprep.subr.bf16.mxu0 0
    %4075 = vmatpush1.bf16.msra.mxu0 %v3990
    %4076 = vmatprep.subr.bf16.mxu0 0
    %4077 = vmatpush1.bf16.msra.mxu0 %v3993
    %4078 = vmatprep.subr.bf16.mxu0 0
    %4079 = vmatpush1.bf16.msra.mxu0 %v3996
    %4080 = vmatprep.subr.bf16.mxu0 0
    %4081 = vmatpush1.bf16.msra.mxu0 %v3999
    %4082 = vmatprep.subr.bf16.mxu0 0
    %4083 = vmatpush1.bf16.msra.mxu0 %v4002
    %4084 = vmatprep.subr.bf16.mxu0 0
    %4085 = vmatpush1.bf16.msra.mxu0 0
    %4086 = vmatprep.subr.bf16.mxu0 0
    %4087 = vmatpush1.bf16.msra.mxu0 0
    %4088 = vmatprep.subr.bf16.mxu0 0
    %4089 = vmatpush1.bf16.msra.mxu0 0
    %4090 = vmatprep.subr.bf16.mxu0 0
    %4091 = vmatpush1.bf16.msra.mxu0 0
    %4092 = vmatprep.subr.bf16.mxu0 0
    %4093 = vmatpush1.bf16.msra.mxu0 0
    %4094 = vmatprep.subr.bf16.mxu0 0
    %4095 = vmatpush1.bf16.msra.mxu0 0
    %4096 = vmatprep.subr.bf16.mxu0 0
    %4097 = vmatpush1.bf16.msra.mxu0 0
    %4098 = vmatprep.subr.bf16.mxu0 0
    %4099 = vmatpush1.bf16.msra.mxu0 0
    %4100 = vmatprep.mubr.bf16.mxu0 0
    %4101 = vmatmul.mubr.bf16.gmra.mrb[0].mxu0 0
    %v4102 = vpop.f32.mrb[0].mxu0
    %v4103 = vadd.f32 %v3895, %v4102
    %v4104 = vpop.f32.mrb[0].mxu0
    %v4105 = vpop.f32.mrb[0].mxu0
    %v4106 = vpop.f32.mrb[0].mxu0
    %4107 = vdwg.mxu0
    %v4108 = vadd.f32 %v3798, %v4062
    %v4109 = vxor.u32 %v4108, 2147483648
    %v4110 = vmul.f32 %v4109, 1.442695
    %v4111 = vpow.pop %v4110
    %v4112 = vadd.f32 %v4111, 1.0
    %v4113 = vrcp.pop %v4112
    %v4114 = vmul.f32 1.0, %v4113
    %v4115 = vadd.f32 %v3800, %v4064
    %v4116 = vxor.u32 %v4115, 2147483648
    %v4117 = vmul.f32 %v4116, 1.442695
    %v4118 = vpow.pop %v4117
    %v4119 = vadd.f32 %v4118, 1.0
    %v4120 = vrcp.pop %v4119
    %v4121 = vmul.f32 1.0, %v4120
    %v4122 = vmul.f32 %v4114, %v4103
    %v4123 = vadd.f32 %v3861, %v4122
    %v4124 = vtanh.pop %v4123
    %v4125 = vsub.f32 1.0, %v4121
    %v4126 = vmul.f32 %v4125, %v4124
    %v4127 = vmul.f32 %v4121, 0.0
    %v4128 = vadd.f32 %v4126, %v4127
    %v4129 = vpack.c.bf16 %v4128, %v4128
    %4130 = vmatprep.subr.bf16.mxu0 %v3980
    %4131 = vmatpush1.bf16.msra.mxu0 %v3979
    %4132 = vmatprep.subr.bf16.mxu0 %v3983
    %4133 = vmatpush1.bf16.msra.mxu0 %v3982
    %4134 = vmatprep.subr.bf16.mxu0 %v3986
    %4135 = vmatpush1.bf16.msra.mxu0 %v3985
    %4136 = vmatprep.subr.bf16.mxu0 %v3989
    %4137 = vmatpush1.bf16.msra.mxu0 %v3988
    %4138 = vmatprep.subr.bf16.mxu0 %v3992
    %4139 = vmatpush1.bf16.msra.mxu0 %v3991
    %4140 = vmatprep.subr.bf16.mxu0 %v3995
    %4141 = vmatpush1.bf16.msra.mxu0 %v3994
    %4142 = vmatprep.subr.bf16.mxu0 %v3998
    %4143 = vmatpush1.bf16.msra.mxu0 %v3997
    %4144 = vmatprep.subr.bf16.mxu0 %v4001
    %4145 = vmatpush1.bf16.msra.mxu0 %v4000
    %4146 = vmatprep.subr.bf16.mxu0 0
    %4147 = vmatpush1.bf16.msra.mxu0 0
    %4148 = vmatprep.subr.bf16.mxu0 0
    %4149 = vmatpush1.bf16.msra.mxu0 0
    %4150 = vmatprep.subr.bf16.mxu0 0
    %4151 = vmatpush1.bf16.msra.mxu0 0
    %4152 = vmatprep.subr.bf16.mxu0 0
    %4153 = vmatpush1.bf16.msra.mxu0 0
    %4154 = vmatprep.subr.bf16.mxu0 0
    %4155 = vmatpush1.bf16.msra.mxu0 0
    %4156 = vmatprep.subr.bf16.mxu0 0
    %4157 = vmatpush1.bf16.msra.mxu0 0
    %4158 = vmatprep.subr.bf16.mxu0 0
    %4159 = vmatpush1.bf16.msra.mxu0 0
    %4160 = vmatprep.subr.bf16.mxu0 0
    %4161 = vmatpush1.bf16.msra.mxu0 0
    %4162 = vmatprep.mubr.bf16.mxu0 0
    %4163 = vmatmul.mubr.bf16.gmra.mrb[0].mxu0 %v4129
    %v4164 = vpop.f32.mrb[0].mxu0
    %v4165 = vadd.f32 %v3887, %v4164
    %v4166 = vpop.f32.mrb[0].mxu0
    %v4167 = vadd.f32 %v3891, %v4166
    %v4168 = vpop.f32.mrb[0].mxu0
    %v4169 = vpop.f32.mrb[0].mxu0
    %4170 = vdwg.mxu0
    %4171 = vmatprep.subr.bf16.mxu0 0
    %4172 = vmatpush1.bf16.msra.mxu0 %v3981
    %4173 = vmatprep.subr.bf16.mxu0 0
    %4174 = vmatpush1.bf16.msra.mxu0 %v3984
    %4175 = vmatprep.subr.bf16.mxu0 0
    %4176 = vmatpush1.bf16.msra.mxu0 %v3987
    %4177 = vmatprep.subr.bf16.mxu0 0
    %4178 = vmatpush1.bf16.msra.mxu0 %v3990
    %4179 = vmatprep.subr.bf16.mxu0 0
    %4180 = vmatpush1.bf16.msra.mxu0 %v3993
    %4181 = vmatprep.subr.bf16.mxu0 0
    %4182 = vmatpush1.bf16.msra.mxu0 %v3996
    %4183 = vmatprep.subr.bf16.mxu0 0
    %4184 = vmatpush1.bf16.msra.mxu0 %v3999
    %4185 = vmatprep.subr.bf16.mxu0 0
    %4186 = vmatpush1.bf16.msra.mxu0 %v4002
    %4187 = vmatprep.subr.bf16.mxu0 0
    %4188 = vmatpush1.bf16.msra.mxu0 0
    %4189 = vmatprep.subr.bf16.mxu0 0
    %4190 = vmatpush1.bf16.msra.mxu0 0
    %4191 = vmatprep.subr.bf16.mxu0 0
    %4192 = vmatpush1.bf16.msra.mxu0 0
    %4193 = vmatprep.subr.bf16.mxu0 0
    %4194 = vmatpush1.bf16.msra.mxu0 0
    %4195 = vmatprep.subr.bf16.mxu0 0
    %4196 = vmatpush1.bf16.msra.mxu0 0
    %4197 = vmatprep.subr.bf16.mxu0 0
    %4198 = vmatpush1.bf16.msra.mxu0 0
    %4199 = vmatprep.subr.bf16.mxu0 0
    %4200 = vmatpush1.bf16.msra.mxu0 0
    %4201 = vmatprep.subr.bf16.mxu0 0
    %4202 = vmatpush1.bf16.msra.mxu0 0
    %4203 = vmatprep.mubr.bf16.mxu0 0
    %4204 = vmatmul.mubr.bf16.gmra.mrb[0].mxu0 %v4129
    %v4205 = vpop.f32.mrb[0].mxu0
    %v4206 = vadd.f32 %v3895, %v4205
    %v4207 = vpop.f32.mrb[0].mxu0
    %v4208 = vpop.f32.mrb[0].mxu0
    %v4209 = vpop.f32.mrb[0].mxu0
    %4210 = vdwg.mxu0
    %v4211 = vadd.f32 %v3802, %v4165
    %v4212 = vxor.u32 %v4211, 2147483648
    %v4213 = vmul.f32 %v4212, 1.442695
    %v4214 = vpow.pop %v4213
    %v4215 = vadd.f32 %v4214, 1.0
    %v4216 = vrcp.pop %v4215
    %v4217 = vmul.f32 1.0, %v4216
    %v4218 = vadd.f32 %v3804, %v4167
    %v4219 = vxor.u32 %v4218, 2147483648
    %v4220 = vmul.f32 %v4219, 1.442695
    %v4221 = vpow.pop %v4220
    %v4222 = vadd.f32 %v4221, 1.0
    %v4223 = vrcp.pop %v4222
    %v4224 = vmul.f32 1.0, %v4223
    %v4225 = vmul.f32 %v4217, %v4206
    %v4226 = vadd.f32 %v3864, %v4225
    %v4227 = vtanh.pop %v4226
    %v4228 = vsub.f32 1.0, %v4224
    %v4229 = vmul.f32 %v4228, %v4227
    %v4230 = vmul.f32 %v4224, %v4128
    %v4231 = vadd.f32 %v4229, %v4230
    %v4232 = vpack.c.bf16 %v4231, %v4231
    %4233 = vmatprep.subr.bf16.mxu0 %v3980
    %4234 = vmatpush1.bf16.msra.mxu0 %v3979
    %4235 = vmatprep.subr.bf16.mxu0 %v3983
    %4236 = vmatpush1.bf16.msra.mxu0 %v3982
    %4237 = vmatprep.subr.bf16.mxu0 %v3986
    %4238 = vmatpush1.bf16.msra.mxu0 %v3985
    %4239 = vmatprep.subr.bf16.mxu0 %v3989
    %4240 = vmatpush1.bf16.msra.mxu0 %v3988
    %4241 = vmatprep.subr.bf16.mxu0 %v3992
    %4242 = vmatpush1.bf16.msra.mxu0 %v3991
    %4243 = vmatprep.subr.bf16.mxu0 %v3995
    %4244 = vmatpush1.bf16.msra.mxu0 %v3994
    %4245 = vmatprep.subr.bf16.mxu0 %v3998
    %4246 = vmatpush1.bf16.msra.mxu0 %v3997
    %4247 = vmatprep.subr.bf16.mxu0 %v4001
    %4248 = vmatpush1.bf16.msra.mxu0 %v4000
    %4249 = vmatprep.subr.bf16.mxu0 0
    %4250 = vmatpush1.bf16.msra.mxu0 0
    %4251 = vmatprep.subr.bf16.mxu0 0
    %4252 = vmatpush1.bf16.msra.mxu0 0
    %4253 = vmatprep.subr.bf16.mxu0 0
    %4254 = vmatpush1.bf16.msra.mxu0 0
    %4255 = vmatprep.subr.bf16.mxu0 0
    %4256 = vmatpush1.bf16.msra.mxu0 0
    %4257 = vmatprep.subr.bf16.mxu0 0
    %4258 = vmatpush1.bf16.msra.mxu0 0
    %4259 = vmatprep.subr.bf16.mxu0 0
    %4260 = vmatpush1.bf16.msra.mxu0 0
    %4261 = vmatprep.subr.bf16.mxu0 0
    %4262 = vmatpush1.bf16.msra.mxu0 0
    %4263 = vmatprep.subr.bf16.mxu0 0
    %4264 = vmatpush1.bf16.msra.mxu0 0
    %4265 = vmatprep.mubr.bf16.mxu0 0
    %4266 = vmatmul.mubr.bf16.gmra.mrb[0].mxu0 %v4232
    %v4267 = vpop.f32.mrb[0].mxu0
    %v4268 = vadd.f32 %v3887, %v4267
    %v4269 = vpop.f32.mrb[0].mxu0
    %v4270 = vadd.f32 %v3891, %v4269
    %v4271 = vpop.f32.mrb[0].mxu0
    %v4272 = vpop.f32.mrb[0].mxu0
    %4273 = vdwg.mxu0
    %4274 = vmatprep.subr.bf16.mxu0 0
    %4275 = vmatpush1.bf16.msra.mxu0 %v3981
    %4276 = vmatprep.subr.bf16.mxu0 0
    %4277 = vmatpush1.bf16.msra.mxu0 %v3984
    %4278 = vmatprep.subr.bf16.mxu0 0
    %4279 = vmatpush1.bf16.msra.mxu0 %v3987
    %4280 = vmatprep.subr.bf16.mxu0 0
    %4281 = vmatpush1.bf16.msra.mxu0 %v3990
    %4282 = vmatprep.subr.bf16.mxu0 0
    %4283 = vmatpush1.bf16.msra.mxu0 %v3993
    %4284 = vmatprep.subr.bf16.mxu0 0
    %4285 = vmatpush1.bf16.msra.mxu0 %v3996
    %4286 = vmatprep.subr.bf16.mxu0 0
    %4287 = vmatpush1.bf16.msra.mxu0 %v3999
    %4288 = vmatprep.subr.bf16.mxu0 0
    %4289 = vmatpush1.bf16.msra.mxu0 %v4002
    %4290 = vmatprep.subr.bf16.mxu0 0
    %4291 = vmatpush1.bf16.msra.mxu0 0
    %4292 = vmatprep.subr.bf16.mxu0 0
    %4293 = vmatpush1.bf16.msra.mxu0 0
    %4294 = vmatprep.subr.bf16.mxu0 0
    %4295 = vmatpush1.bf16.msra.mxu0 0
    %4296 = vmatprep.subr.bf16.mxu0 0
    %4297 = vmatpush1.bf16.msra.mxu0 0
    %4298 = vmatprep.subr.bf16.mxu0 0
    %4299 = vmatpush1.bf16.msra.mxu0 0
    %4300 = vmatprep.subr.bf16.mxu0 0
    %4301 = vmatpush1.bf16.msra.mxu0 0
    %4302 = vmatprep.subr.bf16.mxu0 0
    %4303 = vmatpush1.bf16.msra.mxu0 0
    %4304 = vmatprep.subr.bf16.mxu0 0
    %4305 = vmatpush1.bf16.msra.mxu0 0
    %4306 = vmatprep.mubr.bf16.mxu0 0
    %4307 = vmatmul.mubr.bf16.gmra.mrb[0].mxu0 %v4232
    %v4308 = vpop.f32.mrb[0].mxu0
    %v4309 = vadd.f32 %v3895, %v4308
    %v4310 = vpop.f32.mrb[0].mxu0
    %v4311 = vpop.f32.mrb[0].mxu0
    %v4312 = vpop.f32.mrb[0].mxu0
    %4313 = vdwg.mxu0
    %v4314 = vadd.f32 %v3808, %v4268
    %v4315 = vxor.u32 %v4314, 2147483648
    %v4316 = vmul.f32 %v4315, 1.442695
    %v4317 = vpow.pop %v4316
    %v4318 = vadd.f32 %v4317, 1.0
    %v4319 = vrcp.pop %v4318
    %v4320 = vmul.f32 1.0, %v4319
    %v4321 = vadd.f32 %v3810, %v4270
    %v4322 = vxor.u32 %v4321, 2147483648
    %v4323 = vmul.f32 %v4322, 1.442695
    %v4324 = vpow.pop %v4323
    %v4325 = vadd.f32 %v4324, 1.0
    %v4326 = vrcp.pop %v4325
    %v4327 = vmul.f32 1.0, %v4326
    %v4328 = vmul.f32 %v4320, %v4309
    %v4329 = vadd.f32 %v3869, %v4328
    %v4330 = vtanh.pop %v4329
    %v4331 = vsub.f32 1.0, %v4327
    %v4332 = vmul.f32 %v4331, %v4330
    %v4333 = vmul.f32 %v4327, %v4231
    %v4334 = vadd.f32 %v4332, %v4333
    %v4335 = vpack.c.bf16 %v4334, %v4334
    %4336 = vmatprep.subr.bf16.mxu0 %v3980
    %4337 = vmatpush1.bf16.msra.mxu0 %v3979
    %4338 = vmatprep.subr.bf16.mxu0 %v3983
    %4339 = vmatpush1.bf16.msra.mxu0 %v3982
    %4340 = vmatprep.subr.bf16.mxu0 %v3986
    %4341 = vmatpush1.bf16.msra.mxu0 %v3985
    %4342 = vmatprep.subr.bf16.mxu0 %v3989
    %4343 = vmatpush1.bf16.msra.mxu0 %v3988
    %4344 = vmatprep.subr.bf16.mxu0 %v3992
    %4345 = vmatpush1.bf16.msra.mxu0 %v3991
    %4346 = vmatprep.subr.bf16.mxu0 %v3995
    %4347 = vmatpush1.bf16.msra.mxu0 %v3994
    %4348 = vmatprep.subr.bf16.mxu0 %v3998
    %4349 = vmatpush1.bf16.msra.mxu0 %v3997
    %4350 = vmatprep.subr.bf16.mxu0 %v4001
    %4351 = vmatpush1.bf16.msra.mxu0 %v4000
    %4352 = vmatprep.subr.bf16.mxu0 0
    %4353 = vmatpush1.bf16.msra.mxu0 0
    %4354 = vmatprep.subr.bf16.mxu0 0
    %4355 = vmatpush1.bf16.msra.mxu0 0
    %4356 = vmatprep.subr.bf16.mxu0 0
    %4357 = vmatpush1.bf16.msra.mxu0 0
    %4358 = vmatprep.subr.bf16.mxu0 0
    %4359 = vmatpush1.bf16.msra.mxu0 0
    %4360 = vmatprep.subr.bf16.mxu0 0
    %4361 = vmatpush1.bf16.msra.mxu0 0
    %4362 = vmatprep.subr.bf16.mxu0 0
    %4363 = vmatpush1.bf16.msra.mxu0 0
    %4364 = vmatprep.subr.bf16.mxu0 0
    %4365 = vmatpush1.bf16.msra.mxu0 0
    %4366 = vmatprep.subr.bf16.mxu0 0
    %4367 = vmatpush1.bf16.msra.mxu0 0
    %4368 = vmatprep.mubr.bf16.mxu0 0
    %4369 = vmatmul.mubr.bf16.gmra.mrb[0].mxu0 %v4335
    %v4370 = vpop.f32.mrb[0].mxu0
    %v4371 = vadd.f32 %v3887, %v4370
    %v4372 = vpop.f32.mrb[0].mxu0
    %v4373 = vadd.f32 %v3891, %v4372
    %v4374 = vpop.f32.mrb[0].mxu0
    %v4375 = vpop.f32.mrb[0].mxu0
    %4376 = vdwg.mxu0
    %4377 = vmatprep.subr.bf16.mxu0 0
    %4378 = vmatpush1.bf16.msra.mxu0 %v3981
    %4379 = vmatprep.subr.bf16.mxu0 0
    %4380 = vmatpush1.bf16.msra.mxu0 %v3984
    %4381 = vmatprep.subr.bf16.mxu0 0
    %4382 = vmatpush1.bf16.msra.mxu0 %v3987
    %4383 = vmatprep.subr.bf16.mxu0 0
    %4384 = vmatpush1.bf16.msra.mxu0 %v3990
    %4385 = vmatprep.subr.bf16.mxu0 0
    %4386 = vmatpush1.bf16.msra.mxu0 %v3993
    %4387 = vmatprep.subr.bf16.mxu0 0
    %4388 = vmatpush1.bf16.msra.mxu0 %v3996
    %4389 = vmatprep.subr.bf16.mxu0 0
    %4390 = vmatpush1.bf16.msra.mxu0 %v3999
    %4391 = vmatprep.subr.bf16.mxu0 0
    %4392 = vmatpush1.bf16.msra.mxu0 %v4002
    %4393 = vmatprep.subr.bf16.mxu0 0
    %4394 = vmatpush1.bf16.msra.mxu0 0
    %4395 = vmatprep.subr.bf16.mxu0 0
    %4396 = vmatpush1.bf16.msra.mxu0 0
    %4397 = vmatprep.subr.bf16.mxu0 0
    %4398 = vmatpush1.bf16.msra.mxu0 0
    %4399 = vmatprep.subr.bf16.mxu0 0
    %4400 = vmatpush1.bf16.msra.mxu0 0
    %4401 = vmatprep.subr.bf16.mxu0 0
    %4402 = vmatpush1.bf16.msra.mxu0 0
    %4403 = vmatprep.subr.bf16.mxu0 0
    %4404 = vmatpush1.bf16.msra.mxu0 0
    %4405 = vmatprep.subr.bf16.mxu0 0
    %4406 = vmatpush1.bf16.msra.mxu0 0
    %4407 = vmatprep.subr.bf16.mxu0 0
    %4408 = vmatpush1.bf16.msra.mxu0 0
    %4409 = vmatprep.mubr.bf16.mxu0 0
    %4410 = vmatmul.mubr.bf16.gmra.mrb[0].mxu0 %v4335
    %v4411 = vpop.f32.mrb[0].mxu0
    %v4412 = vadd.f32 %v3895, %v4411
    %v4413 = vpop.f32.mrb[0].mxu0
    %v4414 = vpop.f32.mrb[0].mxu0
    %v4415 = vpop.f32.mrb[0].mxu0
    %4416 = vdwg.mxu0
    %v4417 = vadd.f32 %v3812, %v4371
    %v4418 = vxor.u32 %v4417, 2147483648
    %v4419 = vmul.f32 %v4418, 1.442695
    %v4420 = vpow.pop %v4419
    %v4421 = vadd.f32 %v4420, 1.0
    %v4422 = vrcp.pop %v4421
    %v4423 = vmul.f32 1.0, %v4422
    %v4424 = vadd.f32 %v3814, %v4373
    %v4425 = vxor.u32 %v4424, 2147483648
    %v4426 = vmul.f32 %v4425, 1.442695
    %v4427 = vpow.pop %v4426
    %v4428 = vadd.f32 %v4427, 1.0
    %v4429 = vrcp.pop %v4428
    %v4430 = vmul.f32 1.0, %v4429
    %v4431 = vmul.f32 %v4423, %v4412
    %v4432 = vadd.f32 %v3872, %v4431
    %v4433 = vtanh.pop %v4432
    %v4434 = vsub.f32 1.0, %v4430
    %v4435 = vmul.f32 %v4434, %v4433
    %v4436 = vmul.f32 %v4430, %v4334
    %v4437 = vadd.f32 %v4435, %v4436
    %v4438 = vpack.c.bf16 %v4437, %v4437
    %4439 = vmatprep.subr.bf16.mxu0 %v3980
    %4440 = vmatpush1.bf16.msra.mxu0 %v3979
    %4441 = vmatprep.subr.bf16.mxu0 %v3983
    %4442 = vmatpush1.bf16.msra.mxu0 %v3982
    %4443 = vmatprep.subr.bf16.mxu0 %v3986
    %4444 = vmatpush1.bf16.msra.mxu0 %v3985
    %4445 = vmatprep.subr.bf16.mxu0 %v3989
    %4446 = vmatpush1.bf16.msra.mxu0 %v3988
    %4447 = vmatprep.subr.bf16.mxu0 %v3992
    %4448 = vmatpush1.bf16.msra.mxu0 %v3991
    %4449 = vmatprep.subr.bf16.mxu0 %v3995
    %4450 = vmatpush1.bf16.msra.mxu0 %v3994
    %4451 = vmatprep.subr.bf16.mxu0 %v3998
    %4452 = vmatpush1.bf16.msra.mxu0 %v3997
    %4453 = vmatprep.subr.bf16.mxu0 %v4001
    %4454 = vmatpush1.bf16.msra.mxu0 %v4000
    %4455 = vmatprep.subr.bf16.mxu0 0
    %4456 = vmatpush1.bf16.msra.mxu0 0
    %4457 = vmatprep.subr.bf16.mxu0 0
    %4458 = vmatpush1.bf16.msra.mxu0 0
    %4459 = vmatprep.subr.bf16.mxu0 0
    %4460 = vmatpush1.bf16.msra.mxu0 0
    %4461 = vmatprep.subr.bf16.mxu0 0
    %4462 = vmatpush1.bf16.msra.mxu0 0
    %4463 = vmatprep.subr.bf16.mxu0 0
    %4464 = vmatpush1.bf16.msra.mxu0 0
    %4465 = vmatprep.subr.bf16.mxu0 0
    %4466 = vmatpush1.bf16.msra.mxu0 0
    %4467 = vmatprep.subr.bf16.mxu0 0
    %4468 = vmatpush1.bf16.msra.mxu0 0
    %4469 = vmatprep.subr.bf16.mxu0 0
    %4470 = vmatpush1.bf16.msra.mxu0 0
    %4471 = vmatprep.mubr.bf16.mxu0 0
    %4472 = vmatmul.mubr.bf16.gmra.mrb[0].mxu0 %v4438
    %v4473 = vpop.f32.mrb[0].mxu0
    %v4474 = vadd.f32 %v3887, %v4473
    %v4475 = vpop.f32.mrb[0].mxu0
    %v4476 = vadd.f32 %v3891, %v4475
    %v4477 = vpop.f32.mrb[0].mxu0
    %v4478 = vpop.f32.mrb[0].mxu0
    %4479 = vdwg.mxu0
    %4480 = vmatprep.subr.bf16.mxu0 0
    %4481 = vmatpush1.bf16.msra.mxu0 %v3981
    %4482 = vmatprep.subr.bf16.mxu0 0
    %4483 = vmatpush1.bf16.msra.mxu0 %v3984
    %4484 = vmatprep.subr.bf16.mxu0 0
    %4485 = vmatpush1.bf16.msra.mxu0 %v3987
    %4486 = vmatprep.subr.bf16.mxu0 0
    %4487 = vmatpush1.bf16.msra.mxu0 %v3990
    %4488 = vmatprep.subr.bf16.mxu0 0
    %4489 = vmatpush1.bf16.msra.mxu0 %v3993
    %4490 = vmatprep.subr.bf16.mxu0 0
    %4491 = vmatpush1.bf16.msra.mxu0 %v3996
    %4492 = vmatprep.subr.bf16.mxu0 0
    %4493 = vmatpush1.bf16.msra.mxu0 %v3999
    %4494 = vmatprep.subr.bf16.mxu0 0
    %4495 = vmatpush1.bf16.msra.mxu0 %v4002
    %4496 = vmatprep.subr.bf16.mxu0 0
    %4497 = vmatpush1.bf16.msra.mxu0 0
    %4498 = vmatprep.subr.bf16.mxu0 0
    %4499 = vmatpush1.bf16.msra.mxu0 0
    %4500 = vmatprep.subr.bf16.mxu0 0
    %4501 = vmatpush1.bf16.msra.mxu0 0
    %4502 = vmatprep.subr.bf16.mxu0 0
    %4503 = vmatpush1.bf16.msra.mxu0 0
    %4504 = vmatprep.subr.bf16.mxu0 0
    %4505 = vmatpush1.bf16.msra.mxu0 0
    %4506 = vmatprep.subr.bf16.mxu0 0
    %4507 = vmatpush1.bf16.msra.mxu0 0
    %4508 = vmatprep.subr.bf16.mxu0 0
    %4509 = vmatpush1.bf16.msra.mxu0 0
    %4510 = vmatprep.subr.bf16.mxu0 0
    %4511 = vmatpush1.bf16.msra.mxu0 0
    %4512 = vmatprep.mubr.bf16.mxu0 0
    %4513 = vmatmul.mubr.bf16.gmra.mrb[0].mxu0 %v4438
    %v4514 = vpop.f32.mrb[0].mxu0
    %v4515 = vadd.f32 %v3895, %v4514
    %v4516 = vpop.f32.mrb[0].mxu0
    %v4517 = vpop.f32.mrb[0].mxu0
    %v4518 = vpop.f32.mrb[0].mxu0
    %4519 = vdwg.mxu0
    %v4520 = vadd.f32 %v3818, %v4474
    %v4521 = vxor.u32 %v4520, 2147483648
    %v4522 = vmul.f32 %v4521, 1.442695
    %v4523 = vpow.pop %v4522
    %v4524 = vadd.f32 %v4523, 1.0
    %v4525 = vrcp.pop %v4524
    %v4526 = vmul.f32 1.0, %v4525
    %v4527 = vadd.f32 %v3820, %v4476
    %v4528 = vxor.u32 %v4527, 2147483648
    %v4529 = vmul.f32 %v4528, 1.442695
    %v4530 = vpow.pop %v4529
    %v4531 = vadd.f32 %v4530, 1.0
    %v4532 = vrcp.pop %v4531
    %v4533 = vmul.f32 1.0, %v4532
    %v4534 = vmul.f32 %v4526, %v4515
    %v4535 = vadd.f32 %v3877, %v4534
    %v4536 = vtanh.pop %v4535
    %v4537 = vsub.f32 1.0, %v4533
    %v4538 = vmul.f32 %v4537, %v4536
    %v4539 = vmul.f32 %v4533, %v4437
    %v4540 = vadd.f32 %v4538, %v4539
    %v4541 = vpack.c.bf16 %v4540, %v4540
    %4542 = vmatprep.subr.bf16.mxu0 %v3980
    %4543 = vmatpush1.bf16.msra.mxu0 %v3979
    %4544 = vmatprep.subr.bf16.mxu0 %v3983
    %4545 = vmatpush1.bf16.msra.mxu0 %v3982
    %4546 = vmatprep.subr.bf16.mxu0 %v3986
    %4547 = vmatpush1.bf16.msra.mxu0 %v3985
    %4548 = vmatprep.subr.bf16.mxu0 %v3989
    %4549 = vmatpush1.bf16.msra.mxu0 %v3988
    %4550 = vmatprep.subr.bf16.mxu0 %v3992
    %4551 = vmatpush1.bf16.msra.mxu0 %v3991
    %4552 = vmatprep.subr.bf16.mxu0 %v3995
    %4553 = vmatpush1.bf16.msra.mxu0 %v3994
    %4554 = vmatprep.subr.bf16.mxu0 %v3998
    %4555 = vmatpush1.bf16.msra.mxu0 %v3997
    %4556 = vmatprep.subr.bf16.mxu0 %v4001
    %4557 = vmatpush1.bf16.msra.mxu0 %v4000
    %4558 = vmatprep.subr.bf16.mxu0 0
    %4559 = vmatpush1.bf16.msra.mxu0 0
    %4560 = vmatprep.subr.bf16.mxu0 0
    %4561 = vmatpush1.bf16.msra.mxu0 0
    %4562 = vmatprep.subr.bf16.mxu0 0
    %4563 = vmatpush1.bf16.msra.mxu0 0
    %4564 = vmatprep.subr.bf16.mxu0 0
    %4565 = vmatpush1.bf16.msra.mxu0 0
    %4566 = vmatprep.subr.bf16.mxu0 0
    %4567 = vmatpush1.bf16.msra.mxu0 0
    %4568 = vmatprep.subr.bf16.mxu0 0
    %4569 = vmatpush1.bf16.msra.mxu0 0
    %4570 = vmatprep.subr.bf16.mxu0 0
    %4571 = vmatpush1.bf16.msra.mxu0 0
    %4572 = vmatprep.subr.bf16.mxu0 0
    %4573 = vmatpush1.bf16.msra.mxu0 0
    %4574 = vmatprep.mubr.bf16.mxu0 0
    %4575 = vmatmul.mubr.bf16.gmra.mrb[0].mxu0 %v4541
    %v4576 = vpop.f32.mrb[0].mxu0
    %v4577 = vadd.f32 %v3887, %v4576
    %v4578 = vpop.f32.mrb[0].mxu0
    %v4579 = vadd.f32 %v3891, %v4578
    %v4580 = vpop.f32.mrb[0].mxu0
    %v4581 = vpop.f32.mrb[0].mxu0
    %4582 = vdwg.mxu0
    %4583 = vmatprep.subr.bf16.mxu0 0
    %4584 = vmatpush1.bf16.msra.mxu0 %v3981
    %4585 = vmatprep.subr.bf16.mxu0 0
    %4586 = vmatpush1.bf16.msra.mxu0 %v3984
    %4587 = vmatprep.subr.bf16.mxu0 0
    %4588 = vmatpush1.bf16.msra.mxu0 %v3987
    %4589 = vmatprep.subr.bf16.mxu0 0
    %4590 = vmatpush1.bf16.msra.mxu0 %v3990
    %4591 = vmatprep.subr.bf16.mxu0 0
    %4592 = vmatpush1.bf16.msra.mxu0 %v3993
    %4593 = vmatprep.subr.bf16.mxu0 0
    %4594 = vmatpush1.bf16.msra.mxu0 %v3996
    %4595 = vmatprep.subr.bf16.mxu0 0
    %4596 = vmatpush1.bf16.msra.mxu0 %v3999
    %4597 = vmatprep.subr.bf16.mxu0 0
    %4598 = vmatpush1.bf16.msra.mxu0 %v4002
    %4599 = vmatprep.subr.bf16.mxu0 0
    %4600 = vmatpush1.bf16.msra.mxu0 0
    %4601 = vmatprep.subr.bf16.mxu0 0
    %4602 = vmatpush1.bf16.msra.mxu0 0
    %4603 = vmatprep.subr.bf16.mxu0 0
    %4604 = vmatpush1.bf16.msra.mxu0 0
    %4605 = vmatprep.subr.bf16.mxu0 0
    %4606 = vmatpush1.bf16.msra.mxu0 0
    %4607 = vmatprep.subr.bf16.mxu0 0
    %4608 = vmatpush1.bf16.msra.mxu0 0
    %4609 = vmatprep.subr.bf16.mxu0 0
    %4610 = vmatpush1.bf16.msra.mxu0 0
    %4611 = vmatprep.subr.bf16.mxu0 0
    %4612 = vmatpush1.bf16.msra.mxu0 0
    %4613 = vmatprep.subr.bf16.mxu0 0
    %4614 = vmatpush1.bf16.msra.mxu0 0
    %4615 = vmatprep.mubr.bf16.mxu0 0
    %4616 = vmatmul.mubr.bf16.gmra.mrb[0].mxu0 %v4541
    %v4617 = vpop.f32.mrb[0].mxu0
    %v4618 = vadd.f32 %v3895, %v4617
    %v4619 = vpop.f32.mrb[0].mxu0
    %v4620 = vpop.f32.mrb[0].mxu0
    %v4621 = vpop.f32.mrb[0].mxu0
    %4622 = vdwg.mxu0
    %v4623 = vadd.f32 %v3822, %v4577
    %v4624 = vxor.u32 %v4623, 2147483648
    %v4625 = vmul.f32 %v4624, 1.442695
    %v4626 = vpow.pop %v4625
    %v4627 = vadd.f32 %v4626, 1.0
    %v4628 = vrcp.pop %v4627
    %v4629 = vmul.f32 1.0, %v4628
    %v4630 = vadd.f32 %v3824, %v4579
    %v4631 = vxor.u32 %v4630, 2147483648
    %v4632 = vmul.f32 %v4631, 1.442695
    %v4633 = vpow.pop %v4632
    %v4634 = vadd.f32 %v4633, 1.0
    %v4635 = vrcp.pop %v4634
    %v4636 = vmul.f32 1.0, %v4635
    %v4637 = vmul.f32 %v4629, %v4618
    %v4638 = vadd.f32 %v3880, %v4637
    %v4639 = vtanh.pop %v4638
    %v4640 = vsub.f32 1.0, %v4636
    %v4641 = vmul.f32 %v4640, %v4639
    %v4642 = vmul.f32 %v4636, %v4540
    %v4643 = vadd.f32 %v4641, %v4642
    %v4644 = vld [vmem:[#allocation14] sm:$0xff]
    %v4645 = vld [vmem:[#allocation14 + $0x8] sm:$0xf]
    %v4646 = vld [vmem:[#allocation14 + $0xc] sm:$0xff]
    %v4647 = vld [vmem:[#allocation14 + $0x14] sm:$0xf]
    %v4648 = vld [vmem:[#allocation14 + $0x18] sm:$0xff]
    %v4649 = vld [vmem:[#allocation14 + $0x20] sm:$0xf]
    %v4650 = vld [vmem:[#allocation14 + $0x24] sm:$0xff]
    %v4651 = vld [vmem:[#allocation14 + $0x2c] sm:$0xf]
    %v4652 = vld [vmem:[#allocation14 + $0x30] sm:$0xff]
    %v4653 = vld [vmem:[#allocation14 + $0x38] sm:$0xf]
    %v4654 = vld [vmem:[#allocation14 + $0x3c] sm:$0xff]
    %v4655 = vld [vmem:[#allocation14 + $0x44] sm:$0xf]
    %v4656 = vld [vmem:[#allocation14 + $0x48] sm:$0xff]
    %v4657 = vld [vmem:[#allocation14 + $0x50] sm:$0xf]
    %v4658 = vld [vmem:[#allocation14 + $0x54] sm:$0xff]
    %v4659 = vld [vmem:[#allocation14 + $0x5c] sm:$0xf]
    %v4660 = vld [vmem:[#allocation14 + $0x60] sm:$0xff]
    %v4661 = vld [vmem:[#allocation14 + $0x68] sm:$0xf]
    %v4662 = vld [vmem:[#allocation14 + $0x6c] sm:$0xff]
    %v4663 = vld [vmem:[#allocation14 + $0x74] sm:$0xf]
    %v4664 = vld [vmem:[#allocation14 + $0x78] sm:$0xff]
    %v4665 = vld [vmem:[#allocation14 + $0x80] sm:$0xf]
    %v4666 = vld [vmem:[#allocation14 + $0x84] sm:$0xff]
    %v4667 = vld [vmem:[#allocation14 + $0x8c] sm:$0xf]
    %v4668 = vld [vmem:[#allocation14 + $0x90] sm:$0xff]
    %v4669 = vld [vmem:[#allocation14 + $0x98] sm:$0xf]
    %v4670 = vld [vmem:[#allocation14 + $0x9c] sm:$0xff]
    %v4671 = vld [vmem:[#allocation14 + $0xa4] sm:$0xf]
    %v4672 = vld [vmem:[#allocation14 + $0xa8] sm:$0xff]
    %v4673 = vld [vmem:[#allocation14 + $0xb0] sm:$0xf]
    %v4674 = vld [vmem:[#allocation14 + $0xb4] sm:$0xff]
    %v4675 = vld [vmem:[#allocation14 + $0xbc] sm:$0xf]
    %v4676 = vld [vmem:[#allocation15] sm:$0xff]
    %v4677 = vld [vmem:[#allocation15 + $0x8] sm:$0xf]
    %v4678 = vld [vmem:[#allocation15 + $0xc] sm:$0xff]
    %v4679 = vld [vmem:[#allocation15 + $0x14] sm:$0xf]
    %v4680 = vld [vmem:[#allocation15 + $0x18] sm:$0xff]
    %v4681 = vld [vmem:[#allocation15 + $0x20] sm:$0xf]
    %v4682 = vld [vmem:[#allocation15 + $0x24] sm:$0xff]
    %v4683 = vld [vmem:[#allocation15 + $0x2c] sm:$0xf]
    %v4684 = vld [vmem:[#allocation15 + $0x30] sm:$0xff]
    %v4685 = vld [vmem:[#allocation15 + $0x38] sm:$0xf]
    %v4686 = vld [vmem:[#allocation15 + $0x3c] sm:$0xff]
    %v4687 = vld [vmem:[#allocation15 + $0x44] sm:$0xf]
    %v4688 = vld [vmem:[#allocation15 + $0x48] sm:$0xff]
    %v4689 = vld [vmem:[#allocation15 + $0x50] sm:$0xf]
    %v4690 = vld [vmem:[#allocation15 + $0x54] sm:$0xff]
    %v4691 = vld [vmem:[#allocation15 + $0x5c] sm:$0xf]
    %v4692 = vld [vmem:[#allocation15 + $0x60] sm:$0xff]
    %v4693 = vld [vmem:[#allocation15 + $0x68] sm:$0xf]
    %v4694 = vld [vmem:[#allocation15 + $0x6c] sm:$0xff]
    %v4695 = vld [vmem:[#allocation15 + $0x74] sm:$0xf]
    %v4696 = vld [vmem:[#allocation15 + $0x78] sm:$0xff]
    %v4697 = vld [vmem:[#allocation15 + $0x80] sm:$0xf]
    %v4698 = vld [vmem:[#allocation15 + $0x84] sm:$0xff]
    %v4699 = vld [vmem:[#allocation15 + $0x8c] sm:$0xf]
    %v4700 = vld [vmem:[#allocation15 + $0x90] sm:$0xff]
    %v4701 = vld [vmem:[#allocation15 + $0x98] sm:$0xf]
    %v4702 = vld [vmem:[#allocation15 + $0x9c] sm:$0xff]
    %v4703 = vld [vmem:[#allocation15 + $0xa4] sm:$0xf]
    %v4704 = vld [vmem:[#allocation15 + $0xa8] sm:$0xff]
    %v4705 = vld [vmem:[#allocation15 + $0xb0] sm:$0xf]
    %v4706 = vld [vmem:[#allocation15 + $0xb4] sm:$0xff]
    %v4707 = vld [vmem:[#allocation15 + $0xbc] sm:$0xf]
    %v4708 = vld [vmem:[#allocation17] sm:$0x7]
    %v4709 = vld [vmem:[#allocation18] sm:$0x7]
    %v4710 = vld [vmem:[#allocation20] sm:$0xf]
    %v4711 = vld [vmem:[#allocation20 + $0x4] sm:$0xf]
    %v4712 = vld [vmem:[#allocation20 + $0x8] sm:$0xf]
    %v4713 = vld [vmem:[#allocation20 + $0xc] sm:$0xf]
    %v4714 = vld [vmem:[#allocation20 + $0x10] sm:$0xf]
    %v4715 = vld [vmem:[#allocation20 + $0x14] sm:$0xf]
    %v4716 = vld [vmem:[#allocation20 + $0x18] sm:$0xf]
    %v4717 = vld [vmem:[#allocation20 + $0x1c] sm:$0xf]
    %v4718 = vld [vmem:[#allocation20 + $0x20] sm:$0xf]
    %v4719 = vld [vmem:[#allocation20 + $0x24] sm:$0xf]
    %v4720 = vld [vmem:[#allocation20 + $0x28] sm:$0xf]
    %v4721 = vld [vmem:[#allocation20 + $0x2c] sm:$0xf]
    %v4722 = vld [vmem:[#allocation20 + $0x30] sm:$0xf]
    %v4723 = vld [vmem:[#allocation20 + $0x34] sm:$0xf]
    %v4724 = vld [vmem:[#allocation20 + $0x38] sm:$0xf]
    %v4725 = vld [vmem:[#allocation20 + $0x3c] sm:$0xf]
    %v4726 = vld [vmem:[#allocation21] sm:$0x1]
    %v4727 = vld [vmem:[#allocation23] sm:$0xf]
    %v4728 = vld [vmem:[#allocation23 + $0x4] sm:$0xf]
    %v4729 = vld [vmem:[#allocation23 + $0x8] sm:$0xf]
    %v4730 = vld [vmem:[#allocation23 + $0xc] sm:$0xf]
    %v4731 = vld [vmem:[#allocation23 + $0x10] sm:$0xf]
    %v4732 = vld [vmem:[#allocation23 + $0x14] sm:$0xf]
    %v4733 = vld [vmem:[#allocation23 + $0x18] sm:$0xf]
    %v4734 = vld [vmem:[#allocation23 + $0x1c] sm:$0xf]
    %v4735 = vld [vmem:[#allocation23 + $0x20] sm:$0xf]
    %v4736 = vld [vmem:[#allocation23 + $0x24] sm:$0xf]
    %v4737 = vld [vmem:[#allocation23 + $0x28] sm:$0xf]
    %v4738 = vld [vmem:[#allocation23 + $0x2c] sm:$0xf]
    %v4739 = vld [vmem:[#allocation23 + $0x30] sm:$0xf]
    %v4740 = vld [vmem:[#allocation23 + $0x34] sm:$0xf]
    %v4741 = vld [vmem:[#allocation23 + $0x38] sm:$0xf]
    %v4742 = vld [vmem:[#allocation23 + $0x3c] sm:$0xf]
    %v4743 = vlaneseq
    %v4744 = vand.u32 %v4743, 127
    %vm4745 = vcmp.lt.s32.totalorder %v4744, 64
    %v4746 = vld [vmem:[#allocation6] sm:$0xff]
    %v4747 = vpack.c.bf16 %v4746, %v4746
    %4748 = vst [vmem:[#allocation24] sm:$0xff] 0.0
    %v4750 = vlaneseq
    %v4751 = vshrl.u32 %v4750, 7
    %v4752 = vsub.s32 0, %v4751
    %v4753 = vrot.slane %v4708, %v4752
    %v4754 = vlaneseq
    %v4755 = vshrl.u32 %v4754, 7
    %v4756 = vsub.s32 1, %v4755
    %v4757 = vrot.slane %v4708, %v4756
    %v4758 = vlaneseq
    %v4759 = vshrl.u32 %v4758, 7
    %v4760 = vsub.s32 2, %v4759
    %v4761 = vrot.slane %v4708, %v4760
    %v4797 = vunpack.c.l.b16 %v4644
    %v4798 = vunpack.c.h.b16 %v4644
    %v4799 = vunpack.c.l.b16 %v4645
    %v4800 = vunpack.c.l.b16 %v4646
    %v4801 = vunpack.c.h.b16 %v4646
    %v4802 = vunpack.c.l.b16 %v4647
    %v4803 = vunpack.c.l.b16 %v4648
    %v4804 = vunpack.c.h.b16 %v4648
    %v4805 = vunpack.c.l.b16 %v4649
    %v4806 = vunpack.c.l.b16 %v4650
    %v4807 = vunpack.c.h.b16 %v4650
    %v4808 = vunpack.c.l.b16 %v4651
    %v4809 = vunpack.c.l.b16 %v4652
    %v4810 = vunpack.c.h.b16 %v4652
    %v4811 = vunpack.c.l.b16 %v4653
    %v4812 = vunpack.c.l.b16 %v4654
    %v4813 = vunpack.c.h.b16 %v4654
    %v4814 = vunpack.c.l.b16 %v4655
    %v4815 = vunpack.c.l.b16 %v4656
    %v4816 = vunpack.c.h.b16 %v4656
    %v4817 = vunpack.c.l.b16 %v4657
    %v4818 = vunpack.c.l.b16 %v4658
    %v4819 = vunpack.c.h.b16 %v4658
    %v4820 = vunpack.c.l.b16 %v4659
    %v4821 = vunpack.c.l.b16 %v4660
    %v4822 = vunpack.c.h.b16 %v4660
    %v4823 = vunpack.c.l.b16 %v4661
    %v4824 = vunpack.c.l.b16 %v4662
    %v4825 = vunpack.c.h.b16 %v4662
    %v4826 = vunpack.c.l.b16 %v4663
    %v4827 = vunpack.c.l.b16 %v4664
    %v4828 = vunpack.c.h.b16 %v4664
    %v4829 = vunpack.c.l.b16 %v4665
    %v4830 = vunpack.c.l.b16 %v4666
    %v4831 = vunpack.c.h.b16 %v4666
    %v4832 = vunpack.c.l.b16 %v4667
    %v4833 = vunpack.c.l.b16 %v4668
    %v4834 = vunpack.c.h.b16 %v4668
    %v4835 = vunpack.c.l.b16 %v4669
    %v4836 = vunpack.c.l.b16 %v4670
    %v4837 = vunpack.c.h.b16 %v4670
    %v4838 = vunpack.c.l.b16 %v4671
    %v4839 = vunpack.c.l.b16 %v4672
    %v4840 = vunpack.c.h.b16 %v4672
    %v4841 = vunpack.c.l.b16 %v4673
    %v4842 = vunpack.c.l.b16 %v4674
    %v4843 = vunpack.c.h.b16 %v4674
    %v4844 = vunpack.c.l.b16 %v4675
    %v4845 = vpack.c.b16 %v4800, %v4797
    %v4846 = vpack.c.b16 %v4801, %v4798
    %v4847 = vpack.c.b16 %v4802, %v4799
    %v4848 = vpack.c.b16 %v4806, %v4803
    %v4849 = vpack.c.b16 %v4807, %v4804
    %v4850 = vpack.c.b16 %v4808, %v4805
    %v4851 = vpack.c.b16 %v4812, %v4809
    %v4852 = vpack.c.b16 %v4813, %v4810
    %v4853 = vpack.c.b16 %v4814, %v4811
    %v4854 = vpack.c.b16 %v4818, %v4815
    %v4855 = vpack.c.b16 %v4819, %v4816
    %v4856 = vpack.c.b16 %v4820, %v4817
    %v4857 = vpack.c.b16 %v4824, %v4821
    %v4858 = vpack.c.b16 %v4825, %v4822
    %v4859 = vpack.c.b16 %v4826, %v4823
    %v4860 = vpack.c.b16 %v4830, %v4827
    %v4861 = vpack.c.b16 %v4831, %v4828
    %v4862 = vpack.c.b16 %v4832, %v4829
    %v4863 = vpack.c.b16 %v4836, %v4833
    %v4864 = vpack.c.b16 %v4837, %v4834
    %v4865 = vpack.c.b16 %v4838, %v4835
    %v4866 = vpack.c.b16 %v4842, %v4839
    %v4867 = vpack.c.b16 %v4843, %v4840
    %v4868 = vpack.c.b16 %v4844, %v4841
    %4893 = vmatprep.subr.bf16.mxu0 %v4846
    %4894 = vmatpush1.bf16.msra.mxu0 %v4845
    %4895 = vmatprep.subr.bf16.mxu0 %v4849
    %4896 = vmatpush1.bf16.msra.mxu0 %v4848
    %4897 = vmatprep.subr.bf16.mxu0 %v4852
    %4898 = vmatpush1.bf16.msra.mxu0 %v4851
    %4899 = vmatprep.subr.bf16.mxu0 %v4855
    %4900 = vmatpush1.bf16.msra.mxu0 %v4854
    %4901 = vmatprep.subr.bf16.mxu0 %v4858
    %4902 = vmatpush1.bf16.msra.mxu0 %v4857
    %4903 = vmatprep.subr.bf16.mxu0 %v4861
    %4904 = vmatpush1.bf16.msra.mxu0 %v4860
    %4905 = vmatprep.subr.bf16.mxu0 %v4864
    %4906 = vmatpush1.bf16.msra.mxu0 %v4863
    %4907 = vmatprep.subr.bf16.mxu0 %v4867
    %4908 = vmatpush1.bf16.msra.mxu0 %v4866
    %4909 = vmatprep.subr.bf16.mxu0 0
    %4910 = vmatpush1.bf16.msra.mxu0 0
    %4911 = vmatprep.subr.bf16.mxu0 0
    %4912 = vmatpush1.bf16.msra.mxu0 0
    %4913 = vmatprep.subr.bf16.mxu0 0
    %4914 = vmatpush1.bf16.msra.mxu0 0
    %4915 = vmatprep.subr.bf16.mxu0 0
    %4916 = vmatpush1.bf16.msra.mxu0 0
    %4917 = vmatprep.subr.bf16.mxu0 0
    %4918 = vmatpush1.bf16.msra.mxu0 0
    %4919 = vmatprep.subr.bf16.mxu0 0
    %4920 = vmatpush1.bf16.msra.mxu0 0
    %4921 = vmatprep.subr.bf16.mxu0 0
    %4922 = vmatpush1.bf16.msra.mxu0 0
    %4923 = vmatprep.subr.bf16.mxu0 0
    %4924 = vmatpush1.bf16.msra.mxu0 0
    %4925 = vmatprep.mubr.bf16.mxu0 0
    %4926 = vmatmul.mubr.bf16.gmra.mrb[0].mxu0 %v4747
    %v4927 = vpop.f32.mrb[0].mxu0
    %v4928 = vadd.f32 %v4753, %v4927
    %v4929 = vpop.f32.mrb[0].mxu0
    %v4930 = vadd.f32 %v4757, %v4929
    %v4931 = vpop.f32.mrb[0].mxu0
    %v4932 = vpop.f32.mrb[0].mxu0
    %4933 = vdwg.mxu0
    %4934 = vmatprep.subr.bf16.mxu0 0
    %4935 = vmatpush1.bf16.msra.mxu0 %v4847
    %4936 = vmatprep.subr.bf16.mxu0 0
    %4937 = vmatpush1.bf16.msra.mxu0 %v4850
    %4938 = vmatprep.subr.bf16.mxu0 0
    %4939 = vmatpush1.bf16.msra.mxu0 %v4853
    %4940 = vmatprep.subr.bf16.mxu0 0
    %4941 = vmatpush1.bf16.msra.mxu0 %v4856
    %4942 = vmatprep.subr.bf16.mxu0 0
    %4943 = vmatpush1.bf16.msra.mxu0 %v4859
    %4944 = vmatprep.subr.bf16.mxu0 0
    %4945 = vmatpush1.bf16.msra.mxu0 %v4862
    %4946 = vmatprep.subr.bf16.mxu0 0
    %4947 = vmatpush1.bf16.msra.mxu0 %v4865
    %4948 = vmatprep.subr.bf16.mxu0 0
    %4949 = vmatpush1.bf16.msra.mxu0 %v4868
    %4950 = vmatprep.subr.bf16.mxu0 0
    %4951 = vmatpush1.bf16.msra.mxu0 0
    %4952 = vmatprep.subr.bf16.mxu0 0
    %4953 = vmatpush1.bf16.msra.mxu0 0
    %4954 = vmatprep.subr.bf16.mxu0 0
    %4955 = vmatpush1.bf16.msra.mxu0 0
    %4956 = vmatprep.subr.bf16.mxu0 0
    %4957 = vmatpush1.bf16.msra.mxu0 0
    %4958 = vmatprep.subr.bf16.mxu0 0
    %4959 = vmatpush1.bf16.msra.mxu0 0
    %4960 = vmatprep.subr.bf16.mxu0 0
    %4961 = vmatpush1.bf16.msra.mxu0 0
    %4962 = vmatprep.subr.bf16.mxu0 0
    %4963 = vmatpush1.bf16.msra.mxu0 0
    %4964 = vmatprep.subr.bf16.mxu0 0
    %4965 = vmatpush1.bf16.msra.mxu0 0
    %4966 = vmatprep.mubr.bf16.mxu0 0
    %4967 = vmatmul.mubr.bf16.gmra.mrb[0].mxu0 %v4747
    %v4968 = vpop.f32.mrb[0].mxu0
    %v4969 = vadd.f32 %v4761, %v4968
    %v4970 = vpop.f32.mrb[0].mxu0
    %v4971 = vpop.f32.mrb[0].mxu0
    %v4972 = vpop.f32.mrb[0].mxu0
    %4973 = vdwg.mxu0
    %v4974 = vpack.c.bf16 %v4643, %v4643
    %v4976 = vlaneseq
    %v4977 = vshrl.u32 %v4976, 7
    %v4978 = vsub.s32 0, %v4977
    %v4979 = vrot.slane %v4709, %v4978
    %v4980 = vlaneseq
    %v4981 = vshrl.u32 %v4980, 7
    %v4982 = vsub.s32 1, %v4981
    %v4983 = vrot.slane %v4709, %v4982
    %v4984 = vlaneseq
    %v4985 = vshrl.u32 %v4984, 7
    %v4986 = vsub.s32 2, %v4985
    %v4987 = vrot.slane %v4709, %v4986
    %v5023 = vunpack.c.l.b16 %v4676
    %v5024 = vunpack.c.h.b16 %v4676
    %v5025 = vunpack.c.l.b16 %v4677
    %v5026 = vunpack.c.l.b16 %v4678
    %v5027 = vunpack.c.h.b16 %v4678
    %v5028 = vunpack.c.l.b16 %v4679
    %v5029 = vunpack.c.l.b16 %v4680
    %v5030 = vunpack.c.h.b16 %v4680
    %v5031 = vunpack.c.l.b16 %v4681
    %v5032 = vunpack.c.l.b16 %v4682
    %v5033 = vunpack.c.h.b16 %v4682
    %v5034 = vunpack.c.l.b16 %v4683
    %v5035 = vunpack.c.l.b16 %v4684
    %v5036 = vunpack.c.h.b16 %v4684
    %v5037 = vunpack.c.l.b16 %v4685
    %v5038 = vunpack.c.l.b16 %v4686
    %v5039 = vunpack.c.h.b16 %v4686
    %v5040 = vunpack.c.l.b16 %v4687
    %v5041 = vunpack.c.l.b16 %v4688
    %v5042 = vunpack.c.h.b16 %v4688
    %v5043 = vunpack.c.l.b16 %v4689
    %v5044 = vunpack.c.l.b16 %v4690
    %v5045 = vunpack.c.h.b16 %v4690
    %v5046 = vunpack.c.l.b16 %v4691
    %v5047 = vunpack.c.l.b16 %v4692
    %v5048 = vunpack.c.h.b16 %v4692
    %v5049 = vunpack.c.l.b16 %v4693
    %v5050 = vunpack.c.l.b16 %v4694
    %v5051 = vunpack.c.h.b16 %v4694
    %v5052 = vunpack.c.l.b16 %v4695
    %v5053 = vunpack.c.l.b16 %v4696
    %v5054 = vunpack.c.h.b16 %v4696
    %v5055 = vunpack.c.l.b16 %v4697
    %v5056 = vunpack.c.l.b16 %v4698
    %v5057 = vunpack.c.h.b16 %v4698
    %v5058 = vunpack.c.l.b16 %v4699
    %v5059 = vunpack.c.l.b16 %v4700
    %v5060 = vunpack.c.h.b16 %v4700
    %v5061 = vunpack.c.l.b16 %v4701
    %v5062 = vunpack.c.l.b16 %v4702
    %v5063 = vunpack.c.h.b16 %v4702
    %v5064 = vunpack.c.l.b16 %v4703
    %v5065 = vunpack.c.l.b16 %v4704
    %v5066 = vunpack.c.h.b16 %v4704
    %v5067 = vunpack.c.l.b16 %v4705
    %v5068 = vunpack.c.l.b16 %v4706
    %v5069 = vunpack.c.h.b16 %v4706
    %v5070 = vunpack.c.l.b16 %v4707
    %v5071 = vpack.c.b16 %v5026, %v5023
    %v5072 = vpack.c.b16 %v5027, %v5024
    %v5073 = vpack.c.b16 %v5028, %v5025
    %v5074 = vpack.c.b16 %v5032, %v5029
    %v5075 = vpack.c.b16 %v5033, %v5030
    %v5076 = vpack.c.b16 %v5034, %v5031
    %v5077 = vpack.c.b16 %v5038, %v5035
    %v5078 = vpack.c.b16 %v5039, %v5036
    %v5079 = vpack.c.b16 %v5040, %v5037
    %v5080 = vpack.c.b16 %v5044, %v5041
    %v5081 = vpack.c.b16 %v5045, %v5042
    %v5082 = vpack.c.b16 %v5046, %v5043
    %v5083 = vpack.c.b16 %v5050, %v5047
    %v5084 = vpack.c.b16 %v5051, %v5048
    %v5085 = vpack.c.b16 %v5052, %v5049
    %v5086 = vpack.c.b16 %v5056, %v5053
    %v5087 = vpack.c.b16 %v5057, %v5054
    %v5088 = vpack.c.b16 %v5058, %v5055
    %v5089 = vpack.c.b16 %v5062, %v5059
    %v5090 = vpack.c.b16 %v5063, %v5060
    %v5091 = vpack.c.b16 %v5064, %v5061
    %v5092 = vpack.c.b16 %v5068, %v5065
    %v5093 = vpack.c.b16 %v5069, %v5066
    %v5094 = vpack.c.b16 %v5070, %v5067
    %5119 = vmatprep.subr.bf16.mxu0 %v5072
    %5120 = vmatpush1.bf16.msra.mxu0 %v5071
    %5121 = vmatprep.subr.bf16.mxu0 %v5075
    %5122 = vmatpush1.bf16.msra.mxu0 %v5074
    %5123 = vmatprep.subr.bf16.mxu0 %v5078
    %5124 = vmatpush1.bf16.msra.mxu0 %v5077
    %5125 = vmatprep.subr.bf16.mxu0 %v5081
    %5126 = vmatpush1.bf16.msra.mxu0 %v5080
    %5127 = vmatprep.subr.bf16.mxu0 %v5084
    %5128 = vmatpush1.bf16.msra.mxu0 %v5083
    %5129 = vmatprep.subr.bf16.mxu0 %v5087
    %5130 = vmatpush1.bf16.msra.mxu0 %v5086
    %5131 = vmatprep.subr.bf16.mxu0 %v5090
    %5132 = vmatpush1.bf16.msra.mxu0 %v5089
    %5133 = vmatprep.subr.bf16.mxu0 %v5093
    %5134 = vmatpush1.bf16.msra.mxu0 %v5092
    %5135 = vmatprep.subr.bf16.mxu0 0
    %5136 = vmatpush1.bf16.msra.mxu0 0
    %5137 = vmatprep.subr.bf16.mxu0 0
    %5138 = vmatpush1.bf16.msra.mxu0 0
    %5139 = vmatprep.subr.bf16.mxu0 0
    %5140 = vmatpush1.bf16.msra.mxu0 0
    %5141 = vmatprep.subr.bf16.mxu0 0
    %5142 = vmatpush1.bf16.msra.mxu0 0
    %5143 = vmatprep.subr.bf16.mxu0 0
    %5144 = vmatpush1.bf16.msra.mxu0 0
    %5145 = vmatprep.subr.bf16.mxu0 0
    %5146 = vmatpush1.bf16.msra.mxu0 0
    %5147 = vmatprep.subr.bf16.mxu0 0
    %5148 = vmatpush1.bf16.msra.mxu0 0
    %5149 = vmatprep.subr.bf16.mxu0 0
    %5150 = vmatpush1.bf16.msra.mxu0 0
    %5151 = vmatprep.mubr.bf16.mxu0 0
    %5152 = vmatmul.mubr.bf16.gmra.mrb[0].mxu0 %v4974
    %v5153 = vpop.f32.mrb[0].mxu0
    %v5154 = vadd.f32 %v4979, %v5153
    %v5155 = vpop.f32.mrb[0].mxu0
    %v5156 = vadd.f32 %v4983, %v5155
    %v5157 = vpop.f32.mrb[0].mxu0
    %v5158 = vpop.f32.mrb[0].mxu0
    %5159 = vdwg.mxu0
    %5160 = vmatprep.subr.bf16.mxu0 0
    %5161 = vmatpush1.bf16.msra.mxu0 %v5073
    %5162 = vmatprep.subr.bf16.mxu0 0
    %5163 = vmatpush1.bf16.msra.mxu0 %v5076
    %5164 = vmatprep.subr.bf16.mxu0 0
    %5165 = vmatpush1.bf16.msra.mxu0 %v5079
    %5166 = vmatprep.subr.bf16.mxu0 0
    %5167 = vmatpush1.bf16.msra.mxu0 %v5082
    %5168 = vmatprep.subr.bf16.mxu0 0
    %5169 = vmatpush1.bf16.msra.mxu0 %v5085
    %5170 = vmatprep.subr.bf16.mxu0 0
    %5171 = vmatpush1.bf16.msra.mxu0 %v5088
    %5172 = vmatprep.subr.bf16.mxu0 0
    %5173 = vmatpush1.bf16.msra.mxu0 %v5091
    %5174 = vmatprep.subr.bf16.mxu0 0
    %5175 = vmatpush1.bf16.msra.mxu0 %v5094
    %5176 = vmatprep.subr.bf16.mxu0 0
    %5177 = vmatpush1.bf16.msra.mxu0 0
    %5178 = vmatprep.subr.bf16.mxu0 0
    %5179 = vmatpush1.bf16.msra.mxu0 0
    %5180 = vmatprep.subr.bf16.mxu0 0
    %5181 = vmatpush1.bf16.msra.mxu0 0
    %5182 = vmatprep.subr.bf16.mxu0 0
    %5183 = vmatpush1.bf16.msra.mxu0 0
    %5184 = vmatprep.subr.bf16.mxu0 0
    %5185 = vmatpush1.bf16.msra.mxu0 0
    %5186 = vmatprep.subr.bf16.mxu0 0
    %5187 = vmatpush1.bf16.msra.mxu0 0
    %5188 = vmatprep.subr.bf16.mxu0 0
    %5189 = vmatpush1.bf16.msra.mxu0 0
    %5190 = vmatprep.subr.bf16.mxu0 0
    %5191 = vmatpush1.bf16.msra.mxu0 0
    %5192 = vmatprep.mubr.bf16.mxu0 0
    %5193 = vmatmul.mubr.bf16.gmra.mrb[0].mxu0 %v4974
    %v5194 = vpop.f32.mrb[0].mxu0
    %v5195 = vadd.f32 %v4987, %v5194
    %v5196 = vpop.f32.mrb[0].mxu0
    %v5197 = vpop.f32.mrb[0].mxu0
    %v5198 = vpop.f32.mrb[0].mxu0
    %5199 = vdwg.mxu0
    %v5200 = vadd.f32 %v4928, %v5154
    %v5201 = vxor.u32 %v5200, 2147483648
    %v5202 = vmul.f32 %v5201, 1.442695
    %v5203 = vpow.pop %v5202
    %v5204 = vadd.f32 %v5203, 1.0
    %v5205 = vrcp.pop %v5204
    %v5206 = vmul.f32 1.0, %v5205
    %v5207 = vadd.f32 %v4930, %v5156
    %v5208 = vxor.u32 %v5207, 2147483648
    %v5209 = vmul.f32 %v5208, 1.442695
    %v5210 = vpow.pop %v5209
    %v5211 = vadd.f32 %v5210, 1.0
    %v5212 = vrcp.pop %v5211
    %v5213 = vmul.f32 1.0, %v5212
    %v5214 = vmul.f32 %v5206, %v5195
    %v5215 = vadd.f32 %v4969, %v5214
    %v5216 = vtanh.pop %v5215
    %v5217 = vsub.f32 1.0, %v5213
    %v5218 = vmul.f32 %v5217, %v5216
    %v5219 = vmul.f32 %v5213, %v4643
    %v5220 = vadd.f32 %v5218, %v5219
    %v5221 = vmax.f32 %v5220, 0.0
    %v5222 = vpack.c.bf16 %v5221, %v5221
    %v5224 = vlaneseq
    %v5225 = vshrl.u32 %v5224, 7
    %v5226 = vsub.s32 0, %v5225
    %v5227 = vrot.slane %v4726, %v5226
    %v5245 = vunpack.c.l.b16 %v4710
    %v5246 = vunpack.c.l.b16 %v4711
    %v5247 = vunpack.c.l.b16 %v4712
    %v5248 = vunpack.c.l.b16 %v4713
    %v5249 = vunpack.c.l.b16 %v4714
    %v5250 = vunpack.c.l.b16 %v4715
    %v5251 = vunpack.c.l.b16 %v4716
    %v5252 = vunpack.c.l.b16 %v4717
    %v5253 = vunpack.c.l.b16 %v4718
    %v5254 = vunpack.c.l.b16 %v4719
    %v5255 = vunpack.c.l.b16 %v4720
    %v5256 = vunpack.c.l.b16 %v4721
    %v5257 = vunpack.c.l.b16 %v4722
    %v5258 = vunpack.c.l.b16 %v4723
    %v5259 = vunpack.c.l.b16 %v4724
    %v5260 = vunpack.c.l.b16 %v4725
    %v5261 = vpack.c.b16 %v5246, %v5245
    %v5262 = vpack.c.b16 %v5248, %v5247
    %v5263 = vpack.c.b16 %v5250, %v5249
    %v5264 = vpack.c.b16 %v5252, %v5251
    %v5265 = vpack.c.b16 %v5254, %v5253
    %v5266 = vpack.c.b16 %v5256, %v5255
    %v5267 = vpack.c.b16 %v5258, %v5257
    %v5268 = vpack.c.b16 %v5260, %v5259
    %5277 = vmatprep.subr.bf16.mxu0 0
    %5278 = vmatpush1.bf16.msra.mxu0 %v5261
    %5279 = vmatprep.subr.bf16.mxu0 0
    %5280 = vmatpush1.bf16.msra.mxu0 %v5262
    %5281 = vmatprep.subr.bf16.mxu0 0
    %5282 = vmatpush1.bf16.msra.mxu0 %v5263
    %5283 = vmatprep.subr.bf16.mxu0 0
    %5284 = vmatpush1.bf16.msra.mxu0 %v5264
    %5285 = vmatprep.subr.bf16.mxu0 0
    %5286 = vmatpush1.bf16.msra.mxu0 %v5265
    %5287 = vmatprep.subr.bf16.mxu0 0
    %5288 = vmatpush1.bf16.msra.mxu0 %v5266
    %5289 = vmatprep.subr.bf16.mxu0 0
    %5290 = vmatpush1.bf16.msra.mxu0 %v5267
    %5291 = vmatprep.subr.bf16.mxu0 0
    %5292 = vmatpush1.bf16.msra.mxu0 %v5268
    %5293 = vmatprep.subr.bf16.mxu0 0
    %5294 = vmatpush1.bf16.msra.mxu0 0
    %5295 = vmatprep.subr.bf16.mxu0 0
    %5296 = vmatpush1.bf16.msra.mxu0 0
    %5297 = vmatprep.subr.bf16.mxu0 0
    %5298 = vmatpush1.bf16.msra.mxu0 0
    %5299 = vmatprep.subr.bf16.mxu0 0
    %5300 = vmatpush1.bf16.msra.mxu0 0
    %5301 = vmatprep.subr.bf16.mxu0 0
    %5302 = vmatpush1.bf16.msra.mxu0 0
    %5303 = vmatprep.subr.bf16.mxu0 0
    %5304 = vmatpush1.bf16.msra.mxu0 0
    %5305 = vmatprep.subr.bf16.mxu0 0
    %5306 = vmatpush1.bf16.msra.mxu0 0
    %5307 = vmatprep.subr.bf16.mxu0 0
    %5308 = vmatpush1.bf16.msra.mxu0 0
    %5309 = vmatprep.mubr.bf16.mxu0 0
    %5310 = vmatmul.mubr.bf16.gmra.mrb[0].mxu0 %v5222
    %v5311 = vpop.f32.mrb[0].mxu0
    %v5312 = vadd.f32 %v5227, %v5311
    %v5313 = vpop.f32.mrb[0].mxu0
    %v5314 = vpop.f32.mrb[0].mxu0
    %v5315 = vpop.f32.mrb[0].mxu0
    %5316 = vdwg.mxu0
    %s5317 = scalar_lea.vmem [#allocation24], 8
    %5318 = vst [vmem:[%s5317] sm:$0xff] %v5312
    %v5319 = vsel %vm4745, %v5312, -inf
    %5320 = vmax.xlane.f32.xlu0 %v5319
    %v5321 = vpop.xlane.xlu0 %5320
    %vm5322 = vcmp.eq.f32.partialorder %v5319, %v5321
    %v5323 = vsel %vm5322, %v4744, 128
    %v5324 = vand.u32 %v5323, 65535
    %v5325 = vshra.s32 %v5323, 16
    %v5326 = vcvt.s32.f32 %v5324
    %v5327 = vcvt.s32.f32 %v5325
    %5328 = vmin.xlane.f32.xlu0 %v5327
    %v5329 = vpop.xlane.xlu0 %5328
    %vm5330 = vcmp.eq.f32.partialorder %v5327, %v5329
    %v5331 = vsel %vm5330, %v5326, inf
    %5332 = vmin.xlane.f32.xlu0 %v5331
    %v5333 = vpop.xlane.xlu0 %5332
    %v5334 = vcvt.f32.s32 %v5333
    %v5335 = vcvt.f32.s32 %v5329
    %v5336 = vshll.u32 %v5335, 16
    %v5337 = vadd.s32 %v5336, %v5334
    %vm5338 = vcmp.eq.s32.totalorder %v4744, %v5337
    %v5339 = vsel %vm5338, 1, 0
    %v5340 = vcvt.s32.f32 %v5339
    %v5341 = vpack.c.bf16 %v5340, %v5340
    %v5358 = vunpack.c.l.b16 %v4727
    %v5359 = vunpack.c.l.b16 %v4728
    %v5360 = vunpack.c.l.b16 %v4729
    %v5361 = vunpack.c.l.b16 %v4730
    %v5362 = vunpack.c.l.b16 %v4731
    %v5363 = vunpack.c.l.b16 %v4732
    %v5364 = vunpack.c.l.b16 %v4733
    %v5365 = vunpack.c.l.b16 %v4734
    %v5366 = vunpack.c.l.b16 %v4735
    %v5367 = vunpack.c.l.b16 %v4736
    %v5368 = vunpack.c.l.b16 %v4737
    %v5369 = vunpack.c.l.b16 %v4738
    %v5370 = vunpack.c.l.b16 %v4739
    %v5371 = vunpack.c.l.b16 %v4740
    %v5372 = vunpack.c.l.b16 %v4741
    %v5373 = vunpack.c.l.b16 %v4742
    %v5374 = vpack.c.b16 %v5359, %v5358
    %v5375 = vpack.c.b16 %v5361, %v5360
    %v5376 = vpack.c.b16 %v5363, %v5362
    %v5377 = vpack.c.b16 %v5365, %v5364
    %v5378 = vpack.c.b16 %v5367, %v5366
    %v5379 = vpack.c.b16 %v5369, %v5368
    %v5380 = vpack.c.b16 %v5371, %v5370
    %v5381 = vpack.c.b16 %v5373, %v5372
    %5390 = vmatprep.subr.bf16.mxu0 0
    %5391 = vmatpush1.bf16.msra.mxu0 %v5374
    %5392 = vmatprep.subr.bf16.mxu0 0
    %5393 = vmatpush1.bf16.msra.mxu0 %v5375
    %5394 = vmatprep.subr.bf16.mxu0 0
    %5395 = vmatpush1.bf16.msra.mxu0 %v5376
    %5396 = vmatprep.subr.bf16.mxu0 0
    %5397 = vmatpush1.bf16.msra.mxu0 %v5377
    %5398 = vmatprep.subr.bf16.mxu0 0
    %5399 = vmatpush1.bf16.msra.mxu0 %v5378
    %5400 = vmatprep.subr.bf16.mxu0 0
    %5401 = vmatpush1.bf16.msra.mxu0 %v5379
    %5402 = vmatprep.subr.bf16.mxu0 0
    %5403 = vmatpush1.bf16.msra.mxu0 %v5380
    %5404 = vmatprep.subr.bf16.mxu0 0
    %5405 = vmatpush1.bf16.msra.mxu0 %v5381
    %5406 = vmatprep.subr.bf16.mxu0 0
    %5407 = vmatpush1.bf16.msra.mxu0 0
    %5408 = vmatprep.subr.bf16.mxu0 0
    %5409 = vmatpush1.bf16.msra.mxu0 0
    %5410 = vmatprep.subr.bf16.mxu0 0
    %5411 = vmatpush1.bf16.msra.mxu0 0
    %5412 = vmatprep.subr.bf16.mxu0 0
    %5413 = vmatpush1.bf16.msra.mxu0 0
    %5414 = vmatprep.subr.bf16.mxu0 0
    %5415 = vmatpush1.bf16.msra.mxu0 0
    %5416 = vmatprep.subr.bf16.mxu0 0
    %5417 = vmatpush1.bf16.msra.mxu0 0
    %5418 = vmatprep.subr.bf16.mxu0 0
    %5419 = vmatpush1.bf16.msra.mxu0 0
    %5420 = vmatprep.subr.bf16.mxu0 0
    %5421 = vmatpush1.bf16.msra.mxu0 0
    %5422 = vmatprep.mubr.bf16.mxu0 0
    %5423 = vmatmul.mubr.bf16.gmra.mrb[0].mxu0 %v5341
    %v5424 = vpop.f32.mrb[0].mxu0
    %v5425 = vadd.f32 0.0, %v5424
    %v5426 = vpop.f32.mrb[0].mxu0
    %v5427 = vpop.f32.mrb[0].mxu0
    %v5428 = vpop.f32.mrb[0].mxu0
    %5429 = vdwg.mxu0
    %v5430 = vpack.c.bf16 %v5425, %v5425
    %5431 = vmatprep.subr.bf16.mxu0 %v4846
    %5432 = vmatpush1.bf16.msra.mxu0 %v4845
    %5433 = vmatprep.subr.bf16.mxu0 %v4849
    %5434 = vmatpush1.bf16.msra.mxu0 %v4848
    %5435 = vmatprep.subr.bf16.mxu0 %v4852
    %5436 = vmatpush1.bf16.msra.mxu0 %v4851
    %5437 = vmatprep.subr.bf16.mxu0 %v4855
    %5438 = vmatpush1.bf16.msra.mxu0 %v4854
    %5439 = vmatprep.subr.bf16.mxu0 %v4858
    %5440 = vmatpush1.bf16.msra.mxu0 %v4857
    %5441 = vmatprep.subr.bf16.mxu0 %v4861
    %5442 = vmatpush1.bf16.msra.mxu0 %v4860
    %5443 = vmatprep.subr.bf16.mxu0 %v4864
    %5444 = vmatpush1.bf16.msra.mxu0 %v4863
    %5445 = vmatprep.subr.bf16.mxu0 %v4867
    %5446 = vmatpush1.bf16.msra.mxu0 %v4866
    %5447 = vmatprep.subr.bf16.mxu0 0
    %5448 = vmatpush1.bf16.msra.mxu0 0
    %5449 = vmatprep.subr.bf16.mxu0 0
    %5450 = vmatpush1.bf16.msra.mxu0 0
    %5451 = vmatprep.subr.bf16.mxu0 0
    %5452 = vmatpush1.bf16.msra.mxu0 0
    %5453 = vmatprep.subr.bf16.mxu0 0
    %5454 = vmatpush1.bf16.msra.mxu0 0
    %5455 = vmatprep.subr.bf16.mxu0 0
    %5456 = vmatpush1.bf16.msra.mxu0 0
    %5457 = vmatprep.subr.bf16.mxu0 0
    %5458 = vmatpush1.bf16.msra.mxu0 0
    %5459 = vmatprep.subr.bf16.mxu0 0
    %5460 = vmatpush1.bf16.msra.mxu0 0
    %5461 = vmatprep.subr.bf16.mxu0 0
    %5462 = vmatpush1.bf16.msra.mxu0 0
    %5463 = vmatprep.mubr.bf16.mxu0 0
    %5464 = vmatmul.mubr.bf16.gmra.mrb[0].mxu0 %v5430
    %v5465 = vpop.f32.mrb[0].mxu0
    %v5466 = vadd.f32 %v4753, %v5465
    %v5467 = vpop.f32.mrb[0].mxu0
    %v5468 = vadd.f32 %v4757, %v5467
    %v5469 = vpop.f32.mrb[0].mxu0
    %v5470 = vpop.f32.mrb[0].mxu0
    %5471 = vdwg.mxu0
    %5472 = vmatprep.subr.bf16.mxu0 0
    %5473 = vmatpush1.bf16.msra.mxu0 %v4847
    %5474 = vmatprep.subr.bf16.mxu0 0
    %5475 = vmatpush1.bf16.msra.mxu0 %v4850
    %5476 = vmatprep.subr.bf16.mxu0 0
    %5477 = vmatpush1.bf16.msra.mxu0 %v4853
    %5478 = vmatprep.subr.bf16.mxu0 0
    %5479 = vmatpush1.bf16.msra.mxu0 %v4856
    %5480 = vmatprep.subr.bf16.mxu0 0
    %5481 = vmatpush1.bf16.msra.mxu0 %v4859
    %5482 = vmatprep.subr.bf16.mxu0 0
    %5483 = vmatpush1.bf16.msra.mxu0 %v4862
    %5484 = vmatprep.subr.bf16.mxu0 0
    %5485 = vmatpush1.bf16.msra.mxu0 %v4865
    %5486 = vmatprep.subr.bf16.mxu0 0
    %5487 = vmatpush1.bf16.msra.mxu0 %v4868
    %5488 = vmatprep.subr.bf16.mxu0 0
    %5489 = vmatpush1.bf16.msra.mxu0 0
    %5490 = vmatprep.subr.bf16.mxu0 0
    %5491 = vmatpush1.bf16.msra.mxu0 0
    %5492 = vmatprep.subr.bf16.mxu0 0
    %5493 = vmatpush1.bf16.msra.mxu0 0
    %5494 = vmatprep.subr.bf16.mxu0 0
    %5495 = vmatpush1.bf16.msra.mxu0 0
    %5496 = vmatprep.subr.bf16.mxu0 0
    %5497 = vmatpush1.bf16.msra.mxu0 0
    %5498 = vmatprep.subr.bf16.mxu0 0
    %5499 = vmatpush1.bf16.msra.mxu0 0
    %5500 = vmatprep.subr.bf16.mxu0 0
    %5501 = vmatpush1.bf16.msra.mxu0 0
    %5502 = vmatprep.subr.bf16.mxu0 0
    %5503 = vmatpush1.bf16.msra.mxu0 0
    %5504 = vmatprep.mubr.bf16.mxu0 0
    %5505 = vmatmul.mubr.bf16.gmra.mrb[0].mxu0 %v5430
    %v5506 = vpop.f32.mrb[0].mxu0
    %v5507 = vadd.f32 %v4761, %v5506
    %v5508 = vpop.f32.mrb[0].mxu0
    %v5509 = vpop.f32.mrb[0].mxu0
    %v5510 = vpop.f32.mrb[0].mxu0
    %5511 = vdwg.mxu0
    %v5512 = vpack.c.bf16 %v5220, %v5220
    %5513 = vmatprep.subr.bf16.mxu0 %v5072
    %5514 = vmatpush1.bf16.msra.mxu0 %v5071
    %5515 = vmatprep.subr.bf16.mxu0 %v5075
    %5516 = vmatpush1.bf16.msra.mxu0 %v5074
    %5517 = vmatprep.subr.bf16.mxu0 %v5078
    %5518 = vmatpush1.bf16.msra.mxu0 %v5077
    %5519 = vmatprep.subr.bf16.mxu0 %v5081
    %5520 = vmatpush1.bf16.msra.mxu0 %v5080
    %5521 = vmatprep.subr.bf16.mxu0 %v5084
    %5522 = vmatpush1.bf16.msra.mxu0 %v5083
    %5523 = vmatprep.subr.bf16.mxu0 %v5087
    %5524 = vmatpush1.bf16.msra.mxu0 %v5086
    %5525 = vmatprep.subr.bf16.mxu0 %v5090
    %5526 = vmatpush1.bf16.msra.mxu0 %v5089
    %5527 = vmatprep.subr.bf16.mxu0 %v5093
    %5528 = vmatpush1.bf16.msra.mxu0 %v5092
    %5529 = vmatprep.subr.bf16.mxu0 0
    %5530 = vmatpush1.bf16.msra.mxu0 0
    %5531 = vmatprep.subr.bf16.mxu0 0
    %5532 = vmatpush1.bf16.msra.mxu0 0
    %5533 = vmatprep.subr.bf16.mxu0 0
    %5534 = vmatpush1.bf16.msra.mxu0 0
    %5535 = vmatprep.subr.bf16.mxu0 0
    %5536 = vmatpush1.bf16.msra.mxu0 0
    %5537 = vmatprep.subr.bf16.mxu0 0
    %5538 = vmatpush1.bf16.msra.mxu0 0
    %5539 = vmatprep.subr.bf16.mxu0 0
    %5540 = vmatpush1.bf16.msra.mxu0 0
    %5541 = vmatprep.subr.bf16.mxu0 0
    %5542 = vmatpush1.bf16.msra.mxu0 0
    %5543 = vmatprep.subr.bf16.mxu0 0
    %5544 = vmatpush1.bf16.msra.mxu0 0
    %5545 = vmatprep.mubr.bf16.mxu0 0
    %5546 = vmatmul.mubr.bf16.gmra.mrb[0].mxu0 %v5512
    %v5547 = vpop.f32.mrb[0].mxu0
    %v5548 = vadd.f32 %v4979, %v5547
    %v5549 = vpop.f32.mrb[0].mxu0
    %v5550 = vadd.f32 %v4983, %v5549
    %v5551 = vpop.f32.mrb[0].mxu0
    %v5552 = vpop.f32.mrb[0].mxu0
    %5553 = vdwg.mxu0
    %5554 = vmatprep.subr.bf16.mxu0 0
    %5555 = vmatpush1.bf16.msra.mxu0 %v5073
    %5556 = vmatprep.subr.bf16.mxu0 0
    %5557 = vmatpush1.bf16.msra.mxu0 %v5076
    %5558 = vmatprep.subr.bf16.mxu0 0
    %5559 = vmatpush1.bf16.msra.mxu0 %v5079
    %5560 = vmatprep.subr.bf16.mxu0 0
    %5561 = vmatpush1.bf16.msra.mxu0 %v5082
    %5562 = vmatprep.subr.bf16.mxu0 0
    %5563 = vmatpush1.bf16.msra.mxu0 %v5085
    %5564 = vmatprep.subr.bf16.mxu0 0
    %5565 = vmatpush1.bf16.msra.mxu0 %v5088
    %5566 = vmatprep.subr.bf16.mxu0 0
    %5567 = vmatpush1.bf16.msra.mxu0 %v5091
    %5568 = vmatprep.subr.bf16.mxu0 0
    %5569 = vmatpush1.bf16.msra.mxu0 %v5094
    %5570 = vmatprep.subr.bf16.mxu0 0
    %5571 = vmatpush1.bf16.msra.mxu0 0
    %5572 = vmatprep.subr.bf16.mxu0 0
    %5573 = vmatpush1.bf16.msra.mxu0 0
    %5574 = vmatprep.subr.bf16.mxu0 0
    %5575 = vmatpush1.bf16.msra.mxu0 0
    %5576 = vmatprep.subr.bf16.mxu0 0
    %5577 = vmatpush1.bf16.msra.mxu0 0
    %5578 = vmatprep.subr.bf16.mxu0 0
    %5579 = vmatpush1.bf16.msra.mxu0 0
    %5580 = vmatprep.subr.bf16.mxu0 0
    %5581 = vmatpush1.bf16.msra.mxu0 0
    %5582 = vmatprep.subr.bf16.mxu0 0
    %5583 = vmatpush1.bf16.msra.mxu0 0
    %5584 = vmatprep.subr.bf16.mxu0 0
    %5585 = vmatpush1.bf16.msra.mxu0 0
    %5586 = vmatprep.mubr.bf16.mxu0 0
    %5587 = vmatmul.mubr.bf16.gmra.mrb[0].mxu0 %v5512
    %v5588 = vpop.f32.mrb[0].mxu0
    %v5589 = vadd.f32 %v4987, %v5588
    %v5590 = vpop.f32.mrb[0].mxu0
    %v5591 = vpop.f32.mrb[0].mxu0
    %v5592 = vpop.f32.mrb[0].mxu0
    %5593 = vdwg.mxu0
    %v5594 = vadd.f32 %v5466, %v5548
    %v5595 = vxor.u32 %v5594, 2147483648
    %v5596 = vmul.f32 %v5595, 1.442695
    %v5597 = vpow.pop %v5596
    %v5598 = vadd.f32 %v5597, 1.0
    %v5599 = vrcp.pop %v5598
    %v5600 = vmul.f32 1.0, %v5599
    %v5601 = vadd.f32 %v5468, %v5550
    %v5602 = vxor.u32 %v5601, 2147483648
    %v5603 = vmul.f32 %v5602, 1.442695
    %v5604 = vpow.pop %v5603
    %v5605 = vadd.f32 %v5604, 1.0
    %v5606 = vrcp.pop %v5605
    %v5607 = vmul.f32 1.0, %v5606
    %v5608 = vmul.f32 %v5600, %v5589
    %v5609 = vadd.f32 %v5507, %v5608
    %v5610 = vtanh.pop %v5609
    %v5611 = vsub.f32 1.0, %v5607
    %v5612 = vmul.f32 %v5611, %v5610
    %v5613 = vmul.f32 %v5607, %v5220
    %v5614 = vadd.f32 %v5612, %v5613
    %v5615 = vmax.f32 %v5614, 0.0
    %v5616 = vpack.c.bf16 %v5615, %v5615
    %5617 = vmatprep.subr.bf16.mxu0 0
    %5618 = vmatpush1.bf16.msra.mxu0 %v5261
    %5619 = vmatprep.subr.bf16.mxu0 0
    %5620 = vmatpush1.bf16.msra.mxu0 %v5262
    %5621 = vmatprep.subr.bf16.mxu0 0
    %5622 = vmatpush1.bf16.msra.mxu0 %v5263
    %5623 = vmatprep.subr.bf16.mxu0 0
    %5624 = vmatpush1.bf16.msra.mxu0 %v5264
    %5625 = vmatprep.subr.bf16.mxu0 0
    %5626 = vmatpush1.bf16.msra.mxu0 %v5265
    %5627 = vmatprep.subr.bf16.mxu0 0
    %5628 = vmatpush1.bf16.msra.mxu0 %v5266
    %5629 = vmatprep.subr.bf16.mxu0 0
    %5630 = vmatpush1.bf16.msra.mxu0 %v5267
    %5631 = vmatprep.subr.bf16.mxu0 0
    %5632 = vmatpush1.bf16.msra.mxu0 %v5268
    %5633 = vmatprep.subr.bf16.mxu0 0
    %5634 = vmatpush1.bf16.msra.mxu0 0
    %5635 = vmatprep.subr.bf16.mxu0 0
    %5636 = vmatpush1.bf16.msra.mxu0 0
    %5637 = vmatprep.subr.bf16.mxu0 0
    %5638 = vmatpush1.bf16.msra.mxu0 0
    %5639 = vmatprep.subr.bf16.mxu0 0
    %5640 = vmatpush1.bf16.msra.mxu0 0
    %5641 = vmatprep.subr.bf16.mxu0 0
    %5642 = vmatpush1.bf16.msra.mxu0 0
    %5643 = vmatprep.subr.bf16.mxu0 0
    %5644 = vmatpush1.bf16.msra.mxu0 0
    %5645 = vmatprep.subr.bf16.mxu0 0
    %5646 = vmatpush1.bf16.msra.mxu0 0
    %5647 = vmatprep.subr.bf16.mxu0 0
    %5648 = vmatpush1.bf16.msra.mxu0 0
    %5649 = vmatprep.mubr.bf16.mxu0 0
    %5650 = vmatmul.mubr.bf16.gmra.mrb[0].mxu0 %v5616
    %v5651 = vpop.f32.mrb[0].mxu0
    %v5652 = vadd.f32 %v5227, %v5651
    %v5653 = vpop.f32.mrb[0].mxu0
    %v5654 = vpop.f32.mrb[0].mxu0
    %v5655 = vpop.f32.mrb[0].mxu0
    %5656 = vdwg.mxu0
    %s5657 = scalar_lea.vmem [#allocation24], 16
    %5658 = vst [vmem:[%s5657] sm:$0xff] %v5652
    %v5659 = vsel %vm4745, %v5652, -inf
    %5660 = vmax.xlane.f32.xlu0 %v5659
    %v5661 = vpop.xlane.xlu0 %5660
    %vm5662 = vcmp.eq.f32.partialorder %v5659, %v5661
    %v5663 = vsel %vm5662, %v4744, 128
    %v5664 = vand.u32 %v5663, 65535
    %v5665 = vshra.s32 %v5663, 16
    %v5666 = vcvt.s32.f32 %v5664
    %v5667 = vcvt.s32.f32 %v5665
    %5668 = vmin.xlane.f32.xlu0 %v5667
    %v5669 = vpop.xlane.xlu0 %5668
    %vm5670 = vcmp.eq.f32.partialorder %v5667, %v5669
    %v5671 = vsel %vm5670, %v5666, inf
    %5672 = vmin.xlane.f32.xlu0 %v5671
    %v5673 = vpop.xlane.xlu0 %5672
    %v5674 = vcvt.f32.s32 %v5673
    %v5675 = vcvt.f32.s32 %v5669
    %v5676 = vshll.u32 %v5675, 16
    %v5677 = vadd.s32 %v5676, %v5674
    %vm5678 = vcmp.eq.s32.totalorder %v4744, %v5677
    %v5679 = vsel %vm5678, 1, 0
    %v5680 = vcvt.s32.f32 %v5679
    %v5681 = vpack.c.bf16 %v5680, %v5680
    %5682 = vmatprep.subr.bf16.mxu0 0
    %5683 = vmatpush1.bf16.msra.mxu0 %v5374
    %5684 = vmatprep.subr.bf16.mxu0 0
    %5685 = vmatpush1.bf16.msra.mxu0 %v5375
    %5686 = vmatprep.subr.bf16.mxu0 0
    %5687 = vmatpush1.bf16.msra.mxu0 %v5376
    %5688 = vmatprep.subr.bf16.mxu0 0
    %5689 = vmatpush1.bf16.msra.mxu0 %v5377
    %5690 = vmatprep.subr.bf16.mxu0 0
    %5691 = vmatpush1.bf16.msra.mxu0 %v5378
    %5692 = vmatprep.subr.bf16.mxu0 0
    %5693 = vmatpush1.bf16.msra.mxu0 %v5379
    %5694 = vmatprep.subr.bf16.mxu0 0
    %5695 = vmatpush1.bf16.msra.mxu0 %v5380
    %5696 = vmatprep.subr.bf16.mxu0 0
    %5697 = vmatpush1.bf16.msra.mxu0 %v5381
    %5698 = vmatprep.subr.bf16.mxu0 0
    %5699 = vmatpush1.bf16.msra.mxu0 0
    %5700 = vmatprep.subr.bf16.mxu0 0
    %5701 = vmatpush1.bf16.msra.mxu0 0
    %5702 = vmatprep.subr.bf16.mxu0 0
    %5703 = vmatpush1.bf16.msra.mxu0 0
    %5704 = vmatprep.subr.bf16.mxu0 0
    %5705 = vmatpush1.bf16.msra.mxu0 0
    %5706 = vmatprep.subr.bf16.mxu0 0
    %5707 = vmatpush1.bf16.msra.mxu0 0
    %5708 = vmatprep.subr.bf16.mxu0 0
    %5709 = vmatpush1.bf16.msra.mxu0 0
    %5710 = vmatprep.subr.bf16.mxu0 0
    %5711 = vmatpush1.bf16.msra.mxu0 0
    %5712 = vmatprep.subr.bf16.mxu0 0
    %5713 = vmatpush1.bf16.msra.mxu0 0
    %5714 = vmatprep.mubr.bf16.mxu0 0
    %5715 = vmatmul.mubr.bf16.gmra.mrb[0].mxu0 %v5681
    %v5716 = vpop.f32.mrb[0].mxu0
    %v5717 = vadd.f32 0.0, %v5716
    %v5718 = vpop.f32.mrb[0].mxu0
    %v5719 = vpop.f32.mrb[0].mxu0
    %v5720 = vpop.f32.mrb[0].mxu0
    %5721 = vdwg.mxu0
    %v5722 = vpack.c.bf16 %v5717, %v5717
    %5723 = vmatprep.subr.bf16.mxu0 %v4846
    %5724 = vmatpush1.bf16.msra.mxu0 %v4845
    %5725 = vmatprep.subr.bf16.mxu0 %v4849
    %5726 = vmatpush1.bf16.msra.mxu0 %v4848
    %5727 = vmatprep.subr.bf16.mxu0 %v4852
    %5728 = vmatpush1.bf16.msra.mxu0 %v4851
    %5729 = vmatprep.subr.bf16.mxu0 %v4855
    %5730 = vmatpush1.bf16.msra.mxu0 %v4854
    %5731 = vmatprep.subr.bf16.mxu0 %v4858
    %5732 = vmatpush1.bf16.msra.mxu0 %v4857
    %5733 = vmatprep.subr.bf16.mxu0 %v4861
    %5734 = vmatpush1.bf16.msra.mxu0 %v4860
    %5735 = vmatprep.subr.bf16.mxu0 %v4864
    %5736 = vmatpush1.bf16.msra.mxu0 %v4863
    %5737 = vmatprep.subr.bf16.mxu0 %v4867
    %5738 = vmatpush1.bf16.msra.mxu0 %v4866
    %5739 = vmatprep.subr.bf16.mxu0 0
    %5740 = vmatpush1.bf16.msra.mxu0 0
    %5741 = vmatprep.subr.bf16.mxu0 0
    %5742 = vmatpush1.bf16.msra.mxu0 0
    %5743 = vmatprep.subr.bf16.mxu0 0
    %5744 = vmatpush1.bf16.msra.mxu0 0
    %5745 = vmatprep.subr.bf16.mxu0 0
    %5746 = vmatpush1.bf16.msra.mxu0 0
    %5747 = vmatprep.subr.bf16.mxu0 0
    %5748 = vmatpush1.bf16.msra.mxu0 0
    %5749 = vmatprep.subr.bf16.mxu0 0
    %5750 = vmatpush1.bf16.msra.mxu0 0
    %5751 = vmatprep.subr.bf16.mxu0 0
    %5752 = vmatpush1.bf16.msra.mxu0 0
    %5753 = vmatprep.subr.bf16.mxu0 0
    %5754 = vmatpush1.bf16.msra.mxu0 0
    %5755 = vmatprep.mubr.bf16.mxu0 0
    %5756 = vmatmul.mubr.bf16.gmra.mrb[0].mxu0 %v5722
    %v5757 = vpop.f32.mrb[0].mxu0
    %v5758 = vadd.f32 %v4753, %v5757
    %v5759 = vpop.f32.mrb[0].mxu0
    %v5760 = vadd.f32 %v4757, %v5759
    %v5761 = vpop.f32.mrb[0].mxu0
    %v5762 = vpop.f32.mrb[0].mxu0
    %5763 = vdwg.mxu0
    %5764 = vmatprep.subr.bf16.mxu0 0
    %5765 = vmatpush1.bf16.msra.mxu0 %v4847
    %5766 = vmatprep.subr.bf16.mxu0 0
    %5767 = vmatpush1.bf16.msra.mxu0 %v4850
    %5768 = vmatprep.subr.bf16.mxu0 0
    %5769 = vmatpush1.bf16.msra.mxu0 %v4853
    %5770 = vmatprep.subr.bf16.mxu0 0
    %5771 = vmatpush1.bf16.msra.mxu0 %v4856
    %5772 = vmatprep.subr.bf16.mxu0 0
    %5773 = vmatpush1.bf16.msra.mxu0 %v4859
    %5774 = vmatprep.subr.bf16.mxu0 0
    %5775 = vmatpush1.bf16.msra.mxu0 %v4862
    %5776 = vmatprep.subr.bf16.mxu0 0
    %5777 = vmatpush1.bf16.msra.mxu0 %v4865
    %5778 = vmatprep.subr.bf16.mxu0 0
    %5779 = vmatpush1.bf16.msra.mxu0 %v4868
    %5780 = vmatprep.subr.bf16.mxu0 0
    %5781 = vmatpush1.bf16.msra.mxu0 0
    %5782 = vmatprep.subr.bf16.mxu0 0
    %5783 = vmatpush1.bf16.msra.mxu0 0
    %5784 = vmatprep.subr.bf16.mxu0 0
    %5785 = vmatpush1.bf16.msra.mxu0 0
    %5786 = vmatprep.subr.bf16.mxu0 0
    %5787 = vmatpush1.bf16.msra.mxu0 0
    %5788 = vmatprep.subr.bf16.mxu0 0
    %5789 = vmatpush1.bf16.msra.mxu0 0
    %5790 = vmatprep.subr.bf16.mxu0 0
    %5791 = vmatpush1.bf16.msra.mxu0 0
    %5792 = vmatprep.subr.bf16.mxu0 0
    %5793 = vmatpush1.bf16.msra.mxu0 0
    %5794 = vmatprep.subr.bf16.mxu0 0
    %5795 = vmatpush1.bf16.msra.mxu0 0
    %5796 = vmatprep.mubr.bf16.mxu0 0
    %5797 = vmatmul.mubr.bf16.gmra.mrb[0].mxu0 %v5722
    %v5798 = vpop.f32.mrb[0].mxu0
    %v5799 = vadd.f32 %v4761, %v5798
    %v5800 = vpop.f32.mrb[0].mxu0
    %v5801 = vpop.f32.mrb[0].mxu0
    %v5802 = vpop.f32.mrb[0].mxu0
    %5803 = vdwg.mxu0
    %v5804 = vpack.c.bf16 %v5614, %v5614
    %5805 = vmatprep.subr.bf16.mxu0 %v5072
    %5806 = vmatpush1.bf16.msra.mxu0 %v5071
    %5807 = vmatprep.subr.bf16.mxu0 %v5075
    %5808 = vmatpush1.bf16.msra.mxu0 %v5074
    %5809 = vmatprep.subr.bf16.mxu0 %v5078
    %5810 = vmatpush1.bf16.msra.mxu0 %v5077
    %5811 = vmatprep.subr.bf16.mxu0 %v5081
    %5812 = vmatpush1.bf16.msra.mxu0 %v5080
    %5813 = vmatprep.subr.bf16.mxu0 %v5084
    %5814 = vmatpush1.bf16.msra.mxu0 %v5083
    %5815 = vmatprep.subr.bf16.mxu0 %v5087
    %5816 = vmatpush1.bf16.msra.mxu0 %v5086
    %5817 = vmatprep.subr.bf16.mxu0 %v5090
    %5818 = vmatpush1.bf16.msra.mxu0 %v5089
    %5819 = vmatprep.subr.bf16.mxu0 %v5093
    %5820 = vmatpush1.bf16.msra.mxu0 %v5092
    %5821 = vmatprep.subr.bf16.mxu0 0
    %5822 = vmatpush1.bf16.msra.mxu0 0
    %5823 = vmatprep.subr.bf16.mxu0 0
    %5824 = vmatpush1.bf16.msra.mxu0 0
    %5825 = vmatprep.subr.bf16.mxu0 0
    %5826 = vmatpush1.bf16.msra.mxu0 0
    %5827 = vmatprep.subr.bf16.mxu0 0
    %5828 = vmatpush1.bf16.msra.mxu0 0
    %5829 = vmatprep.subr.bf16.mxu0 0
    %5830 = vmatpush1.bf16.msra.mxu0 0
    %5831 = vmatprep.subr.bf16.mxu0 0
    %5832 = vmatpush1.bf16.msra.mxu0 0
    %5833 = vmatprep.subr.bf16.mxu0 0
    %5834 = vmatpush1.bf16.msra.mxu0 0
    %5835 = vmatprep.subr.bf16.mxu0 0
    %5836 = vmatpush1.bf16.msra.mxu0 0
    %5837 = vmatprep.mubr.bf16.mxu0 0
    %5838 = vmatmul.mubr.bf16.gmra.mrb[0].mxu0 %v5804
    %v5839 = vpop.f32.mrb[0].mxu0
    %v5840 = vadd.f32 %v4979, %v5839
    %v5841 = vpop.f32.mrb[0].mxu0
    %v5842 = vadd.f32 %v4983, %v5841
    %v5843 = vpop.f32.mrb[0].mxu0
    %v5844 = vpop.f32.mrb[0].mxu0
    %5845 = vdwg.mxu0
    %5846 = vmatprep.subr.bf16.mxu0 0
    %5847 = vmatpush1.bf16.msra.mxu0 %v5073
    %5848 = vmatprep.subr.bf16.mxu0 0
    %5849 = vmatpush1.bf16.msra.mxu0 %v5076
    %5850 = vmatprep.subr.bf16.mxu0 0
    %5851 = vmatpush1.bf16.msra.mxu0 %v5079
    %5852 = vmatprep.subr.bf16.mxu0 0
    %5853 = vmatpush1.bf16.msra.mxu0 %v5082
    %5854 = vmatprep.subr.bf16.mxu0 0
    %5855 = vmatpush1.bf16.msra.mxu0 %v5085
    %5856 = vmatprep.subr.bf16.mxu0 0
    %5857 = vmatpush1.bf16.msra.mxu0 %v5088
    %5858 = vmatprep.subr.bf16.mxu0 0
    %5859 = vmatpush1.bf16.msra.mxu0 %v5091
    %5860 = vmatprep.subr.bf16.mxu0 0
    %5861 = vmatpush1.bf16.msra.mxu0 %v5094
    %5862 = vmatprep.subr.bf16.mxu0 0
    %5863 = vmatpush1.bf16.msra.mxu0 0
    %5864 = vmatprep.subr.bf16.mxu0 0
    %5865 = vmatpush1.bf16.msra.mxu0 0
    %5866 = vmatprep.subr.bf16.mxu0 0
    %5867 = vmatpush1.bf16.msra.mxu0 0
    %5868 = vmatprep.subr.bf16.mxu0 0
    %5869 = vmatpush1.bf16.msra.mxu0 0
    %5870 = vmatprep.subr.bf16.mxu0 0
    %5871 = vmatpush1.bf16.msra.mxu0 0
    %5872 = vmatprep.subr.bf16.mxu0 0
    %5873 = vmatpush1.bf16.msra.mxu0 0
    %5874 = vmatprep.subr.bf16.mxu0 0
    %5875 = vmatpush1.bf16.msra.mxu0 0
    %5876 = vmatprep.subr.bf16.mxu0 0
    %5877 = vmatpush1.bf16.msra.mxu0 0
    %5878 = vmatprep.mubr.bf16.mxu0 0
    %5879 = vmatmul.mubr.bf16.gmra.mrb[0].mxu0 %v5804
    %v5880 = vpop.f32.mrb[0].mxu0
    %v5881 = vadd.f32 %v4987, %v5880
    %v5882 = vpop.f32.mrb[0].mxu0
    %v5883 = vpop.f32.mrb[0].mxu0
    %v5884 = vpop.f32.mrb[0].mxu0
    %5885 = vdwg.mxu0
    %v5886 = vadd.f32 %v5758, %v5840
    %v5887 = vxor.u32 %v5886, 2147483648
    %v5888 = vmul.f32 %v5887, 1.442695
    %v5889 = vpow.pop %v5888
    %v5890 = vadd.f32 %v5889, 1.0
    %v5891 = vrcp.pop %v5890
    %v5892 = vmul.f32 1.0, %v5891
    %v5893 = vadd.f32 %v5760, %v5842
    %v5894 = vxor.u32 %v5893, 2147483648
    %v5895 = vmul.f32 %v5894, 1.442695
    %v5896 = vpow.pop %v5895
    %v5897 = vadd.f32 %v5896, 1.0
    %v5898 = vrcp.pop %v5897
    %v5899 = vmul.f32 1.0, %v5898
    %v5900 = vmul.f32 %v5892, %v5881
    %v5901 = vadd.f32 %v5799, %v5900
    %v5902 = vtanh.pop %v5901
    %v5903 = vsub.f32 1.0, %v5899
    %v5904 = vmul.f32 %v5903, %v5902
    %v5905 = vmul.f32 %v5899, %v5614
    %v5906 = vadd.f32 %v5904, %v5905
    %v5907 = vmax.f32 %v5906, 0.0
    %v5908 = vpack.c.bf16 %v5907, %v5907
    %5909 = vmatprep.subr.bf16.mxu0 0
    %5910 = vmatpush1.bf16.msra.mxu0 %v5261
    %5911 = vmatprep.subr.bf16.mxu0 0
    %5912 = vmatpush1.bf16.msra.mxu0 %v5262
    %5913 = vmatprep.subr.bf16.mxu0 0
    %5914 = vmatpush1.bf16.msra.mxu0 %v5263
    %5915 = vmatprep.subr.bf16.mxu0 0
    %5916 = vmatpush1.bf16.msra.mxu0 %v5264
    %5917 = vmatprep.subr.bf16.mxu0 0
    %5918 = vmatpush1.bf16.msra.mxu0 %v5265
    %5919 = vmatprep.subr.bf16.mxu0 0
    %5920 = vmatpush1.bf16.msra.mxu0 %v5266
    %5921 = vmatprep.subr.bf16.mxu0 0
    %5922 = vmatpush1.bf16.msra.mxu0 %v5267
    %5923 = vmatprep.subr.bf16.mxu0 0
    %5924 = vmatpush1.bf16.msra.mxu0 %v5268
    %5925 = vmatprep.subr.bf16.mxu0 0
    %5926 = vmatpush1.bf16.msra.mxu0 0
    %5927 = vmatprep.subr.bf16.mxu0 0
    %5928 = vmatpush1.bf16.msra.mxu0 0
    %5929 = vmatprep.subr.bf16.mxu0 0
    %5930 = vmatpush1.bf16.msra.mxu0 0
    %5931 = vmatprep.subr.bf16.mxu0 0
    %5932 = vmatpush1.bf16.msra.mxu0 0
    %5933 = vmatprep.subr.bf16.mxu0 0
    %5934 = vmatpush1.bf16.msra.mxu0 0
    %5935 = vmatprep.subr.bf16.mxu0 0
    %5936 = vmatpush1.bf16.msra.mxu0 0
    %5937 = vmatprep.subr.bf16.mxu0 0
    %5938 = vmatpush1.bf16.msra.mxu0 0
    %5939 = vmatprep.subr.bf16.mxu0 0
    %5940 = vmatpush1.bf16.msra.mxu0 0
    %5941 = vmatprep.mubr.bf16.mxu0 0
    %5942 = vmatmul.mubr.bf16.gmra.mrb[0].mxu0 %v5908
    %v5943 = vpop.f32.mrb[0].mxu0
    %v5944 = vadd.f32 %v5227, %v5943
    %v5945 = vpop.f32.mrb[0].mxu0
    %v5946 = vpop.f32.mrb[0].mxu0
    %v5947 = vpop.f32.mrb[0].mxu0
    %5948 = vdwg.mxu0
    %s5949 = scalar_lea.vmem [#allocation24], 24
    %5950 = vst [vmem:[%s5949] sm:$0xff] %v5944
    // Predicated region
    $region106: #{tpu_custom_call.1} parent=1 // pred_check
      _
    $region107: #{tpu_custom_call.1} parent=1 // pred_check_branch
      %5952 = sbr.rel (0) target = $region109
    $region108: #{tpu_custom_call.1} parent=1 // pred_region
      %s5954 = ssub.s32 512, 512
      %5955 = vsyncadd [#allocation5], %s5954
      %s5956 = sshll.u32 [#allocation24], 4
      %s5957 = int_to_ptr.vmem [resolvable:$true] %s5956
      %5962 = dma.vmem_to_hbm [thread:$0]  %s5957, 512, %s13, [#allocation5], 128, 128, 8
    $region109: #{tpu_custom_call.1} parent=1 // pred_fallthru
      _
    // Predicated region
    $region110: #{tpu_custom_call.1} parent=1 // pred_check
      _
    $region111: #{tpu_custom_call.1} parent=1 // pred_check_branch
      %5964 = sbr.rel (0) target = $region113
    $region112: #{tpu_custom_call.1} parent=1 // pred_region
      %5965 = dma.done [#allocation5], 512
    $region113: #{tpu_custom_call.1} parent=1 // pred_fallthru
      _
    %5966 = vsyncpa [#allocation4], 1
    %5967 = vsyncpa [#allocation7], 1
    %5968 = vsyncpa [#allocation10], 1
    %5969 = vsyncpa [#allocation13], 1
    %5970 = vsyncpa [#allocation16], 1
    %5971 = vsyncpa [#allocation19], 1
    %5972 = vsyncpa [#allocation22], 1
    %5973 = vsyncpa [#allocation5], 1

</llo_original>
